<compile_context>
chip_gen: v7x
topology: tpu7x:2x2x1
jax: 0.10.0
libtpu: 0.0.40
codegen_flags: <defaults>
</compile_context>

<pallas_src>
import functools

import jax
import jax.numpy as jnp
from jax.experimental import pallas as pl
from jax.experimental.pallas import tpu as pltpu

EPS = 1e-6
BF16 = jnp.bfloat16
F32 = jnp.float32


def _rmsnorm(v, w):
    # f32 elementwise; callers cast to bf16 only at MXU inputs.
    ms = jnp.mean(v * v, axis=-1, keepdims=True)
    return v * jax.lax.rsqrt(ms + EPS) * w


# --------------------------------------------------------------------------- #
# Stage 1: RMSNorm + QKV projection + vectorized rotary.  Grid over seq tiles.
# --------------------------------------------------------------------------- #
def qkv_rope_kernel(x_ref, cq_ref, saq_ref, sbq_ref, ck_ref, sak_ref, sbk_ref,
                    an_ref, wq_ref, wk_ref, wv_ref,
                    q_ref, kT_ref, v_ref, *, head_dim):
    hd2 = head_dim // 2
    hn = _rmsnorm(x_ref[...], an_ref[...]).astype(BF16)      # bf16 MXU inputs

    xq = jnp.dot(hn, wq_ref[...], preferred_element_type=F32)   # (tq, dq)
    xk = jnp.dot(hn, wk_ref[...], preferred_element_type=F32)   # (tq, dkv)
    xv = jnp.dot(hn, wv_ref[...], preferred_element_type=F32)   # (tq, dkv)

    v_ref[...] = xv.astype(v_ref.dtype)

    # Rotate-half RoPE on the de-interleaved per-head layout, vectorized over
    # heads.  partner(c) = c +/- hd2 within each head; the two global rolls
    # fetch both candidates and the sign-folded, zero-masked sin tables pick
    # the in-head one (out-of-head values are multiplied by 0).  Result is one
    # lane-dense full-width store per output.
    dq = xq.shape[-1]
    dkv = xk.shape[-1]
    q_rot = (xq * cq_ref[...]
             + pltpu.roll(xq, dq - hd2, axis=1) * saq_ref[...]
             + pltpu.roll(xq, hd2, axis=1) * sbq_ref[...])
    q_ref[...] = q_rot.astype(q_ref.dtype)

    k_rot = (xk * ck_ref[...]
             + pltpu.roll(xk, dkv - hd2, axis=1) * sak_ref[...]
             + pltpu.roll(xk, hd2, axis=1) * sbk_ref[...])
    # Store K transposed once per tile so stage-2 QK^T is an NN matmul.
    kT_ref[...] = k_rot.T.astype(kT_ref.dtype)


# --------------------------------------------------------------------------- #
# Stage 2: attention core.  Grid = (n_kv_heads, n_tiles); one step does all
# `rep` query heads of one kv head for one seq tile (GQA via index_map).
# --------------------------------------------------------------------------- #
def attn_kernel(q_ref, kT_ref, v_ref, o_ref, *, rep, head_dim):
    kT = kT_ref[...]                              # (D, S)  bf16
    v = v_ref[...]                                # (S, D)  bf16
    for r in range(rep):                          # small static unroll
        q_r = q_ref[:, r * head_dim:(r + 1) * head_dim]   # (tq, D) bf16
        s = jnp.dot(q_r, kT, preferred_element_type=F32)  # (tq, S) f32
        m = jnp.max(s, axis=-1, keepdims=True)
        p = jnp.exp(s - m)
        p = p * pl.reciprocal(jnp.sum(p, axis=-1, keepdims=True), approx=True)
        o_r = jnp.dot(p.astype(BF16), v, preferred_element_type=F32)   # (tq, D)
        o_ref[:, r * head_dim:(r + 1) * head_dim] = o_r.astype(o_ref.dtype)


# --------------------------------------------------------------------------- #
# Stage 3: wo projection (single K=dq matmul) + residual + RMSNorm + SwiGLU FFN.
# --------------------------------------------------------------------------- #
def wo_ffn_kernel(x_ref, attn_ref, wo_ref, fn_ref, w1_ref, w3_ref, w2_ref, o_ref):
    h = x_ref[...] + jnp.dot(attn_ref[...], wo_ref[...],
                             preferred_element_type=F32)          # x + attn @ wo
    hn2 = _rmsnorm(h, fn_ref[...]).astype(BF16)
    g1 = jnp.dot(hn2, w1_ref[...], preferred_element_type=F32)
    g3 = jnp.dot(hn2, w3_ref[...], preferred_element_type=F32)
    # silu(g1) = g1 * sigmoid(g1); exp(-g1) may overflow to +inf for very
    # negative g1, but the product still saturates to the correct limit of 0.
    silu = g1 * pl.reciprocal(1.0 + jnp.exp(-g1), approx=True)
    ff = jnp.dot((silu * g3).astype(BF16), w2_ref[...],
                 preferred_element_type=F32)
    o_ref[...] = (h + ff).astype(o_ref.dtype)


# --------------------------------------------------------------------------- #
# Wrapper
# --------------------------------------------------------------------------- #
def _vmem_limit_bytes():
    """~80% of physical VMEM, capped at 110 MiB (v5e/v6e: ~102 MiB, v7x: ~51 MiB)."""
    try:
        cap = pltpu.get_tpu_info().vmem_capacity_bytes
        return max(32 * 1024 * 1024, min(int(cap * 0.8), 110 * 1024 * 1024))
    except Exception:
        return 64 * 1024 * 1024


def _weight_spec(block_shape, index_map, single_buffer):
    # Grid-invariant blocks: single-buffer them so the pipeline does not double
    # their VMEM footprint (they are only DMA'd once anyway).
    if single_buffer:
        return pl.BlockSpec(block_shape, index_map, pipeline_mode=pl.Buffered(1))
    return pl.BlockSpec(block_shape, index_map)


def transformer_block(x, params, *, n_heads, n_kv_heads, head_dim, tq,
                      single_buffer_weights=True):
    S, dim = x.shape
    dq = n_heads * head_dim
    dkv = n_kv_heads * head_dim
    rep = n_heads // n_kv_heads
    hidden = params["w1_t"].shape[1]
    assert n_heads % n_kv_heads == 0
    assert S % tq == 0 and tq % 8 == 0
    assert head_dim % 128 == 0 and dim % 128 == 0 and hidden % 128 == 0
    n_tiles = S // tq
    vmem_limit = _vmem_limit_bytes()

    def res(shape, imap):
        return _weight_spec(shape, imap, single_buffer_weights)

    # ---- stage 1: RMSNorm + QKV + rope ----
    q_rot, k_t, v_proj = pl.pallas_call(
        functools.partial(qkv_rope_kernel, head_dim=head_dim),
        grid=(n_tiles,),
        in_specs=[
            pl.BlockSpec((tq, dim), lambda i: (i, 0)),    # x
            pl.BlockSpec((tq, dq), lambda i: (i, 0)),     # cos table (q width)
            pl.BlockSpec((tq, dq), lambda i: (i, 0)),     # -sin | 0
            pl.BlockSpec((tq, dq), lambda i: (i, 0)),     # 0 | +sin
            pl.BlockSpec((tq, dkv), lambda i: (i, 0)),    # cos table (k width)
            pl.BlockSpec((tq, dkv), lambda i: (i, 0)),
            pl.BlockSpec((tq, dkv), lambda i: (i, 0)),
            res((1, dim), lambda i: (0, 0)),              # attn_norm (resident)
            res((dim, dq), lambda i: (0, 0)),             # wq (resident)
            res((dim, dkv), lambda i: (0, 0)),            # wk
            res((dim, dkv), lambda i: (0, 0)),            # wv
        ],
        out_specs=[
            pl.BlockSpec((tq, dq), lambda i: (i, 0)),     # q (rope'd)
            pl.BlockSpec((dkv, tq), lambda i: (0, i)),    # k^T (rope'd, transposed)
            pl.BlockSpec((tq, dkv), lambda i: (i, 0)),    # v
        ],
        out_shape=[
            jax.ShapeDtypeStruct((S, dq), BF16),
            jax.ShapeDtypeStruct((dkv, S), BF16),
            jax.ShapeDtypeStruct((S, dkv), BF16),
        ],
        compiler_params=pltpu.CompilerParams(
            dimension_semantics=("parallel",),
            vmem_limit_bytes=vmem_limit),
    )(x, params["rope_cos_q"], params["rope_sin_a_q"], params["rope_sin_b_q"],
      params["rope_cos_k"], params["rope_sin_a_k"], params["rope_sin_b_k"],
      params["attn_norm"], params["wq_t"], params["wk_t"], params["wv_t"])

    # ---- stage 2: attention core (kv-head outermost so K/V blocks are reused
    #      across the inner seq-tile axis; every output block written once) ----
    attn = pl.pallas_call(
        functools.partial(attn_kernel, rep=rep, head_dim=head_dim),
        grid=(n_kv_heads, n_tiles),
        in_specs=[
            pl.BlockSpec((tq, rep * head_dim), lambda g, i: (i, g)),   # q group
            pl.BlockSpec((head_dim, S), lambda g, i: (g, 0)),          # k^T, kv head g
            pl.BlockSpec((S, head_dim), lambda g, i: (0, g)),          # v,   kv head g
        ],
        out_specs=pl.BlockSpec((tq, rep * head_dim), lambda g, i: (i, g)),
        out_shape=jax.ShapeDtypeStruct((S, dq), BF16),
        compiler_params=pltpu.CompilerParams(
            dimension_semantics=("parallel", "parallel"),
            vmem_limit_bytes=vmem_limit),
    )(q_rot, k_t, v_proj)

    # ---- stage 3: wo + residual + RMSNorm + SwiGLU FFN ----
    out = pl.pallas_call(
        wo_ffn_kernel,
        grid=(n_tiles,),
        in_specs=[
            pl.BlockSpec((tq, dim), lambda i: (i, 0)),    # x (residual)
            pl.BlockSpec((tq, dq), lambda i: (i, 0)),     # per-head attention
            res((dq, dim), lambda i: (0, 0)),             # wo (resident)
            res((1, dim), lambda i: (0, 0)),              # ffn_norm
            res((dim, hidden), lambda i: (0, 0)),         # w1
            res((dim, hidden), lambda i: (0, 0)),         # w3
            res((hidden, dim), lambda i: (0, 0)),         # w2
        ],
        out_specs=pl.BlockSpec((tq, dim), lambda i: (i, 0)),
        out_shape=jax.ShapeDtypeStruct((S, dim), F32),
        compiler_params=pltpu.CompilerParams(
            dimension_semantics=("parallel",),
            vmem_limit_bytes=vmem_limit),
    )(x, attn, params["wo_t"], params["ffn_norm"],
      params["w1_t"], params["w3_t"], params["w2_t"])
    return out


# --------------------------------------------------------------------------- #
# Weight prep.  LAYOUT CONTRACT (must stay in sync with the kernels above):
#   * wq/wk output features are de-interleaved per head (even dims first, then
#     odd dims) so rotary becomes rotate-half; the shared permutation cancels
#     in q @ k^T, so v and wo are untouched.
#   * 1/sqrt(head_dim) is folded into wq.
#   * rope tables are sign-folded and tiled to the full q / k feature widths.
# --------------------------------------------------------------------------- #
def prepare_params(w, cos, sin, *, n_heads, n_kv_heads, head_dim):
    dim = w["wq"].shape[1]
    scale = head_dim ** -0.5

    deint = jnp.concatenate([jnp.arange(0, head_dim, 2),
                             jnp.arange(1, head_dim, 2)])
    perm_q = jnp.concatenate([h * head_dim + deint for h in range(n_heads)])
    perm_k = jnp.concatenate([h * head_dim + deint for h in range(n_kv_heads)])

    zeros = jnp.zeros_like(sin)
    cos_h = jnp.concatenate([cos, cos], axis=1)      # per-head (S, head_dim)
    sa_h = jnp.concatenate([-sin, zeros], axis=1)    # partner = c + hd2 half
    sb_h = jnp.concatenate([zeros, sin], axis=1)     # partner = c - hd2 half

    return {
        "wq_t": (w["wq"][perm_q, :].T * scale).astype(BF16),   # (dim, dq)
        "wk_t": w["wk"][perm_k, :].T.astype(BF16),             # (dim, dkv)
        "wv_t": w["wv"].T.astype(BF16),                        # (dim, dkv)
        "wo_t": w["wo"].T.astype(BF16),                        # (dq, dim)
        "w1_t": w["w1"].T.astype(BF16),                        # (dim, hidden)
        "w2_t": w["w2"].T.astype(BF16),                        # (hidden, dim)
        "w3_t": w["w3"].T.astype(BF16),                        # (dim, hidden)
        "attn_norm": w["attn_norm"].reshape(1, dim).astype(F32),
        "ffn_norm": w["ffn_norm"].reshape(1, dim).astype(F32),
        "rope_cos_q": jnp.tile(cos_h, (1, n_heads)),
        "rope_sin_a_q": jnp.tile(sa_h, (1, n_heads)),
        "rope_sin_b_q": jnp.tile(sb_h, (1, n_heads)),
        "rope_cos_k": jnp.tile(cos_h, (1, n_kv_heads)),
        "rope_sin_a_k": jnp.tile(sa_h, (1, n_kv_heads)),
        "rope_sin_b_k": jnp.tile(sb_h, (1, n_kv_heads)),
    }


# ------------- pure-JAX reference (PyTorch semantics, interleaved rotary) ----
def reference_block(x, cos, sin, w, *, n_heads, n_kv_heads, head_dim):
    S, dim = x.shape
    rep = n_heads // n_kv_heads
    scale = head_dim ** -0.5

    def rms(v, g):
        return v * jax.lax.rsqrt(jnp.mean(v * v, -1, keepdims=True) + EPS) * g

    def rope_interleaved(t):  # t: (S, H, D)
        tr = t.reshape(S, t.shape[1], head_dim // 2, 2)
        c = cos[:, None, :]
        s = sin[:, None, :]
        re = tr[..., 0] * c - tr[..., 1] * s
        im = tr[..., 0] * s + tr[..., 1] * c
        return jnp.stack([re, im], axis=-1).reshape(t.shape)

    hn = rms(x, w["attn_norm"][0])
    xq = (hn @ w["wq"].T).reshape(S, n_heads, head_dim)
    xk = (hn @ w["wk"].T).reshape(S, n_kv_heads, head_dim)
    xv = (hn @ w["wv"].T).reshape(S, n_kv_heads, head_dim)
    xq, xk = rope_interleaved(xq), rope_interleaved(xk)
    key = jnp.repeat(xk, rep, axis=1)
    val = jnp.repeat(xv, rep, axis=1)
    sc = jnp.einsum("qhd,khd->hqk", xq, key) * scale
    p = jax.nn.softmax(sc, axis=-1)
    out = jnp.einsum("hqk,khd->qhd", p, val).reshape(S, n_heads * head_dim)
    h = x + out @ w["wo"].T
    hn2 = rms(h, w["ffn_norm"][0])
    ff = (jax.nn.silu(hn2 @ w["w1"].T) * (hn2 @ w["w3"].T)) @ w["w2"].T
    return h + ff


if __name__ == "__main__":
    # small TransformerModelArgs (lane-aligned so per-head BlockSpec tiles are legal)
    S, dim = 256, 256
    n_heads, n_kv_heads, head_dim = 4, 2, 128
    hidden_dim = 512
    tq = 128

    key = jax.random.PRNGKey(0)
    ks = jax.random.split(key, 10)

    def rnd(k, shape, s=0.08):
        return jax.random.normal(k, shape, F32) * s

    # weights "stored" in bf16 (checkpoint precision); the f32 reference uses the
    # same rounded values so only activation rounding differs from the kernel.
    def as_stored(w):
        return w.astype(BF16).astype(F32)

    # nn.Linear weight shapes: (out_features, in_features)
    raw = {
        "wq": as_stored(rnd(ks[0], (n_heads * head_dim, dim))),
        "wk": as_stored(rnd(ks[1], (n_kv_heads * head_dim, dim))),
        "wv": as_stored(rnd(ks[2], (n_kv_heads * head_dim, dim))),
        "wo": as_stored(rnd(ks[3], (dim, n_heads * head_dim))),
        "w1": as_stored(rnd(ks[4], (hidden_dim, dim))),
        "w2": as_stored(rnd(ks[5], (dim, hidden_dim))),
        "w3": as_stored(rnd(ks[6], (hidden_dim, dim))),
        "attn_norm": 1.0 + 0.1 * jax.random.normal(ks[7], (dim,), F32),
        "ffn_norm": 1.0 + 0.1 * jax.random.normal(ks[8], (dim,), F32),
    }
    x = jax.random.normal(ks[9], (S, dim), F32)

    # rotary tables (mistral precompute_freqs_cis, theta=10000)
    inv = 1.0 / (10000.0 ** (jnp.arange(0, head_dim, 2, dtype=F32) / head_dim))
    ang = jnp.outer(jnp.arange(S, dtype=F32), inv)       # (S, head_dim//2)
    cos, sin = jnp.cos(ang), jnp.sin(ang)

    params = prepare_params(raw, cos, sin, n_heads=n_heads,
                            n_kv_heads=n_kv_heads, head_dim=head_dim)

    run = functools.partial(transformer_block, x, params, n_heads=n_heads,
                            n_kv_heads=n_kv_heads, head_dim=head_dim, tq=tq)
    try:
        out = jax.block_until_ready(run(single_buffer_weights=True))
    except Exception:
        # pl.Buffered(1) single-buffering of grid-invariant weights not
        # supported by this jax version; fall back to default double buffering.
        out = jax.block_until_ready(run(single_buffer_weights=False))

    ref = reference_block(
        x, cos, sin,
        {"wq": raw["wq"], "wk": raw["wk"], "wv": raw["wv"], "wo": raw["wo"],
         "w1": raw["w1"], "w2": raw["w2"], "w3": raw["w3"],
         "attn_norm": raw["attn_norm"].reshape(1, dim),
         "ffn_norm": raw["ffn_norm"].reshape(1, dim)},
        n_heads=n_heads, n_kv_heads=n_kv_heads, head_dim=head_dim)

    assert out.shape == (S, dim)
    max_err = float(jnp.max(jnp.abs(out - ref)))
    assert jnp.allclose(out, ref, rtol=5e-2, atol=5e-2), (
        f"mismatch vs reference (max abs err {max_err})")

    print("KERNEL_OK")
</pallas_src>

<mosaic_0001>
module attributes {stable_mosaic.version = 11 : i64} {
  func.func @qkv_rope_kernel(%arg0: i32, %arg1: memref<128x256xf32, #tpu.memory_space<vmem>>, %arg2: memref<128x512xf32, #tpu.memory_space<vmem>>, %arg3: memref<128x512xf32, #tpu.memory_space<vmem>>, %arg4: memref<128x512xf32, #tpu.memory_space<vmem>>, %arg5: memref<128x256xf32, #tpu.memory_space<vmem>>, %arg6: memref<128x256xf32, #tpu.memory_space<vmem>>, %arg7: memref<128x256xf32, #tpu.memory_space<vmem>>, %arg8: memref<1x256xf32, #tpu.memory_space<vmem>>, %arg9: memref<256x512xbf16, #tpu.memory_space<vmem>>, %arg10: memref<256x256xbf16, #tpu.memory_space<vmem>>, %arg11: memref<256x256xbf16, #tpu.memory_space<vmem>>, %arg12: memref<128x512xbf16, #tpu.memory_space<vmem>>, %arg13: memref<256x128xbf16, #tpu.memory_space<vmem>>, %arg14: memref<128x256xbf16, #tpu.memory_space<vmem>>) attributes {dimension_semantics = [#tpu.dimension_semantics<parallel>], iteration_bounds = array<i64: 2>, scalar_prefetch = 0 : i64, scratch_operands = 0 : i64, tpu.core_type = #tpu.core_type<tc>, window_params = [{transform_indices = @transform_0, window_bounds = array<i64: 128, 256>}, {transform_indices = @transform_1, window_bounds = array<i64: 128, 512>}, {transform_indices = @transform_2, window_bounds = array<i64: 128, 512>}, {transform_indices = @transform_3, window_bounds = array<i64: 128, 512>}, {transform_indices = @transform_4, window_bounds = array<i64: 128, 256>}, {transform_indices = @transform_5, window_bounds = array<i64: 128, 256>}, {transform_indices = @transform_6, window_bounds = array<i64: 128, 256>}, {pipeline_mode = #tpu.pipeline_mode<synchronous>, transform_indices = @transform_7, window_bounds = array<i64: 1, 256>}, {pipeline_mode = #tpu.pipeline_mode<synchronous>, transform_indices = @transform_8, window_bounds = array<i64: 256, 512>}, {pipeline_mode = #tpu.pipeline_mode<synchronous>, transform_indices = @transform_9, window_bounds = array<i64: 256, 256>}, {pipeline_mode = #tpu.pipeline_mode<synchronous>, transform_indices = @transform_10, window_bounds = array<i64: 256, 256>}, {transform_indices = @transform_11, window_bounds = array<i64: 128, 512>}, {transform_indices = @transform_12, window_bounds = array<i64: 256, 128>}, {transform_indices = @transform_13, window_bounds = array<i64: 128, 256>}]} {
    %c0 = arith.constant 0 : index
    %c0_0 = arith.constant 0 : index
    %0 = vector.load %arg1[%c0, %c0_0] : memref<128x256xf32, #tpu.memory_space<vmem>>, vector<128x256xf32>
    %c0_1 = arith.constant 0 : index
    %c0_2 = arith.constant 0 : index
    %1 = vector.load %arg8[%c0_1, %c0_2] : memref<1x256xf32, #tpu.memory_space<vmem>>, vector<1x256xf32>
    %2 = arith.mulf %0, %0 : vector<128x256xf32>
    %cst = arith.constant dense<0.000000e+00> : vector<128xf32>
    %3 = vector.multi_reduction <add>, %2, %cst [1] : vector<128x256xf32> to vector<128xf32>
    %4 = vector.shape_cast %3 : vector<128xf32> to vector<128x1xf32>
    %cst_3 = arith.constant 2.560000e+02 : f32
    %5 = vector.broadcast %cst_3 : f32 to vector<128x1xf32>
    %6 = arith.divf %4, %5 : vector<128x1xf32>
    %cst_4 = arith.constant 9.99999997E-7 : f32
    %7 = vector.broadcast %cst_4 : f32 to vector<128x1xf32>
    %8 = arith.addf %6, %7 : vector<128x1xf32>
    %9 = math.rsqrt %8 : vector<128x1xf32>
    %10 = vector.broadcast %9 : vector<128x1xf32> to vector<128x256xf32>
    %11 = arith.mulf %0, %10 : vector<128x256xf32>
    %12 = vector.broadcast %1 : vector<1x256xf32> to vector<128x256xf32>
    %13 = arith.mulf %11, %12 : vector<128x256xf32>
    %14 = arith.truncf %13 : vector<128x256xf32> to vector<128x256xbf16>
    %c0_5 = arith.constant 0 : index
    %c0_6 = arith.constant 0 : index
    %15 = vector.load %arg9[%c0_5, %c0_6] : memref<256x512xbf16, #tpu.memory_space<vmem>>, vector<256x512xbf16>
    %cst_7 = arith.constant dense<0.000000e+00> : vector<128x512xf32>
    %16 = tpu.matmul %14, %15, %cst_7 {dimension_numbers = #tpu.dot_dimension_numbers<[1], [0], [0], [1], [0, 0, 1, 1], [], []>} : vector<128x256xbf16>, vector<256x512xbf16>, vector<128x512xf32> -> vector<128x512xf32>
    %c0_8 = arith.constant 0 : index
    %c0_9 = arith.constant 0 : index
    %17 = vector.load %arg10[%c0_8, %c0_9] : memref<256x256xbf16, #tpu.memory_space<vmem>>, vector<256x256xbf16>
    %cst_10 = arith.constant dense<0.000000e+00> : vector<128x256xf32>
    %18 = tpu.matmul %14, %17, %cst_10 {dimension_numbers = #tpu.dot_dimension_numbers<[1], [0], [0], [1], [0, 0, 1, 1], [], []>} : vector<128x256xbf16>, vector<256x256xbf16>, vector<128x256xf32> -> vector<128x256xf32>
    %c0_11 = arith.constant 0 : index
    %c0_12 = arith.constant 0 : index
    %19 = vector.load %arg11[%c0_11, %c0_12] : memref<256x256xbf16, #tpu.memory_space<vmem>>, vector<256x256xbf16>
    %cst_13 = arith.constant dense<0.000000e+00> : vector<128x256xf32>
    %20 = tpu.matmul %14, %19, %cst_13 {dimension_numbers = #tpu.dot_dimension_numbers<[1], [0], [0], [1], [0, 0, 1, 1], [], []>} : vector<128x256xbf16>, vector<256x256xbf16>, vector<128x256xf32> -> vector<128x256xf32>
    %21 = arith.truncf %20 : vector<128x256xf32> to vector<128x256xbf16>
    %c0_14 = arith.constant 0 : index
    %c0_15 = arith.constant 0 : index
    %22 = vector.load %arg14[%c0_14, %c0_15] : memref<128x256xbf16, #tpu.memory_space<vmem>>, vector<128x256xbf16>
    tpu.vector_store %arg14[%c0_14, %c0_15], %21 {strides = array<i32>} : memref<128x256xbf16, #tpu.memory_space<vmem>>, vector<128x256xbf16>,
    %c0_16 = arith.constant 0 : index
    %c0_17 = arith.constant 0 : index
    %23 = vector.load %arg2[%c0_16, %c0_17] : memref<128x512xf32, #tpu.memory_space<vmem>>, vector<128x512xf32>
    %24 = arith.mulf %16, %23 : vector<128x512xf32>
    %c448_i32 = arith.constant 448 : i32
    %25 = tpu.dynamic_rotate %16 by %c448_i32 dim 1 : vector<128x512xf32>, i32 -> vector<128x512xf32>
    %c0_18 = arith.constant 0 : index
    %c0_19 = arith.constant 0 : index
    %26 = vector.load %arg3[%c0_18, %c0_19] : memref<128x512xf32, #tpu.memory_space<vmem>>, vector<128x512xf32>
    %27 = arith.mulf %25, %26 : vector<128x512xf32>
    %28 = arith.addf %24, %27 : vector<128x512xf32>
    %c64_i32 = arith.constant 64 : i32
    %29 = tpu.dynamic_rotate %16 by %c64_i32 dim 1 : vector<128x512xf32>, i32 -> vector<128x512xf32>
    %c0_20 = arith.constant 0 : index
    %c0_21 = arith.constant 0 : index
    %30 = vector.load %arg4[%c0_20, %c0_21] : memref<128x512xf32, #tpu.memory_space<vmem>>, vector<128x512xf32>
    %31 = arith.mulf %29, %30 : vector<128x512xf32>
    %32 = arith.addf %28, %31 : vector<128x512xf32>
    %33 = arith.truncf %32 : vector<128x512xf32> to vector<128x512xbf16>
    %c0_22 = arith.constant 0 : index
    %c0_23 = arith.constant 0 : index
    %34 = vector.load %arg12[%c0_22, %c0_23] : memref<128x512xbf16, #tpu.memory_space<vmem>>, vector<128x512xbf16>
    tpu.vector_store %arg12[%c0_22, %c0_23], %33 {strides = array<i32>} : memref<128x512xbf16, #tpu.memory_space<vmem>>, vector<128x512xbf16>,
    %c0_24 = arith.constant 0 : index
    %c0_25 = arith.constant 0 : index
    %35 = vector.load %arg5[%c0_24, %c0_25] : memref<128x256xf32, #tpu.memory_space<vmem>>, vector<128x256xf32>
    %36 = arith.mulf %18, %35 : vector<128x256xf32>
    %c192_i32 = arith.constant 192 : i32
    %37 = tpu.dynamic_rotate %18 by %c192_i32 dim 1 : vector<128x256xf32>, i32 -> vector<128x256xf32>
    %c0_26 = arith.constant 0 : index
    %c0_27 = arith.constant 0 : index
    %38 = vector.load %arg6[%c0_26, %c0_27] : memref<128x256xf32, #tpu.memory_space<vmem>>, vector<128x256xf32>
    %39 = arith.mulf %37, %38 : vector<128x256xf32>
    %40 = arith.addf %36, %39 : vector<128x256xf32>
    %c64_i32_28 = arith.constant 64 : i32
    %41 = tpu.dynamic_rotate %18 by %c64_i32_28 dim 1 : vector<128x256xf32>, i32 -> vector<128x256xf32>
    %c0_29 = arith.constant 0 : index
    %c0_30 = arith.constant 0 : index
    %42 = vector.load %arg7[%c0_29, %c0_30] : memref<128x256xf32, #tpu.memory_space<vmem>>, vector<128x256xf32>
    %43 = arith.mulf %41, %42 : vector<128x256xf32>
    %44 = arith.addf %40, %43 : vector<128x256xf32>
    %45 = tpu.transpose %44, [1, 0] : vector<128x256xf32> -> vector<256x128xf32>
    %46 = arith.truncf %45 : vector<256x128xf32> to vector<256x128xbf16>
    %c0_31 = arith.constant 0 : index
    %c0_32 = arith.constant 0 : index
    %47 = vector.load %arg13[%c0_31, %c0_32] : memref<256x128xbf16, #tpu.memory_space<vmem>>, vector<256x128xbf16>
    tpu.vector_store %arg13[%c0_31, %c0_32], %46 {strides = array<i32>} : memref<256x128xbf16, #tpu.memory_space<vmem>>, vector<256x128xbf16>,
    return
  }
  func.func @transform_0(%arg0: i32) -> (i32, i32) {
    %c0_i32 = arith.constant 0 : i32
    %c0_i32_0 = arith.constant 0 : i32
    return %arg0, %c0_i32 : i32, i32
  }
  func.func @transform_1(%arg0: i32) -> (i32, i32) {
    %c0_i32 = arith.constant 0 : i32
    %c0_i32_0 = arith.constant 0 : i32
    return %arg0, %c0_i32 : i32, i32
  }
  func.func @transform_2(%arg0: i32) -> (i32, i32) {
    %c0_i32 = arith.constant 0 : i32
    %c0_i32_0 = arith.constant 0 : i32
    return %arg0, %c0_i32 : i32, i32
  }
  func.func @transform_3(%arg0: i32) -> (i32, i32) {
    %c0_i32 = arith.constant 0 : i32
    %c0_i32_0 = arith.constant 0 : i32
    return %arg0, %c0_i32 : i32, i32
  }
  func.func @transform_4(%arg0: i32) -> (i32, i32) {
    %c0_i32 = arith.constant 0 : i32
    %c0_i32_0 = arith.constant 0 : i32
    return %arg0, %c0_i32 : i32, i32
  }
  func.func @transform_5(%arg0: i32) -> (i32, i32) {
    %c0_i32 = arith.constant 0 : i32
    %c0_i32_0 = arith.constant 0 : i32
    return %arg0, %c0_i32 : i32, i32
  }
  func.func @transform_6(%arg0: i32) -> (i32, i32) {
    %c0_i32 = arith.constant 0 : i32
    %c0_i32_0 = arith.constant 0 : i32
    return %arg0, %c0_i32 : i32, i32
  }
  func.func @transform_7(%arg0: i32) -> (i32, i32) {
    %c0_i32 = arith.constant 0 : i32
    %c0_i32_0 = arith.constant 0 : i32
    %c0_i32_1 = arith.constant 0 : i32
    return %c0_i32, %c0_i32_0 : i32, i32
  }
  func.func @transform_8(%arg0: i32) -> (i32, i32) {
    %c0_i32 = arith.constant 0 : i32
    %c0_i32_0 = arith.constant 0 : i32
    %c0_i32_1 = arith.constant 0 : i32
    return %c0_i32, %c0_i32_0 : i32, i32
  }
  func.func @transform_9(%arg0: i32) -> (i32, i32) {
    %c0_i32 = arith.constant 0 : i32
    %c0_i32_0 = arith.constant 0 : i32
    %c0_i32_1 = arith.constant 0 : i32
    return %c0_i32, %c0_i32_0 : i32, i32
  }
  func.func @transform_10(%arg0: i32) -> (i32, i32) {
    %c0_i32 = arith.constant 0 : i32
    %c0_i32_0 = arith.constant 0 : i32
    %c0_i32_1 = arith.constant 0 : i32
    return %c0_i32, %c0_i32_0 : i32, i32
  }
  func.func @transform_11(%arg0: i32) -> (i32, i32) {
    %c0_i32 = arith.constant 0 : i32
    %c0_i32_0 = arith.constant 0 : i32
    return %arg0, %c0_i32 : i32, i32
  }
  func.func @transform_12(%arg0: i32) -> (i32, i32) {
    %c0_i32 = arith.constant 0 : i32
    %c0_i32_0 = arith.constant 0 : i32
    return %c0_i32, %arg0 : i32, i32
  }
  func.func @transform_13(%arg0: i32) -> (i32, i32) {
    %c0_i32 = arith.constant 0 : i32
    %c0_i32_0 = arith.constant 0 : i32
    return %arg0, %c0_i32 : i32, i32
  }
}

module attributes {stable_mosaic.version = 11 : i64} {
  func.func @qkv_rope_kernel(%arg0: i32, %arg1: memref<128x256xf32, #tpu.memory_space<vmem>>, %arg2: memref<128x512xf32, #tpu.memory_space<vmem>>, %arg3: memref<128x512xf32, #tpu.memory_space<vmem>>, %arg4: memref<128x512xf32, #tpu.memory_space<vmem>>, %arg5: memref<128x256xf32, #tpu.memory_space<vmem>>, %arg6: memref<128x256xf32, #tpu.memory_space<vmem>>, %arg7: memref<128x256xf32, #tpu.memory_space<vmem>>, %arg8: memref<1x256xf32, #tpu.memory_space<vmem>>, %arg9: memref<256x512xbf16, #tpu.memory_space<vmem>>, %arg10: memref<256x256xbf16, #tpu.memory_space<vmem>>, %arg11: memref<256x256xbf16, #tpu.memory_space<vmem>>, %arg12: memref<128x512xbf16, #tpu.memory_space<vmem>>, %arg13: memref<256x128xbf16, #tpu.memory_space<vmem>>, %arg14: memref<128x256xbf16, #tpu.memory_space<vmem>>) attributes {dimension_semantics = [#tpu.dimension_semantics<parallel>], iteration_bounds = array<i64: 2>, scalar_prefetch = 0 : i64, scratch_operands = 0 : i64, tpu.core_type = #tpu.core_type<tc>, window_params = [{transform_indices = @transform_0, window_bounds = array<i64: 128, 256>}, {transform_indices = @transform_1, window_bounds = array<i64: 128, 512>}, {transform_indices = @transform_2, window_bounds = array<i64: 128, 512>}, {transform_indices = @transform_3, window_bounds = array<i64: 128, 512>}, {transform_indices = @transform_4, window_bounds = array<i64: 128, 256>}, {transform_indices = @transform_5, window_bounds = array<i64: 128, 256>}, {transform_indices = @transform_6, window_bounds = array<i64: 128, 256>}, {pipeline_mode = #tpu.pipeline_mode<synchronous>, transform_indices = @transform_7, window_bounds = array<i64: 1, 256>}, {pipeline_mode = #tpu.pipeline_mode<synchronous>, transform_indices = @transform_8, window_bounds = array<i64: 256, 512>}, {pipeline_mode = #tpu.pipeline_mode<synchronous>, transform_indices = @transform_9, window_bounds = array<i64: 256, 256>}, {pipeline_mode = #tpu.pipeline_mode<synchronous>, transform_indices = @transform_10, window_bounds = array<i64: 256, 256>}, {transform_indices = @transform_11, window_bounds = array<i64: 128, 512>}, {transform_indices = @transform_12, window_bounds = array<i64: 256, 128>}, {transform_indices = @transform_13, window_bounds = array<i64: 128, 256>}]} {
    %c0 = arith.constant 0 : index
    %c0_0 = arith.constant 0 : index
    %0 = vector.load %arg1[%c0, %c0_0] : memref<128x256xf32, #tpu.memory_space<vmem>>, vector<128x256xf32>
    %c0_1 = arith.constant 0 : index
    %c0_2 = arith.constant 0 : index
    %1 = vector.load %arg8[%c0_1, %c0_2] : memref<1x256xf32, #tpu.memory_space<vmem>>, vector<1x256xf32>
    %2 = arith.mulf %0, %0 : vector<128x256xf32>
    %cst = arith.constant dense<0.000000e+00> : vector<128xf32>
    %3 = vector.multi_reduction <add>, %2, %cst [1] : vector<128x256xf32> to vector<128xf32>
    %4 = vector.shape_cast %3 : vector<128xf32> to vector<128x1xf32>
    %cst_3 = arith.constant 2.560000e+02 : f32
    %5 = vector.broadcast %cst_3 : f32 to vector<128x1xf32>
    %6 = arith.divf %4, %5 : vector<128x1xf32>
    %cst_4 = arith.constant 9.99999997E-7 : f32
    %7 = vector.broadcast %cst_4 : f32 to vector<128x1xf32>
    %8 = arith.addf %6, %7 : vector<128x1xf32>
    %9 = math.rsqrt %8 : vector<128x1xf32>
    %10 = vector.broadcast %9 : vector<128x1xf32> to vector<128x256xf32>
    %11 = arith.mulf %0, %10 : vector<128x256xf32>
    %12 = vector.broadcast %1 : vector<1x256xf32> to vector<128x256xf32>
    %13 = arith.mulf %11, %12 : vector<128x256xf32>
    %14 = arith.truncf %13 : vector<128x256xf32> to vector<128x256xbf16>
    %c0_5 = arith.constant 0 : index
    %c0_6 = arith.constant 0 : index
    %15 = vector.load %arg9[%c0_5, %c0_6] : memref<256x512xbf16, #tpu.memory_space<vmem>>, vector<256x512xbf16>
    %cst_7 = arith.constant dense<0.000000e+00> : vector<128x512xf32>
    %16 = tpu.matmul %14, %15, %cst_7 {dimension_numbers = #tpu.dot_dimension_numbers<[1], [0], [0], [1], [0, 0, 1, 1], [], []>} : vector<128x256xbf16>, vector<256x512xbf16>, vector<128x512xf32> -> vector<128x512xf32>
    %c0_8 = arith.constant 0 : index
    %c0_9 = arith.constant 0 : index
    %17 = vector.load %arg10[%c0_8, %c0_9] : memref<256x256xbf16, #tpu.memory_space<vmem>>, vector<256x256xbf16>
    %cst_10 = arith.constant dense<0.000000e+00> : vector<128x256xf32>
    %18 = tpu.matmul %14, %17, %cst_10 {dimension_numbers = #tpu.dot_dimension_numbers<[1], [0], [0], [1], [0, 0, 1, 1], [], []>} : vector<128x256xbf16>, vector<256x256xbf16>, vector<128x256xf32> -> vector<128x256xf32>
    %c0_11 = arith.constant 0 : index
    %c0_12 = arith.constant 0 : index
    %19 = vector.load %arg11[%c0_11, %c0_12] : memref<256x256xbf16, #tpu.memory_space<vmem>>, vector<256x256xbf16>
    %cst_13 = arith.constant dense<0.000000e+00> : vector<128x256xf32>
    %20 = tpu.matmul %14, %19, %cst_13 {dimension_numbers = #tpu.dot_dimension_numbers<[1], [0], [0], [1], [0, 0, 1, 1], [], []>} : vector<128x256xbf16>, vector<256x256xbf16>, vector<128x256xf32> -> vector<128x256xf32>
    %21 = arith.truncf %20 : vector<128x256xf32> to vector<128x256xbf16>
    %c0_14 = arith.constant 0 : index
    %c0_15 = arith.constant 0 : index
    %22 = vector.load %arg14[%c0_14, %c0_15] : memref<128x256xbf16, #tpu.memory_space<vmem>>, vector<128x256xbf16>
    tpu.vector_store %arg14[%c0_14, %c0_15], %21 {strides = array<i32>} : memref<128x256xbf16, #tpu.memory_space<vmem>>, vector<128x256xbf16>,
    %c0_16 = arith.constant 0 : index
    %c0_17 = arith.constant 0 : index
    %23 = vector.load %arg2[%c0_16, %c0_17] : memref<128x512xf32, #tpu.memory_space<vmem>>, vector<128x512xf32>
    %24 = arith.mulf %16, %23 : vector<128x512xf32>
    %c448_i32 = arith.constant 448 : i32
    %25 = tpu.dynamic_rotate %16 by %c448_i32 dim 1 : vector<128x512xf32>, i32 -> vector<128x512xf32>
    %c0_18 = arith.constant 0 : index
    %c0_19 = arith.constant 0 : index
    %26 = vector.load %arg3[%c0_18, %c0_19] : memref<128x512xf32, #tpu.memory_space<vmem>>, vector<128x512xf32>
    %27 = arith.mulf %25, %26 : vector<128x512xf32>
    %28 = arith.addf %24, %27 : vector<128x512xf32>
    %c64_i32 = arith.constant 64 : i32
    %29 = tpu.dynamic_rotate %16 by %c64_i32 dim 1 : vector<128x512xf32>, i32 -> vector<128x512xf32>
    %c0_20 = arith.constant 0 : index
    %c0_21 = arith.constant 0 : index
    %30 = vector.load %arg4[%c0_20, %c0_21] : memref<128x512xf32, #tpu.memory_space<vmem>>, vector<128x512xf32>
    %31 = arith.mulf %29, %30 : vector<128x512xf32>
    %32 = arith.addf %28, %31 : vector<128x512xf32>
    %33 = arith.truncf %32 : vector<128x512xf32> to vector<128x512xbf16>
    %c0_22 = arith.constant 0 : index
    %c0_23 = arith.constant 0 : index
    %34 = vector.load %arg12[%c0_22, %c0_23] : memref<128x512xbf16, #tpu.memory_space<vmem>>, vector<128x512xbf16>
    tpu.vector_store %arg12[%c0_22, %c0_23], %33 {strides = array<i32>} : memref<128x512xbf16, #tpu.memory_space<vmem>>, vector<128x512xbf16>,
    %c0_24 = arith.constant 0 : index
    %c0_25 = arith.constant 0 : index
    %35 = vector.load %arg5[%c0_24, %c0_25] : memref<128x256xf32, #tpu.memory_space<vmem>>, vector<128x256xf32>
    %36 = arith.mulf %18, %35 : vector<128x256xf32>
    %c192_i32 = arith.constant 192 : i32
    %37 = tpu.dynamic_rotate %18 by %c192_i32 dim 1 : vector<128x256xf32>, i32 -> vector<128x256xf32>
    %c0_26 = arith.constant 0 : index
    %c0_27 = arith.constant 0 : index
    %38 = vector.load %arg6[%c0_26, %c0_27] : memref<128x256xf32, #tpu.memory_space<vmem>>, vector<128x256xf32>
    %39 = arith.mulf %37, %38 : vector<128x256xf32>
    %40 = arith.addf %36, %39 : vector<128x256xf32>
    %c64_i32_28 = arith.constant 64 : i32
    %41 = tpu.dynamic_rotate %18 by %c64_i32_28 dim 1 : vector<128x256xf32>, i32 -> vector<128x256xf32>
    %c0_29 = arith.constant 0 : index
    %c0_30 = arith.constant 0 : index
    %42 = vector.load %arg7[%c0_29, %c0_30] : memref<128x256xf32, #tpu.memory_space<vmem>>, vector<128x256xf32>
    %43 = arith.mulf %41, %42 : vector<128x256xf32>
    %44 = arith.addf %40, %43 : vector<128x256xf32>
    %45 = tpu.transpose %44, [1, 0] : vector<128x256xf32> -> vector<256x128xf32>
    %46 = arith.truncf %45 : vector<256x128xf32> to vector<256x128xbf16>
    %c0_31 = arith.constant 0 : index
    %c0_32 = arith.constant 0 : index
    %47 = vector.load %arg13[%c0_31, %c0_32] : memref<256x128xbf16, #tpu.memory_space<vmem>>, vector<256x128xbf16>
    tpu.vector_store %arg13[%c0_31, %c0_32], %46 {strides = array<i32>} : memref<256x128xbf16, #tpu.memory_space<vmem>>, vector<256x128xbf16>,
    return
  }
  func.func @transform_0(%arg0: i32) -> (i32, i32) {
    %c0_i32 = arith.constant 0 : i32
    %c0_i32_0 = arith.constant 0 : i32
    return %arg0, %c0_i32 : i32, i32
  }
  func.func @transform_1(%arg0: i32) -> (i32, i32) {
    %c0_i32 = arith.constant 0 : i32
    %c0_i32_0 = arith.constant 0 : i32
    return %arg0, %c0_i32 : i32, i32
  }
  func.func @transform_2(%arg0: i32) -> (i32, i32) {
    %c0_i32 = arith.constant 0 : i32
    %c0_i32_0 = arith.constant 0 : i32
    return %arg0, %c0_i32 : i32, i32
  }
  func.func @transform_3(%arg0: i32) -> (i32, i32) {
    %c0_i32 = arith.constant 0 : i32
    %c0_i32_0 = arith.constant 0 : i32
    return %arg0, %c0_i32 : i32, i32
  }
  func.func @transform_4(%arg0: i32) -> (i32, i32) {
    %c0_i32 = arith.constant 0 : i32
    %c0_i32_0 = arith.constant 0 : i32
    return %arg0, %c0_i32 : i32, i32
  }
  func.func @transform_5(%arg0: i32) -> (i32, i32) {
    %c0_i32 = arith.constant 0 : i32
    %c0_i32_0 = arith.constant 0 : i32
    return %arg0, %c0_i32 : i32, i32
  }
  func.func @transform_6(%arg0: i32) -> (i32, i32) {
    %c0_i32 = arith.constant 0 : i32
    %c0_i32_0 = arith.constant 0 : i32
    return %arg0, %c0_i32 : i32, i32
  }
  func.func @transform_7(%arg0: i32) -> (i32, i32) {
    %c0_i32 = arith.constant 0 : i32
    %c0_i32_0 = arith.constant 0 : i32
    %c0_i32_1 = arith.constant 0 : i32
    return %c0_i32, %c0_i32_0 : i32, i32
  }
  func.func @transform_8(%arg0: i32) -> (i32, i32) {
    %c0_i32 = arith.constant 0 : i32
    %c0_i32_0 = arith.constant 0 : i32
    %c0_i32_1 = arith.constant 0 : i32
    return %c0_i32, %c0_i32_0 : i32, i32
  }
  func.func @transform_9(%arg0: i32) -> (i32, i32) {
    %c0_i32 = arith.constant 0 : i32
    %c0_i32_0 = arith.constant 0 : i32
    %c0_i32_1 = arith.constant 0 : i32
    return %c0_i32, %c0_i32_0 : i32, i32
  }
  func.func @transform_10(%arg0: i32) -> (i32, i32) {
    %c0_i32 = arith.constant 0 : i32
    %c0_i32_0 = arith.constant 0 : i32
    %c0_i32_1 = arith.constant 0 : i32
    return %c0_i32, %c0_i32_0 : i32, i32
  }
  func.func @transform_11(%arg0: i32) -> (i32, i32) {
    %c0_i32 = arith.constant 0 : i32
    %c0_i32_0 = arith.constant 0 : i32
    return %arg0, %c0_i32 : i32, i32
  }
  func.func @transform_12(%arg0: i32) -> (i32, i32) {
    %c0_i32 = arith.constant 0 : i32
    %c0_i32_0 = arith.constant 0 : i32
    return %c0_i32, %arg0 : i32, i32
  }
  func.func @transform_13(%arg0: i32) -> (i32, i32) {
    %c0_i32 = arith.constant 0 : i32
    %c0_i32_0 = arith.constant 0 : i32
    return %arg0, %c0_i32 : i32, i32
  }
}

</mosaic_0001>

<llo_original>
// kernel: tpu_custom_call.1
$region0: #{tpu_custom_call.1}
  #allocation0 [shape = 'u32[]', space=smem, size = 0x4, offset = 0x4, fixed_abs, tag = 'smem constant byte address 0x4 - core index']
  #allocation1 [shape = 'u32[144,128]{1,0:T(1,128)}', space=vmem, size = 0x12000, scoped, tag = 'internal scratch']
  %s0 = inlined_call_operand.hbm [shape: f32[256,256], index: 0, kind: input, shape index: {}]
  %s1 = inlined_call_operand.hbm [shape: f32[256,512], index: 1, kind: input, shape index: {}]
  %s2 = inlined_call_operand.hbm [shape: f32[256,512], index: 2, kind: input, shape index: {}]
  %s3 = inlined_call_operand.hbm [shape: f32[256,512], index: 3, kind: input, shape index: {}]
  %s4 = inlined_call_operand.hbm [shape: f32[256,256], index: 4, kind: input, shape index: {}]
  %s5 = inlined_call_operand.hbm [shape: f32[256,256], index: 5, kind: input, shape index: {}]
  %s6 = inlined_call_operand.hbm [shape: f32[256,256], index: 6, kind: input, shape index: {}]
  %s7 = inlined_call_operand.hbm [shape: f32[1,256], index: 7, kind: input, shape index: {}]
  %s8 = inlined_call_operand.hbm [shape: bf16[256,512], index: 8, kind: input, shape index: {}]
  %s9 = inlined_call_operand.hbm [shape: bf16[256,256], index: 9, kind: input, shape index: {}]
  %s10 = inlined_call_operand.hbm [shape: bf16[256,256], index: 10, kind: input, shape index: {}]
  %s11 = inlined_call_operand.hbm [shape: bf16[256,512], index: 11, kind: output, shape index: {0}]
  %s12 = inlined_call_operand.hbm [shape: bf16[256,256], index: 12, kind: output, shape index: {1}]
  %s13 = inlined_call_operand.hbm [shape: bf16[256,256], index: 13, kind: output, shape index: {2}]
  %14 = xla_tuple %s11, %s12, %s13
  %s15 = sld [smem:[#allocation0]]
  $region137: #{tpu_custom_call.1} parent=0
    _
  %s17 = ssub.s32 1, %s15
  %s18 = scalar_select 0, %s17, %s15
  $region1: #{tpu_custom_call.1} parent=0
    #allocation2 [shape = 'u8[262144]{0}', space=vmem, size = 0x40000, scoped, tag = 'input window, operand 0']
    #allocation3 [shape = 's32[2]{0}', space=sflag, size = 0x8, scoped, tag = 'scoped memory for tpu_custom_call.1']
    #allocation4 [shape = 's32[2]{0}', space=sflag, size = 0x8, scoped, tag = 'scoped memory for tpu_custom_call.1']
    #allocation5 [shape = 'u8[524288]{0}', space=vmem, size = 0x80000, scoped, tag = 'input window, operand 1']
    #allocation6 [shape = 's32[2]{0}', space=sflag, size = 0x8, scoped, tag = 'scoped memory for tpu_custom_call.1']
    #allocation7 [shape = 'u8[524288]{0}', space=vmem, size = 0x80000, scoped, tag = 'input window, operand 2']
    #allocation8 [shape = 'u8[524288]{0}', space=vmem, size = 0x80000, scoped, tag = 'input window, operand 3']
    #allocation9 [shape = 's32[2]{0}', space=sflag, size = 0x8, scoped, tag = 'scoped memory for tpu_custom_call.1']
    #allocation10 [shape = 'u8[262144]{0}', space=vmem, size = 0x40000, scoped, tag = 'input window, operand 4']
    #allocation11 [shape = 'u8[262144]{0}', space=vmem, size = 0x40000, scoped, tag = 'input window, operand 5']
    #allocation12 [shape = 's32[2]{0}', space=sflag, size = 0x8, scoped, tag = 'scoped memory for tpu_custom_call.1']
    #allocation13 [shape = 'u8[262144]{0}', space=vmem, size = 0x40000, scoped, tag = 'input window, operand 6']
    #allocation14 [shape = 'u8[1024]{0}', space=vmem, size = 0x400, scoped, tag = 'input window, operand 7, single buffered']
    #allocation15 [shape = 's32[1]{0}', space=sflag, size = 0x4, scoped, tag = 'scoped memory for tpu_custom_call.1']
    #allocation16 [shape = 'u8[262144]{0}', space=vmem, size = 0x40000, scoped, tag = 'input window, operand 8, single buffered']
    #allocation17 [shape = 'u8[131072]{0}', space=vmem, size = 0x20000, scoped, tag = 'input window, operand 9, single buffered']
    #allocation18 [shape = 's32[1]{0}', space=sflag, size = 0x4, scoped, tag = 'scoped memory for tpu_custom_call.1']
    #allocation19 [shape = 'u8[131072]{0}', space=vmem, size = 0x20000, scoped, tag = 'input window, operand 10, single buffered']
    #allocation20 [shape = 'u8[262144]{0}', space=vmem, size = 0x40000, scoped, tag = 'output window, operand 0']
    #allocation21 [shape = 'u8[131072]{0}', space=vmem, size = 0x20000, scoped, tag = 'output window, operand 1']
    #allocation22 [shape = 's32[2]{0}', space=sflag, size = 0x8, scoped, tag = 'scoped memory for tpu_custom_call.1']
    #allocation23 [shape = 'u8[131072]{0}', space=vmem, size = 0x20000, scoped, tag = 'output window, operand 2']
    %19 = vsyncpa [#allocation3], 0
    %s20 = scalar_lea.sflag [#allocation3], 1
    %21 = vsyncpa %s20, 0
    %22 = vsyncpa [#allocation6], 0
    %s23 = scalar_lea.sflag [#allocation6], 1
    %24 = vsyncpa %s23, 0
    %25 = vsyncpa [#allocation9], 0
    %s26 = scalar_lea.sflag [#allocation9], 1
    %27 = vsyncpa %s26, 0
    %28 = vsyncpa [#allocation12], 0
    %s29 = scalar_lea.sflag [#allocation12], 1
    %30 = vsyncpa %s29, 0
    %31 = vsyncpa [#allocation15], 0
    %32 = vsyncpa [#allocation18], 0
    %33 = vsyncpa [#allocation4], 0
    %s34 = scalar_lea.sflag [#allocation4], 1
    %35 = vsyncpa %s34, 0
    %36 = vsyncpa [#allocation22], 0
    %s37 = scalar_lea.sflag [#allocation22], 1
    %38 = vsyncpa %s37, 0
    loop: start=0, step=1, limit=4
    $region2: #{tpu_custom_call.1} parent=1 // loop_pre_header
      _
    $region3: #{tpu_custom_call.1} parent=1 // loop_header
      %s40 = sphi 0, %s44
      %p41 = scmp.ge.s32.totalorder %s40, 4
      %s50 = sphi 0, %s52
      %s53 = sphi 0, %s50
      %s54 = sphi 0, %s53
      %s70 = sphi 0, %s54
      %s76 = sphi 0, %s78
      %s79 = sphi 0, %s76
      %s80 = sphi 0, %s79
      %s96 = sphi 0, %s80
      %s102 = sphi 0, %s104
      %s105 = sphi 0, %s102
      %s106 = sphi 0, %s105
      %s122 = sphi 0, %s106
      %s128 = sphi 0, %s130
      %s131 = sphi 0, %s128
      %s132 = sphi 0, %s131
      %s148 = sphi 0, %s132
      %s154 = sphi 0, %s156
      %s157 = sphi 0, %s154
      %s158 = sphi 0, %s157
      %s174 = sphi 0, %s158
      %s180 = sphi 0, %s182
      %s183 = sphi 0, %s180
      %s184 = sphi 0, %s183
      %s200 = sphi 0, %s184
      %s206 = sphi 0, %s208
      %s209 = sphi 0, %s206
      %s210 = sphi 0, %s209
      %s226 = sphi 0, %s210
      %s230 = sphi 0, %s230
      %s232 = sphi 0, %s230
      %s233 = sphi 0, %s232
      %s247 = sphi 0, %s233
      %s251 = sphi 0, %s251
      %s253 = sphi 0, %s251
      %s254 = sphi 0, %s253
      %s268 = sphi 0, %s254
      %s272 = sphi 0, %s272
      %s274 = sphi 0, %s272
      %s275 = sphi 0, %s274
      %s289 = sphi 0, %s275
      %s293 = sphi 0, %s293
      %s295 = sphi 0, %s293
      %s296 = sphi 0, %s295
      %s310 = sphi 0, %s296
      %s316 = sphi 0, %s318
      %s319 = sphi 0, %s316
      %s320 = sphi 0, %s319
      %s336 = sphi 0, %s320
      %s342 = sphi 0, %s344
      %s345 = sphi 0, %s342
      %s346 = sphi 0, %s345
      %s362 = sphi 0, %s346
      %s368 = sphi 0, %s370
      %s371 = sphi 0, %s368
      %s372 = sphi 0, %s371
      %s388 = sphi 0, %s372
    $region4: #{tpu_custom_call.1} parent=1 // loop_header_branch
      %43 = sbr.rel (%p41) target = $region8
    $region5: #{tpu_custom_call.1} parent=1 // loop_body
      %s45 = ssub.s32 %s40, 1
      %s46 = ssub.s32 %s40, 2
      %s47 = sadd.s32 %s40, 1
      %s48 = ssub.s32 %s40, %s47
      %p49 = scmp.eq.s32.totalorder %s48, 0
      %s51 = sadd.s32 %s50, 1
      %s52 = scalar_select %p49, %s50, %s51
      %p55 = pneg %p49
      %p56 = scmp.eq.s32.totalorder %s40, 1
      %p57 = por %p55, %p56
      %p58 = scmp.ne.s32.totalorder %s50, %s53
      %p59 = scmp.eq.s32.totalorder %s40, 0
      %p60 = por %p58, %p59
      %p61 = scmp.ne.s32.totalorder %s50, %s53
      %p62 = scmp.eq.s32.totalorder %s45, 1
      %p63 = por %p61, %p62
      %p64 = scmp.ne.s32.totalorder %s53, %s54
      %p65 = scmp.eq.s32.totalorder %s45, 0
      %p66 = por %p64, %p65
      %p67 = scmp.ne.s32.totalorder %s53, %s54
      %p68 = scmp.eq.s32.totalorder %s46, 1
      %p69 = por %p67, %p68
      %p71 = scmp.ne.s32.totalorder %s54, %s70
      %p72 = scmp.eq.s32.totalorder %s46, 0
      %p73 = por %p71, %p72
      %s74 = ssub.s32 %s40, %s47
      %p75 = scmp.eq.s32.totalorder %s74, 0
      %s77 = sadd.s32 %s76, 1
      %s78 = scalar_select %p75, %s76, %s77
      %p81 = pneg %p75
      %p82 = scmp.eq.s32.totalorder %s40, 1
      %p83 = por %p81, %p82
      %p84 = scmp.ne.s32.totalorder %s76, %s79
      %p85 = scmp.eq.s32.totalorder %s40, 0
      %p86 = por %p84, %p85
      %p87 = scmp.ne.s32.totalorder %s76, %s79
      %p88 = scmp.eq.s32.totalorder %s45, 1
      %p89 = por %p87, %p88
      %p90 = scmp.ne.s32.totalorder %s79, %s80
      %p91 = scmp.eq.s32.totalorder %s45, 0
      %p92 = por %p90, %p91
      %p93 = scmp.ne.s32.totalorder %s79, %s80
      %p94 = scmp.eq.s32.totalorder %s46, 1
      %p95 = por %p93, %p94
      %p97 = scmp.ne.s32.totalorder %s80, %s96
      %p98 = scmp.eq.s32.totalorder %s46, 0
      %p99 = por %p97, %p98
      %s100 = ssub.s32 %s40, %s47
      %p101 = scmp.eq.s32.totalorder %s100, 0
      %s103 = sadd.s32 %s102, 1
      %s104 = scalar_select %p101, %s102, %s103
      %p107 = pneg %p101
      %p108 = scmp.eq.s32.totalorder %s40, 1
      %p109 = por %p107, %p108
      %p110 = scmp.ne.s32.totalorder %s102, %s105
      %p111 = scmp.eq.s32.totalorder %s40, 0
      %p112 = por %p110, %p111
      %p113 = scmp.ne.s32.totalorder %s102, %s105
      %p114 = scmp.eq.s32.totalorder %s45, 1
      %p115 = por %p113, %p114
      %p116 = scmp.ne.s32.totalorder %s105, %s106
      %p117 = scmp.eq.s32.totalorder %s45, 0
      %p118 = por %p116, %p117
      %p119 = scmp.ne.s32.totalorder %s105, %s106
      %p120 = scmp.eq.s32.totalorder %s46, 1
      %p121 = por %p119, %p120
      %p123 = scmp.ne.s32.totalorder %s106, %s122
      %p124 = scmp.eq.s32.totalorder %s46, 0
      %p125 = por %p123, %p124
      %s126 = ssub.s32 %s40, %s47
      %p127 = scmp.eq.s32.totalorder %s126, 0
      %s129 = sadd.s32 %s128, 1
      %s130 = scalar_select %p127, %s128, %s129
      %p133 = pneg %p127
      %p134 = scmp.eq.s32.totalorder %s40, 1
      %p135 = por %p133, %p134
      %p136 = scmp.ne.s32.totalorder %s128, %s131
      %p137 = scmp.eq.s32.totalorder %s40, 0
      %p138 = por %p136, %p137
      %p139 = scmp.ne.s32.totalorder %s128, %s131
      %p140 = scmp.eq.s32.totalorder %s45, 1
      %p141 = por %p139, %p140
      %p142 = scmp.ne.s32.totalorder %s131, %s132
      %p143 = scmp.eq.s32.totalorder %s45, 0
      %p144 = por %p142, %p143
      %p145 = scmp.ne.s32.totalorder %s131, %s132
      %p146 = scmp.eq.s32.totalorder %s46, 1
      %p147 = por %p145, %p146
      %p149 = scmp.ne.s32.totalorder %s132, %s148
      %p150 = scmp.eq.s32.totalorder %s46, 0
      %p151 = por %p149, %p150
      %s152 = ssub.s32 %s40, %s47
      %p153 = scmp.eq.s32.totalorder %s152, 0
      %s155 = sadd.s32 %s154, 1
      %s156 = scalar_select %p153, %s154, %s155
      %p159 = pneg %p153
      %p160 = scmp.eq.s32.totalorder %s40, 1
      %p161 = por %p159, %p160
      %p162 = scmp.ne.s32.totalorder %s154, %s157
      %p163 = scmp.eq.s32.totalorder %s40, 0
      %p164 = por %p162, %p163
      %p165 = scmp.ne.s32.totalorder %s154, %s157
      %p166 = scmp.eq.s32.totalorder %s45, 1
      %p167 = por %p165, %p166
      %p168 = scmp.ne.s32.totalorder %s157, %s158
      %p169 = scmp.eq.s32.totalorder %s45, 0
      %p170 = por %p168, %p169
      %p171 = scmp.ne.s32.totalorder %s157, %s158
      %p172 = scmp.eq.s32.totalorder %s46, 1
      %p173 = por %p171, %p172
      %p175 = scmp.ne.s32.totalorder %s158, %s174
      %p176 = scmp.eq.s32.totalorder %s46, 0
      %p177 = por %p175, %p176
      %s178 = ssub.s32 %s40, %s47
      %p179 = scmp.eq.s32.totalorder %s178, 0
      %s181 = sadd.s32 %s180, 1
      %s182 = scalar_select %p179, %s180, %s181
      %p185 = pneg %p179
      %p186 = scmp.eq.s32.totalorder %s40, 1
      %p187 = por %p185, %p186
      %p188 = scmp.ne.s32.totalorder %s180, %s183
      %p189 = scmp.eq.s32.totalorder %s40, 0
      %p190 = por %p188, %p189
      %p191 = scmp.ne.s32.totalorder %s180, %s183
      %p192 = scmp.eq.s32.totalorder %s45, 1
      %p193 = por %p191, %p192
      %p194 = scmp.ne.s32.totalorder %s183, %s184
      %p195 = scmp.eq.s32.totalorder %s45, 0
      %p196 = por %p194, %p195
      %p197 = scmp.ne.s32.totalorder %s183, %s184
      %p198 = scmp.eq.s32.totalorder %s46, 1
      %p199 = por %p197, %p198
      %p201 = scmp.ne.s32.totalorder %s184, %s200
      %p202 = scmp.eq.s32.totalorder %s46, 0
      %p203 = por %p201, %p202
      %s204 = ssub.s32 %s40, %s47
      %p205 = scmp.eq.s32.totalorder %s204, 0
      %s207 = sadd.s32 %s206, 1
      %s208 = scalar_select %p205, %s206, %s207
      %p211 = pneg %p205
      %p212 = scmp.eq.s32.totalorder %s40, 1
      %p213 = por %p211, %p212
      %p214 = scmp.ne.s32.totalorder %s206, %s209
      %p215 = scmp.eq.s32.totalorder %s40, 0
      %p216 = por %p214, %p215
      %p217 = scmp.ne.s32.totalorder %s206, %s209
      %p218 = scmp.eq.s32.totalorder %s45, 1
      %p219 = por %p217, %p218
      %p220 = scmp.ne.s32.totalorder %s209, %s210
      %p221 = scmp.eq.s32.totalorder %s45, 0
      %p222 = por %p220, %p221
      %p223 = scmp.ne.s32.totalorder %s209, %s210
      %p224 = scmp.eq.s32.totalorder %s46, 1
      %p225 = por %p223, %p224
      %p227 = scmp.ne.s32.totalorder %s210, %s226
      %p228 = scmp.eq.s32.totalorder %s46, 0
      %p229 = por %p227, %p228
      %s231 = sadd.s32 %s230, 1
      %p234 = scmp.eq.s32.totalorder %s40, 1
      %p235 = scmp.ne.s32.totalorder %s230, %s232
      %p236 = scmp.eq.s32.totalorder %s40, 0
      %p237 = por %p235, %p236
      %p238 = scmp.ne.s32.totalorder %s230, %s232
      %p239 = scmp.eq.s32.totalorder %s45, 1
      %p240 = por %p238, %p239
      %p241 = scmp.ne.s32.totalorder %s232, %s233
      %p242 = scmp.eq.s32.totalorder %s45, 0
      %p243 = por %p241, %p242
      %p244 = scmp.ne.s32.totalorder %s232, %s233
      %p245 = scmp.eq.s32.totalorder %s46, 1
      %p246 = por %p244, %p245
      %p248 = scmp.ne.s32.totalorder %s233, %s247
      %p249 = scmp.eq.s32.totalorder %s46, 0
      %p250 = por %p248, %p249
      %s252 = sadd.s32 %s251, 1
      %p255 = scmp.eq.s32.totalorder %s40, 1
      %p256 = scmp.ne.s32.totalorder %s251, %s253
      %p257 = scmp.eq.s32.totalorder %s40, 0
      %p258 = por %p256, %p257
      %p259 = scmp.ne.s32.totalorder %s251, %s253
      %p260 = scmp.eq.s32.totalorder %s45, 1
      %p261 = por %p259, %p260
      %p262 = scmp.ne.s32.totalorder %s253, %s254
      %p263 = scmp.eq.s32.totalorder %s45, 0
      %p264 = por %p262, %p263
      %p265 = scmp.ne.s32.totalorder %s253, %s254
      %p266 = scmp.eq.s32.totalorder %s46, 1
      %p267 = por %p265, %p266
      %p269 = scmp.ne.s32.totalorder %s254, %s268
      %p270 = scmp.eq.s32.totalorder %s46, 0
      %p271 = por %p269, %p270
      %s273 = sadd.s32 %s272, 1
      %p276 = scmp.eq.s32.totalorder %s40, 1
      %p277 = scmp.ne.s32.totalorder %s272, %s274
      %p278 = scmp.eq.s32.totalorder %s40, 0
      %p279 = por %p277, %p278
      %p280 = scmp.ne.s32.totalorder %s272, %s274
      %p281 = scmp.eq.s32.totalorder %s45, 1
      %p282 = por %p280, %p281
      %p283 = scmp.ne.s32.totalorder %s274, %s275
      %p284 = scmp.eq.s32.totalorder %s45, 0
      %p285 = por %p283, %p284
      %p286 = scmp.ne.s32.totalorder %s274, %s275
      %p287 = scmp.eq.s32.totalorder %s46, 1
      %p288 = por %p286, %p287
      %p290 = scmp.ne.s32.totalorder %s275, %s289
      %p291 = scmp.eq.s32.totalorder %s46, 0
      %p292 = por %p290, %p291
      %s294 = sadd.s32 %s293, 1
      %p297 = scmp.eq.s32.totalorder %s40, 1
      %p298 = scmp.ne.s32.totalorder %s293, %s295
      %p299 = scmp.eq.s32.totalorder %s40, 0
      %p300 = por %p298, %p299
      %p301 = scmp.ne.s32.totalorder %s293, %s295
      %p302 = scmp.eq.s32.totalorder %s45, 1
      %p303 = por %p301, %p302
      %p304 = scmp.ne.s32.totalorder %s295, %s296
      %p305 = scmp.eq.s32.totalorder %s45, 0
      %p306 = por %p304, %p305
      %p307 = scmp.ne.s32.totalorder %s295, %s296
      %p308 = scmp.eq.s32.totalorder %s46, 1
      %p309 = por %p307, %p308
      %p311 = scmp.ne.s32.totalorder %s296, %s310
      %p312 = scmp.eq.s32.totalorder %s46, 0
      %p313 = por %p311, %p312
      %s314 = ssub.s32 %s40, %s47
      %p315 = scmp.eq.s32.totalorder %s314, 0
      %s317 = sadd.s32 %s316, 1
      %s318 = scalar_select %p315, %s316, %s317
      %p321 = pneg %p315
      %p322 = scmp.eq.s32.totalorder %s40, 1
      %p323 = por %p321, %p322
      %p324 = scmp.ne.s32.totalorder %s316, %s319
      %p325 = scmp.eq.s32.totalorder %s40, 0
      %p326 = por %p324, %p325
      %p327 = scmp.ne.s32.totalorder %s316, %s319
      %p328 = scmp.eq.s32.totalorder %s45, 1
      %p329 = por %p327, %p328
      %p330 = scmp.ne.s32.totalorder %s319, %s320
      %p331 = scmp.eq.s32.totalorder %s45, 0
      %p332 = por %p330, %p331
      %p333 = scmp.ne.s32.totalorder %s319, %s320
      %p334 = scmp.eq.s32.totalorder %s46, 1
      %p335 = por %p333, %p334
      %p337 = scmp.ne.s32.totalorder %s320, %s336
      %p338 = scmp.eq.s32.totalorder %s46, 0
      %p339 = por %p337, %p338
      %s340 = ssub.s32 %s40, %s47
      %p341 = scmp.eq.s32.totalorder %s340, 0
      %s343 = sadd.s32 %s342, 1
      %s344 = scalar_select %p341, %s342, %s343
      %p347 = pneg %p341
      %p348 = scmp.eq.s32.totalorder %s40, 1
      %p349 = por %p347, %p348
      %p350 = scmp.ne.s32.totalorder %s342, %s345
      %p351 = scmp.eq.s32.totalorder %s40, 0
      %p352 = por %p350, %p351
      %p353 = scmp.ne.s32.totalorder %s342, %s345
      %p354 = scmp.eq.s32.totalorder %s45, 1
      %p355 = por %p353, %p354
      %p356 = scmp.ne.s32.totalorder %s345, %s346
      %p357 = scmp.eq.s32.totalorder %s45, 0
      %p358 = por %p356, %p357
      %p359 = scmp.ne.s32.totalorder %s345, %s346
      %p360 = scmp.eq.s32.totalorder %s46, 1
      %p361 = por %p359, %p360
      %p363 = scmp.ne.s32.totalorder %s346, %s362
      %p364 = scmp.eq.s32.totalorder %s46, 0
      %p365 = por %p363, %p364
      %s366 = ssub.s32 %s40, %s47
      %p367 = scmp.eq.s32.totalorder %s366, 0
      %s369 = sadd.s32 %s368, 1
      %s370 = scalar_select %p367, %s368, %s369
      %p373 = pneg %p367
      %p374 = scmp.eq.s32.totalorder %s40, 1
      %p375 = por %p373, %p374
      %p376 = scmp.ne.s32.totalorder %s368, %s371
      %p377 = scmp.eq.s32.totalorder %s40, 0
      %p378 = por %p376, %p377
      %p379 = scmp.ne.s32.totalorder %s368, %s371
      %p380 = scmp.eq.s32.totalorder %s45, 1
      %p381 = por %p379, %p380
      %p382 = scmp.ne.s32.totalorder %s371, %s372
      %p383 = scmp.eq.s32.totalorder %s45, 0
      %p384 = por %p382, %p383
      %p385 = scmp.ne.s32.totalorder %s371, %s372
      %p386 = scmp.eq.s32.totalorder %s46, 1
      %p387 = por %p385, %p386
      %p389 = scmp.ne.s32.totalorder %s372, %s388
      %p390 = scmp.eq.s32.totalorder %s46, 0
      %p391 = por %p389, %p390
      %p392 = scmp.le.s32.totalorder 1, %s40
      %p393 = scmp.lt.s32.totalorder %s40, 3
      %p394 = pnand %p392, %p393
      %p395 = pneg %p394
      // Predicated region
      $region9: #{tpu_custom_call.1} parent=5 // pred_check
        _
      $region10: #{tpu_custom_call.1} parent=5 // pred_check_branch
        %397 = sbr.rel (%p394) target = $region12
      $region11: #{tpu_custom_call.1} parent=5 // pred_region
        %s398 = ssub.s32 %s40, 1
        // Predicated region
        $region13: #{tpu_custom_call.1} parent=11 // pred_check
          %p399 = pneg %p243
        $region14: #{tpu_custom_call.1} parent=11 // pred_check_branch
          %401 = sbr.rel (%p399) target = $region16
        $region15: #{tpu_custom_call.1} parent=11 // pred_region
          %s403 = ssub.s32 32, 32
          %404 = vsyncadd [#allocation15], %s403
          %s406 = sshll.u32 [#allocation14], 4
          %s407 = int_to_ptr.vmem [resolvable:$true] %s406
          %409 = dma.hbm_to_vmem [thread:$0]  %s7, 32, %s407, [#allocation15]
        $region16: #{tpu_custom_call.1} parent=11 // pred_fallthru
          _
        // Predicated region
        $region17: #{tpu_custom_call.1} parent=11 // pred_check
          %p410 = pneg %p264
        $region18: #{tpu_custom_call.1} parent=11 // pred_check_branch
          %412 = sbr.rel (%p410) target = $region20
        $region19: #{tpu_custom_call.1} parent=11 // pred_region
          %s414 = ssub.s32 8192, 8192
          %415 = vsyncadd [#allocation15], %s414
          %s416 = sshll.u32 [#allocation16], 4
          %s417 = int_to_ptr.vmem [resolvable:$true] %s416
          %422 = dma.hbm_to_vmem [thread:$0]  %s8, 8192, %s417, [#allocation15], 256, 256, 16
        $region20: #{tpu_custom_call.1} parent=11 // pred_fallthru
          _
        // Predicated region
        $region21: #{tpu_custom_call.1} parent=11 // pred_check
          %p423 = pneg %p285
        $region22: #{tpu_custom_call.1} parent=11 // pred_check_branch
          %425 = sbr.rel (%p423) target = $region24
        $region23: #{tpu_custom_call.1} parent=11 // pred_region
          %s427 = ssub.s32 4096, 4096
          %428 = vsyncadd [#allocation18], %s427
          %s429 = sshll.u32 [#allocation17], 4
          %s430 = int_to_ptr.vmem [resolvable:$true] %s429
          %435 = dma.hbm_to_vmem [thread:$0]  %s9, 4096, %s430, [#allocation18], 128, 128, 8
        $region24: #{tpu_custom_call.1} parent=11 // pred_fallthru
          _
        // Predicated region
        $region25: #{tpu_custom_call.1} parent=11 // pred_check
          %p436 = pneg %p306
        $region26: #{tpu_custom_call.1} parent=11 // pred_check_branch
          %438 = sbr.rel (%p436) target = $region28
        $region27: #{tpu_custom_call.1} parent=11 // pred_region
          %s440 = ssub.s32 4096, 4096
          %441 = vsyncadd [#allocation18], %s440
          %s442 = sshll.u32 [#allocation19], 4
          %s443 = int_to_ptr.vmem [resolvable:$true] %s442
          %448 = dma.hbm_to_vmem [thread:$0]  %s10, 4096, %s443, [#allocation18], 128, 128, 8
        $region28: #{tpu_custom_call.1} parent=11 // pred_fallthru
          _
      $region12: #{tpu_custom_call.1} parent=5 // pred_fallthru
        _
      %p449 = scmp.lt.s32.totalorder %s40, 2
      // Predicated region
      $region29: #{tpu_custom_call.1} parent=5 // pred_check
        %p450 = pneg %p449
      $region30: #{tpu_custom_call.1} parent=5 // pred_check_branch
        %452 = sbr.rel (%p450) target = $region32
      $region31: #{tpu_custom_call.1} parent=5 // pred_region
        // Predicated region
        $region33: #{tpu_custom_call.1} parent=31 // pred_check
          %p453 = pneg %p60
        $region34: #{tpu_custom_call.1} parent=31 // pred_check_branch
          %455 = sbr.rel (%p453) target = $region36
        $region35: #{tpu_custom_call.1} parent=31 // pred_region
          %s456 = sand.u32 %s50, 1
          %s457 = scalar_lea.sflag [#allocation3], %s456
          %s458 = sand.u32 %s50, 1
          %s459 = smul.addr %s458, 256
          %s460 = scalar_lea.vmem [#allocation2], %s459
          %s461 = smul.u32 16, %s40
          %s463 = ssub.s32 4096, 4096
          %464 = vsyncadd %s457, %s463
          %s465 = smul.addr %s461, 2
          %s466 = smul.addr %s465, 128
          %s467 = scalar_lea.hbm %s0, %s466
          %s468 = sshll.u32 %s460, 4
          %s469 = int_to_ptr.vmem [resolvable:$true] %s468
          %474 = dma.hbm_to_vmem [thread:$0]  %s467, 4096, %s469, %s457, 256, 256, 16
        $region36: #{tpu_custom_call.1} parent=31 // pred_fallthru
          _
        // Predicated region
        $region37: #{tpu_custom_call.1} parent=31 // pred_check
          %p475 = pneg %p86
        $region38: #{tpu_custom_call.1} parent=31 // pred_check_branch
          %477 = sbr.rel (%p475) target = $region40
        $region39: #{tpu_custom_call.1} parent=31 // pred_region
          %s478 = sand.u32 %s40, 1
          %s479 = scalar_lea.sflag [#allocation6], %s478
          %s480 = sand.u32 %s76, 1
          %s481 = smul.addr %s480, 512
          %s482 = scalar_lea.vmem [#allocation5], %s481
          %s483 = smul.u32 16, %s40
          %s485 = ssub.s32 8192, 8192
          %486 = vsyncadd %s479, %s485
          %s487 = smul.addr %s483, 4
          %s488 = smul.addr %s487, 128
          %s489 = scalar_lea.hbm %s1, %s488
          %s490 = sshll.u32 %s482, 4
          %s491 = int_to_ptr.vmem [resolvable:$true] %s490
          %496 = dma.hbm_to_vmem [thread:$0]  %s489, 8192, %s491, %s479, 512, 512, 32
        $region40: #{tpu_custom_call.1} parent=31 // pred_fallthru
          _
        // Predicated region
        $region41: #{tpu_custom_call.1} parent=31 // pred_check
          %p497 = pneg %p112
        $region42: #{tpu_custom_call.1} parent=31 // pred_check_branch
          %499 = sbr.rel (%p497) target = $region44
        $region43: #{tpu_custom_call.1} parent=31 // pred_region
          %s500 = sand.u32 %s40, 1
          %s501 = scalar_lea.sflag [#allocation6], %s500
          %s502 = sand.u32 %s102, 1
          %s503 = smul.addr %s502, 512
          %s504 = scalar_lea.vmem [#allocation7], %s503
          %s505 = smul.u32 16, %s40
          %s507 = ssub.s32 8192, 8192
          %508 = vsyncadd %s501, %s507
          %s509 = smul.addr %s505, 4
          %s510 = smul.addr %s509, 128
          %s511 = scalar_lea.hbm %s2, %s510
          %s512 = sshll.u32 %s504, 4
          %s513 = int_to_ptr.vmem [resolvable:$true] %s512
          %518 = dma.hbm_to_vmem [thread:$0]  %s511, 8192, %s513, %s501, 512, 512, 32
        $region44: #{tpu_custom_call.1} parent=31 // pred_fallthru
          _
        // Predicated region
        $region45: #{tpu_custom_call.1} parent=31 // pred_check
          %p519 = pneg %p138
        $region46: #{tpu_custom_call.1} parent=31 // pred_check_branch
          %521 = sbr.rel (%p519) target = $region48
        $region47: #{tpu_custom_call.1} parent=31 // pred_region
          %s522 = sand.u32 %s40, 1
          %s523 = scalar_lea.sflag [#allocation9], %s522
          %s524 = sand.u32 %s128, 1
          %s525 = smul.addr %s524, 512
          %s526 = scalar_lea.vmem [#allocation8], %s525
          %s527 = smul.u32 16, %s40
          %s529 = ssub.s32 8192, 8192
          %530 = vsyncadd %s523, %s529
          %s531 = smul.addr %s527, 4
          %s532 = smul.addr %s531, 128
          %s533 = scalar_lea.hbm %s3, %s532
          %s534 = sshll.u32 %s526, 4
          %s535 = int_to_ptr.vmem [resolvable:$true] %s534
          %540 = dma.hbm_to_vmem [thread:$0]  %s533, 8192, %s535, %s523, 512, 512, 32
        $region48: #{tpu_custom_call.1} parent=31 // pred_fallthru
          _
        // Predicated region
        $region49: #{tpu_custom_call.1} parent=31 // pred_check
          %p541 = pneg %p164
        $region50: #{tpu_custom_call.1} parent=31 // pred_check_branch
          %543 = sbr.rel (%p541) target = $region52
        $region51: #{tpu_custom_call.1} parent=31 // pred_region
          %s544 = sand.u32 %s40, 1
          %s545 = scalar_lea.sflag [#allocation9], %s544
          %s546 = sand.u32 %s154, 1
          %s547 = smul.addr %s546, 256
          %s548 = scalar_lea.vmem [#allocation10], %s547
          %s549 = smul.u32 16, %s40
          %s551 = ssub.s32 4096, 4096
          %552 = vsyncadd %s545, %s551
          %s553 = smul.addr %s549, 2
          %s554 = smul.addr %s553, 128
          %s555 = scalar_lea.hbm %s4, %s554
          %s556 = sshll.u32 %s548, 4
          %s557 = int_to_ptr.vmem [resolvable:$true] %s556
          %562 = dma.hbm_to_vmem [thread:$0]  %s555, 4096, %s557, %s545, 256, 256, 16
        $region52: #{tpu_custom_call.1} parent=31 // pred_fallthru
          _
        // Predicated region
        $region53: #{tpu_custom_call.1} parent=31 // pred_check
          %p563 = pneg %p190
        $region54: #{tpu_custom_call.1} parent=31 // pred_check_branch
          %565 = sbr.rel (%p563) target = $region56
        $region55: #{tpu_custom_call.1} parent=31 // pred_region
          %s566 = sand.u32 %s40, 1
          %s567 = scalar_lea.sflag [#allocation12], %s566
          %s568 = sand.u32 %s180, 1
          %s569 = smul.addr %s568, 256
          %s570 = scalar_lea.vmem [#allocation11], %s569
          %s571 = smul.u32 16, %s40
          %s573 = ssub.s32 4096, 4096
          %574 = vsyncadd %s567, %s573
          %s575 = smul.addr %s571, 2
          %s576 = smul.addr %s575, 128
          %s577 = scalar_lea.hbm %s5, %s576
          %s578 = sshll.u32 %s570, 4
          %s579 = int_to_ptr.vmem [resolvable:$true] %s578
          %584 = dma.hbm_to_vmem [thread:$0]  %s577, 4096, %s579, %s567, 256, 256, 16
        $region56: #{tpu_custom_call.1} parent=31 // pred_fallthru
          _
        // Predicated region
        $region57: #{tpu_custom_call.1} parent=31 // pred_check
          %p585 = pneg %p216
        $region58: #{tpu_custom_call.1} parent=31 // pred_check_branch
          %587 = sbr.rel (%p585) target = $region60
        $region59: #{tpu_custom_call.1} parent=31 // pred_region
          %s588 = sand.u32 %s40, 1
          %s589 = scalar_lea.sflag [#allocation12], %s588
          %s590 = sand.u32 %s206, 1
          %s591 = smul.addr %s590, 256
          %s592 = scalar_lea.vmem [#allocation13], %s591
          %s593 = smul.u32 16, %s40
          %s595 = ssub.s32 4096, 4096
          %596 = vsyncadd %s589, %s595
          %s597 = smul.addr %s593, 2
          %s598 = smul.addr %s597, 128
          %s599 = scalar_lea.hbm %s6, %s598
          %s600 = sshll.u32 %s592, 4
          %s601 = int_to_ptr.vmem [resolvable:$true] %s600
          %606 = dma.hbm_to_vmem [thread:$0]  %s599, 4096, %s601, %s589, 256, 256, 16
        $region60: #{tpu_custom_call.1} parent=31 // pred_fallthru
          _
      $region32: #{tpu_custom_call.1} parent=5 // pred_fallthru
        _
      %p607 = scmp.le.s32.totalorder 1, %s40
      %p608 = scmp.lt.s32.totalorder %s40, 3
      %p609 = pnand %p607, %p608
      %p610 = pneg %p609
      // Predicated region
      $region61: #{tpu_custom_call.1} parent=5 // pred_check
        _
      $region62: #{tpu_custom_call.1} parent=5 // pred_check_branch
        %612 = sbr.rel (%p609) target = $region64
      $region63: #{tpu_custom_call.1} parent=5 // pred_region
        %s613 = ssub.s32 %s40, 1
        %s614 = sand.u32 %s53, 1
        %s615 = scalar_lea.sflag [#allocation3], %s614
        %s616 = sand.u32 %s53, 1
        %s617 = smul.addr %s616, 256
        %s618 = scalar_lea.vmem [#allocation2], %s617
        // Predicated region
        $region65: #{tpu_custom_call.1} parent=63 // pred_check
          %p619 = pneg %p66
        $region66: #{tpu_custom_call.1} parent=63 // pred_check_branch
          %621 = sbr.rel (%p619) target = $region68
        $region67: #{tpu_custom_call.1} parent=63 // pred_region
          %622 = dma.done %s615, 4096
        $region68: #{tpu_custom_call.1} parent=63 // pred_fallthru
          _
        %s623 = sand.u32 %s45, 1
        %s624 = scalar_lea.sflag [#allocation6], %s623
        %s625 = sand.u32 %s79, 1
        %s626 = smul.addr %s625, 512
        %s627 = scalar_lea.vmem [#allocation5], %s626
        // Predicated region
        $region69: #{tpu_custom_call.1} parent=63 // pred_check
          %p628 = pneg %p92
        $region70: #{tpu_custom_call.1} parent=63 // pred_check_branch
          %630 = sbr.rel (%p628) target = $region72
        $region71: #{tpu_custom_call.1} parent=63 // pred_region
          %631 = dma.done %s624, 8192
        $region72: #{tpu_custom_call.1} parent=63 // pred_fallthru
          _
        %s632 = sand.u32 %s45, 1
        %s633 = scalar_lea.sflag [#allocation6], %s632
        %s634 = sand.u32 %s105, 1
        %s635 = smul.addr %s634, 512
        %s636 = scalar_lea.vmem [#allocation7], %s635
        // Predicated region
        $region73: #{tpu_custom_call.1} parent=63 // pred_check
          %p637 = pneg %p118
        $region74: #{tpu_custom_call.1} parent=63 // pred_check_branch
          %639 = sbr.rel (%p637) target = $region76
        $region75: #{tpu_custom_call.1} parent=63 // pred_region
          %640 = dma.done %s633, 8192
        $region76: #{tpu_custom_call.1} parent=63 // pred_fallthru
          _
        %s641 = sand.u32 %s45, 1
        %s642 = scalar_lea.sflag [#allocation9], %s641
        %s643 = sand.u32 %s131, 1
        %s644 = smul.addr %s643, 512
        %s645 = scalar_lea.vmem [#allocation8], %s644
        // Predicated region
        $region77: #{tpu_custom_call.1} parent=63 // pred_check
          %p646 = pneg %p144
        $region78: #{tpu_custom_call.1} parent=63 // pred_check_branch
          %648 = sbr.rel (%p646) target = $region80
        $region79: #{tpu_custom_call.1} parent=63 // pred_region
          %649 = dma.done %s642, 8192
        $region80: #{tpu_custom_call.1} parent=63 // pred_fallthru
          _
        %s650 = sand.u32 %s45, 1
        %s651 = scalar_lea.sflag [#allocation9], %s650
        %s652 = sand.u32 %s157, 1
        %s653 = smul.addr %s652, 256
        %s654 = scalar_lea.vmem [#allocation10], %s653
        // Predicated region
        $region81: #{tpu_custom_call.1} parent=63 // pred_check
          %p655 = pneg %p170
        $region82: #{tpu_custom_call.1} parent=63 // pred_check_branch
          %657 = sbr.rel (%p655) target = $region84
        $region83: #{tpu_custom_call.1} parent=63 // pred_region
          %658 = dma.done %s651, 4096
        $region84: #{tpu_custom_call.1} parent=63 // pred_fallthru
          _
        %s659 = sand.u32 %s45, 1
        %s660 = scalar_lea.sflag [#allocation12], %s659
        %s661 = sand.u32 %s183, 1
        %s662 = smul.addr %s661, 256
        %s663 = scalar_lea.vmem [#allocation11], %s662
        // Predicated region
        $region85: #{tpu_custom_call.1} parent=63 // pred_check
          %p664 = pneg %p196
        $region86: #{tpu_custom_call.1} parent=63 // pred_check_branch
          %666 = sbr.rel (%p664) target = $region88
        $region87: #{tpu_custom_call.1} parent=63 // pred_region
          %667 = dma.done %s660, 4096
        $region88: #{tpu_custom_call.1} parent=63 // pred_fallthru
          _
        %s668 = sand.u32 %s45, 1
        %s669 = scalar_lea.sflag [#allocation12], %s668
        %s670 = sand.u32 %s209, 1
        %s671 = smul.addr %s670, 256
        %s672 = scalar_lea.vmem [#allocation13], %s671
        // Predicated region
        $region89: #{tpu_custom_call.1} parent=63 // pred_check
          %p673 = pneg %p222
        $region90: #{tpu_custom_call.1} parent=63 // pred_check_branch
          %675 = sbr.rel (%p673) target = $region92
        $region91: #{tpu_custom_call.1} parent=63 // pred_region
          %676 = dma.done %s669, 4096
        $region92: #{tpu_custom_call.1} parent=63 // pred_fallthru
          _
        // Predicated region
        $region93: #{tpu_custom_call.1} parent=63 // pred_check
          %p677 = pneg %p243
        $region94: #{tpu_custom_call.1} parent=63 // pred_check_branch
          %679 = sbr.rel (%p677) target = $region96
        $region95: #{tpu_custom_call.1} parent=63 // pred_region
          %680 = dma.done [#allocation15], 32
        $region96: #{tpu_custom_call.1} parent=63 // pred_fallthru
          _
        // Predicated region
        $region97: #{tpu_custom_call.1} parent=63 // pred_check
          %p681 = pneg %p264
        $region98: #{tpu_custom_call.1} parent=63 // pred_check_branch
          %683 = sbr.rel (%p681) target = $region100
        $region99: #{tpu_custom_call.1} parent=63 // pred_region
          %684 = dma.done [#allocation15], 8192
        $region100: #{tpu_custom_call.1} parent=63 // pred_fallthru
          _
        // Predicated region
        $region101: #{tpu_custom_call.1} parent=63 // pred_check
          %p685 = pneg %p285
        $region102: #{tpu_custom_call.1} parent=63 // pred_check_branch
          %687 = sbr.rel (%p685) target = $region104
        $region103: #{tpu_custom_call.1} parent=63 // pred_region
          %688 = dma.done [#allocation18], 4096
        $region104: #{tpu_custom_call.1} parent=63 // pred_fallthru
          _
        // Predicated region
        $region105: #{tpu_custom_call.1} parent=63 // pred_check
          %p689 = pneg %p306
        $region106: #{tpu_custom_call.1} parent=63 // pred_check_branch
          %691 = sbr.rel (%p689) target = $region108
        $region107: #{tpu_custom_call.1} parent=63 // pred_region
          %692 = dma.done [#allocation18], 4096
        $region108: #{tpu_custom_call.1} parent=63 // pred_fallthru
          _
        %s693 = sand.u32 %s53, 1
        %s694 = scalar_lea.sflag [#allocation3], %s693
        %s695 = sand.u32 %s53, 1
        %s696 = smul.addr %s695, 256
        %s697 = scalar_lea.vmem [#allocation2], %s696
        %p698 = pneg %p66
        %p699 = pneg %p63
        %s700 = sand.u32 %s45, 1
        %s701 = scalar_lea.sflag [#allocation6], %s700
        %s702 = sand.u32 %s79, 1
        %s703 = smul.addr %s702, 512
        %s704 = scalar_lea.vmem [#allocation5], %s703
        %p705 = pneg %p92
        %p706 = pneg %p89
        %s707 = sand.u32 %s45, 1
        %s708 = scalar_lea.sflag [#allocation6], %s707
        %s709 = sand.u32 %s105, 1
        %s710 = smul.addr %s709, 512
        %s711 = scalar_lea.vmem [#allocation7], %s710
        %p712 = pneg %p118
        %p713 = pneg %p115
        %s714 = sand.u32 %s45, 1
        %s715 = scalar_lea.sflag [#allocation9], %s714
        %s716 = sand.u32 %s131, 1
        %s717 = smul.addr %s716, 512
        %s718 = scalar_lea.vmem [#allocation8], %s717
        %p719 = pneg %p144
        %p720 = pneg %p141
        %s721 = sand.u32 %s45, 1
        %s722 = scalar_lea.sflag [#allocation9], %s721
        %s723 = sand.u32 %s157, 1
        %s724 = smul.addr %s723, 256
        %s725 = scalar_lea.vmem [#allocation10], %s724
        %p726 = pneg %p170
        %p727 = pneg %p167
        %s728 = sand.u32 %s45, 1
        %s729 = scalar_lea.sflag [#allocation12], %s728
        %s730 = sand.u32 %s183, 1
        %s731 = smul.addr %s730, 256
        %s732 = scalar_lea.vmem [#allocation11], %s731
        %p733 = pneg %p196
        %p734 = pneg %p193
        %s735 = sand.u32 %s45, 1
        %s736 = scalar_lea.sflag [#allocation12], %s735
        %s737 = sand.u32 %s209, 1
        %s738 = smul.addr %s737, 256
        %s739 = scalar_lea.vmem [#allocation13], %s738
        %p740 = pneg %p222
        %p741 = pneg %p219
        %p742 = pneg %p243
        %p743 = pneg %p240
        %p744 = pneg %p264
        %p745 = pneg %p261
        %p746 = pneg %p285
        %p747 = pneg %p282
        %p748 = pneg %p306
        %p749 = pneg %p303
        %p750 = pneg %p332
        %p751 = pneg %p329
        %s752 = sand.u32 %s319, 1
        %s753 = scalar_lea.sflag [#allocation4], %s752
        %s754 = sand.u32 %s319, 1
        %s755 = smul.addr %s754, 256
        %s756 = scalar_lea.vmem [#allocation20], %s755
        %p757 = pneg %p358
        %p758 = pneg %p355
        %s759 = sand.u32 %s45, 1
        %s760 = scalar_lea.sflag [#allocation22], %s759
        %s761 = sand.u32 %s345, 1
        %s762 = smul.addr %s761, 128
        %s763 = scalar_lea.vmem [#allocation21], %s762
        %p764 = pneg %p384
        %p765 = pneg %p381
        %s766 = sand.u32 %s45, 1
        %s767 = scalar_lea.sflag [#allocation22], %s766
        %s768 = sand.u32 %s371, 1
        %s769 = smul.addr %s768, 128
        %s770 = scalar_lea.vmem [#allocation23], %s769
        %s771 = smul.u32 16, %s45
        %s772 = smul.u32 16, %s45
        %s773 = smul.u32 16, %s45
        %s774 = smul.u32 16, %s45
        %s775 = smul.u32 16, %s45
        %s776 = smul.u32 16, %s45
        %s777 = smul.u32 16, %s45
        %s778 = smul.u32 16, %s45
        %s779 = smul.u32 16, %s45
        %v780 = vld [vmem:[%s618] sm:$0xff]
        %v781 = vld [vmem:[%s618 + $0x8] sm:$0xff]
        %v782 = vld [vmem:[%s618 + $0x10] sm:$0xff]
        %v783 = vld [vmem:[%s618 + $0x18] sm:$0xff]
        %v784 = vld [vmem:[%s618 + $0x20] sm:$0xff]
        %v785 = vld [vmem:[%s618 + $0x28] sm:$0xff]
        %v786 = vld [vmem:[%s618 + $0x30] sm:$0xff]
        %v787 = vld [vmem:[%s618 + $0x38] sm:$0xff]
        %v788 = vld [vmem:[%s618 + $0x40] sm:$0xff]
        %v789 = vld [vmem:[%s618 + $0x48] sm:$0xff]
        %v790 = vld [vmem:[%s618 + $0x50] sm:$0xff]
        %v791 = vld [vmem:[%s618 + $0x58] sm:$0xff]
        %v792 = vld [vmem:[%s618 + $0x60] sm:$0xff]
        %v793 = vld [vmem:[%s618 + $0x68] sm:$0xff]
        %v794 = vld [vmem:[%s618 + $0x70] sm:$0xff]
        %v795 = vld [vmem:[%s618 + $0x78] sm:$0xff]
        %v796 = vld [vmem:[%s618 + $0x80] sm:$0xff]
        %v797 = vld [vmem:[%s618 + $0x88] sm:$0xff]
        %v798 = vld [vmem:[%s618 + $0x90] sm:$0xff]
        %v799 = vld [vmem:[%s618 + $0x98] sm:$0xff]
        %v800 = vld [vmem:[%s618 + $0xa0] sm:$0xff]
        %v801 = vld [vmem:[%s618 + $0xa8] sm:$0xff]
        %v802 = vld [vmem:[%s618 + $0xb0] sm:$0xff]
        %v803 = vld [vmem:[%s618 + $0xb8] sm:$0xff]
        %v804 = vld [vmem:[%s618 + $0xc0] sm:$0xff]
        %v805 = vld [vmem:[%s618 + $0xc8] sm:$0xff]
        %v806 = vld [vmem:[%s618 + $0xd0] sm:$0xff]
        %v807 = vld [vmem:[%s618 + $0xd8] sm:$0xff]
        %v808 = vld [vmem:[%s618 + $0xe0] sm:$0xff]
        %v809 = vld [vmem:[%s618 + $0xe8] sm:$0xff]
        %v810 = vld [vmem:[%s618 + $0xf0] sm:$0xff]
        %v811 = vld [vmem:[%s618 + $0xf8] sm:$0xff]
        %v812 = vld [vmem:[#allocation14] sm:$0x3]
        %v813 = vmul.f32 %v780, %v780
        %v814 = vmul.f32 %v781, %v781
        %v815 = vmul.f32 %v782, %v782
        %v816 = vmul.f32 %v783, %v783
        %v817 = vmul.f32 %v784, %v784
        %v818 = vmul.f32 %v785, %v785
        %v819 = vmul.f32 %v786, %v786
        %v820 = vmul.f32 %v787, %v787
        %v821 = vmul.f32 %v788, %v788
        %v822 = vmul.f32 %v789, %v789
        %v823 = vmul.f32 %v790, %v790
        %v824 = vmul.f32 %v791, %v791
        %v825 = vmul.f32 %v792, %v792
        %v826 = vmul.f32 %v793, %v793
        %v827 = vmul.f32 %v794, %v794
        %v828 = vmul.f32 %v795, %v795
        %v829 = vmul.f32 %v796, %v796
        %v830 = vmul.f32 %v797, %v797
        %v831 = vmul.f32 %v798, %v798
        %v832 = vmul.f32 %v799, %v799
        %v833 = vmul.f32 %v800, %v800
        %v834 = vmul.f32 %v801, %v801
        %v835 = vmul.f32 %v802, %v802
        %v836 = vmul.f32 %v803, %v803
        %v837 = vmul.f32 %v804, %v804
        %v838 = vmul.f32 %v805, %v805
        %v839 = vmul.f32 %v806, %v806
        %v840 = vmul.f32 %v807, %v807
        %v841 = vmul.f32 %v808, %v808
        %v842 = vmul.f32 %v809, %v809
        %v843 = vmul.f32 %v810, %v810
        %v844 = vmul.f32 %v811, %v811
        %v845 = vadd.f32 %v813, %v814
        %846 = vadd.xlane.f32.xlu0 %v845
        %v847 = vpop.xlane.xlu0 %846
        %v848 = vadd.f32 %v815, %v816
        %849 = vadd.xlane.f32.xlu0 %v848
        %v850 = vpop.xlane.xlu0 %849
        %v851 = vadd.f32 %v817, %v818
        %852 = vadd.xlane.f32.xlu0 %v851
        %v853 = vpop.xlane.xlu0 %852
        %v854 = vadd.f32 %v819, %v820
        %855 = vadd.xlane.f32.xlu0 %v854
        %v856 = vpop.xlane.xlu0 %855
        %v857 = vadd.f32 %v821, %v822
        %858 = vadd.xlane.f32.xlu0 %v857
        %v859 = vpop.xlane.xlu0 %858
        %v860 = vadd.f32 %v823, %v824
        %861 = vadd.xlane.f32.xlu0 %v860
        %v862 = vpop.xlane.xlu0 %861
        %v863 = vadd.f32 %v825, %v826
        %864 = vadd.xlane.f32.xlu0 %v863
        %v865 = vpop.xlane.xlu0 %864
        %v866 = vadd.f32 %v827, %v828
        %867 = vadd.xlane.f32.xlu0 %v866
        %v868 = vpop.xlane.xlu0 %867
        %v869 = vadd.f32 %v829, %v830
        %870 = vadd.xlane.f32.xlu0 %v869
        %v871 = vpop.xlane.xlu0 %870
        %v872 = vadd.f32 %v831, %v832
        %873 = vadd.xlane.f32.xlu0 %v872
        %v874 = vpop.xlane.xlu0 %873
        %v875 = vadd.f32 %v833, %v834
        %876 = vadd.xlane.f32.xlu0 %v875
        %v877 = vpop.xlane.xlu0 %876
        %v878 = vadd.f32 %v835, %v836
        %879 = vadd.xlane.f32.xlu0 %v878
        %v880 = vpop.xlane.xlu0 %879
        %v881 = vadd.f32 %v837, %v838
        %882 = vadd.xlane.f32.xlu0 %v881
        %v883 = vpop.xlane.xlu0 %882
        %v884 = vadd.f32 %v839, %v840
        %885 = vadd.xlane.f32.xlu0 %v884
        %v886 = vpop.xlane.xlu0 %885
        %v887 = vadd.f32 %v841, %v842
        %888 = vadd.xlane.f32.xlu0 %v887
        %v889 = vpop.xlane.xlu0 %888
        %v890 = vadd.f32 %v843, %v844
        %891 = vadd.xlane.f32.xlu0 %v890
        %v892 = vpop.xlane.xlu0 %891
        %v893 = vrcp.pop 256.0
        %v894 = vmul.f32 %v847, %v893
        %v895 = vmul.f32 %v850, %v893
        %v896 = vmul.f32 %v853, %v893
        %v897 = vmul.f32 %v856, %v893
        %v898 = vmul.f32 %v859, %v893
        %v899 = vmul.f32 %v862, %v893
        %v900 = vmul.f32 %v865, %v893
        %v901 = vmul.f32 %v868, %v893
        %v902 = vmul.f32 %v871, %v893
        %v903 = vmul.f32 %v874, %v893
        %v904 = vmul.f32 %v877, %v893
        %v905 = vmul.f32 %v880, %v893
        %v906 = vmul.f32 %v883, %v893
        %v907 = vmul.f32 %v886, %v893
        %v908 = vmul.f32 %v889, %v893
        %v909 = vmul.f32 %v892, %v893
        %v910 = vadd.f32 %v894, 1e-06
        %v911 = vadd.f32 %v895, 1e-06
        %v912 = vadd.f32 %v896, 1e-06
        %v913 = vadd.f32 %v897, 1e-06
        %v914 = vadd.f32 %v898, 1e-06
        %v915 = vadd.f32 %v899, 1e-06
        %v916 = vadd.f32 %v900, 1e-06
        %v917 = vadd.f32 %v901, 1e-06
        %v918 = vadd.f32 %v902, 1e-06
        %v919 = vadd.f32 %v903, 1e-06
        %v920 = vadd.f32 %v904, 1e-06
        %v921 = vadd.f32 %v905, 1e-06
        %v922 = vadd.f32 %v906, 1e-06
        %v923 = vadd.f32 %v907, 1e-06
        %v924 = vadd.f32 %v908, 1e-06
        %v925 = vadd.f32 %v909, 1e-06
        %v926 = vrsqrt.pop %v910
        %v927 = vrsqrt.pop %v911
        %v928 = vrsqrt.pop %v912
        %v929 = vrsqrt.pop %v913
        %v930 = vrsqrt.pop %v914
        %v931 = vrsqrt.pop %v915
        %v932 = vrsqrt.pop %v916
        %v933 = vrsqrt.pop %v917
        %v934 = vrsqrt.pop %v918
        %v935 = vrsqrt.pop %v919
        %v936 = vrsqrt.pop %v920
        %v937 = vrsqrt.pop %v921
        %v938 = vrsqrt.pop %v922
        %v939 = vrsqrt.pop %v923
        %v940 = vrsqrt.pop %v924
        %v941 = vrsqrt.pop %v925
        %v942 = vmul.f32 %v780, %v926
        %v943 = vmul.f32 %v781, %v926
        %v944 = vmul.f32 %v782, %v927
        %v945 = vmul.f32 %v783, %v927
        %v946 = vmul.f32 %v784, %v928
        %v947 = vmul.f32 %v785, %v928
        %v948 = vmul.f32 %v786, %v929
        %v949 = vmul.f32 %v787, %v929
        %v950 = vmul.f32 %v788, %v930
        %v951 = vmul.f32 %v789, %v930
        %v952 = vmul.f32 %v790, %v931
        %v953 = vmul.f32 %v791, %v931
        %v954 = vmul.f32 %v792, %v932
        %v955 = vmul.f32 %v793, %v932
        %v956 = vmul.f32 %v794, %v933
        %v957 = vmul.f32 %v795, %v933
        %v958 = vmul.f32 %v796, %v934
        %v959 = vmul.f32 %v797, %v934
        %v960 = vmul.f32 %v798, %v935
        %v961 = vmul.f32 %v799, %v935
        %v962 = vmul.f32 %v800, %v936
        %v963 = vmul.f32 %v801, %v936
        %v964 = vmul.f32 %v802, %v937
        %v965 = vmul.f32 %v803, %v937
        %v966 = vmul.f32 %v804, %v938
        %v967 = vmul.f32 %v805, %v938
        %v968 = vmul.f32 %v806, %v939
        %v969 = vmul.f32 %v807, %v939
        %v970 = vmul.f32 %v808, %v940
        %v971 = vmul.f32 %v809, %v940
        %v972 = vmul.f32 %v810, %v941
        %v973 = vmul.f32 %v811, %v941
        %v975 = vlaneseq
        %v976 = vshrl.u32 %v975, 7
        %v977 = vsub.s32 0, %v976
        %v978 = vrot.slane %v812, %v977
        %v979 = vlaneseq
        %v980 = vshrl.u32 %v979, 7
        %v981 = vsub.s32 1, %v980
        %v982 = vrot.slane %v812, %v981
        %v985 = vmul.f32 %v942, %v978
        %v986 = vmul.f32 %v943, %v982
        %v987 = vmul.f32 %v944, %v978
        %v988 = vmul.f32 %v945, %v982
        %v989 = vmul.f32 %v946, %v978
        %v990 = vmul.f32 %v947, %v982
        %v991 = vmul.f32 %v948, %v978
        %v992 = vmul.f32 %v949, %v982
        %v993 = vmul.f32 %v950, %v978
        %v994 = vmul.f32 %v951, %v982
        %v995 = vmul.f32 %v952, %v978
        %v996 = vmul.f32 %v953, %v982
        %v997 = vmul.f32 %v954, %v978
        %v998 = vmul.f32 %v955, %v982
        %v999 = vmul.f32 %v956, %v978
        %v1000 = vmul.f32 %v957, %v982
        %v1001 = vmul.f32 %v958, %v978
        %v1002 = vmul.f32 %v959, %v982
        %v1003 = vmul.f32 %v960, %v978
        %v1004 = vmul.f32 %v961, %v982
        %v1005 = vmul.f32 %v962, %v978
        %v1006 = vmul.f32 %v963, %v982
        %v1007 = vmul.f32 %v964, %v978
        %v1008 = vmul.f32 %v965, %v982
        %v1009 = vmul.f32 %v966, %v978
        %v1010 = vmul.f32 %v967, %v982
        %v1011 = vmul.f32 %v968, %v978
        %v1012 = vmul.f32 %v969, %v982
        %v1013 = vmul.f32 %v970, %v978
        %v1014 = vmul.f32 %v971, %v982
        %v1015 = vmul.f32 %v972, %v978
        %v1016 = vmul.f32 %v973, %v982
        %v1017 = vpack.c.bf16 %v987, %v985
        %v1018 = vpack.c.bf16 %v988, %v986
        %v1019 = vpack.c.bf16 %v991, %v989
        %v1020 = vpack.c.bf16 %v992, %v990
        %v1021 = vpack.c.bf16 %v995, %v993
        %v1022 = vpack.c.bf16 %v996, %v994
        %v1023 = vpack.c.bf16 %v999, %v997
        %v1024 = vpack.c.bf16 %v1000, %v998
        %v1025 = vpack.c.bf16 %v1003, %v1001
        %v1026 = vpack.c.bf16 %v1004, %v1002
        %v1027 = vpack.c.bf16 %v1007, %v1005
        %v1028 = vpack.c.bf16 %v1008, %v1006
        %v1029 = vpack.c.bf16 %v1011, %v1009
        %v1030 = vpack.c.bf16 %v1012, %v1010
        %v1031 = vpack.c.bf16 %v1015, %v1013
        %v1032 = vpack.c.bf16 %v1016, %v1014
        %v1033 = vld [vmem:[#allocation16] sm:$0xff]
        %v1034 = vld [vmem:[#allocation16 + $0x8] sm:$0xff]
        %v1035 = vld [vmem:[#allocation16 + $0x10] sm:$0xff]
        %v1036 = vld [vmem:[#allocation16 + $0x18] sm:$0xff]
        %v1037 = vld [vmem:[#allocation16 + $0x20] sm:$0xff]
        %v1038 = vld [vmem:[#allocation16 + $0x28] sm:$0xff]
        %v1039 = vld [vmem:[#allocation16 + $0x30] sm:$0xff]
        %v1040 = vld [vmem:[#allocation16 + $0x38] sm:$0xff]
        %v1041 = vld [vmem:[#allocation16 + $0x40] sm:$0xff]
        %v1042 = vld [vmem:[#allocation16 + $0x48] sm:$0xff]
        %v1043 = vld [vmem:[#allocation16 + $0x50] sm:$0xff]
        %v1044 = vld [vmem:[#allocation16 + $0x58] sm:$0xff]
        %v1045 = vld [vmem:[#allocation16 + $0x60] sm:$0xff]
        %v1046 = vld [vmem:[#allocation16 + $0x68] sm:$0xff]
        %v1047 = vld [vmem:[#allocation16 + $0x70] sm:$0xff]
        %v1048 = vld [vmem:[#allocation16 + $0x78] sm:$0xff]
        %v1049 = vld [vmem:[#allocation16 + $0x80] sm:$0xff]
        %v1050 = vld [vmem:[#allocation16 + $0x88] sm:$0xff]
        %v1051 = vld [vmem:[#allocation16 + $0x90] sm:$0xff]
        %v1052 = vld [vmem:[#allocation16 + $0x98] sm:$0xff]
        %v1053 = vld [vmem:[#allocation16 + $0xa0] sm:$0xff]
        %v1054 = vld [vmem:[#allocation16 + $0xa8] sm:$0xff]
        %v1055 = vld [vmem:[#allocation16 + $0xb0] sm:$0xff]
        %v1056 = vld [vmem:[#allocation16 + $0xb8] sm:$0xff]
        %v1057 = vld [vmem:[#allocation16 + $0xc0] sm:$0xff]
        %v1058 = vld [vmem:[#allocation16 + $0xc8] sm:$0xff]
        %v1059 = vld [vmem:[#allocation16 + $0xd0] sm:$0xff]
        %v1060 = vld [vmem:[#allocation16 + $0xd8] sm:$0xff]
        %v1061 = vld [vmem:[#allocation16 + $0xe0] sm:$0xff]
        %v1062 = vld [vmem:[#allocation16 + $0xe8] sm:$0xff]
        %v1063 = vld [vmem:[#allocation16 + $0xf0] sm:$0xff]
        %v1064 = vld [vmem:[#allocation16 + $0xf8] sm:$0xff]
        %v1065 = vld [vmem:[#allocation16 + $0x100] sm:$0xff]
        %v1066 = vld [vmem:[#allocation16 + $0x108] sm:$0xff]
        %v1067 = vld [vmem:[#allocation16 + $0x110] sm:$0xff]
        %v1068 = vld [vmem:[#allocation16 + $0x118] sm:$0xff]
        %v1069 = vld [vmem:[#allocation16 + $0x120] sm:$0xff]
        %v1070 = vld [vmem:[#allocation16 + $0x128] sm:$0xff]
        %v1071 = vld [vmem:[#allocation16 + $0x130] sm:$0xff]
        %v1072 = vld [vmem:[#allocation16 + $0x138] sm:$0xff]
        %v1073 = vld [vmem:[#allocation16 + $0x140] sm:$0xff]
        %v1074 = vld [vmem:[#allocation16 + $0x148] sm:$0xff]
        %v1075 = vld [vmem:[#allocation16 + $0x150] sm:$0xff]
        %v1076 = vld [vmem:[#allocation16 + $0x158] sm:$0xff]
        %v1077 = vld [vmem:[#allocation16 + $0x160] sm:$0xff]
        %v1078 = vld [vmem:[#allocation16 + $0x168] sm:$0xff]
        %v1079 = vld [vmem:[#allocation16 + $0x170] sm:$0xff]
        %v1080 = vld [vmem:[#allocation16 + $0x178] sm:$0xff]
        %v1081 = vld [vmem:[#allocation16 + $0x180] sm:$0xff]
        %v1082 = vld [vmem:[#allocation16 + $0x188] sm:$0xff]
        %v1083 = vld [vmem:[#allocation16 + $0x190] sm:$0xff]
        %v1084 = vld [vmem:[#allocation16 + $0x198] sm:$0xff]
        %v1085 = vld [vmem:[#allocation16 + $0x1a0] sm:$0xff]
        %v1086 = vld [vmem:[#allocation16 + $0x1a8] sm:$0xff]
        %v1087 = vld [vmem:[#allocation16 + $0x1b0] sm:$0xff]
        %v1088 = vld [vmem:[#allocation16 + $0x1b8] sm:$0xff]
        %v1089 = vld [vmem:[#allocation16 + $0x1c0] sm:$0xff]
        %v1090 = vld [vmem:[#allocation16 + $0x1c8] sm:$0xff]
        %v1091 = vld [vmem:[#allocation16 + $0x1d0] sm:$0xff]
        %v1092 = vld [vmem:[#allocation16 + $0x1d8] sm:$0xff]
        %v1093 = vld [vmem:[#allocation16 + $0x1e0] sm:$0xff]
        %v1094 = vld [vmem:[#allocation16 + $0x1e8] sm:$0xff]
        %v1095 = vld [vmem:[#allocation16 + $0x1f0] sm:$0xff]
        %v1096 = vld [vmem:[#allocation16 + $0x1f8] sm:$0xff]
        %v1161 = vunpack.c.l.b16 %v1033
        %v1162 = vunpack.c.h.b16 %v1033
        %v1163 = vunpack.c.l.b16 %v1034
        %v1164 = vunpack.c.h.b16 %v1034
        %v1165 = vunpack.c.l.b16 %v1035
        %v1166 = vunpack.c.h.b16 %v1035
        %v1167 = vunpack.c.l.b16 %v1036
        %v1168 = vunpack.c.h.b16 %v1036
        %v1169 = vunpack.c.l.b16 %v1037
        %v1170 = vunpack.c.h.b16 %v1037
        %v1171 = vunpack.c.l.b16 %v1038
        %v1172 = vunpack.c.h.b16 %v1038
        %v1173 = vunpack.c.l.b16 %v1039
        %v1174 = vunpack.c.h.b16 %v1039
        %v1175 = vunpack.c.l.b16 %v1040
        %v1176 = vunpack.c.h.b16 %v1040
        %v1177 = vunpack.c.l.b16 %v1041
        %v1178 = vunpack.c.h.b16 %v1041
        %v1179 = vunpack.c.l.b16 %v1042
        %v1180 = vunpack.c.h.b16 %v1042
        %v1181 = vunpack.c.l.b16 %v1043
        %v1182 = vunpack.c.h.b16 %v1043
        %v1183 = vunpack.c.l.b16 %v1044
        %v1184 = vunpack.c.h.b16 %v1044
        %v1185 = vunpack.c.l.b16 %v1045
        %v1186 = vunpack.c.h.b16 %v1045
        %v1187 = vunpack.c.l.b16 %v1046
        %v1188 = vunpack.c.h.b16 %v1046
        %v1189 = vunpack.c.l.b16 %v1047
        %v1190 = vunpack.c.h.b16 %v1047
        %v1191 = vunpack.c.l.b16 %v1048
        %v1192 = vunpack.c.h.b16 %v1048
        %v1193 = vunpack.c.l.b16 %v1049
        %v1194 = vunpack.c.h.b16 %v1049
        %v1195 = vunpack.c.l.b16 %v1050
        %v1196 = vunpack.c.h.b16 %v1050
        %v1197 = vunpack.c.l.b16 %v1051
        %v1198 = vunpack.c.h.b16 %v1051
        %v1199 = vunpack.c.l.b16 %v1052
        %v1200 = vunpack.c.h.b16 %v1052
        %v1201 = vunpack.c.l.b16 %v1053
        %v1202 = vunpack.c.h.b16 %v1053
        %v1203 = vunpack.c.l.b16 %v1054
        %v1204 = vunpack.c.h.b16 %v1054
        %v1205 = vunpack.c.l.b16 %v1055
        %v1206 = vunpack.c.h.b16 %v1055
        %v1207 = vunpack.c.l.b16 %v1056
        %v1208 = vunpack.c.h.b16 %v1056
        %v1209 = vunpack.c.l.b16 %v1057
        %v1210 = vunpack.c.h.b16 %v1057
        %v1211 = vunpack.c.l.b16 %v1058
        %v1212 = vunpack.c.h.b16 %v1058
        %v1213 = vunpack.c.l.b16 %v1059
        %v1214 = vunpack.c.h.b16 %v1059
        %v1215 = vunpack.c.l.b16 %v1060
        %v1216 = vunpack.c.h.b16 %v1060
        %v1217 = vunpack.c.l.b16 %v1061
        %v1218 = vunpack.c.h.b16 %v1061
        %v1219 = vunpack.c.l.b16 %v1062
        %v1220 = vunpack.c.h.b16 %v1062
        %v1221 = vunpack.c.l.b16 %v1063
        %v1222 = vunpack.c.h.b16 %v1063
        %v1223 = vunpack.c.l.b16 %v1064
        %v1224 = vunpack.c.h.b16 %v1064
        %v1225 = vunpack.c.l.b16 %v1065
        %v1226 = vunpack.c.h.b16 %v1065
        %v1227 = vunpack.c.l.b16 %v1066
        %v1228 = vunpack.c.h.b16 %v1066
        %v1229 = vunpack.c.l.b16 %v1067
        %v1230 = vunpack.c.h.b16 %v1067
        %v1231 = vunpack.c.l.b16 %v1068
        %v1232 = vunpack.c.h.b16 %v1068
        %v1233 = vunpack.c.l.b16 %v1069
        %v1234 = vunpack.c.h.b16 %v1069
        %v1235 = vunpack.c.l.b16 %v1070
        %v1236 = vunpack.c.h.b16 %v1070
        %v1237 = vunpack.c.l.b16 %v1071
        %v1238 = vunpack.c.h.b16 %v1071
        %v1239 = vunpack.c.l.b16 %v1072
        %v1240 = vunpack.c.h.b16 %v1072
        %v1241 = vunpack.c.l.b16 %v1073
        %v1242 = vunpack.c.h.b16 %v1073
        %v1243 = vunpack.c.l.b16 %v1074
        %v1244 = vunpack.c.h.b16 %v1074
        %v1245 = vunpack.c.l.b16 %v1075
        %v1246 = vunpack.c.h.b16 %v1075
        %v1247 = vunpack.c.l.b16 %v1076
        %v1248 = vunpack.c.h.b16 %v1076
        %v1249 = vunpack.c.l.b16 %v1077
        %v1250 = vunpack.c.h.b16 %v1077
        %v1251 = vunpack.c.l.b16 %v1078
        %v1252 = vunpack.c.h.b16 %v1078
        %v1253 = vunpack.c.l.b16 %v1079
        %v1254 = vunpack.c.h.b16 %v1079
        %v1255 = vunpack.c.l.b16 %v1080
        %v1256 = vunpack.c.h.b16 %v1080
        %v1257 = vunpack.c.l.b16 %v1081
        %v1258 = vunpack.c.h.b16 %v1081
        %v1259 = vunpack.c.l.b16 %v1082
        %v1260 = vunpack.c.h.b16 %v1082
        %v1261 = vunpack.c.l.b16 %v1083
        %v1262 = vunpack.c.h.b16 %v1083
        %v1263 = vunpack.c.l.b16 %v1084
        %v1264 = vunpack.c.h.b16 %v1084
        %v1265 = vunpack.c.l.b16 %v1085
        %v1266 = vunpack.c.h.b16 %v1085
        %v1267 = vunpack.c.l.b16 %v1086
        %v1268 = vunpack.c.h.b16 %v1086
        %v1269 = vunpack.c.l.b16 %v1087
        %v1270 = vunpack.c.h.b16 %v1087
        %v1271 = vunpack.c.l.b16 %v1088
        %v1272 = vunpack.c.h.b16 %v1088
        %v1273 = vunpack.c.l.b16 %v1089
        %v1274 = vunpack.c.h.b16 %v1089
        %v1275 = vunpack.c.l.b16 %v1090
        %v1276 = vunpack.c.h.b16 %v1090
        %v1277 = vunpack.c.l.b16 %v1091
        %v1278 = vunpack.c.h.b16 %v1091
        %v1279 = vunpack.c.l.b16 %v1092
        %v1280 = vunpack.c.h.b16 %v1092
        %v1281 = vunpack.c.l.b16 %v1093
        %v1282 = vunpack.c.h.b16 %v1093
        %v1283 = vunpack.c.l.b16 %v1094
        %v1284 = vunpack.c.h.b16 %v1094
        %v1285 = vunpack.c.l.b16 %v1095
        %v1286 = vunpack.c.h.b16 %v1095
        %v1287 = vunpack.c.l.b16 %v1096
        %v1288 = vunpack.c.h.b16 %v1096
        %v1289 = vpack.c.b16 %v1165, %v1161
        %v1290 = vpack.c.b16 %v1166, %v1162
        %v1291 = vpack.c.b16 %v1167, %v1163
        %v1292 = vpack.c.b16 %v1168, %v1164
        %v1293 = vpack.c.b16 %v1173, %v1169
        %v1294 = vpack.c.b16 %v1174, %v1170
        %v1295 = vpack.c.b16 %v1175, %v1171
        %v1296 = vpack.c.b16 %v1176, %v1172
        %v1297 = vpack.c.b16 %v1181, %v1177
        %v1298 = vpack.c.b16 %v1182, %v1178
        %v1299 = vpack.c.b16 %v1183, %v1179
        %v1300 = vpack.c.b16 %v1184, %v1180
        %v1301 = vpack.c.b16 %v1189, %v1185
        %v1302 = vpack.c.b16 %v1190, %v1186
        %v1303 = vpack.c.b16 %v1191, %v1187
        %v1304 = vpack.c.b16 %v1192, %v1188
        %v1305 = vpack.c.b16 %v1197, %v1193
        %v1306 = vpack.c.b16 %v1198, %v1194
        %v1307 = vpack.c.b16 %v1199, %v1195
        %v1308 = vpack.c.b16 %v1200, %v1196
        %v1309 = vpack.c.b16 %v1205, %v1201
        %v1310 = vpack.c.b16 %v1206, %v1202
        %v1311 = vpack.c.b16 %v1207, %v1203
        %v1312 = vpack.c.b16 %v1208, %v1204
        %v1313 = vpack.c.b16 %v1213, %v1209
        %v1314 = vpack.c.b16 %v1214, %v1210
        %v1315 = vpack.c.b16 %v1215, %v1211
        %v1316 = vpack.c.b16 %v1216, %v1212
        %v1317 = vpack.c.b16 %v1221, %v1217
        %v1318 = vpack.c.b16 %v1222, %v1218
        %v1319 = vpack.c.b16 %v1223, %v1219
        %v1320 = vpack.c.b16 %v1224, %v1220
        %v1321 = vpack.c.b16 %v1229, %v1225
        %v1322 = vpack.c.b16 %v1230, %v1226
        %v1323 = vpack.c.b16 %v1231, %v1227
        %v1324 = vpack.c.b16 %v1232, %v1228
        %v1325 = vpack.c.b16 %v1237, %v1233
        %v1326 = vpack.c.b16 %v1238, %v1234
        %v1327 = vpack.c.b16 %v1239, %v1235
        %v1328 = vpack.c.b16 %v1240, %v1236
        %v1329 = vpack.c.b16 %v1245, %v1241
        %v1330 = vpack.c.b16 %v1246, %v1242
        %v1331 = vpack.c.b16 %v1247, %v1243
        %v1332 = vpack.c.b16 %v1248, %v1244
        %v1333 = vpack.c.b16 %v1253, %v1249
        %v1334 = vpack.c.b16 %v1254, %v1250
        %v1335 = vpack.c.b16 %v1255, %v1251
        %v1336 = vpack.c.b16 %v1256, %v1252
        %v1337 = vpack.c.b16 %v1261, %v1257
        %v1338 = vpack.c.b16 %v1262, %v1258
        %v1339 = vpack.c.b16 %v1263, %v1259
        %v1340 = vpack.c.b16 %v1264, %v1260
        %v1341 = vpack.c.b16 %v1269, %v1265
        %v1342 = vpack.c.b16 %v1270, %v1266
        %v1343 = vpack.c.b16 %v1271, %v1267
        %v1344 = vpack.c.b16 %v1272, %v1268
        %v1345 = vpack.c.b16 %v1277, %v1273
        %v1346 = vpack.c.b16 %v1278, %v1274
        %v1347 = vpack.c.b16 %v1279, %v1275
        %v1348 = vpack.c.b16 %v1280, %v1276
        %v1349 = vpack.c.b16 %v1285, %v1281
        %v1350 = vpack.c.b16 %v1286, %v1282
        %v1351 = vpack.c.b16 %v1287, %v1283
        %v1352 = vpack.c.b16 %v1288, %v1284
        %1417 = vmatprep.subr.bf16.mxu0 %v1290
        %1418 = vmatpush1.bf16.msra.mxu0 %v1289
        %1419 = vmatprep.subr.bf16.mxu0 %v1294
        %1420 = vmatpush1.bf16.msra.mxu0 %v1293
        %1421 = vmatprep.subr.bf16.mxu0 %v1298
        %1422 = vmatpush1.bf16.msra.mxu0 %v1297
        %1423 = vmatprep.subr.bf16.mxu0 %v1302
        %1424 = vmatpush1.bf16.msra.mxu0 %v1301
        %1425 = vmatprep.subr.bf16.mxu0 %v1306
        %1426 = vmatpush1.bf16.msra.mxu0 %v1305
        %1427 = vmatprep.subr.bf16.mxu0 %v1310
        %1428 = vmatpush1.bf16.msra.mxu0 %v1309
        %1429 = vmatprep.subr.bf16.mxu0 %v1314
        %1430 = vmatpush1.bf16.msra.mxu0 %v1313
        %1431 = vmatprep.subr.bf16.mxu0 %v1318
        %1432 = vmatpush1.bf16.msra.mxu0 %v1317
        %1433 = vmatprep.subr.bf16.mxu0 %v1322
        %1434 = vmatpush1.bf16.msra.mxu0 %v1321
        %1435 = vmatprep.subr.bf16.mxu0 %v1326
        %1436 = vmatpush1.bf16.msra.mxu0 %v1325
        %1437 = vmatprep.subr.bf16.mxu0 %v1330
        %1438 = vmatpush1.bf16.msra.mxu0 %v1329
        %1439 = vmatprep.subr.bf16.mxu0 %v1334
        %1440 = vmatpush1.bf16.msra.mxu0 %v1333
        %1441 = vmatprep.subr.bf16.mxu0 %v1338
        %1442 = vmatpush1.bf16.msra.mxu0 %v1337
        %1443 = vmatprep.subr.bf16.mxu0 %v1342
        %1444 = vmatpush1.bf16.msra.mxu0 %v1341
        %1445 = vmatprep.subr.bf16.mxu0 %v1346
        %1446 = vmatpush1.bf16.msra.mxu0 %v1345
        %1447 = vmatprep.subr.bf16.mxu0 %v1350
        %1448 = vmatpush1.bf16.msra.mxu0 %v1349
        %1449 = vmatprep.mubr.bf16.mxu0 %v1018
        %1450 = vmatmul.mubr.bf16.gmra.mrb[0].mxu0 %v1017
        %v1451 = vpop.f32.mrb[0].mxu0
        %v1452 = vadd.f32 0.0, %v1451
        %v1453 = vpop.f32.mrb[0].mxu0
        %v1454 = vadd.f32 0.0, %v1453
        %v1455 = vpop.f32.mrb[0].mxu0
        %v1456 = vadd.f32 0.0, %v1455
        %v1457 = vpop.f32.mrb[0].mxu0
        %v1458 = vadd.f32 0.0, %v1457
        %1459 = vmatprep.mubr.bf16.mxu0 %v1020
        %1460 = vmatmul.mubr.bf16.gmra.mrb[0].mxu0 %v1019
        %v1461 = vpop.f32.mrb[0].mxu0
        %v1462 = vadd.f32 0.0, %v1461
        %v1463 = vpop.f32.mrb[0].mxu0
        %v1464 = vadd.f32 0.0, %v1463
        %v1465 = vpop.f32.mrb[0].mxu0
        %v1466 = vadd.f32 0.0, %v1465
        %v1467 = vpop.f32.mrb[0].mxu0
        %v1468 = vadd.f32 0.0, %v1467
        %1469 = vmatprep.mubr.bf16.mxu0 %v1022
        %1470 = vmatmul.mubr.bf16.gmra.mrb[0].mxu0 %v1021
        %v1471 = vpop.f32.mrb[0].mxu0
        %v1472 = vadd.f32 0.0, %v1471
        %v1473 = vpop.f32.mrb[0].mxu0
        %v1474 = vadd.f32 0.0, %v1473
        %v1475 = vpop.f32.mrb[0].mxu0
        %v1476 = vadd.f32 0.0, %v1475
        %v1477 = vpop.f32.mrb[0].mxu0
        %v1478 = vadd.f32 0.0, %v1477
        %1479 = vmatprep.mubr.bf16.mxu0 %v1024
        %1480 = vmatmul.mubr.bf16.gmra.mrb[0].mxu0 %v1023
        %v1481 = vpop.f32.mrb[0].mxu0
        %v1482 = vadd.f32 0.0, %v1481
        %v1483 = vpop.f32.mrb[0].mxu0
        %v1484 = vadd.f32 0.0, %v1483
        %v1485 = vpop.f32.mrb[0].mxu0
        %v1486 = vadd.f32 0.0, %v1485
        %v1487 = vpop.f32.mrb[0].mxu0
        %v1488 = vadd.f32 0.0, %v1487
        %1489 = vmatprep.mubr.bf16.mxu0 %v1026
        %1490 = vmatmul.mubr.bf16.gmra.mrb[0].mxu0 %v1025
        %v1491 = vpop.f32.mrb[0].mxu0
        %v1492 = vadd.f32 0.0, %v1491
        %v1493 = vpop.f32.mrb[0].mxu0
        %v1494 = vadd.f32 0.0, %v1493
        %v1495 = vpop.f32.mrb[0].mxu0
        %v1496 = vadd.f32 0.0, %v1495
        %v1497 = vpop.f32.mrb[0].mxu0
        %v1498 = vadd.f32 0.0, %v1497
        %1499 = vmatprep.mubr.bf16.mxu0 %v1028
        %1500 = vmatmul.mubr.bf16.gmra.mrb[0].mxu0 %v1027
        %v1501 = vpop.f32.mrb[0].mxu0
        %v1502 = vadd.f32 0.0, %v1501
        %v1503 = vpop.f32.mrb[0].mxu0
        %v1504 = vadd.f32 0.0, %v1503
        %v1505 = vpop.f32.mrb[0].mxu0
        %v1506 = vadd.f32 0.0, %v1505
        %v1507 = vpop.f32.mrb[0].mxu0
        %v1508 = vadd.f32 0.0, %v1507
        %1509 = vmatprep.mubr.bf16.mxu0 %v1030
        %1510 = vmatmul.mubr.bf16.gmra.mrb[0].mxu0 %v1029
        %v1511 = vpop.f32.mrb[0].mxu0
        %v1512 = vadd.f32 0.0, %v1511
        %v1513 = vpop.f32.mrb[0].mxu0
        %v1514 = vadd.f32 0.0, %v1513
        %v1515 = vpop.f32.mrb[0].mxu0
        %v1516 = vadd.f32 0.0, %v1515
        %v1517 = vpop.f32.mrb[0].mxu0
        %v1518 = vadd.f32 0.0, %v1517
        %1519 = vmatprep.mubr.bf16.mxu0 %v1032
        %1520 = vmatmul.mubr.bf16.gmra.mrb[0].mxu0 %v1031
        %v1521 = vpop.f32.mrb[0].mxu0
        %v1522 = vadd.f32 0.0, %v1521
        %v1523 = vpop.f32.mrb[0].mxu0
        %v1524 = vadd.f32 0.0, %v1523
        %v1525 = vpop.f32.mrb[0].mxu0
        %v1526 = vadd.f32 0.0, %v1525
        %v1527 = vpop.f32.mrb[0].mxu0
        %v1528 = vadd.f32 0.0, %v1527
        %1529 = vdwg.mxu0
        %1530 = vmatprep.subr.bf16.mxu0 %v1292
        %1531 = vmatpush1.bf16.msra.mxu0 %v1291
        %1532 = vmatprep.subr.bf16.mxu0 %v1296
        %1533 = vmatpush1.bf16.msra.mxu0 %v1295
        %1534 = vmatprep.subr.bf16.mxu0 %v1300
        %1535 = vmatpush1.bf16.msra.mxu0 %v1299
        %1536 = vmatprep.subr.bf16.mxu0 %v1304
        %1537 = vmatpush1.bf16.msra.mxu0 %v1303
        %1538 = vmatprep.subr.bf16.mxu0 %v1308
        %1539 = vmatpush1.bf16.msra.mxu0 %v1307
        %1540 = vmatprep.subr.bf16.mxu0 %v1312
        %1541 = vmatpush1.bf16.msra.mxu0 %v1311
        %1542 = vmatprep.subr.bf16.mxu0 %v1316
        %1543 = vmatpush1.bf16.msra.mxu0 %v1315
        %1544 = vmatprep.subr.bf16.mxu0 %v1320
        %1545 = vmatpush1.bf16.msra.mxu0 %v1319
        %1546 = vmatprep.subr.bf16.mxu0 %v1324
        %1547 = vmatpush1.bf16.msra.mxu0 %v1323
        %1548 = vmatprep.subr.bf16.mxu0 %v1328
        %1549 = vmatpush1.bf16.msra.mxu0 %v1327
        %1550 = vmatprep.subr.bf16.mxu0 %v1332
        %1551 = vmatpush1.bf16.msra.mxu0 %v1331
        %1552 = vmatprep.subr.bf16.mxu0 %v1336
        %1553 = vmatpush1.bf16.msra.mxu0 %v1335
        %1554 = vmatprep.subr.bf16.mxu0 %v1340
        %1555 = vmatpush1.bf16.msra.mxu0 %v1339
        %1556 = vmatprep.subr.bf16.mxu0 %v1344
        %1557 = vmatpush1.bf16.msra.mxu0 %v1343
        %1558 = vmatprep.subr.bf16.mxu0 %v1348
        %1559 = vmatpush1.bf16.msra.mxu0 %v1347
        %1560 = vmatprep.subr.bf16.mxu0 %v1352
        %1561 = vmatpush1.bf16.msra.mxu0 %v1351
        %1562 = vmatprep.mubr.bf16.mxu0 %v1018
        %1563 = vmatmul.mubr.bf16.gmra.mrb[0].mxu0 %v1017
        %v1564 = vpop.f32.mrb[0].mxu0
        %v1565 = vadd.f32 0.0, %v1564
        %v1566 = vpop.f32.mrb[0].mxu0
        %v1567 = vadd.f32 0.0, %v1566
        %v1568 = vpop.f32.mrb[0].mxu0
        %v1569 = vadd.f32 0.0, %v1568
        %v1570 = vpop.f32.mrb[0].mxu0
        %v1571 = vadd.f32 0.0, %v1570
        %1572 = vmatprep.mubr.bf16.mxu0 %v1020
        %1573 = vmatmul.mubr.bf16.gmra.mrb[0].mxu0 %v1019
        %v1574 = vpop.f32.mrb[0].mxu0
        %v1575 = vadd.f32 0.0, %v1574
        %v1576 = vpop.f32.mrb[0].mxu0
        %v1577 = vadd.f32 0.0, %v1576
        %v1578 = vpop.f32.mrb[0].mxu0
        %v1579 = vadd.f32 0.0, %v1578
        %v1580 = vpop.f32.mrb[0].mxu0
        %v1581 = vadd.f32 0.0, %v1580
        %1582 = vmatprep.mubr.bf16.mxu0 %v1022
        %1583 = vmatmul.mubr.bf16.gmra.mrb[0].mxu0 %v1021
        %v1584 = vpop.f32.mrb[0].mxu0
        %v1585 = vadd.f32 0.0, %v1584
        %v1586 = vpop.f32.mrb[0].mxu0
        %v1587 = vadd.f32 0.0, %v1586
        %v1588 = vpop.f32.mrb[0].mxu0
        %v1589 = vadd.f32 0.0, %v1588
        %v1590 = vpop.f32.mrb[0].mxu0
        %v1591 = vadd.f32 0.0, %v1590
        %1592 = vmatprep.mubr.bf16.mxu0 %v1024
        %1593 = vmatmul.mubr.bf16.gmra.mrb[0].mxu0 %v1023
        %v1594 = vpop.f32.mrb[0].mxu0
        %v1595 = vadd.f32 0.0, %v1594
        %v1596 = vpop.f32.mrb[0].mxu0
        %v1597 = vadd.f32 0.0, %v1596
        %v1598 = vpop.f32.mrb[0].mxu0
        %v1599 = vadd.f32 0.0, %v1598
        %v1600 = vpop.f32.mrb[0].mxu0
        %v1601 = vadd.f32 0.0, %v1600
        %1602 = vmatprep.mubr.bf16.mxu0 %v1026
        %1603 = vmatmul.mubr.bf16.gmra.mrb[0].mxu0 %v1025
        %v1604 = vpop.f32.mrb[0].mxu0
        %v1605 = vadd.f32 0.0, %v1604
        %v1606 = vpop.f32.mrb[0].mxu0
        %v1607 = vadd.f32 0.0, %v1606
        %v1608 = vpop.f32.mrb[0].mxu0
        %v1609 = vadd.f32 0.0, %v1608
        %v1610 = vpop.f32.mrb[0].mxu0
        %v1611 = vadd.f32 0.0, %v1610
        %1612 = vmatprep.mubr.bf16.mxu0 %v1028
        %1613 = vmatmul.mubr.bf16.gmra.mrb[0].mxu0 %v1027
        %v1614 = vpop.f32.mrb[0].mxu0
        %v1615 = vadd.f32 0.0, %v1614
        %v1616 = vpop.f32.mrb[0].mxu0
        %v1617 = vadd.f32 0.0, %v1616
        %v1618 = vpop.f32.mrb[0].mxu0
        %v1619 = vadd.f32 0.0, %v1618
        %v1620 = vpop.f32.mrb[0].mxu0
        %v1621 = vadd.f32 0.0, %v1620
        %1622 = vmatprep.mubr.bf16.mxu0 %v1030
        %1623 = vmatmul.mubr.bf16.gmra.mrb[0].mxu0 %v1029
        %v1624 = vpop.f32.mrb[0].mxu0
        %v1625 = vadd.f32 0.0, %v1624
        %v1626 = vpop.f32.mrb[0].mxu0
        %v1627 = vadd.f32 0.0, %v1626
        %v1628 = vpop.f32.mrb[0].mxu0
        %v1629 = vadd.f32 0.0, %v1628
        %v1630 = vpop.f32.mrb[0].mxu0
        %v1631 = vadd.f32 0.0, %v1630
        %1632 = vmatprep.mubr.bf16.mxu0 %v1032
        %1633 = vmatmul.mubr.bf16.gmra.mrb[0].mxu0 %v1031
        %v1634 = vpop.f32.mrb[0].mxu0
        %v1635 = vadd.f32 0.0, %v1634
        %v1636 = vpop.f32.mrb[0].mxu0
        %v1637 = vadd.f32 0.0, %v1636
        %v1638 = vpop.f32.mrb[0].mxu0
        %v1639 = vadd.f32 0.0, %v1638
        %v1640 = vpop.f32.mrb[0].mxu0
        %v1641 = vadd.f32 0.0, %v1640
        %1642 = vdwg.mxu0
        %v1643 = vld [vmem:[#allocation17] sm:$0xff]
        %v1644 = vld [vmem:[#allocation17 + $0x8] sm:$0xff]
        %v1645 = vld [vmem:[#allocation17 + $0x10] sm:$0xff]
        %v1646 = vld [vmem:[#allocation17 + $0x18] sm:$0xff]
        %v1647 = vld [vmem:[#allocation17 + $0x20] sm:$0xff]
        %v1648 = vld [vmem:[#allocation17 + $0x28] sm:$0xff]
        %v1649 = vld [vmem:[#allocation17 + $0x30] sm:$0xff]
        %v1650 = vld [vmem:[#allocation17 + $0x38] sm:$0xff]
        %v1651 = vld [vmem:[#allocation17 + $0x40] sm:$0xff]
        %v1652 = vld [vmem:[#allocation17 + $0x48] sm:$0xff]
        %v1653 = vld [vmem:[#allocation17 + $0x50] sm:$0xff]
        %v1654 = vld [vmem:[#allocation17 + $0x58] sm:$0xff]
        %v1655 = vld [vmem:[#allocation17 + $0x60] sm:$0xff]
        %v1656 = vld [vmem:[#allocation17 + $0x68] sm:$0xff]
        %v1657 = vld [vmem:[#allocation17 + $0x70] sm:$0xff]
        %v1658 = vld [vmem:[#allocation17 + $0x78] sm:$0xff]
        %v1659 = vld [vmem:[#allocation17 + $0x80] sm:$0xff]
        %v1660 = vld [vmem:[#allocation17 + $0x88] sm:$0xff]
        %v1661 = vld [vmem:[#allocation17 + $0x90] sm:$0xff]
        %v1662 = vld [vmem:[#allocation17 + $0x98] sm:$0xff]
        %v1663 = vld [vmem:[#allocation17 + $0xa0] sm:$0xff]
        %v1664 = vld [vmem:[#allocation17 + $0xa8] sm:$0xff]
        %v1665 = vld [vmem:[#allocation17 + $0xb0] sm:$0xff]
        %v1666 = vld [vmem:[#allocation17 + $0xb8] sm:$0xff]
        %v1667 = vld [vmem:[#allocation17 + $0xc0] sm:$0xff]
        %v1668 = vld [vmem:[#allocation17 + $0xc8] sm:$0xff]
        %v1669 = vld [vmem:[#allocation17 + $0xd0] sm:$0xff]
        %v1670 = vld [vmem:[#allocation17 + $0xd8] sm:$0xff]
        %v1671 = vld [vmem:[#allocation17 + $0xe0] sm:$0xff]
        %v1672 = vld [vmem:[#allocation17 + $0xe8] sm:$0xff]
        %v1673 = vld [vmem:[#allocation17 + $0xf0] sm:$0xff]
        %v1674 = vld [vmem:[#allocation17 + $0xf8] sm:$0xff]
        %v1707 = vunpack.c.l.b16 %v1643
        %v1708 = vunpack.c.h.b16 %v1643
        %v1709 = vunpack.c.l.b16 %v1644
        %v1710 = vunpack.c.h.b16 %v1644
        %v1711 = vunpack.c.l.b16 %v1645
        %v1712 = vunpack.c.h.b16 %v1645
        %v1713 = vunpack.c.l.b16 %v1646
        %v1714 = vunpack.c.h.b16 %v1646
        %v1715 = vunpack.c.l.b16 %v1647
        %v1716 = vunpack.c.h.b16 %v1647
        %v1717 = vunpack.c.l.b16 %v1648
        %v1718 = vunpack.c.h.b16 %v1648
        %v1719 = vunpack.c.l.b16 %v1649
        %v1720 = vunpack.c.h.b16 %v1649
        %v1721 = vunpack.c.l.b16 %v1650
        %v1722 = vunpack.c.h.b16 %v1650
        %v1723 = vunpack.c.l.b16 %v1651
        %v1724 = vunpack.c.h.b16 %v1651
        %v1725 = vunpack.c.l.b16 %v1652
        %v1726 = vunpack.c.h.b16 %v1652
        %v1727 = vunpack.c.l.b16 %v1653
        %v1728 = vunpack.c.h.b16 %v1653
        %v1729 = vunpack.c.l.b16 %v1654
        %v1730 = vunpack.c.h.b16 %v1654
        %v1731 = vunpack.c.l.b16 %v1655
        %v1732 = vunpack.c.h.b16 %v1655
        %v1733 = vunpack.c.l.b16 %v1656
        %v1734 = vunpack.c.h.b16 %v1656
        %v1735 = vunpack.c.l.b16 %v1657
        %v1736 = vunpack.c.h.b16 %v1657
        %v1737 = vunpack.c.l.b16 %v1658
        %v1738 = vunpack.c.h.b16 %v1658
        %v1739 = vunpack.c.l.b16 %v1659
        %v1740 = vunpack.c.h.b16 %v1659
        %v1741 = vunpack.c.l.b16 %v1660
        %v1742 = vunpack.c.h.b16 %v1660
        %v1743 = vunpack.c.l.b16 %v1661
        %v1744 = vunpack.c.h.b16 %v1661
        %v1745 = vunpack.c.l.b16 %v1662
        %v1746 = vunpack.c.h.b16 %v1662
        %v1747 = vunpack.c.l.b16 %v1663
        %v1748 = vunpack.c.h.b16 %v1663
        %v1749 = vunpack.c.l.b16 %v1664
        %v1750 = vunpack.c.h.b16 %v1664
        %v1751 = vunpack.c.l.b16 %v1665
        %v1752 = vunpack.c.h.b16 %v1665
        %v1753 = vunpack.c.l.b16 %v1666
        %v1754 = vunpack.c.h.b16 %v1666
        %v1755 = vunpack.c.l.b16 %v1667
        %v1756 = vunpack.c.h.b16 %v1667
        %v1757 = vunpack.c.l.b16 %v1668
        %v1758 = vunpack.c.h.b16 %v1668
        %v1759 = vunpack.c.l.b16 %v1669
        %v1760 = vunpack.c.h.b16 %v1669
        %v1761 = vunpack.c.l.b16 %v1670
        %v1762 = vunpack.c.h.b16 %v1670
        %v1763 = vunpack.c.l.b16 %v1671
        %v1764 = vunpack.c.h.b16 %v1671
        %v1765 = vunpack.c.l.b16 %v1672
        %v1766 = vunpack.c.h.b16 %v1672
        %v1767 = vunpack.c.l.b16 %v1673
        %v1768 = vunpack.c.h.b16 %v1673
        %v1769 = vunpack.c.l.b16 %v1674
        %v1770 = vunpack.c.h.b16 %v1674
        %v1771 = vpack.c.b16 %v1709, %v1707
        %v1772 = vpack.c.b16 %v1710, %v1708
        %v1773 = vpack.c.b16 %v1713, %v1711
        %v1774 = vpack.c.b16 %v1714, %v1712
        %v1775 = vpack.c.b16 %v1717, %v1715
        %v1776 = vpack.c.b16 %v1718, %v1716
        %v1777 = vpack.c.b16 %v1721, %v1719
        %v1778 = vpack.c.b16 %v1722, %v1720
        %v1779 = vpack.c.b16 %v1725, %v1723
        %v1780 = vpack.c.b16 %v1726, %v1724
        %v1781 = vpack.c.b16 %v1729, %v1727
        %v1782 = vpack.c.b16 %v1730, %v1728
        %v1783 = vpack.c.b16 %v1733, %v1731
        %v1784 = vpack.c.b16 %v1734, %v1732
        %v1785 = vpack.c.b16 %v1737, %v1735
        %v1786 = vpack.c.b16 %v1738, %v1736
        %v1787 = vpack.c.b16 %v1741, %v1739
        %v1788 = vpack.c.b16 %v1742, %v1740
        %v1789 = vpack.c.b16 %v1745, %v1743
        %v1790 = vpack.c.b16 %v1746, %v1744
        %v1791 = vpack.c.b16 %v1749, %v1747
        %v1792 = vpack.c.b16 %v1750, %v1748
        %v1793 = vpack.c.b16 %v1753, %v1751
        %v1794 = vpack.c.b16 %v1754, %v1752
        %v1795 = vpack.c.b16 %v1757, %v1755
        %v1796 = vpack.c.b16 %v1758, %v1756
        %v1797 = vpack.c.b16 %v1761, %v1759
        %v1798 = vpack.c.b16 %v1762, %v1760
        %v1799 = vpack.c.b16 %v1765, %v1763
        %v1800 = vpack.c.b16 %v1766, %v1764
        %v1801 = vpack.c.b16 %v1769, %v1767
        %v1802 = vpack.c.b16 %v1770, %v1768
        %1835 = vmatprep.subr.bf16.mxu0 %v1772
        %1836 = vmatpush1.bf16.msra.mxu0 %v1771
        %1837 = vmatprep.subr.bf16.mxu0 %v1774
        %1838 = vmatpush1.bf16.msra.mxu0 %v1773
        %1839 = vmatprep.subr.bf16.mxu0 %v1776
        %1840 = vmatpush1.bf16.msra.mxu0 %v1775
        %1841 = vmatprep.subr.bf16.mxu0 %v1778
        %1842 = vmatpush1.bf16.msra.mxu0 %v1777
        %1843 = vmatprep.subr.bf16.mxu0 %v1780
        %1844 = vmatpush1.bf16.msra.mxu0 %v1779
        %1845 = vmatprep.subr.bf16.mxu0 %v1782
        %1846 = vmatpush1.bf16.msra.mxu0 %v1781
        %1847 = vmatprep.subr.bf16.mxu0 %v1784
        %1848 = vmatpush1.bf16.msra.mxu0 %v1783
        %1849 = vmatprep.subr.bf16.mxu0 %v1786
        %1850 = vmatpush1.bf16.msra.mxu0 %v1785
        %1851 = vmatprep.subr.bf16.mxu0 %v1788
        %1852 = vmatpush1.bf16.msra.mxu0 %v1787
        %1853 = vmatprep.subr.bf16.mxu0 %v1790
        %1854 = vmatpush1.bf16.msra.mxu0 %v1789
        %1855 = vmatprep.subr.bf16.mxu0 %v1792
        %1856 = vmatpush1.bf16.msra.mxu0 %v1791
        %1857 = vmatprep.subr.bf16.mxu0 %v1794
        %1858 = vmatpush1.bf16.msra.mxu0 %v1793
        %1859 = vmatprep.subr.bf16.mxu0 %v1796
        %1860 = vmatpush1.bf16.msra.mxu0 %v1795
        %1861 = vmatprep.subr.bf16.mxu0 %v1798
        %1862 = vmatpush1.bf16.msra.mxu0 %v1797
        %1863 = vmatprep.subr.bf16.mxu0 %v1800
        %1864 = vmatpush1.bf16.msra.mxu0 %v1799
        %1865 = vmatprep.subr.bf16.mxu0 %v1802
        %1866 = vmatpush1.bf16.msra.mxu0 %v1801
        %1867 = vmatprep.mubr.bf16.mxu0 %v1018
        %1868 = vmatmul.mubr.bf16.gmra.mrb[0].mxu0 %v1017
        %v1869 = vpop.f32.mrb[0].mxu0
        %v1870 = vadd.f32 0.0, %v1869
        %v1871 = vpop.f32.mrb[0].mxu0
        %v1872 = vadd.f32 0.0, %v1871
        %v1873 = vpop.f32.mrb[0].mxu0
        %v1874 = vadd.f32 0.0, %v1873
        %v1875 = vpop.f32.mrb[0].mxu0
        %v1876 = vadd.f32 0.0, %v1875
        %1877 = vmatprep.mubr.bf16.mxu0 %v1020
        %1878 = vmatmul.mubr.bf16.gmra.mrb[0].mxu0 %v1019
        %v1879 = vpop.f32.mrb[0].mxu0
        %v1880 = vadd.f32 0.0, %v1879
        %v1881 = vpop.f32.mrb[0].mxu0
        %v1882 = vadd.f32 0.0, %v1881
        %v1883 = vpop.f32.mrb[0].mxu0
        %v1884 = vadd.f32 0.0, %v1883
        %v1885 = vpop.f32.mrb[0].mxu0
        %v1886 = vadd.f32 0.0, %v1885
        %1887 = vmatprep.mubr.bf16.mxu0 %v1022
        %1888 = vmatmul.mubr.bf16.gmra.mrb[0].mxu0 %v1021
        %v1889 = vpop.f32.mrb[0].mxu0
        %v1890 = vadd.f32 0.0, %v1889
        %v1891 = vpop.f32.mrb[0].mxu0
        %v1892 = vadd.f32 0.0, %v1891
        %v1893 = vpop.f32.mrb[0].mxu0
        %v1894 = vadd.f32 0.0, %v1893
        %v1895 = vpop.f32.mrb[0].mxu0
        %v1896 = vadd.f32 0.0, %v1895
        %1897 = vmatprep.mubr.bf16.mxu0 %v1024
        %1898 = vmatmul.mubr.bf16.gmra.mrb[0].mxu0 %v1023
        %v1899 = vpop.f32.mrb[0].mxu0
        %v1900 = vadd.f32 0.0, %v1899
        %v1901 = vpop.f32.mrb[0].mxu0
        %v1902 = vadd.f32 0.0, %v1901
        %v1903 = vpop.f32.mrb[0].mxu0
        %v1904 = vadd.f32 0.0, %v1903
        %v1905 = vpop.f32.mrb[0].mxu0
        %v1906 = vadd.f32 0.0, %v1905
        %1907 = vmatprep.mubr.bf16.mxu0 %v1026
        %1908 = vmatmul.mubr.bf16.gmra.mrb[0].mxu0 %v1025
        %v1909 = vpop.f32.mrb[0].mxu0
        %v1910 = vadd.f32 0.0, %v1909
        %v1911 = vpop.f32.mrb[0].mxu0
        %v1912 = vadd.f32 0.0, %v1911
        %v1913 = vpop.f32.mrb[0].mxu0
        %v1914 = vadd.f32 0.0, %v1913
        %v1915 = vpop.f32.mrb[0].mxu0
        %v1916 = vadd.f32 0.0, %v1915
        %1917 = vmatprep.mubr.bf16.mxu0 %v1028
        %1918 = vmatmul.mubr.bf16.gmra.mrb[0].mxu0 %v1027
        %v1919 = vpop.f32.mrb[0].mxu0
        %v1920 = vadd.f32 0.0, %v1919
        %v1921 = vpop.f32.mrb[0].mxu0
        %v1922 = vadd.f32 0.0, %v1921
        %v1923 = vpop.f32.mrb[0].mxu0
        %v1924 = vadd.f32 0.0, %v1923
        %v1925 = vpop.f32.mrb[0].mxu0
        %v1926 = vadd.f32 0.0, %v1925
        %1927 = vmatprep.mubr.bf16.mxu0 %v1030
        %1928 = vmatmul.mubr.bf16.gmra.mrb[0].mxu0 %v1029
        %v1929 = vpop.f32.mrb[0].mxu0
        %v1930 = vadd.f32 0.0, %v1929
        %v1931 = vpop.f32.mrb[0].mxu0
        %v1932 = vadd.f32 0.0, %v1931
        %v1933 = vpop.f32.mrb[0].mxu0
        %v1934 = vadd.f32 0.0, %v1933
        %v1935 = vpop.f32.mrb[0].mxu0
        %v1936 = vadd.f32 0.0, %v1935
        %1937 = vmatprep.mubr.bf16.mxu0 %v1032
        %1938 = vmatmul.mubr.bf16.gmra.mrb[0].mxu0 %v1031
        %v1939 = vpop.f32.mrb[0].mxu0
        %v1940 = vadd.f32 0.0, %v1939
        %v1941 = vpop.f32.mrb[0].mxu0
        %v1942 = vadd.f32 0.0, %v1941
        %v1943 = vpop.f32.mrb[0].mxu0
        %v1944 = vadd.f32 0.0, %v1943
        %v1945 = vpop.f32.mrb[0].mxu0
        %v1946 = vadd.f32 0.0, %v1945
        %1947 = vdwg.mxu0
        %v1948 = vld [vmem:[#allocation19] sm:$0xff]
        %v1949 = vld [vmem:[#allocation19 + $0x8] sm:$0xff]
        %v1950 = vld [vmem:[#allocation19 + $0x10] sm:$0xff]
        %v1951 = vld [vmem:[#allocation19 + $0x18] sm:$0xff]
        %v1952 = vld [vmem:[#allocation19 + $0x20] sm:$0xff]
        %v1953 = vld [vmem:[#allocation19 + $0x28] sm:$0xff]
        %v1954 = vld [vmem:[#allocation19 + $0x30] sm:$0xff]
        %v1955 = vld [vmem:[#allocation19 + $0x38] sm:$0xff]
        %v1956 = vld [vmem:[#allocation19 + $0x40] sm:$0xff]
        %v1957 = vld [vmem:[#allocation19 + $0x48] sm:$0xff]
        %v1958 = vld [vmem:[#allocation19 + $0x50] sm:$0xff]
        %v1959 = vld [vmem:[#allocation19 + $0x58] sm:$0xff]
        %v1960 = vld [vmem:[#allocation19 + $0x60] sm:$0xff]
        %v1961 = vld [vmem:[#allocation19 + $0x68] sm:$0xff]
        %v1962 = vld [vmem:[#allocation19 + $0x70] sm:$0xff]
        %v1963 = vld [vmem:[#allocation19 + $0x78] sm:$0xff]
        %v1964 = vld [vmem:[#allocation19 + $0x80] sm:$0xff]
        %v1965 = vld [vmem:[#allocation19 + $0x88] sm:$0xff]
        %v1966 = vld [vmem:[#allocation19 + $0x90] sm:$0xff]
        %v1967 = vld [vmem:[#allocation19 + $0x98] sm:$0xff]
        %v1968 = vld [vmem:[#allocation19 + $0xa0] sm:$0xff]
        %v1969 = vld [vmem:[#allocation19 + $0xa8] sm:$0xff]
        %v1970 = vld [vmem:[#allocation19 + $0xb0] sm:$0xff]
        %v1971 = vld [vmem:[#allocation19 + $0xb8] sm:$0xff]
        %v1972 = vld [vmem:[#allocation19 + $0xc0] sm:$0xff]
        %v1973 = vld [vmem:[#allocation19 + $0xc8] sm:$0xff]
        %v1974 = vld [vmem:[#allocation19 + $0xd0] sm:$0xff]
        %v1975 = vld [vmem:[#allocation19 + $0xd8] sm:$0xff]
        %v1976 = vld [vmem:[#allocation19 + $0xe0] sm:$0xff]
        %v1977 = vld [vmem:[#allocation19 + $0xe8] sm:$0xff]
        %v1978 = vld [vmem:[#allocation19 + $0xf0] sm:$0xff]
        %v1979 = vld [vmem:[#allocation19 + $0xf8] sm:$0xff]
        %v2012 = vunpack.c.l.b16 %v1948
        %v2013 = vunpack.c.h.b16 %v1948
        %v2014 = vunpack.c.l.b16 %v1949
        %v2015 = vunpack.c.h.b16 %v1949
        %v2016 = vunpack.c.l.b16 %v1950
        %v2017 = vunpack.c.h.b16 %v1950
        %v2018 = vunpack.c.l.b16 %v1951
        %v2019 = vunpack.c.h.b16 %v1951
        %v2020 = vunpack.c.l.b16 %v1952
        %v2021 = vunpack.c.h.b16 %v1952
        %v2022 = vunpack.c.l.b16 %v1953
        %v2023 = vunpack.c.h.b16 %v1953
        %v2024 = vunpack.c.l.b16 %v1954
        %v2025 = vunpack.c.h.b16 %v1954
        %v2026 = vunpack.c.l.b16 %v1955
        %v2027 = vunpack.c.h.b16 %v1955
        %v2028 = vunpack.c.l.b16 %v1956
        %v2029 = vunpack.c.h.b16 %v1956
        %v2030 = vunpack.c.l.b16 %v1957
        %v2031 = vunpack.c.h.b16 %v1957
        %v2032 = vunpack.c.l.b16 %v1958
        %v2033 = vunpack.c.h.b16 %v1958
        %v2034 = vunpack.c.l.b16 %v1959
        %v2035 = vunpack.c.h.b16 %v1959
        %v2036 = vunpack.c.l.b16 %v1960
        %v2037 = vunpack.c.h.b16 %v1960
        %v2038 = vunpack.c.l.b16 %v1961
        %v2039 = vunpack.c.h.b16 %v1961
        %v2040 = vunpack.c.l.b16 %v1962
        %v2041 = vunpack.c.h.b16 %v1962
        %v2042 = vunpack.c.l.b16 %v1963
        %v2043 = vunpack.c.h.b16 %v1963
        %v2044 = vunpack.c.l.b16 %v1964
        %v2045 = vunpack.c.h.b16 %v1964
        %v2046 = vunpack.c.l.b16 %v1965
        %v2047 = vunpack.c.h.b16 %v1965
        %v2048 = vunpack.c.l.b16 %v1966
        %v2049 = vunpack.c.h.b16 %v1966
        %v2050 = vunpack.c.l.b16 %v1967
        %v2051 = vunpack.c.h.b16 %v1967
        %v2052 = vunpack.c.l.b16 %v1968
        %v2053 = vunpack.c.h.b16 %v1968
        %v2054 = vunpack.c.l.b16 %v1969
        %v2055 = vunpack.c.h.b16 %v1969
        %v2056 = vunpack.c.l.b16 %v1970
        %v2057 = vunpack.c.h.b16 %v1970
        %v2058 = vunpack.c.l.b16 %v1971
        %v2059 = vunpack.c.h.b16 %v1971
        %v2060 = vunpack.c.l.b16 %v1972
        %v2061 = vunpack.c.h.b16 %v1972
        %v2062 = vunpack.c.l.b16 %v1973
        %v2063 = vunpack.c.h.b16 %v1973
        %v2064 = vunpack.c.l.b16 %v1974
        %v2065 = vunpack.c.h.b16 %v1974
        %v2066 = vunpack.c.l.b16 %v1975
        %v2067 = vunpack.c.h.b16 %v1975
        %v2068 = vunpack.c.l.b16 %v1976
        %v2069 = vunpack.c.h.b16 %v1976
        %v2070 = vunpack.c.l.b16 %v1977
        %v2071 = vunpack.c.h.b16 %v1977
        %v2072 = vunpack.c.l.b16 %v1978
        %v2073 = vunpack.c.h.b16 %v1978
        %v2074 = vunpack.c.l.b16 %v1979
        %v2075 = vunpack.c.h.b16 %v1979
        %v2076 = vpack.c.b16 %v2014, %v2012
        %v2077 = vpack.c.b16 %v2015, %v2013
        %v2078 = vpack.c.b16 %v2018, %v2016
        %v2079 = vpack.c.b16 %v2019, %v2017
        %v2080 = vpack.c.b16 %v2022, %v2020
        %v2081 = vpack.c.b16 %v2023, %v2021
        %v2082 = vpack.c.b16 %v2026, %v2024
        %v2083 = vpack.c.b16 %v2027, %v2025
        %v2084 = vpack.c.b16 %v2030, %v2028
        %v2085 = vpack.c.b16 %v2031, %v2029
        %v2086 = vpack.c.b16 %v2034, %v2032
        %v2087 = vpack.c.b16 %v2035, %v2033
        %v2088 = vpack.c.b16 %v2038, %v2036
        %v2089 = vpack.c.b16 %v2039, %v2037
        %v2090 = vpack.c.b16 %v2042, %v2040
        %v2091 = vpack.c.b16 %v2043, %v2041
        %v2092 = vpack.c.b16 %v2046, %v2044
        %v2093 = vpack.c.b16 %v2047, %v2045
        %v2094 = vpack.c.b16 %v2050, %v2048
        %v2095 = vpack.c.b16 %v2051, %v2049
        %v2096 = vpack.c.b16 %v2054, %v2052
        %v2097 = vpack.c.b16 %v2055, %v2053
        %v2098 = vpack.c.b16 %v2058, %v2056
        %v2099 = vpack.c.b16 %v2059, %v2057
        %v2100 = vpack.c.b16 %v2062, %v2060
        %v2101 = vpack.c.b16 %v2063, %v2061
        %v2102 = vpack.c.b16 %v2066, %v2064
        %v2103 = vpack.c.b16 %v2067, %v2065
        %v2104 = vpack.c.b16 %v2070, %v2068
        %v2105 = vpack.c.b16 %v2071, %v2069
        %v2106 = vpack.c.b16 %v2074, %v2072
        %v2107 = vpack.c.b16 %v2075, %v2073
        %2140 = vmatprep.subr.bf16.mxu0 %v2077
        %2141 = vmatpush1.bf16.msra.mxu0 %v2076
        %2142 = vmatprep.subr.bf16.mxu0 %v2079
        %2143 = vmatpush1.bf16.msra.mxu0 %v2078
        %2144 = vmatprep.subr.bf16.mxu0 %v2081
        %2145 = vmatpush1.bf16.msra.mxu0 %v2080
        %2146 = vmatprep.subr.bf16.mxu0 %v2083
        %2147 = vmatpush1.bf16.msra.mxu0 %v2082
        %2148 = vmatprep.subr.bf16.mxu0 %v2085
        %2149 = vmatpush1.bf16.msra.mxu0 %v2084
        %2150 = vmatprep.subr.bf16.mxu0 %v2087
        %2151 = vmatpush1.bf16.msra.mxu0 %v2086
        %2152 = vmatprep.subr.bf16.mxu0 %v2089
        %2153 = vmatpush1.bf16.msra.mxu0 %v2088
        %2154 = vmatprep.subr.bf16.mxu0 %v2091
        %2155 = vmatpush1.bf16.msra.mxu0 %v2090
        %2156 = vmatprep.subr.bf16.mxu0 %v2093
        %2157 = vmatpush1.bf16.msra.mxu0 %v2092
        %2158 = vmatprep.subr.bf16.mxu0 %v2095
        %2159 = vmatpush1.bf16.msra.mxu0 %v2094
        %2160 = vmatprep.subr.bf16.mxu0 %v2097
        %2161 = vmatpush1.bf16.msra.mxu0 %v2096
        %2162 = vmatprep.subr.bf16.mxu0 %v2099
        %2163 = vmatpush1.bf16.msra.mxu0 %v2098
        %2164 = vmatprep.subr.bf16.mxu0 %v2101
        %2165 = vmatpush1.bf16.msra.mxu0 %v2100
        %2166 = vmatprep.subr.bf16.mxu0 %v2103
        %2167 = vmatpush1.bf16.msra.mxu0 %v2102
        %2168 = vmatprep.subr.bf16.mxu0 %v2105
        %2169 = vmatpush1.bf16.msra.mxu0 %v2104
        %2170 = vmatprep.subr.bf16.mxu0 %v2107
        %2171 = vmatpush1.bf16.msra.mxu0 %v2106
        %2172 = vmatprep.mubr.bf16.mxu0 %v1018
        %2173 = vmatmul.mubr.bf16.gmra.mrb[0].mxu0 %v1017
        %v2174 = vpop.f32.mrb[0].mxu0
        %v2175 = vadd.f32 0.0, %v2174
        %v2176 = vpop.f32.mrb[0].mxu0
        %v2177 = vadd.f32 0.0, %v2176
        %v2178 = vpop.f32.mrb[0].mxu0
        %v2179 = vadd.f32 0.0, %v2178
        %v2180 = vpop.f32.mrb[0].mxu0
        %v2181 = vadd.f32 0.0, %v2180
        %2182 = vmatprep.mubr.bf16.mxu0 %v1020
        %2183 = vmatmul.mubr.bf16.gmra.mrb[0].mxu0 %v1019
        %v2184 = vpop.f32.mrb[0].mxu0
        %v2185 = vadd.f32 0.0, %v2184
        %v2186 = vpop.f32.mrb[0].mxu0
        %v2187 = vadd.f32 0.0, %v2186
        %v2188 = vpop.f32.mrb[0].mxu0
        %v2189 = vadd.f32 0.0, %v2188
        %v2190 = vpop.f32.mrb[0].mxu0
        %v2191 = vadd.f32 0.0, %v2190
        %2192 = vmatprep.mubr.bf16.mxu0 %v1022
        %2193 = vmatmul.mubr.bf16.gmra.mrb[0].mxu0 %v1021
        %v2194 = vpop.f32.mrb[0].mxu0
        %v2195 = vadd.f32 0.0, %v2194
        %v2196 = vpop.f32.mrb[0].mxu0
        %v2197 = vadd.f32 0.0, %v2196
        %v2198 = vpop.f32.mrb[0].mxu0
        %v2199 = vadd.f32 0.0, %v2198
        %v2200 = vpop.f32.mrb[0].mxu0
        %v2201 = vadd.f32 0.0, %v2200
        %2202 = vmatprep.mubr.bf16.mxu0 %v1024
        %2203 = vmatmul.mubr.bf16.gmra.mrb[0].mxu0 %v1023
        %v2204 = vpop.f32.mrb[0].mxu0
        %v2205 = vadd.f32 0.0, %v2204
        %v2206 = vpop.f32.mrb[0].mxu0
        %v2207 = vadd.f32 0.0, %v2206
        %v2208 = vpop.f32.mrb[0].mxu0
        %v2209 = vadd.f32 0.0, %v2208
        %v2210 = vpop.f32.mrb[0].mxu0
        %v2211 = vadd.f32 0.0, %v2210
        %2212 = vmatprep.mubr.bf16.mxu0 %v1026
        %2213 = vmatmul.mubr.bf16.gmra.mrb[0].mxu0 %v1025
        %v2214 = vpop.f32.mrb[0].mxu0
        %v2215 = vadd.f32 0.0, %v2214
        %v2216 = vpop.f32.mrb[0].mxu0
        %v2217 = vadd.f32 0.0, %v2216
        %v2218 = vpop.f32.mrb[0].mxu0
        %v2219 = vadd.f32 0.0, %v2218
        %v2220 = vpop.f32.mrb[0].mxu0
        %v2221 = vadd.f32 0.0, %v2220
        %2222 = vmatprep.mubr.bf16.mxu0 %v1028
        %2223 = vmatmul.mubr.bf16.gmra.mrb[0].mxu0 %v1027
        %v2224 = vpop.f32.mrb[0].mxu0
        %v2225 = vadd.f32 0.0, %v2224
        %v2226 = vpop.f32.mrb[0].mxu0
        %v2227 = vadd.f32 0.0, %v2226
        %v2228 = vpop.f32.mrb[0].mxu0
        %v2229 = vadd.f32 0.0, %v2228
        %v2230 = vpop.f32.mrb[0].mxu0
        %v2231 = vadd.f32 0.0, %v2230
        %2232 = vmatprep.mubr.bf16.mxu0 %v1030
        %2233 = vmatmul.mubr.bf16.gmra.mrb[0].mxu0 %v1029
        %v2234 = vpop.f32.mrb[0].mxu0
        %v2235 = vadd.f32 0.0, %v2234
        %v2236 = vpop.f32.mrb[0].mxu0
        %v2237 = vadd.f32 0.0, %v2236
        %v2238 = vpop.f32.mrb[0].mxu0
        %v2239 = vadd.f32 0.0, %v2238
        %v2240 = vpop.f32.mrb[0].mxu0
        %v2241 = vadd.f32 0.0, %v2240
        %2242 = vmatprep.mubr.bf16.mxu0 %v1032
        %2243 = vmatmul.mubr.bf16.gmra.mrb[0].mxu0 %v1031
        %v2244 = vpop.f32.mrb[0].mxu0
        %v2245 = vadd.f32 0.0, %v2244
        %v2246 = vpop.f32.mrb[0].mxu0
        %v2247 = vadd.f32 0.0, %v2246
        %v2248 = vpop.f32.mrb[0].mxu0
        %v2249 = vadd.f32 0.0, %v2248
        %v2250 = vpop.f32.mrb[0].mxu0
        %v2251 = vadd.f32 0.0, %v2250
        %2252 = vdwg.mxu0
        %v2253 = vpack.c.bf16 %v2179, %v2175
        %v2254 = vpack.c.bf16 %v2181, %v2177
        %v2255 = vpack.c.bf16 %v2189, %v2185
        %v2256 = vpack.c.bf16 %v2191, %v2187
        %v2257 = vpack.c.bf16 %v2199, %v2195
        %v2258 = vpack.c.bf16 %v2201, %v2197
        %v2259 = vpack.c.bf16 %v2209, %v2205
        %v2260 = vpack.c.bf16 %v2211, %v2207
        %v2261 = vpack.c.bf16 %v2219, %v2215
        %v2262 = vpack.c.bf16 %v2221, %v2217
        %v2263 = vpack.c.bf16 %v2229, %v2225
        %v2264 = vpack.c.bf16 %v2231, %v2227
        %v2265 = vpack.c.bf16 %v2239, %v2235
        %v2266 = vpack.c.bf16 %v2241, %v2237
        %v2267 = vpack.c.bf16 %v2249, %v2245
        %v2268 = vpack.c.bf16 %v2251, %v2247
        %v2285 = vunpack.c.l.b16 %v2253
        %v2286 = vunpack.c.l.b16 %v2254
        %v2287 = vunpack.c.h.b16 %v2253
        %v2288 = vunpack.c.h.b16 %v2254
        %v2289 = vunpack.c.l.b16 %v2255
        %v2290 = vunpack.c.l.b16 %v2256
        %v2291 = vunpack.c.h.b16 %v2255
        %v2292 = vunpack.c.h.b16 %v2256
        %v2293 = vunpack.c.l.b16 %v2257
        %v2294 = vunpack.c.l.b16 %v2258
        %v2295 = vunpack.c.h.b16 %v2257
        %v2296 = vunpack.c.h.b16 %v2258
        %v2297 = vunpack.c.l.b16 %v2259
        %v2298 = vunpack.c.l.b16 %v2260
        %v2299 = vunpack.c.h.b16 %v2259
        %v2300 = vunpack.c.h.b16 %v2260
        %v2301 = vunpack.c.l.b16 %v2261
        %v2302 = vunpack.c.l.b16 %v2262
        %v2303 = vunpack.c.h.b16 %v2261
        %v2304 = vunpack.c.h.b16 %v2262
        %v2305 = vunpack.c.l.b16 %v2263
        %v2306 = vunpack.c.l.b16 %v2264
        %v2307 = vunpack.c.h.b16 %v2263
        %v2308 = vunpack.c.h.b16 %v2264
        %v2309 = vunpack.c.l.b16 %v2265
        %v2310 = vunpack.c.l.b16 %v2266
        %v2311 = vunpack.c.h.b16 %v2265
        %v2312 = vunpack.c.h.b16 %v2266
        %v2313 = vunpack.c.l.b16 %v2267
        %v2314 = vunpack.c.l.b16 %v2268
        %v2315 = vunpack.c.h.b16 %v2267
        %v2316 = vunpack.c.h.b16 %v2268
        %v2317 = vpack.c.b16 %v2286, %v2285
        %v2318 = vpack.c.b16 %v2288, %v2287
        %v2319 = vpack.c.b16 %v2290, %v2289
        %v2320 = vpack.c.b16 %v2292, %v2291
        %v2321 = vpack.c.b16 %v2294, %v2293
        %v2322 = vpack.c.b16 %v2296, %v2295
        %v2323 = vpack.c.b16 %v2298, %v2297
        %v2324 = vpack.c.b16 %v2300, %v2299
        %v2325 = vpack.c.b16 %v2302, %v2301
        %v2326 = vpack.c.b16 %v2304, %v2303
        %v2327 = vpack.c.b16 %v2306, %v2305
        %v2328 = vpack.c.b16 %v2308, %v2307
        %v2329 = vpack.c.b16 %v2310, %v2309
        %v2330 = vpack.c.b16 %v2312, %v2311
        %v2331 = vpack.c.b16 %v2314, %v2313
        %v2332 = vpack.c.b16 %v2316, %v2315
        %2349 = vst [vmem:[%s770] sm:$0xff] %v2317
        %2350 = vst [vmem:[%s770 + $0x8] sm:$0xff] %v2318
        %2351 = vst [vmem:[%s770 + $0x10] sm:$0xff] %v2319
        %2352 = vst [vmem:[%s770 + $0x18] sm:$0xff] %v2320
        %2353 = vst [vmem:[%s770 + $0x20] sm:$0xff] %v2321
        %2354 = vst [vmem:[%s770 + $0x28] sm:$0xff] %v2322
        %2355 = vst [vmem:[%s770 + $0x30] sm:$0xff] %v2323
        %2356 = vst [vmem:[%s770 + $0x38] sm:$0xff] %v2324
        %2357 = vst [vmem:[%s770 + $0x40] sm:$0xff] %v2325
        %2358 = vst [vmem:[%s770 + $0x48] sm:$0xff] %v2326
        %2359 = vst [vmem:[%s770 + $0x50] sm:$0xff] %v2327
        %2360 = vst [vmem:[%s770 + $0x58] sm:$0xff] %v2328
        %2361 = vst [vmem:[%s770 + $0x60] sm:$0xff] %v2329
        %2362 = vst [vmem:[%s770 + $0x68] sm:$0xff] %v2330
        %2363 = vst [vmem:[%s770 + $0x70] sm:$0xff] %v2331
        %2364 = vst [vmem:[%s770 + $0x78] sm:$0xff] %v2332
        %v2365 = vld [vmem:[%s627] sm:$0xff]
        %v2366 = vld [vmem:[%s627 + $0x8] sm:$0xff]
        %v2367 = vld [vmem:[%s627 + $0x10] sm:$0xff]
        %v2368 = vld [vmem:[%s627 + $0x18] sm:$0xff]
        %v2369 = vld [vmem:[%s627 + $0x20] sm:$0xff]
        %v2370 = vld [vmem:[%s627 + $0x28] sm:$0xff]
        %v2371 = vld [vmem:[%s627 + $0x30] sm:$0xff]
        %v2372 = vld [vmem:[%s627 + $0x38] sm:$0xff]
        %v2373 = vld [vmem:[%s627 + $0x40] sm:$0xff]
        %v2374 = vld [vmem:[%s627 + $0x48] sm:$0xff]
        %v2375 = vld [vmem:[%s627 + $0x50] sm:$0xff]
        %v2376 = vld [vmem:[%s627 + $0x58] sm:$0xff]
        %v2377 = vld [vmem:[%s627 + $0x60] sm:$0xff]
        %v2378 = vld [vmem:[%s627 + $0x68] sm:$0xff]
        %v2379 = vld [vmem:[%s627 + $0x70] sm:$0xff]
        %v2380 = vld [vmem:[%s627 + $0x78] sm:$0xff]
        %v2381 = vld [vmem:[%s627 + $0x80] sm:$0xff]
        %v2382 = vld [vmem:[%s627 + $0x88] sm:$0xff]
        %v2383 = vld [vmem:[%s627 + $0x90] sm:$0xff]
        %v2384 = vld [vmem:[%s627 + $0x98] sm:$0xff]
        %v2385 = vld [vmem:[%s627 + $0xa0] sm:$0xff]
        %v2386 = vld [vmem:[%s627 + $0xa8] sm:$0xff]
        %v2387 = vld [vmem:[%s627 + $0xb0] sm:$0xff]
        %v2388 = vld [vmem:[%s627 + $0xb8] sm:$0xff]
        %v2389 = vld [vmem:[%s627 + $0xc0] sm:$0xff]
        %v2390 = vld [vmem:[%s627 + $0xc8] sm:$0xff]
        %v2391 = vld [vmem:[%s627 + $0xd0] sm:$0xff]
        %v2392 = vld [vmem:[%s627 + $0xd8] sm:$0xff]
        %v2393 = vld [vmem:[%s627 + $0xe0] sm:$0xff]
        %v2394 = vld [vmem:[%s627 + $0xe8] sm:$0xff]
        %v2395 = vld [vmem:[%s627 + $0xf0] sm:$0xff]
        %v2396 = vld [vmem:[%s627 + $0xf8] sm:$0xff]
        %v2397 = vld [vmem:[%s627 + $0x100] sm:$0xff]
        %v2398 = vld [vmem:[%s627 + $0x108] sm:$0xff]
        %v2399 = vld [vmem:[%s627 + $0x110] sm:$0xff]
        %v2400 = vld [vmem:[%s627 + $0x118] sm:$0xff]
        %v2401 = vld [vmem:[%s627 + $0x120] sm:$0xff]
        %v2402 = vld [vmem:[%s627 + $0x128] sm:$0xff]
        %v2403 = vld [vmem:[%s627 + $0x130] sm:$0xff]
        %v2404 = vld [vmem:[%s627 + $0x138] sm:$0xff]
        %v2405 = vld [vmem:[%s627 + $0x140] sm:$0xff]
        %v2406 = vld [vmem:[%s627 + $0x148] sm:$0xff]
        %v2407 = vld [vmem:[%s627 + $0x150] sm:$0xff]
        %v2408 = vld [vmem:[%s627 + $0x158] sm:$0xff]
        %v2409 = vld [vmem:[%s627 + $0x160] sm:$0xff]
        %v2410 = vld [vmem:[%s627 + $0x168] sm:$0xff]
        %v2411 = vld [vmem:[%s627 + $0x170] sm:$0xff]
        %v2412 = vld [vmem:[%s627 + $0x178] sm:$0xff]
        %v2413 = vld [vmem:[%s627 + $0x180] sm:$0xff]
        %v2414 = vld [vmem:[%s627 + $0x188] sm:$0xff]
        %v2415 = vld [vmem:[%s627 + $0x190] sm:$0xff]
        %v2416 = vld [vmem:[%s627 + $0x198] sm:$0xff]
        %v2417 = vld [vmem:[%s627 + $0x1a0] sm:$0xff]
        %v2418 = vld [vmem:[%s627 + $0x1a8] sm:$0xff]
        %v2419 = vld [vmem:[%s627 + $0x1b0] sm:$0xff]
        %v2420 = vld [vmem:[%s627 + $0x1b8] sm:$0xff]
        %v2421 = vld [vmem:[%s627 + $0x1c0] sm:$0xff]
        %v2422 = vld [vmem:[%s627 + $0x1c8] sm:$0xff]
        %v2423 = vld [vmem:[%s627 + $0x1d0] sm:$0xff]
        %v2424 = vld [vmem:[%s627 + $0x1d8] sm:$0xff]
        %v2425 = vld [vmem:[%s627 + $0x1e0] sm:$0xff]
        %v2426 = vld [vmem:[%s627 + $0x1e8] sm:$0xff]
        %v2427 = vld [vmem:[%s627 + $0x1f0] sm:$0xff]
        %v2428 = vld [vmem:[%s627 + $0x1f8] sm:$0xff]
        %v2429 = vmul.f32 %v1452, %v2365
        %v2430 = vmul.f32 %v1454, %v2366
        %v2431 = vmul.f32 %v1565, %v2367
        %v2432 = vmul.f32 %v1567, %v2368
        %v2433 = vmul.f32 %v1456, %v2369
        %v2434 = vmul.f32 %v1458, %v2370
        %v2435 = vmul.f32 %v1569, %v2371
        %v2436 = vmul.f32 %v1571, %v2372
        %v2437 = vmul.f32 %v1462, %v2373
        %v2438 = vmul.f32 %v1464, %v2374
        %v2439 = vmul.f32 %v1575, %v2375
        %v2440 = vmul.f32 %v1577, %v2376
        %v2441 = vmul.f32 %v1466, %v2377
        %v2442 = vmul.f32 %v1468, %v2378
        %v2443 = vmul.f32 %v1579, %v2379
        %v2444 = vmul.f32 %v1581, %v2380
        %v2445 = vmul.f32 %v1472, %v2381
        %v2446 = vmul.f32 %v1474, %v2382
        %v2447 = vmul.f32 %v1585, %v2383
        %v2448 = vmul.f32 %v1587, %v2384
        %v2449 = vmul.f32 %v1476, %v2385
        %v2450 = vmul.f32 %v1478, %v2386
        %v2451 = vmul.f32 %v1589, %v2387
        %v2452 = vmul.f32 %v1591, %v2388
        %v2453 = vmul.f32 %v1482, %v2389
        %v2454 = vmul.f32 %v1484, %v2390
        %v2455 = vmul.f32 %v1595, %v2391
        %v2456 = vmul.f32 %v1597, %v2392
        %v2457 = vmul.f32 %v1486, %v2393
        %v2458 = vmul.f32 %v1488, %v2394
        %v2459 = vmul.f32 %v1599, %v2395
        %v2460 = vmul.f32 %v1601, %v2396
        %v2461 = vmul.f32 %v1492, %v2397
        %v2462 = vmul.f32 %v1494, %v2398
        %v2463 = vmul.f32 %v1605, %v2399
        %v2464 = vmul.f32 %v1607, %v2400
        %v2465 = vmul.f32 %v1496, %v2401
        %v2466 = vmul.f32 %v1498, %v2402
        %v2467 = vmul.f32 %v1609, %v2403
        %v2468 = vmul.f32 %v1611, %v2404
        %v2469 = vmul.f32 %v1502, %v2405
        %v2470 = vmul.f32 %v1504, %v2406
        %v2471 = vmul.f32 %v1615, %v2407
        %v2472 = vmul.f32 %v1617, %v2408
        %v2473 = vmul.f32 %v1506, %v2409
        %v2474 = vmul.f32 %v1508, %v2410
        %v2475 = vmul.f32 %v1619, %v2411
        %v2476 = vmul.f32 %v1621, %v2412
        %v2477 = vmul.f32 %v1512, %v2413
        %v2478 = vmul.f32 %v1514, %v2414
        %v2479 = vmul.f32 %v1625, %v2415
        %v2480 = vmul.f32 %v1627, %v2416
        %v2481 = vmul.f32 %v1516, %v2417
        %v2482 = vmul.f32 %v1518, %v2418
        %v2483 = vmul.f32 %v1629, %v2419
        %v2484 = vmul.f32 %v1631, %v2420
        %v2485 = vmul.f32 %v1522, %v2421
        %v2486 = vmul.f32 %v1524, %v2422
        %v2487 = vmul.f32 %v1635, %v2423
        %v2488 = vmul.f32 %v1637, %v2424
        %v2489 = vmul.f32 %v1526, %v2425
        %v2490 = vmul.f32 %v1528, %v2426
        %v2491 = vmul.f32 %v1639, %v2427
        %v2492 = vmul.f32 %v1641, %v2428
        %2493 = vrot.lane.b32.xlu0 %v1452, 64
        %v2494 = vpop.permute.xlu0 %2493
        %2495 = vrot.lane.b32.xlu0 %v1456, 64
        %v2496 = vpop.permute.xlu0 %2495
        %2497 = vrot.lane.b32.xlu0 %v1462, 64
        %v2498 = vpop.permute.xlu0 %2497
        %2499 = vrot.lane.b32.xlu0 %v1466, 64
        %v2500 = vpop.permute.xlu0 %2499
        %2501 = vrot.lane.b32.xlu0 %v1472, 64
        %v2502 = vpop.permute.xlu0 %2501
        %2503 = vrot.lane.b32.xlu0 %v1476, 64
        %v2504 = vpop.permute.xlu0 %2503
        %2505 = vrot.lane.b32.xlu0 %v1482, 64
        %v2506 = vpop.permute.xlu0 %2505
        %2507 = vrot.lane.b32.xlu0 %v1486, 64
        %v2508 = vpop.permute.xlu0 %2507
        %2509 = vrot.lane.b32.xlu0 %v1492, 64
        %v2510 = vpop.permute.xlu0 %2509
        %2511 = vrot.lane.b32.xlu0 %v1496, 64
        %v2512 = vpop.permute.xlu0 %2511
        %2513 = vrot.lane.b32.xlu0 %v1502, 64
        %v2514 = vpop.permute.xlu0 %2513
        %2515 = vrot.lane.b32.xlu0 %v1506, 64
        %v2516 = vpop.permute.xlu0 %2515
        %2517 = vrot.lane.b32.xlu0 %v1512, 64
        %v2518 = vpop.permute.xlu0 %2517
        %2519 = vrot.lane.b32.xlu0 %v1516, 64
        %v2520 = vpop.permute.xlu0 %2519
        %2521 = vrot.lane.b32.xlu0 %v1522, 64
        %v2522 = vpop.permute.xlu0 %2521
        %2523 = vrot.lane.b32.xlu0 %v1526, 64
        %v2524 = vpop.permute.xlu0 %2523
        %2525 = vrot.lane.b32.xlu0 %v1454, 64
        %v2526 = vpop.permute.xlu0 %2525
        %2527 = vrot.lane.b32.xlu0 %v1458, 64
        %v2528 = vpop.permute.xlu0 %2527
        %2529 = vrot.lane.b32.xlu0 %v1464, 64
        %v2530 = vpop.permute.xlu0 %2529
        %2531 = vrot.lane.b32.xlu0 %v1468, 64
        %v2532 = vpop.permute.xlu0 %2531
        %2533 = vrot.lane.b32.xlu0 %v1474, 64
        %v2534 = vpop.permute.xlu0 %2533
        %2535 = vrot.lane.b32.xlu0 %v1478, 64
        %v2536 = vpop.permute.xlu0 %2535
        %2537 = vrot.lane.b32.xlu0 %v1484, 64
        %v2538 = vpop.permute.xlu0 %2537
        %2539 = vrot.lane.b32.xlu0 %v1488, 64
        %v2540 = vpop.permute.xlu0 %2539
        %2541 = vrot.lane.b32.xlu0 %v1494, 64
        %v2542 = vpop.permute.xlu0 %2541
        %2543 = vrot.lane.b32.xlu0 %v1498, 64
        %v2544 = vpop.permute.xlu0 %2543
        %2545 = vrot.lane.b32.xlu0 %v1504, 64
        %v2546 = vpop.permute.xlu0 %2545
        %2547 = vrot.lane.b32.xlu0 %v1508, 64
        %v2548 = vpop.permute.xlu0 %2547
        %2549 = vrot.lane.b32.xlu0 %v1514, 64
        %v2550 = vpop.permute.xlu0 %2549
        %2551 = vrot.lane.b32.xlu0 %v1518, 64
        %v2552 = vpop.permute.xlu0 %2551
        %2553 = vrot.lane.b32.xlu0 %v1524, 64
        %v2554 = vpop.permute.xlu0 %2553
        %2555 = vrot.lane.b32.xlu0 %v1528, 64
        %v2556 = vpop.permute.xlu0 %2555
        %2557 = vrot.lane.b32.xlu0 %v1565, 64
        %v2558 = vpop.permute.xlu0 %2557
        %2559 = vrot.lane.b32.xlu0 %v1569, 64
        %v2560 = vpop.permute.xlu0 %2559
        %2561 = vrot.lane.b32.xlu0 %v1575, 64
        %v2562 = vpop.permute.xlu0 %2561
        %2563 = vrot.lane.b32.xlu0 %v1579, 64
        %v2564 = vpop.permute.xlu0 %2563
        %2565 = vrot.lane.b32.xlu0 %v1585, 64
        %v2566 = vpop.permute.xlu0 %2565
        %2567 = vrot.lane.b32.xlu0 %v1589, 64
        %v2568 = vpop.permute.xlu0 %2567
        %2569 = vrot.lane.b32.xlu0 %v1595, 64
        %v2570 = vpop.permute.xlu0 %2569
        %2571 = vrot.lane.b32.xlu0 %v1599, 64
        %v2572 = vpop.permute.xlu0 %2571
        %2573 = vrot.lane.b32.xlu0 %v1605, 64
        %v2574 = vpop.permute.xlu0 %2573
        %2575 = vrot.lane.b32.xlu0 %v1609, 64
        %v2576 = vpop.permute.xlu0 %2575
        %2577 = vrot.lane.b32.xlu0 %v1615, 64
        %v2578 = vpop.permute.xlu0 %2577
        %2579 = vrot.lane.b32.xlu0 %v1619, 64
        %v2580 = vpop.permute.xlu0 %2579
        %2581 = vrot.lane.b32.xlu0 %v1625, 64
        %v2582 = vpop.permute.xlu0 %2581
        %2583 = vrot.lane.b32.xlu0 %v1629, 64
        %v2584 = vpop.permute.xlu0 %2583
        %2585 = vrot.lane.b32.xlu0 %v1635, 64
        %v2586 = vpop.permute.xlu0 %2585
        %2587 = vrot.lane.b32.xlu0 %v1639, 64
        %v2588 = vpop.permute.xlu0 %2587
        %2589 = vrot.lane.b32.xlu0 %v1567, 64
        %v2590 = vpop.permute.xlu0 %2589
        %2591 = vrot.lane.b32.xlu0 %v1571, 64
        %v2592 = vpop.permute.xlu0 %2591
        %2593 = vrot.lane.b32.xlu0 %v1577, 64
        %v2594 = vpop.permute.xlu0 %2593
        %2595 = vrot.lane.b32.xlu0 %v1581, 64
        %v2596 = vpop.permute.xlu0 %2595
        %2597 = vrot.lane.b32.xlu0 %v1587, 64
        %v2598 = vpop.permute.xlu0 %2597
        %2599 = vrot.lane.b32.xlu0 %v1591, 64
        %v2600 = vpop.permute.xlu0 %2599
        %2601 = vrot.lane.b32.xlu0 %v1597, 64
        %v2602 = vpop.permute.xlu0 %2601
        %2603 = vrot.lane.b32.xlu0 %v1601, 64
        %v2604 = vpop.permute.xlu0 %2603
        %2605 = vrot.lane.b32.xlu0 %v1607, 64
        %v2606 = vpop.permute.xlu0 %2605
        %2607 = vrot.lane.b32.xlu0 %v1611, 64
        %v2608 = vpop.permute.xlu0 %2607
        %2609 = vrot.lane.b32.xlu0 %v1617, 64
        %v2610 = vpop.permute.xlu0 %2609
        %2611 = vrot.lane.b32.xlu0 %v1621, 64
        %v2612 = vpop.permute.xlu0 %2611
        %2613 = vrot.lane.b32.xlu0 %v1627, 64
        %v2614 = vpop.permute.xlu0 %2613
        %2615 = vrot.lane.b32.xlu0 %v1631, 64
        %v2616 = vpop.permute.xlu0 %2615
        %2617 = vrot.lane.b32.xlu0 %v1637, 64
        %v2618 = vpop.permute.xlu0 %2617
        %2619 = vrot.lane.b32.xlu0 %v1641, 64
        %v2620 = vpop.permute.xlu0 %2619
        %v2621 = vlaneseq
        %v2622 = vand.u32 %v2621, 127
        %vm2623 = vcmp.lt.s32.totalorder %v2622, 64
        %v2624 = vsel %vm2623, %v2558, %v2590
        %v2625 = vsel %vm2623, %v2560, %v2592
        %v2626 = vsel %vm2623, %v2562, %v2594
        %v2627 = vsel %vm2623, %v2564, %v2596
        %v2628 = vsel %vm2623, %v2566, %v2598
        %v2629 = vsel %vm2623, %v2568, %v2600
        %v2630 = vsel %vm2623, %v2570, %v2602
        %v2631 = vsel %vm2623, %v2572, %v2604
        %v2632 = vsel %vm2623, %v2574, %v2606
        %v2633 = vsel %vm2623, %v2576, %v2608
        %v2634 = vsel %vm2623, %v2578, %v2610
        %v2635 = vsel %vm2623, %v2580, %v2612
        %v2636 = vsel %vm2623, %v2582, %v2614
        %v2637 = vsel %vm2623, %v2584, %v2616
        %v2638 = vsel %vm2623, %v2586, %v2618
        %v2639 = vsel %vm2623, %v2588, %v2620
        %v2640 = vsel %vm2623, %v2526, %v2558
        %v2641 = vsel %vm2623, %v2528, %v2560
        %v2642 = vsel %vm2623, %v2530, %v2562
        %v2643 = vsel %vm2623, %v2532, %v2564
        %v2644 = vsel %vm2623, %v2534, %v2566
        %v2645 = vsel %vm2623, %v2536, %v2568
        %v2646 = vsel %vm2623, %v2538, %v2570
        %v2647 = vsel %vm2623, %v2540, %v2572
        %v2648 = vsel %vm2623, %v2542, %v2574
        %v2649 = vsel %vm2623, %v2544, %v2576
        %v2650 = vsel %vm2623, %v2546, %v2578
        %v2651 = vsel %vm2623, %v2548, %v2580
        %v2652 = vsel %vm2623, %v2550, %v2582
        %v2653 = vsel %vm2623, %v2552, %v2584
        %v2654 = vsel %vm2623, %v2554, %v2586
        %v2655 = vsel %vm2623, %v2556, %v2588
        %v2656 = vsel %vm2623, %v2494, %v2526
        %v2657 = vsel %vm2623, %v2496, %v2528
        %v2658 = vsel %vm2623, %v2498, %v2530
        %v2659 = vsel %vm2623, %v2500, %v2532
        %v2660 = vsel %vm2623, %v2502, %v2534
        %v2661 = vsel %vm2623, %v2504, %v2536
        %v2662 = vsel %vm2623, %v2506, %v2538
        %v2663 = vsel %vm2623, %v2508, %v2540
        %v2664 = vsel %vm2623, %v2510, %v2542
        %v2665 = vsel %vm2623, %v2512, %v2544
        %v2666 = vsel %vm2623, %v2514, %v2546
        %v2667 = vsel %vm2623, %v2516, %v2548
        %v2668 = vsel %vm2623, %v2518, %v2550
        %v2669 = vsel %vm2623, %v2520, %v2552
        %v2670 = vsel %vm2623, %v2522, %v2554
        %v2671 = vsel %vm2623, %v2524, %v2556
        %v2672 = vsel %vm2623, %v2590, %v2494
        %v2673 = vsel %vm2623, %v2592, %v2496
        %v2674 = vsel %vm2623, %v2594, %v2498
        %v2675 = vsel %vm2623, %v2596, %v2500
        %v2676 = vsel %vm2623, %v2598, %v2502
        %v2677 = vsel %vm2623, %v2600, %v2504
        %v2678 = vsel %vm2623, %v2602, %v2506
        %v2679 = vsel %vm2623, %v2604, %v2508
        %v2680 = vsel %vm2623, %v2606, %v2510
        %v2681 = vsel %vm2623, %v2608, %v2512
        %v2682 = vsel %vm2623, %v2610, %v2514
        %v2683 = vsel %vm2623, %v2612, %v2516
        %v2684 = vsel %vm2623, %v2614, %v2518
        %v2685 = vsel %vm2623, %v2616, %v2520
        %v2686 = vsel %vm2623, %v2618, %v2522
        %v2687 = vsel %vm2623, %v2620, %v2524
        %v2688 = vld [vmem:[%s636] sm:$0xff]
        %v2689 = vld [vmem:[%s636 + $0x8] sm:$0xff]
        %v2690 = vld [vmem:[%s636 + $0x10] sm:$0xff]
        %v2691 = vld [vmem:[%s636 + $0x18] sm:$0xff]
        %v2692 = vld [vmem:[%s636 + $0x20] sm:$0xff]
        %v2693 = vld [vmem:[%s636 + $0x28] sm:$0xff]
        %v2694 = vld [vmem:[%s636 + $0x30] sm:$0xff]
        %v2695 = vld [vmem:[%s636 + $0x38] sm:$0xff]
        %v2696 = vld [vmem:[%s636 + $0x40] sm:$0xff]
        %v2697 = vld [vmem:[%s636 + $0x48] sm:$0xff]
        %v2698 = vld [vmem:[%s636 + $0x50] sm:$0xff]
        %v2699 = vld [vmem:[%s636 + $0x58] sm:$0xff]
        %v2700 = vld [vmem:[%s636 + $0x60] sm:$0xff]
        %v2701 = vld [vmem:[%s636 + $0x68] sm:$0xff]
        %v2702 = vld [vmem:[%s636 + $0x70] sm:$0xff]
        %v2703 = vld [vmem:[%s636 + $0x78] sm:$0xff]
        %v2704 = vld [vmem:[%s636 + $0x80] sm:$0xff]
        %v2705 = vld [vmem:[%s636 + $0x88] sm:$0xff]
        %v2706 = vld [vmem:[%s636 + $0x90] sm:$0xff]
        %v2707 = vld [vmem:[%s636 + $0x98] sm:$0xff]
        %v2708 = vld [vmem:[%s636 + $0xa0] sm:$0xff]
        %v2709 = vld [vmem:[%s636 + $0xa8] sm:$0xff]
        %v2710 = vld [vmem:[%s636 + $0xb0] sm:$0xff]
        %v2711 = vld [vmem:[%s636 + $0xb8] sm:$0xff]
        %v2712 = vld [vmem:[%s636 + $0xc0] sm:$0xff]
        %v2713 = vld [vmem:[%s636 + $0xc8] sm:$0xff]
        %v2714 = vld [vmem:[%s636 + $0xd0] sm:$0xff]
        %v2715 = vld [vmem:[%s636 + $0xd8] sm:$0xff]
        %v2716 = vld [vmem:[%s636 + $0xe0] sm:$0xff]
        %v2717 = vld [vmem:[%s636 + $0xe8] sm:$0xff]
        %v2718 = vld [vmem:[%s636 + $0xf0] sm:$0xff]
        %v2719 = vld [vmem:[%s636 + $0xf8] sm:$0xff]
        %v2720 = vld [vmem:[%s636 + $0x100] sm:$0xff]
        %v2721 = vld [vmem:[%s636 + $0x108] sm:$0xff]
        %v2722 = vld [vmem:[%s636 + $0x110] sm:$0xff]
        %v2723 = vld [vmem:[%s636 + $0x118] sm:$0xff]
        %v2724 = vld [vmem:[%s636 + $0x120] sm:$0xff]
        %v2725 = vld [vmem:[%s636 + $0x128] sm:$0xff]
        %v2726 = vld [vmem:[%s636 + $0x130] sm:$0xff]
        %v2727 = vld [vmem:[%s636 + $0x138] sm:$0xff]
        %v2728 = vld [vmem:[%s636 + $0x140] sm:$0xff]
        %v2729 = vld [vmem:[%s636 + $0x148] sm:$0xff]
        %v2730 = vld [vmem:[%s636 + $0x150] sm:$0xff]
        %v2731 = vld [vmem:[%s636 + $0x158] sm:$0xff]
        %v2732 = vld [vmem:[%s636 + $0x160] sm:$0xff]
        %v2733 = vld [vmem:[%s636 + $0x168] sm:$0xff]
        %v2734 = vld [vmem:[%s636 + $0x170] sm:$0xff]
        %v2735 = vld [vmem:[%s636 + $0x178] sm:$0xff]
        %v2736 = vld [vmem:[%s636 + $0x180] sm:$0xff]
        %v2737 = vld [vmem:[%s636 + $0x188] sm:$0xff]
        %v2738 = vld [vmem:[%s636 + $0x190] sm:$0xff]
        %v2739 = vld [vmem:[%s636 + $0x198] sm:$0xff]
        %v2740 = vld [vmem:[%s636 + $0x1a0] sm:$0xff]
        %v2741 = vld [vmem:[%s636 + $0x1a8] sm:$0xff]
        %v2742 = vld [vmem:[%s636 + $0x1b0] sm:$0xff]
        %v2743 = vld [vmem:[%s636 + $0x1b8] sm:$0xff]
        %v2744 = vld [vmem:[%s636 + $0x1c0] sm:$0xff]
        %v2745 = vld [vmem:[%s636 + $0x1c8] sm:$0xff]
        %v2746 = vld [vmem:[%s636 + $0x1d0] sm:$0xff]
        %v2747 = vld [vmem:[%s636 + $0x1d8] sm:$0xff]
        %v2748 = vld [vmem:[%s636 + $0x1e0] sm:$0xff]
        %v2749 = vld [vmem:[%s636 + $0x1e8] sm:$0xff]
        %v2750 = vld [vmem:[%s636 + $0x1f0] sm:$0xff]
        %v2751 = vld [vmem:[%s636 + $0x1f8] sm:$0xff]
        %v2752 = vmul.f32 %v2656, %v2688
        %v2753 = vmul.f32 %v2640, %v2689
        %v2754 = vmul.f32 %v2624, %v2690
        %v2755 = vmul.f32 %v2672, %v2691
        %v2756 = vmul.f32 %v2657, %v2692
        %v2757 = vmul.f32 %v2641, %v2693
        %v2758 = vmul.f32 %v2625, %v2694
        %v2759 = vmul.f32 %v2673, %v2695
        %v2760 = vmul.f32 %v2658, %v2696
        %v2761 = vmul.f32 %v2642, %v2697
        %v2762 = vmul.f32 %v2626, %v2698
        %v2763 = vmul.f32 %v2674, %v2699
        %v2764 = vmul.f32 %v2659, %v2700
        %v2765 = vmul.f32 %v2643, %v2701
        %v2766 = vmul.f32 %v2627, %v2702
        %v2767 = vmul.f32 %v2675, %v2703
        %v2768 = vmul.f32 %v2660, %v2704
        %v2769 = vmul.f32 %v2644, %v2705
        %v2770 = vmul.f32 %v2628, %v2706
        %v2771 = vmul.f32 %v2676, %v2707
        %v2772 = vmul.f32 %v2661, %v2708
        %v2773 = vmul.f32 %v2645, %v2709
        %v2774 = vmul.f32 %v2629, %v2710
        %v2775 = vmul.f32 %v2677, %v2711
        %v2776 = vmul.f32 %v2662, %v2712
        %v2777 = vmul.f32 %v2646, %v2713
        %v2778 = vmul.f32 %v2630, %v2714
        %v2779 = vmul.f32 %v2678, %v2715
        %v2780 = vmul.f32 %v2663, %v2716
        %v2781 = vmul.f32 %v2647, %v2717
        %v2782 = vmul.f32 %v2631, %v2718
        %v2783 = vmul.f32 %v2679, %v2719
        %v2784 = vmul.f32 %v2664, %v2720
        %v2785 = vmul.f32 %v2648, %v2721
        %v2786 = vmul.f32 %v2632, %v2722
        %v2787 = vmul.f32 %v2680, %v2723
        %v2788 = vmul.f32 %v2665, %v2724
        %v2789 = vmul.f32 %v2649, %v2725
        %v2790 = vmul.f32 %v2633, %v2726
        %v2791 = vmul.f32 %v2681, %v2727
        %v2792 = vmul.f32 %v2666, %v2728
        %v2793 = vmul.f32 %v2650, %v2729
        %v2794 = vmul.f32 %v2634, %v2730
        %v2795 = vmul.f32 %v2682, %v2731
        %v2796 = vmul.f32 %v2667, %v2732
        %v2797 = vmul.f32 %v2651, %v2733
        %v2798 = vmul.f32 %v2635, %v2734
        %v2799 = vmul.f32 %v2683, %v2735
        %v2800 = vmul.f32 %v2668, %v2736
        %v2801 = vmul.f32 %v2652, %v2737
        %v2802 = vmul.f32 %v2636, %v2738
        %v2803 = vmul.f32 %v2684, %v2739
        %v2804 = vmul.f32 %v2669, %v2740
        %v2805 = vmul.f32 %v2653, %v2741
        %v2806 = vmul.f32 %v2637, %v2742
        %v2807 = vmul.f32 %v2685, %v2743
        %v2808 = vmul.f32 %v2670, %v2744
        %v2809 = vmul.f32 %v2654, %v2745
        %v2810 = vmul.f32 %v2638, %v2746
        %v2811 = vmul.f32 %v2686, %v2747
        %v2812 = vmul.f32 %v2671, %v2748
        %v2813 = vmul.f32 %v2655, %v2749
        %v2814 = vmul.f32 %v2639, %v2750
        %v2815 = vmul.f32 %v2687, %v2751
        %v2816 = vadd.f32 %v2429, %v2752
        %v2817 = vadd.f32 %v2430, %v2753
        %v2818 = vadd.f32 %v2431, %v2754
        %v2819 = vadd.f32 %v2432, %v2755
        %v2820 = vadd.f32 %v2433, %v2756
        %v2821 = vadd.f32 %v2434, %v2757
        %v2822 = vadd.f32 %v2435, %v2758
        %v2823 = vadd.f32 %v2436, %v2759
        %v2824 = vadd.f32 %v2437, %v2760
        %v2825 = vadd.f32 %v2438, %v2761
        %v2826 = vadd.f32 %v2439, %v2762
        %v2827 = vadd.f32 %v2440, %v2763
        %v2828 = vadd.f32 %v2441, %v2764
        %v2829 = vadd.f32 %v2442, %v2765
        %v2830 = vadd.f32 %v2443, %v2766
        %v2831 = vadd.f32 %v2444, %v2767
        %v2832 = vadd.f32 %v2445, %v2768
        %v2833 = vadd.f32 %v2446, %v2769
        %v2834 = vadd.f32 %v2447, %v2770
        %v2835 = vadd.f32 %v2448, %v2771
        %v2836 = vadd.f32 %v2449, %v2772
        %v2837 = vadd.f32 %v2450, %v2773
        %v2838 = vadd.f32 %v2451, %v2774
        %v2839 = vadd.f32 %v2452, %v2775
        %v2840 = vadd.f32 %v2453, %v2776
        %v2841 = vadd.f32 %v2454, %v2777
        %v2842 = vadd.f32 %v2455, %v2778
        %v2843 = vadd.f32 %v2456, %v2779
        %v2844 = vadd.f32 %v2457, %v2780
        %v2845 = vadd.f32 %v2458, %v2781
        %v2846 = vadd.f32 %v2459, %v2782
        %v2847 = vadd.f32 %v2460, %v2783
        %v2848 = vadd.f32 %v2461, %v2784
        %v2849 = vadd.f32 %v2462, %v2785
        %v2850 = vadd.f32 %v2463, %v2786
        %v2851 = vadd.f32 %v2464, %v2787
        %v2852 = vadd.f32 %v2465, %v2788
        %v2853 = vadd.f32 %v2466, %v2789
        %v2854 = vadd.f32 %v2467, %v2790
        %v2855 = vadd.f32 %v2468, %v2791
        %v2856 = vadd.f32 %v2469, %v2792
        %v2857 = vadd.f32 %v2470, %v2793
        %v2858 = vadd.f32 %v2471, %v2794
        %v2859 = vadd.f32 %v2472, %v2795
        %v2860 = vadd.f32 %v2473, %v2796
        %v2861 = vadd.f32 %v2474, %v2797
        %v2862 = vadd.f32 %v2475, %v2798
        %v2863 = vadd.f32 %v2476, %v2799
        %v2864 = vadd.f32 %v2477, %v2800
        %v2865 = vadd.f32 %v2478, %v2801
        %v2866 = vadd.f32 %v2479, %v2802
        %v2867 = vadd.f32 %v2480, %v2803
        %v2868 = vadd.f32 %v2481, %v2804
        %v2869 = vadd.f32 %v2482, %v2805
        %v2870 = vadd.f32 %v2483, %v2806
        %v2871 = vadd.f32 %v2484, %v2807
        %v2872 = vadd.f32 %v2485, %v2808
        %v2873 = vadd.f32 %v2486, %v2809
        %v2874 = vadd.f32 %v2487, %v2810
        %v2875 = vadd.f32 %v2488, %v2811
        %v2876 = vadd.f32 %v2489, %v2812
        %v2877 = vadd.f32 %v2490, %v2813
        %v2878 = vadd.f32 %v2491, %v2814
        %v2879 = vadd.f32 %v2492, %v2815
        %v2880 = vld [vmem:[%s645] sm:$0xff]
        %v2881 = vld [vmem:[%s645 + $0x8] sm:$0xff]
        %v2882 = vld [vmem:[%s645 + $0x10] sm:$0xff]
        %v2883 = vld [vmem:[%s645 + $0x18] sm:$0xff]
        %v2884 = vld [vmem:[%s645 + $0x20] sm:$0xff]
        %v2885 = vld [vmem:[%s645 + $0x28] sm:$0xff]
        %v2886 = vld [vmem:[%s645 + $0x30] sm:$0xff]
        %v2887 = vld [vmem:[%s645 + $0x38] sm:$0xff]
        %v2888 = vld [vmem:[%s645 + $0x40] sm:$0xff]
        %v2889 = vld [vmem:[%s645 + $0x48] sm:$0xff]
        %v2890 = vld [vmem:[%s645 + $0x50] sm:$0xff]
        %v2891 = vld [vmem:[%s645 + $0x58] sm:$0xff]
        %v2892 = vld [vmem:[%s645 + $0x60] sm:$0xff]
        %v2893 = vld [vmem:[%s645 + $0x68] sm:$0xff]
        %v2894 = vld [vmem:[%s645 + $0x70] sm:$0xff]
        %v2895 = vld [vmem:[%s645 + $0x78] sm:$0xff]
        %v2896 = vld [vmem:[%s645 + $0x80] sm:$0xff]
        %v2897 = vld [vmem:[%s645 + $0x88] sm:$0xff]
        %v2898 = vld [vmem:[%s645 + $0x90] sm:$0xff]
        %v2899 = vld [vmem:[%s645 + $0x98] sm:$0xff]
        %v2900 = vld [vmem:[%s645 + $0xa0] sm:$0xff]
        %v2901 = vld [vmem:[%s645 + $0xa8] sm:$0xff]
        %v2902 = vld [vmem:[%s645 + $0xb0] sm:$0xff]
        %v2903 = vld [vmem:[%s645 + $0xb8] sm:$0xff]
        %v2904 = vld [vmem:[%s645 + $0xc0] sm:$0xff]
        %v2905 = vld [vmem:[%s645 + $0xc8] sm:$0xff]
        %v2906 = vld [vmem:[%s645 + $0xd0] sm:$0xff]
        %v2907 = vld [vmem:[%s645 + $0xd8] sm:$0xff]
        %v2908 = vld [vmem:[%s645 + $0xe0] sm:$0xff]
        %v2909 = vld [vmem:[%s645 + $0xe8] sm:$0xff]
        %v2910 = vld [vmem:[%s645 + $0xf0] sm:$0xff]
        %v2911 = vld [vmem:[%s645 + $0xf8] sm:$0xff]
        %v2912 = vld [vmem:[%s645 + $0x100] sm:$0xff]
        %v2913 = vld [vmem:[%s645 + $0x108] sm:$0xff]
        %v2914 = vld [vmem:[%s645 + $0x110] sm:$0xff]
        %v2915 = vld [vmem:[%s645 + $0x118] sm:$0xff]
        %v2916 = vld [vmem:[%s645 + $0x120] sm:$0xff]
        %v2917 = vld [vmem:[%s645 + $0x128] sm:$0xff]
        %v2918 = vld [vmem:[%s645 + $0x130] sm:$0xff]
        %v2919 = vld [vmem:[%s645 + $0x138] sm:$0xff]
        %v2920 = vld [vmem:[%s645 + $0x140] sm:$0xff]
        %v2921 = vld [vmem:[%s645 + $0x148] sm:$0xff]
        %v2922 = vld [vmem:[%s645 + $0x150] sm:$0xff]
        %v2923 = vld [vmem:[%s645 + $0x158] sm:$0xff]
        %v2924 = vld [vmem:[%s645 + $0x160] sm:$0xff]
        %v2925 = vld [vmem:[%s645 + $0x168] sm:$0xff]
        %v2926 = vld [vmem:[%s645 + $0x170] sm:$0xff]
        %v2927 = vld [vmem:[%s645 + $0x178] sm:$0xff]
        %v2928 = vld [vmem:[%s645 + $0x180] sm:$0xff]
        %v2929 = vld [vmem:[%s645 + $0x188] sm:$0xff]
        %v2930 = vld [vmem:[%s645 + $0x190] sm:$0xff]
        %v2931 = vld [vmem:[%s645 + $0x198] sm:$0xff]
        %v2932 = vld [vmem:[%s645 + $0x1a0] sm:$0xff]
        %v2933 = vld [vmem:[%s645 + $0x1a8] sm:$0xff]
        %v2934 = vld [vmem:[%s645 + $0x1b0] sm:$0xff]
        %v2935 = vld [vmem:[%s645 + $0x1b8] sm:$0xff]
        %v2936 = vld [vmem:[%s645 + $0x1c0] sm:$0xff]
        %v2937 = vld [vmem:[%s645 + $0x1c8] sm:$0xff]
        %v2938 = vld [vmem:[%s645 + $0x1d0] sm:$0xff]
        %v2939 = vld [vmem:[%s645 + $0x1d8] sm:$0xff]
        %v2940 = vld [vmem:[%s645 + $0x1e0] sm:$0xff]
        %v2941 = vld [vmem:[%s645 + $0x1e8] sm:$0xff]
        %v2942 = vld [vmem:[%s645 + $0x1f0] sm:$0xff]
        %v2943 = vld [vmem:[%s645 + $0x1f8] sm:$0xff]
        %v2944 = vmul.f32 %v2672, %v2880
        %v2945 = vmul.f32 %v2656, %v2881
        %v2946 = vmul.f32 %v2640, %v2882
        %v2947 = vmul.f32 %v2624, %v2883
        %v2948 = vmul.f32 %v2673, %v2884
        %v2949 = vmul.f32 %v2657, %v2885
        %v2950 = vmul.f32 %v2641, %v2886
        %v2951 = vmul.f32 %v2625, %v2887
        %v2952 = vmul.f32 %v2674, %v2888
        %v2953 = vmul.f32 %v2658, %v2889
        %v2954 = vmul.f32 %v2642, %v2890
        %v2955 = vmul.f32 %v2626, %v2891
        %v2956 = vmul.f32 %v2675, %v2892
        %v2957 = vmul.f32 %v2659, %v2893
        %v2958 = vmul.f32 %v2643, %v2894
        %v2959 = vmul.f32 %v2627, %v2895
        %v2960 = vmul.f32 %v2676, %v2896
        %v2961 = vmul.f32 %v2660, %v2897
        %v2962 = vmul.f32 %v2644, %v2898
        %v2963 = vmul.f32 %v2628, %v2899
        %v2964 = vmul.f32 %v2677, %v2900
        %v2965 = vmul.f32 %v2661, %v2901
        %v2966 = vmul.f32 %v2645, %v2902
        %v2967 = vmul.f32 %v2629, %v2903
        %v2968 = vmul.f32 %v2678, %v2904
        %v2969 = vmul.f32 %v2662, %v2905
        %v2970 = vmul.f32 %v2646, %v2906
        %v2971 = vmul.f32 %v2630, %v2907
        %v2972 = vmul.f32 %v2679, %v2908
        %v2973 = vmul.f32 %v2663, %v2909
        %v2974 = vmul.f32 %v2647, %v2910
        %v2975 = vmul.f32 %v2631, %v2911
        %v2976 = vmul.f32 %v2680, %v2912
        %v2977 = vmul.f32 %v2664, %v2913
        %v2978 = vmul.f32 %v2648, %v2914
        %v2979 = vmul.f32 %v2632, %v2915
        %v2980 = vmul.f32 %v2681, %v2916
        %v2981 = vmul.f32 %v2665, %v2917
        %v2982 = vmul.f32 %v2649, %v2918
        %v2983 = vmul.f32 %v2633, %v2919
        %v2984 = vmul.f32 %v2682, %v2920
        %v2985 = vmul.f32 %v2666, %v2921
        %v2986 = vmul.f32 %v2650, %v2922
        %v2987 = vmul.f32 %v2634, %v2923
        %v2988 = vmul.f32 %v2683, %v2924
        %v2989 = vmul.f32 %v2667, %v2925
        %v2990 = vmul.f32 %v2651, %v2926
        %v2991 = vmul.f32 %v2635, %v2927
        %v2992 = vmul.f32 %v2684, %v2928
        %v2993 = vmul.f32 %v2668, %v2929
        %v2994 = vmul.f32 %v2652, %v2930
        %v2995 = vmul.f32 %v2636, %v2931
        %v2996 = vmul.f32 %v2685, %v2932
        %v2997 = vmul.f32 %v2669, %v2933
        %v2998 = vmul.f32 %v2653, %v2934
        %v2999 = vmul.f32 %v2637, %v2935
        %v3000 = vmul.f32 %v2686, %v2936
        %v3001 = vmul.f32 %v2670, %v2937
        %v3002 = vmul.f32 %v2654, %v2938
        %v3003 = vmul.f32 %v2638, %v2939
        %v3004 = vmul.f32 %v2687, %v2940
        %v3005 = vmul.f32 %v2671, %v2941
        %v3006 = vmul.f32 %v2655, %v2942
        %v3007 = vmul.f32 %v2639, %v2943
        %v3008 = vadd.f32 %v2816, %v2944
        %v3009 = vadd.f32 %v2817, %v2945
        %v3010 = vadd.f32 %v2818, %v2946
        %v3011 = vadd.f32 %v2819, %v2947
        %v3012 = vadd.f32 %v2820, %v2948
        %v3013 = vadd.f32 %v2821, %v2949
        %v3014 = vadd.f32 %v2822, %v2950
        %v3015 = vadd.f32 %v2823, %v2951
        %v3016 = vadd.f32 %v2824, %v2952
        %v3017 = vadd.f32 %v2825, %v2953
        %v3018 = vadd.f32 %v2826, %v2954
        %v3019 = vadd.f32 %v2827, %v2955
        %v3020 = vadd.f32 %v2828, %v2956
        %v3021 = vadd.f32 %v2829, %v2957
        %v3022 = vadd.f32 %v2830, %v2958
        %v3023 = vadd.f32 %v2831, %v2959
        %v3024 = vadd.f32 %v2832, %v2960
        %v3025 = vadd.f32 %v2833, %v2961
        %v3026 = vadd.f32 %v2834, %v2962
        %v3027 = vadd.f32 %v2835, %v2963
        %v3028 = vadd.f32 %v2836, %v2964
        %v3029 = vadd.f32 %v2837, %v2965
        %v3030 = vadd.f32 %v2838, %v2966
        %v3031 = vadd.f32 %v2839, %v2967
        %v3032 = vadd.f32 %v2840, %v2968
        %v3033 = vadd.f32 %v2841, %v2969
        %v3034 = vadd.f32 %v2842, %v2970
        %v3035 = vadd.f32 %v2843, %v2971
        %v3036 = vadd.f32 %v2844, %v2972
        %v3037 = vadd.f32 %v2845, %v2973
        %v3038 = vadd.f32 %v2846, %v2974
        %v3039 = vadd.f32 %v2847, %v2975
        %v3040 = vadd.f32 %v2848, %v2976
        %v3041 = vadd.f32 %v2849, %v2977
        %v3042 = vadd.f32 %v2850, %v2978
        %v3043 = vadd.f32 %v2851, %v2979
        %v3044 = vadd.f32 %v2852, %v2980
        %v3045 = vadd.f32 %v2853, %v2981
        %v3046 = vadd.f32 %v2854, %v2982
        %v3047 = vadd.f32 %v2855, %v2983
        %v3048 = vadd.f32 %v2856, %v2984
        %v3049 = vadd.f32 %v2857, %v2985
        %v3050 = vadd.f32 %v2858, %v2986
        %v3051 = vadd.f32 %v2859, %v2987
        %v3052 = vadd.f32 %v2860, %v2988
        %v3053 = vadd.f32 %v2861, %v2989
        %v3054 = vadd.f32 %v2862, %v2990
        %v3055 = vadd.f32 %v2863, %v2991
        %v3056 = vadd.f32 %v2864, %v2992
        %v3057 = vadd.f32 %v2865, %v2993
        %v3058 = vadd.f32 %v2866, %v2994
        %v3059 = vadd.f32 %v2867, %v2995
        %v3060 = vadd.f32 %v2868, %v2996
        %v3061 = vadd.f32 %v2869, %v2997
        %v3062 = vadd.f32 %v2870, %v2998
        %v3063 = vadd.f32 %v2871, %v2999
        %v3064 = vadd.f32 %v2872, %v3000
        %v3065 = vadd.f32 %v2873, %v3001
        %v3066 = vadd.f32 %v2874, %v3002
        %v3067 = vadd.f32 %v2875, %v3003
        %v3068 = vadd.f32 %v2876, %v3004
        %v3069 = vadd.f32 %v2877, %v3005
        %v3070 = vadd.f32 %v2878, %v3006
        %v3071 = vadd.f32 %v2879, %v3007
        %v3072 = vpack.c.bf16 %v3012, %v3008
        %v3073 = vpack.c.bf16 %v3013, %v3009
        %v3074 = vpack.c.bf16 %v3014, %v3010
        %v3075 = vpack.c.bf16 %v3015, %v3011
        %v3076 = vpack.c.bf16 %v3020, %v3016
        %v3077 = vpack.c.bf16 %v3021, %v3017
        %v3078 = vpack.c.bf16 %v3022, %v3018
        %v3079 = vpack.c.bf16 %v3023, %v3019
        %v3080 = vpack.c.bf16 %v3028, %v3024
        %v3081 = vpack.c.bf16 %v3029, %v3025
        %v3082 = vpack.c.bf16 %v3030, %v3026
        %v3083 = vpack.c.bf16 %v3031, %v3027
        %v3084 = vpack.c.bf16 %v3036, %v3032
        %v3085 = vpack.c.bf16 %v3037, %v3033
        %v3086 = vpack.c.bf16 %v3038, %v3034
        %v3087 = vpack.c.bf16 %v3039, %v3035
        %v3088 = vpack.c.bf16 %v3044, %v3040
        %v3089 = vpack.c.bf16 %v3045, %v3041
        %v3090 = vpack.c.bf16 %v3046, %v3042
        %v3091 = vpack.c.bf16 %v3047, %v3043
        %v3092 = vpack.c.bf16 %v3052, %v3048
        %v3093 = vpack.c.bf16 %v3053, %v3049
        %v3094 = vpack.c.bf16 %v3054, %v3050
        %v3095 = vpack.c.bf16 %v3055, %v3051
        %v3096 = vpack.c.bf16 %v3060, %v3056
        %v3097 = vpack.c.bf16 %v3061, %v3057
        %v3098 = vpack.c.bf16 %v3062, %v3058
        %v3099 = vpack.c.bf16 %v3063, %v3059
        %v3100 = vpack.c.bf16 %v3068, %v3064
        %v3101 = vpack.c.bf16 %v3069, %v3065
        %v3102 = vpack.c.bf16 %v3070, %v3066
        %v3103 = vpack.c.bf16 %v3071, %v3067
        %v3136 = vunpack.c.l.b16 %v3072
        %v3137 = vunpack.c.l.b16 %v3073
        %v3138 = vunpack.c.l.b16 %v3074
        %v3139 = vunpack.c.l.b16 %v3075
        %v3140 = vunpack.c.h.b16 %v3072
        %v3141 = vunpack.c.h.b16 %v3073
        %v3142 = vunpack.c.h.b16 %v3074
        %v3143 = vunpack.c.h.b16 %v3075
        %v3144 = vunpack.c.l.b16 %v3076
        %v3145 = vunpack.c.l.b16 %v3077
        %v3146 = vunpack.c.l.b16 %v3078
        %v3147 = vunpack.c.l.b16 %v3079
        %v3148 = vunpack.c.h.b16 %v3076
        %v3149 = vunpack.c.h.b16 %v3077
        %v3150 = vunpack.c.h.b16 %v3078
        %v3151 = vunpack.c.h.b16 %v3079
        %v3152 = vunpack.c.l.b16 %v3080
        %v3153 = vunpack.c.l.b16 %v3081
        %v3154 = vunpack.c.l.b16 %v3082
        %v3155 = vunpack.c.l.b16 %v3083
        %v3156 = vunpack.c.h.b16 %v3080
        %v3157 = vunpack.c.h.b16 %v3081
        %v3158 = vunpack.c.h.b16 %v3082
        %v3159 = vunpack.c.h.b16 %v3083
        %v3160 = vunpack.c.l.b16 %v3084
        %v3161 = vunpack.c.l.b16 %v3085
        %v3162 = vunpack.c.l.b16 %v3086
        %v3163 = vunpack.c.l.b16 %v3087
        %v3164 = vunpack.c.h.b16 %v3084
        %v3165 = vunpack.c.h.b16 %v3085
        %v3166 = vunpack.c.h.b16 %v3086
        %v3167 = vunpack.c.h.b16 %v3087
        %v3168 = vunpack.c.l.b16 %v3088
        %v3169 = vunpack.c.l.b16 %v3089
        %v3170 = vunpack.c.l.b16 %v3090
        %v3171 = vunpack.c.l.b16 %v3091
        %v3172 = vunpack.c.h.b16 %v3088
        %v3173 = vunpack.c.h.b16 %v3089
        %v3174 = vunpack.c.h.b16 %v3090
        %v3175 = vunpack.c.h.b16 %v3091
        %v3176 = vunpack.c.l.b16 %v3092
        %v3177 = vunpack.c.l.b16 %v3093
        %v3178 = vunpack.c.l.b16 %v3094
        %v3179 = vunpack.c.l.b16 %v3095
        %v3180 = vunpack.c.h.b16 %v3092
        %v3181 = vunpack.c.h.b16 %v3093
        %v3182 = vunpack.c.h.b16 %v3094
        %v3183 = vunpack.c.h.b16 %v3095
        %v3184 = vunpack.c.l.b16 %v3096
        %v3185 = vunpack.c.l.b16 %v3097
        %v3186 = vunpack.c.l.b16 %v3098
        %v3187 = vunpack.c.l.b16 %v3099
        %v3188 = vunpack.c.h.b16 %v3096
        %v3189 = vunpack.c.h.b16 %v3097
        %v3190 = vunpack.c.h.b16 %v3098
        %v3191 = vunpack.c.h.b16 %v3099
        %v3192 = vunpack.c.l.b16 %v3100
        %v3193 = vunpack.c.l.b16 %v3101
        %v3194 = vunpack.c.l.b16 %v3102
        %v3195 = vunpack.c.l.b16 %v3103
        %v3196 = vunpack.c.h.b16 %v3100
        %v3197 = vunpack.c.h.b16 %v3101
        %v3198 = vunpack.c.h.b16 %v3102
        %v3199 = vunpack.c.h.b16 %v3103
        %v3200 = vpack.c.b16 %v3137, %v3136
        %v3201 = vpack.c.b16 %v3139, %v3138
        %v3202 = vpack.c.b16 %v3141, %v3140
        %v3203 = vpack.c.b16 %v3143, %v3142
        %v3204 = vpack.c.b16 %v3145, %v3144
        %v3205 = vpack.c.b16 %v3147, %v3146
        %v3206 = vpack.c.b16 %v3149, %v3148
        %v3207 = vpack.c.b16 %v3151, %v3150
        %v3208 = vpack.c.b16 %v3153, %v3152
        %v3209 = vpack.c.b16 %v3155, %v3154
        %v3210 = vpack.c.b16 %v3157, %v3156
        %v3211 = vpack.c.b16 %v3159, %v3158
        %v3212 = vpack.c.b16 %v3161, %v3160
        %v3213 = vpack.c.b16 %v3163, %v3162
        %v3214 = vpack.c.b16 %v3165, %v3164
        %v3215 = vpack.c.b16 %v3167, %v3166
        %v3216 = vpack.c.b16 %v3169, %v3168
        %v3217 = vpack.c.b16 %v3171, %v3170
        %v3218 = vpack.c.b16 %v3173, %v3172
        %v3219 = vpack.c.b16 %v3175, %v3174
        %v3220 = vpack.c.b16 %v3177, %v3176
        %v3221 = vpack.c.b16 %v3179, %v3178
        %v3222 = vpack.c.b16 %v3181, %v3180
        %v3223 = vpack.c.b16 %v3183, %v3182
        %v3224 = vpack.c.b16 %v3185, %v3184
        %v3225 = vpack.c.b16 %v3187, %v3186
        %v3226 = vpack.c.b16 %v3189, %v3188
        %v3227 = vpack.c.b16 %v3191, %v3190
        %v3228 = vpack.c.b16 %v3193, %v3192
        %v3229 = vpack.c.b16 %v3195, %v3194
        %v3230 = vpack.c.b16 %v3197, %v3196
        %v3231 = vpack.c.b16 %v3199, %v3198
        %3264 = vst [vmem:[%s756] sm:$0xff] %v3200
        %3265 = vst [vmem:[%s756 + $0x8] sm:$0xff] %v3201
        %3266 = vst [vmem:[%s756 + $0x10] sm:$0xff] %v3202
        %3267 = vst [vmem:[%s756 + $0x18] sm:$0xff] %v3203
        %3268 = vst [vmem:[%s756 + $0x20] sm:$0xff] %v3204
        %3269 = vst [vmem:[%s756 + $0x28] sm:$0xff] %v3205
        %3270 = vst [vmem:[%s756 + $0x30] sm:$0xff] %v3206
        %3271 = vst [vmem:[%s756 + $0x38] sm:$0xff] %v3207
        %3272 = vst [vmem:[%s756 + $0x40] sm:$0xff] %v3208
        %3273 = vst [vmem:[%s756 + $0x48] sm:$0xff] %v3209
        %3274 = vst [vmem:[%s756 + $0x50] sm:$0xff] %v3210
        %3275 = vst [vmem:[%s756 + $0x58] sm:$0xff] %v3211
        %3276 = vst [vmem:[%s756 + $0x60] sm:$0xff] %v3212
        %3277 = vst [vmem:[%s756 + $0x68] sm:$0xff] %v3213
        %3278 = vst [vmem:[%s756 + $0x70] sm:$0xff] %v3214
        %3279 = vst [vmem:[%s756 + $0x78] sm:$0xff] %v3215
        %3280 = vst [vmem:[%s756 + $0x80] sm:$0xff] %v3216
        %3281 = vst [vmem:[%s756 + $0x88] sm:$0xff] %v3217
        %3282 = vst [vmem:[%s756 + $0x90] sm:$0xff] %v3218
        %3283 = vst [vmem:[%s756 + $0x98] sm:$0xff] %v3219
        %3284 = vst [vmem:[%s756 + $0xa0] sm:$0xff] %v3220
        %3285 = vst [vmem:[%s756 + $0xa8] sm:$0xff] %v3221
        %3286 = vst [vmem:[%s756 + $0xb0] sm:$0xff] %v3222
        %3287 = vst [vmem:[%s756 + $0xb8] sm:$0xff] %v3223
        %3288 = vst [vmem:[%s756 + $0xc0] sm:$0xff] %v3224
        %3289 = vst [vmem:[%s756 + $0xc8] sm:$0xff] %v3225
        %3290 = vst [vmem:[%s756 + $0xd0] sm:$0xff] %v3226
        %3291 = vst [vmem:[%s756 + $0xd8] sm:$0xff] %v3227
        %3292 = vst [vmem:[%s756 + $0xe0] sm:$0xff] %v3228
        %3293 = vst [vmem:[%s756 + $0xe8] sm:$0xff] %v3229
        %3294 = vst [vmem:[%s756 + $0xf0] sm:$0xff] %v3230
        %3295 = vst [vmem:[%s756 + $0xf8] sm:$0xff] %v3231
        %v3296 = vld [vmem:[%s654] sm:$0xff]
        %v3297 = vld [vmem:[%s654 + $0x8] sm:$0xff]
        %v3298 = vld [vmem:[%s654 + $0x10] sm:$0xff]
        %v3299 = vld [vmem:[%s654 + $0x18] sm:$0xff]
        %v3300 = vld [vmem:[%s654 + $0x20] sm:$0xff]
        %v3301 = vld [vmem:[%s654 + $0x28] sm:$0xff]
        %v3302 = vld [vmem:[%s654 + $0x30] sm:$0xff]
        %v3303 = vld [vmem:[%s654 + $0x38] sm:$0xff]
        %v3304 = vld [vmem:[%s654 + $0x40] sm:$0xff]
        %v3305 = vld [vmem:[%s654 + $0x48] sm:$0xff]
        %v3306 = vld [vmem:[%s654 + $0x50] sm:$0xff]
        %v3307 = vld [vmem:[%s654 + $0x58] sm:$0xff]
        %v3308 = vld [vmem:[%s654 + $0x60] sm:$0xff]
        %v3309 = vld [vmem:[%s654 + $0x68] sm:$0xff]
        %v3310 = vld [vmem:[%s654 + $0x70] sm:$0xff]
        %v3311 = vld [vmem:[%s654 + $0x78] sm:$0xff]
        %v3312 = vld [vmem:[%s654 + $0x80] sm:$0xff]
        %v3313 = vld [vmem:[%s654 + $0x88] sm:$0xff]
        %v3314 = vld [vmem:[%s654 + $0x90] sm:$0xff]
        %v3315 = vld [vmem:[%s654 + $0x98] sm:$0xff]
        %v3316 = vld [vmem:[%s654 + $0xa0] sm:$0xff]
        %v3317 = vld [vmem:[%s654 + $0xa8] sm:$0xff]
        %v3318 = vld [vmem:[%s654 + $0xb0] sm:$0xff]
        %v3319 = vld [vmem:[%s654 + $0xb8] sm:$0xff]
        %v3320 = vld [vmem:[%s654 + $0xc0] sm:$0xff]
        %v3321 = vld [vmem:[%s654 + $0xc8] sm:$0xff]
        %v3322 = vld [vmem:[%s654 + $0xd0] sm:$0xff]
        %v3323 = vld [vmem:[%s654 + $0xd8] sm:$0xff]
        %v3324 = vld [vmem:[%s654 + $0xe0] sm:$0xff]
        %v3325 = vld [vmem:[%s654 + $0xe8] sm:$0xff]
        %v3326 = vld [vmem:[%s654 + $0xf0] sm:$0xff]
        %v3327 = vld [vmem:[%s654 + $0xf8] sm:$0xff]
        %v3328 = vmul.f32 %v1870, %v3296
        %v3329 = vmul.f32 %v1872, %v3297
        %v3330 = vmul.f32 %v1874, %v3298
        %v3331 = vmul.f32 %v1876, %v3299
        %v3332 = vmul.f32 %v1880, %v3300
        %v3333 = vmul.f32 %v1882, %v3301
        %v3334 = vmul.f32 %v1884, %v3302
        %v3335 = vmul.f32 %v1886, %v3303
        %v3336 = vmul.f32 %v1890, %v3304
        %v3337 = vmul.f32 %v1892, %v3305
        %v3338 = vmul.f32 %v1894, %v3306
        %v3339 = vmul.f32 %v1896, %v3307
        %v3340 = vmul.f32 %v1900, %v3308
        %v3341 = vmul.f32 %v1902, %v3309
        %v3342 = vmul.f32 %v1904, %v3310
        %v3343 = vmul.f32 %v1906, %v3311
        %v3344 = vmul.f32 %v1910, %v3312
        %v3345 = vmul.f32 %v1912, %v3313
        %v3346 = vmul.f32 %v1914, %v3314
        %v3347 = vmul.f32 %v1916, %v3315
        %v3348 = vmul.f32 %v1920, %v3316
        %v3349 = vmul.f32 %v1922, %v3317
        %v3350 = vmul.f32 %v1924, %v3318
        %v3351 = vmul.f32 %v1926, %v3319
        %v3352 = vmul.f32 %v1930, %v3320
        %v3353 = vmul.f32 %v1932, %v3321
        %v3354 = vmul.f32 %v1934, %v3322
        %v3355 = vmul.f32 %v1936, %v3323
        %v3356 = vmul.f32 %v1940, %v3324
        %v3357 = vmul.f32 %v1942, %v3325
        %v3358 = vmul.f32 %v1944, %v3326
        %v3359 = vmul.f32 %v1946, %v3327
        %3360 = vrot.lane.b32.xlu0 %v1870, 64
        %v3361 = vpop.permute.xlu0 %3360
        %3362 = vrot.lane.b32.xlu0 %v1874, 64
        %v3363 = vpop.permute.xlu0 %3362
        %3364 = vrot.lane.b32.xlu0 %v1880, 64
        %v3365 = vpop.permute.xlu0 %3364
        %3366 = vrot.lane.b32.xlu0 %v1884, 64
        %v3367 = vpop.permute.xlu0 %3366
        %3368 = vrot.lane.b32.xlu0 %v1890, 64
        %v3369 = vpop.permute.xlu0 %3368
        %3370 = vrot.lane.b32.xlu0 %v1894, 64
        %v3371 = vpop.permute.xlu0 %3370
        %3372 = vrot.lane.b32.xlu0 %v1900, 64
        %v3373 = vpop.permute.xlu0 %3372
        %3374 = vrot.lane.b32.xlu0 %v1904, 64
        %v3375 = vpop.permute.xlu0 %3374
        %3376 = vrot.lane.b32.xlu0 %v1910, 64
        %v3377 = vpop.permute.xlu0 %3376
        %3378 = vrot.lane.b32.xlu0 %v1914, 64
        %v3379 = vpop.permute.xlu0 %3378
        %3380 = vrot.lane.b32.xlu0 %v1920, 64
        %v3381 = vpop.permute.xlu0 %3380
        %3382 = vrot.lane.b32.xlu0 %v1924, 64
        %v3383 = vpop.permute.xlu0 %3382
        %3384 = vrot.lane.b32.xlu0 %v1930, 64
        %v3385 = vpop.permute.xlu0 %3384
        %3386 = vrot.lane.b32.xlu0 %v1934, 64
        %v3387 = vpop.permute.xlu0 %3386
        %3388 = vrot.lane.b32.xlu0 %v1940, 64
        %v3389 = vpop.permute.xlu0 %3388
        %3390 = vrot.lane.b32.xlu0 %v1944, 64
        %v3391 = vpop.permute.xlu0 %3390
        %3392 = vrot.lane.b32.xlu0 %v1872, 64
        %v3393 = vpop.permute.xlu0 %3392
        %3394 = vrot.lane.b32.xlu0 %v1876, 64
        %v3395 = vpop.permute.xlu0 %3394
        %3396 = vrot.lane.b32.xlu0 %v1882, 64
        %v3397 = vpop.permute.xlu0 %3396
        %3398 = vrot.lane.b32.xlu0 %v1886, 64
        %v3399 = vpop.permute.xlu0 %3398
        %3400 = vrot.lane.b32.xlu0 %v1892, 64
        %v3401 = vpop.permute.xlu0 %3400
        %3402 = vrot.lane.b32.xlu0 %v1896, 64
        %v3403 = vpop.permute.xlu0 %3402
        %3404 = vrot.lane.b32.xlu0 %v1902, 64
        %v3405 = vpop.permute.xlu0 %3404
        %3406 = vrot.lane.b32.xlu0 %v1906, 64
        %v3407 = vpop.permute.xlu0 %3406
        %3408 = vrot.lane.b32.xlu0 %v1912, 64
        %v3409 = vpop.permute.xlu0 %3408
        %3410 = vrot.lane.b32.xlu0 %v1916, 64
        %v3411 = vpop.permute.xlu0 %3410
        %3412 = vrot.lane.b32.xlu0 %v1922, 64
        %v3413 = vpop.permute.xlu0 %3412
        %3414 = vrot.lane.b32.xlu0 %v1926, 64
        %v3415 = vpop.permute.xlu0 %3414
        %3416 = vrot.lane.b32.xlu0 %v1932, 64
        %v3417 = vpop.permute.xlu0 %3416
        %3418 = vrot.lane.b32.xlu0 %v1936, 64
        %v3419 = vpop.permute.xlu0 %3418
        %3420 = vrot.lane.b32.xlu0 %v1942, 64
        %v3421 = vpop.permute.xlu0 %3420
        %3422 = vrot.lane.b32.xlu0 %v1946, 64
        %v3423 = vpop.permute.xlu0 %3422
        %v3424 = vsel %vm2623, %v3361, %v3393
        %v3425 = vsel %vm2623, %v3363, %v3395
        %v3426 = vsel %vm2623, %v3365, %v3397
        %v3427 = vsel %vm2623, %v3367, %v3399
        %v3428 = vsel %vm2623, %v3369, %v3401
        %v3429 = vsel %vm2623, %v3371, %v3403
        %v3430 = vsel %vm2623, %v3373, %v3405
        %v3431 = vsel %vm2623, %v3375, %v3407
        %v3432 = vsel %vm2623, %v3377, %v3409
        %v3433 = vsel %vm2623, %v3379, %v3411
        %v3434 = vsel %vm2623, %v3381, %v3413
        %v3435 = vsel %vm2623, %v3383, %v3415
        %v3436 = vsel %vm2623, %v3385, %v3417
        %v3437 = vsel %vm2623, %v3387, %v3419
        %v3438 = vsel %vm2623, %v3389, %v3421
        %v3439 = vsel %vm2623, %v3391, %v3423
        %v3440 = vsel %vm2623, %v3393, %v3361
        %v3441 = vsel %vm2623, %v3395, %v3363
        %v3442 = vsel %vm2623, %v3397, %v3365
        %v3443 = vsel %vm2623, %v3399, %v3367
        %v3444 = vsel %vm2623, %v3401, %v3369
        %v3445 = vsel %vm2623, %v3403, %v3371
        %v3446 = vsel %vm2623, %v3405, %v3373
        %v3447 = vsel %vm2623, %v3407, %v3375
        %v3448 = vsel %vm2623, %v3409, %v3377
        %v3449 = vsel %vm2623, %v3411, %v3379
        %v3450 = vsel %vm2623, %v3413, %v3381
        %v3451 = vsel %vm2623, %v3415, %v3383
        %v3452 = vsel %vm2623, %v3417, %v3385
        %v3453 = vsel %vm2623, %v3419, %v3387
        %v3454 = vsel %vm2623, %v3421, %v3389
        %v3455 = vsel %vm2623, %v3423, %v3391
        %v3456 = vld [vmem:[%s663] sm:$0xff]
        %v3457 = vld [vmem:[%s663 + $0x8] sm:$0xff]
        %v3458 = vld [vmem:[%s663 + $0x10] sm:$0xff]
        %v3459 = vld [vmem:[%s663 + $0x18] sm:$0xff]
        %v3460 = vld [vmem:[%s663 + $0x20] sm:$0xff]
        %v3461 = vld [vmem:[%s663 + $0x28] sm:$0xff]
        %v3462 = vld [vmem:[%s663 + $0x30] sm:$0xff]
        %v3463 = vld [vmem:[%s663 + $0x38] sm:$0xff]
        %v3464 = vld [vmem:[%s663 + $0x40] sm:$0xff]
        %v3465 = vld [vmem:[%s663 + $0x48] sm:$0xff]
        %v3466 = vld [vmem:[%s663 + $0x50] sm:$0xff]
        %v3467 = vld [vmem:[%s663 + $0x58] sm:$0xff]
        %v3468 = vld [vmem:[%s663 + $0x60] sm:$0xff]
        %v3469 = vld [vmem:[%s663 + $0x68] sm:$0xff]
        %v3470 = vld [vmem:[%s663 + $0x70] sm:$0xff]
        %v3471 = vld [vmem:[%s663 + $0x78] sm:$0xff]
        %v3472 = vld [vmem:[%s663 + $0x80] sm:$0xff]
        %v3473 = vld [vmem:[%s663 + $0x88] sm:$0xff]
        %v3474 = vld [vmem:[%s663 + $0x90] sm:$0xff]
        %v3475 = vld [vmem:[%s663 + $0x98] sm:$0xff]
        %v3476 = vld [vmem:[%s663 + $0xa0] sm:$0xff]
        %v3477 = vld [vmem:[%s663 + $0xa8] sm:$0xff]
        %v3478 = vld [vmem:[%s663 + $0xb0] sm:$0xff]
        %v3479 = vld [vmem:[%s663 + $0xb8] sm:$0xff]
        %v3480 = vld [vmem:[%s663 + $0xc0] sm:$0xff]
        %v3481 = vld [vmem:[%s663 + $0xc8] sm:$0xff]
        %v3482 = vld [vmem:[%s663 + $0xd0] sm:$0xff]
        %v3483 = vld [vmem:[%s663 + $0xd8] sm:$0xff]
        %v3484 = vld [vmem:[%s663 + $0xe0] sm:$0xff]
        %v3485 = vld [vmem:[%s663 + $0xe8] sm:$0xff]
        %v3486 = vld [vmem:[%s663 + $0xf0] sm:$0xff]
        %v3487 = vld [vmem:[%s663 + $0xf8] sm:$0xff]
        %v3488 = vmul.f32 %v3424, %v3456
        %v3489 = vmul.f32 %v3440, %v3457
        %v3490 = vmul.f32 %v3425, %v3458
        %v3491 = vmul.f32 %v3441, %v3459
        %v3492 = vmul.f32 %v3426, %v3460
        %v3493 = vmul.f32 %v3442, %v3461
        %v3494 = vmul.f32 %v3427, %v3462
        %v3495 = vmul.f32 %v3443, %v3463
        %v3496 = vmul.f32 %v3428, %v3464
        %v3497 = vmul.f32 %v3444, %v3465
        %v3498 = vmul.f32 %v3429, %v3466
        %v3499 = vmul.f32 %v3445, %v3467
        %v3500 = vmul.f32 %v3430, %v3468
        %v3501 = vmul.f32 %v3446, %v3469
        %v3502 = vmul.f32 %v3431, %v3470
        %v3503 = vmul.f32 %v3447, %v3471
        %v3504 = vmul.f32 %v3432, %v3472
        %v3505 = vmul.f32 %v3448, %v3473
        %v3506 = vmul.f32 %v3433, %v3474
        %v3507 = vmul.f32 %v3449, %v3475
        %v3508 = vmul.f32 %v3434, %v3476
        %v3509 = vmul.f32 %v3450, %v3477
        %v3510 = vmul.f32 %v3435, %v3478
        %v3511 = vmul.f32 %v3451, %v3479
        %v3512 = vmul.f32 %v3436, %v3480
        %v3513 = vmul.f32 %v3452, %v3481
        %v3514 = vmul.f32 %v3437, %v3482
        %v3515 = vmul.f32 %v3453, %v3483
        %v3516 = vmul.f32 %v3438, %v3484
        %v3517 = vmul.f32 %v3454, %v3485
        %v3518 = vmul.f32 %v3439, %v3486
        %v3519 = vmul.f32 %v3455, %v3487
        %v3520 = vadd.f32 %v3328, %v3488
        %v3521 = vadd.f32 %v3329, %v3489
        %v3522 = vadd.f32 %v3330, %v3490
        %v3523 = vadd.f32 %v3331, %v3491
        %v3524 = vadd.f32 %v3332, %v3492
        %v3525 = vadd.f32 %v3333, %v3493
        %v3526 = vadd.f32 %v3334, %v3494
        %v3527 = vadd.f32 %v3335, %v3495
        %v3528 = vadd.f32 %v3336, %v3496
        %v3529 = vadd.f32 %v3337, %v3497
        %v3530 = vadd.f32 %v3338, %v3498
        %v3531 = vadd.f32 %v3339, %v3499
        %v3532 = vadd.f32 %v3340, %v3500
        %v3533 = vadd.f32 %v3341, %v3501
        %v3534 = vadd.f32 %v3342, %v3502
        %v3535 = vadd.f32 %v3343, %v3503
        %v3536 = vadd.f32 %v3344, %v3504
        %v3537 = vadd.f32 %v3345, %v3505
        %v3538 = vadd.f32 %v3346, %v3506
        %v3539 = vadd.f32 %v3347, %v3507
        %v3540 = vadd.f32 %v3348, %v3508
        %v3541 = vadd.f32 %v3349, %v3509
        %v3542 = vadd.f32 %v3350, %v3510
        %v3543 = vadd.f32 %v3351, %v3511
        %v3544 = vadd.f32 %v3352, %v3512
        %v3545 = vadd.f32 %v3353, %v3513
        %v3546 = vadd.f32 %v3354, %v3514
        %v3547 = vadd.f32 %v3355, %v3515
        %v3548 = vadd.f32 %v3356, %v3516
        %v3549 = vadd.f32 %v3357, %v3517
        %v3550 = vadd.f32 %v3358, %v3518
        %v3551 = vadd.f32 %v3359, %v3519
        %v3552 = vld [vmem:[%s672] sm:$0xff]
        %v3553 = vld [vmem:[%s672 + $0x8] sm:$0xff]
        %v3554 = vld [vmem:[%s672 + $0x10] sm:$0xff]
        %v3555 = vld [vmem:[%s672 + $0x18] sm:$0xff]
        %v3556 = vld [vmem:[%s672 + $0x20] sm:$0xff]
        %v3557 = vld [vmem:[%s672 + $0x28] sm:$0xff]
        %v3558 = vld [vmem:[%s672 + $0x30] sm:$0xff]
        %v3559 = vld [vmem:[%s672 + $0x38] sm:$0xff]
        %v3560 = vld [vmem:[%s672 + $0x40] sm:$0xff]
        %v3561 = vld [vmem:[%s672 + $0x48] sm:$0xff]
        %v3562 = vld [vmem:[%s672 + $0x50] sm:$0xff]
        %v3563 = vld [vmem:[%s672 + $0x58] sm:$0xff]
        %v3564 = vld [vmem:[%s672 + $0x60] sm:$0xff]
        %v3565 = vld [vmem:[%s672 + $0x68] sm:$0xff]
        %v3566 = vld [vmem:[%s672 + $0x70] sm:$0xff]
        %v3567 = vld [vmem:[%s672 + $0x78] sm:$0xff]
        %v3568 = vld [vmem:[%s672 + $0x80] sm:$0xff]
        %v3569 = vld [vmem:[%s672 + $0x88] sm:$0xff]
        %v3570 = vld [vmem:[%s672 + $0x90] sm:$0xff]
        %v3571 = vld [vmem:[%s672 + $0x98] sm:$0xff]
        %v3572 = vld [vmem:[%s672 + $0xa0] sm:$0xff]
        %v3573 = vld [vmem:[%s672 + $0xa8] sm:$0xff]
        %v3574 = vld [vmem:[%s672 + $0xb0] sm:$0xff]
        %v3575 = vld [vmem:[%s672 + $0xb8] sm:$0xff]
        %v3576 = vld [vmem:[%s672 + $0xc0] sm:$0xff]
        %v3577 = vld [vmem:[%s672 + $0xc8] sm:$0xff]
        %v3578 = vld [vmem:[%s672 + $0xd0] sm:$0xff]
        %v3579 = vld [vmem:[%s672 + $0xd8] sm:$0xff]
        %v3580 = vld [vmem:[%s672 + $0xe0] sm:$0xff]
        %v3581 = vld [vmem:[%s672 + $0xe8] sm:$0xff]
        %v3582 = vld [vmem:[%s672 + $0xf0] sm:$0xff]
        %v3583 = vld [vmem:[%s672 + $0xf8] sm:$0xff]
        %v3584 = vmul.f32 %v3440, %v3552
        %v3585 = vmul.f32 %v3424, %v3553
        %v3586 = vmul.f32 %v3441, %v3554
        %v3587 = vmul.f32 %v3425, %v3555
        %v3588 = vmul.f32 %v3442, %v3556
        %v3589 = vmul.f32 %v3426, %v3557
        %v3590 = vmul.f32 %v3443, %v3558
        %v3591 = vmul.f32 %v3427, %v3559
        %v3592 = vmul.f32 %v3444, %v3560
        %v3593 = vmul.f32 %v3428, %v3561
        %v3594 = vmul.f32 %v3445, %v3562
        %v3595 = vmul.f32 %v3429, %v3563
        %v3596 = vmul.f32 %v3446, %v3564
        %v3597 = vmul.f32 %v3430, %v3565
        %v3598 = vmul.f32 %v3447, %v3566
        %v3599 = vmul.f32 %v3431, %v3567
        %v3600 = vmul.f32 %v3448, %v3568
        %v3601 = vmul.f32 %v3432, %v3569
        %v3602 = vmul.f32 %v3449, %v3570
        %v3603 = vmul.f32 %v3433, %v3571
        %v3604 = vmul.f32 %v3450, %v3572
        %v3605 = vmul.f32 %v3434, %v3573
        %v3606 = vmul.f32 %v3451, %v3574
        %v3607 = vmul.f32 %v3435, %v3575
        %v3608 = vmul.f32 %v3452, %v3576
        %v3609 = vmul.f32 %v3436, %v3577
        %v3610 = vmul.f32 %v3453, %v3578
        %v3611 = vmul.f32 %v3437, %v3579
        %v3612 = vmul.f32 %v3454, %v3580
        %v3613 = vmul.f32 %v3438, %v3581
        %v3614 = vmul.f32 %v3455, %v3582
        %v3615 = vmul.f32 %v3439, %v3583
        %v3616 = vadd.f32 %v3520, %v3584
        %v3617 = vadd.f32 %v3521, %v3585
        %v3618 = vadd.f32 %v3522, %v3586
        %v3619 = vadd.f32 %v3523, %v3587
        %v3620 = vadd.f32 %v3524, %v3588
        %v3621 = vadd.f32 %v3525, %v3589
        %v3622 = vadd.f32 %v3526, %v3590
        %v3623 = vadd.f32 %v3527, %v3591
        %v3624 = vadd.f32 %v3528, %v3592
        %v3625 = vadd.f32 %v3529, %v3593
        %v3626 = vadd.f32 %v3530, %v3594
        %v3627 = vadd.f32 %v3531, %v3595
        %v3628 = vadd.f32 %v3532, %v3596
        %v3629 = vadd.f32 %v3533, %v3597
        %v3630 = vadd.f32 %v3534, %v3598
        %v3631 = vadd.f32 %v3535, %v3599
        %v3632 = vadd.f32 %v3536, %v3600
        %v3633 = vadd.f32 %v3537, %v3601
        %v3634 = vadd.f32 %v3538, %v3602
        %v3635 = vadd.f32 %v3539, %v3603
        %v3636 = vadd.f32 %v3540, %v3604
        %v3637 = vadd.f32 %v3541, %v3605
        %v3638 = vadd.f32 %v3542, %v3606
        %v3639 = vadd.f32 %v3543, %v3607
        %v3640 = vadd.f32 %v3544, %v3608
        %v3641 = vadd.f32 %v3545, %v3609
        %v3642 = vadd.f32 %v3546, %v3610
        %v3643 = vadd.f32 %v3547, %v3611
        %v3644 = vadd.f32 %v3548, %v3612
        %v3645 = vadd.f32 %v3549, %v3613
        %v3646 = vadd.f32 %v3550, %v3614
        %v3647 = vadd.f32 %v3551, %v3615
        %3648 = vxpose.xlu0.b32.start [1/16] %v3616, 128
        %3649 = vxpose.xlu0.b32.cont [2/16] %v3618, 128
        %3650 = vxpose.xlu0.b32.cont [3/16] %v3620, 128
        %3651 = vxpose.xlu0.b32.cont [4/16] %v3622, 128
        %3652 = vxpose.xlu0.b32.cont [5/16] %v3624, 128
        %3653 = vxpose.xlu0.b32.cont [6/16] %v3626, 128
        %3654 = vxpose.xlu0.b32.cont [7/16] %v3628, 128
        %3655 = vxpose.xlu0.b32.cont [8/16] %v3630, 128
        %3656 = vxpose.xlu0.b32.cont [9/16] %v3632, 128
        %3657 = vxpose.xlu0.b32.cont [10/16] %v3634, 128
        %3658 = vxpose.xlu0.b32.cont [11/16] %v3636, 128
        %3659 = vxpose.xlu0.b32.cont [12/16] %v3638, 128
        %3660 = vxpose.xlu0.b32.cont [13/16] %v3640, 128
        %3661 = vxpose.xlu0.b32.cont [14/16] %v3642, 128
        %3662 = vxpose.xlu0.b32.cont [15/16] %v3644, 128
        %3663 = vxpose.xlu0.b32.end [16/16] %v3646, 128
        %v3664 = vpop.trf.xlu0
        %v3665 = vpop.trf.xlu0
        %v3666 = vpop.trf.xlu0
        %v3667 = vpop.trf.xlu0
        %v3668 = vpop.trf.xlu0
        %v3669 = vpop.trf.xlu0
        %v3670 = vpop.trf.xlu0
        %v3671 = vpop.trf.xlu0
        %v3672 = vpop.trf.xlu0
        %v3673 = vpop.trf.xlu0
        %v3674 = vpop.trf.xlu0
        %v3675 = vpop.trf.xlu0
        %v3676 = vpop.trf.xlu0
        %v3677 = vpop.trf.xlu0
        %v3678 = vpop.trf.xlu0
        %v3679 = vpop.trf.xlu0
        %3680 = vxpose.xlu0.b32.start [1/16] %v3617, 128
        %3681 = vxpose.xlu0.b32.cont [2/16] %v3619, 128
        %3682 = vxpose.xlu0.b32.cont [3/16] %v3621, 128
        %3683 = vxpose.xlu0.b32.cont [4/16] %v3623, 128
        %3684 = vxpose.xlu0.b32.cont [5/16] %v3625, 128
        %3685 = vxpose.xlu0.b32.cont [6/16] %v3627, 128
        %3686 = vxpose.xlu0.b32.cont [7/16] %v3629, 128
        %3687 = vxpose.xlu0.b32.cont [8/16] %v3631, 128
        %3688 = vxpose.xlu0.b32.cont [9/16] %v3633, 128
        %3689 = vxpose.xlu0.b32.cont [10/16] %v3635, 128
        %3690 = vxpose.xlu0.b32.cont [11/16] %v3637, 128
        %3691 = vxpose.xlu0.b32.cont [12/16] %v3639, 128
        %3692 = vxpose.xlu0.b32.cont [13/16] %v3641, 128
        %3693 = vxpose.xlu0.b32.cont [14/16] %v3643, 128
        %3694 = vxpose.xlu0.b32.cont [15/16] %v3645, 128
        %3695 = vxpose.xlu0.b32.end [16/16] %v3647, 128
        %v3696 = vpop.trf.xlu0
        %v3697 = vpop.trf.xlu0
        %v3698 = vpop.trf.xlu0
        %v3699 = vpop.trf.xlu0
        %v3700 = vpop.trf.xlu0
        %v3701 = vpop.trf.xlu0
        %v3702 = vpop.trf.xlu0
        %v3703 = vpop.trf.xlu0
        %v3704 = vpop.trf.xlu0
        %v3705 = vpop.trf.xlu0
        %v3706 = vpop.trf.xlu0
        %v3707 = vpop.trf.xlu0
        %v3708 = vpop.trf.xlu0
        %v3709 = vpop.trf.xlu0
        %v3710 = vpop.trf.xlu0
        %v3711 = vpop.trf.xlu0
        %v3712 = vpack.c.bf16 %v3665, %v3664
        %v3713 = vpack.c.bf16 %v3667, %v3666
        %v3714 = vpack.c.bf16 %v3669, %v3668
        %v3715 = vpack.c.bf16 %v3671, %v3670
        %v3716 = vpack.c.bf16 %v3673, %v3672
        %v3717 = vpack.c.bf16 %v3675, %v3674
        %v3718 = vpack.c.bf16 %v3677, %v3676
        %v3719 = vpack.c.bf16 %v3679, %v3678
        %v3720 = vpack.c.bf16 %v3697, %v3696
        %v3721 = vpack.c.bf16 %v3699, %v3698
        %v3722 = vpack.c.bf16 %v3701, %v3700
        %v3723 = vpack.c.bf16 %v3703, %v3702
        %v3724 = vpack.c.bf16 %v3705, %v3704
        %v3725 = vpack.c.bf16 %v3707, %v3706
        %v3726 = vpack.c.bf16 %v3709, %v3708
        %v3727 = vpack.c.bf16 %v3711, %v3710
        %v3744 = vunpack.c.l.b16 %v3712
        %v3745 = vunpack.c.h.b16 %v3712
        %v3746 = vunpack.c.l.b16 %v3713
        %v3747 = vunpack.c.h.b16 %v3713
        %v3748 = vunpack.c.l.b16 %v3714
        %v3749 = vunpack.c.h.b16 %v3714
        %v3750 = vunpack.c.l.b16 %v3715
        %v3751 = vunpack.c.h.b16 %v3715
        %v3752 = vunpack.c.l.b16 %v3716
        %v3753 = vunpack.c.h.b16 %v3716
        %v3754 = vunpack.c.l.b16 %v3717
        %v3755 = vunpack.c.h.b16 %v3717
        %v3756 = vunpack.c.l.b16 %v3718
        %v3757 = vunpack.c.h.b16 %v3718
        %v3758 = vunpack.c.l.b16 %v3719
        %v3759 = vunpack.c.h.b16 %v3719
        %v3760 = vunpack.c.l.b16 %v3720
        %v3761 = vunpack.c.h.b16 %v3720
        %v3762 = vunpack.c.l.b16 %v3721
        %v3763 = vunpack.c.h.b16 %v3721
        %v3764 = vunpack.c.l.b16 %v3722
        %v3765 = vunpack.c.h.b16 %v3722
        %v3766 = vunpack.c.l.b16 %v3723
        %v3767 = vunpack.c.h.b16 %v3723
        %v3768 = vunpack.c.l.b16 %v3724
        %v3769 = vunpack.c.h.b16 %v3724
        %v3770 = vunpack.c.l.b16 %v3725
        %v3771 = vunpack.c.h.b16 %v3725
        %v3772 = vunpack.c.l.b16 %v3726
        %v3773 = vunpack.c.h.b16 %v3726
        %v3774 = vunpack.c.l.b16 %v3727
        %v3775 = vunpack.c.h.b16 %v3727
        %v3776 = vpack.c.b16 %v3744, %v3744
        %v3777 = vpack.c.b16 %v3745, %v3745
        %v3778 = vpack.c.b16 %v3746, %v3746
        %v3779 = vpack.c.b16 %v3747, %v3747
        %v3780 = vpack.c.b16 %v3748, %v3748
        %v3781 = vpack.c.b16 %v3749, %v3749
        %v3782 = vpack.c.b16 %v3750, %v3750
        %v3783 = vpack.c.b16 %v3751, %v3751
        %v3784 = vpack.c.b16 %v3752, %v3752
        %v3785 = vpack.c.b16 %v3753, %v3753
        %v3786 = vpack.c.b16 %v3754, %v3754
        %v3787 = vpack.c.b16 %v3755, %v3755
        %v3788 = vpack.c.b16 %v3756, %v3756
        %v3789 = vpack.c.b16 %v3757, %v3757
        %v3790 = vpack.c.b16 %v3758, %v3758
        %v3791 = vpack.c.b16 %v3759, %v3759
        %v3792 = vpack.c.b16 %v3760, %v3760
        %v3793 = vpack.c.b16 %v3761, %v3761
        %v3794 = vpack.c.b16 %v3762, %v3762
        %v3795 = vpack.c.b16 %v3763, %v3763
        %v3796 = vpack.c.b16 %v3764, %v3764
        %v3797 = vpack.c.b16 %v3765, %v3765
        %v3798 = vpack.c.b16 %v3766, %v3766
        %v3799 = vpack.c.b16 %v3767, %v3767
        %v3800 = vpack.c.b16 %v3768, %v3768
        %v3801 = vpack.c.b16 %v3769, %v3769
        %v3802 = vpack.c.b16 %v3770, %v3770
        %v3803 = vpack.c.b16 %v3771, %v3771
        %v3804 = vpack.c.b16 %v3772, %v3772
        %v3805 = vpack.c.b16 %v3773, %v3773
        %v3806 = vpack.c.b16 %v3774, %v3774
        %v3807 = vpack.c.b16 %v3775, %v3775
        %3840 = vst [vmem:[%s763] sm:$0xf] %v3776
        %3841 = vst [vmem:[%s763 + $0x4] sm:$0xf] %v3777
        %3842 = vst [vmem:[%s763 + $0x8] sm:$0xf] %v3778
        %3843 = vst [vmem:[%s763 + $0xc] sm:$0xf] %v3779
        %3844 = vst [vmem:[%s763 + $0x10] sm:$0xf] %v3780
        %3845 = vst [vmem:[%s763 + $0x14] sm:$0xf] %v3781
        %3846 = vst [vmem:[%s763 + $0x18] sm:$0xf] %v3782
        %3847 = vst [vmem:[%s763 + $0x1c] sm:$0xf] %v3783
        %3848 = vst [vmem:[%s763 + $0x20] sm:$0xf] %v3784
        %3849 = vst [vmem:[%s763 + $0x24] sm:$0xf] %v3785
        %3850 = vst [vmem:[%s763 + $0x28] sm:$0xf] %v3786
        %3851 = vst [vmem:[%s763 + $0x2c] sm:$0xf] %v3787
        %3852 = vst [vmem:[%s763 + $0x30] sm:$0xf] %v3788
        %3853 = vst [vmem:[%s763 + $0x34] sm:$0xf] %v3789
        %3854 = vst [vmem:[%s763 + $0x38] sm:$0xf] %v3790
        %3855 = vst [vmem:[%s763 + $0x3c] sm:$0xf] %v3791
        %3856 = vst [vmem:[%s763 + $0x40] sm:$0xf] %v3792
        %3857 = vst [vmem:[%s763 + $0x44] sm:$0xf] %v3793
        %3858 = vst [vmem:[%s763 + $0x48] sm:$0xf] %v3794
        %3859 = vst [vmem:[%s763 + $0x4c] sm:$0xf] %v3795
        %3860 = vst [vmem:[%s763 + $0x50] sm:$0xf] %v3796
        %3861 = vst [vmem:[%s763 + $0x54] sm:$0xf] %v3797
        %3862 = vst [vmem:[%s763 + $0x58] sm:$0xf] %v3798
        %3863 = vst [vmem:[%s763 + $0x5c] sm:$0xf] %v3799
        %3864 = vst [vmem:[%s763 + $0x60] sm:$0xf] %v3800
        %3865 = vst [vmem:[%s763 + $0x64] sm:$0xf] %v3801
        %3866 = vst [vmem:[%s763 + $0x68] sm:$0xf] %v3802
        %3867 = vst [vmem:[%s763 + $0x6c] sm:$0xf] %v3803
        %3868 = vst [vmem:[%s763 + $0x70] sm:$0xf] %v3804
        %3869 = vst [vmem:[%s763 + $0x74] sm:$0xf] %v3805
        %3870 = vst [vmem:[%s763 + $0x78] sm:$0xf] %v3806
        %3871 = vst [vmem:[%s763 + $0x7c] sm:$0xf] %v3807
        %s3872 = sand.u32 %s319, 1
        %s3873 = scalar_lea.sflag [#allocation4], %s3872
        %s3874 = sand.u32 %s319, 1
        %s3875 = smul.addr %s3874, 256
        %s3876 = scalar_lea.vmem [#allocation20], %s3875
        %s3877 = sand.u32 %s45, 1
        %s3878 = scalar_lea.sflag [#allocation22], %s3877
        %s3879 = sand.u32 %s345, 1
        %s3880 = smul.addr %s3879, 128
        %s3881 = scalar_lea.vmem [#allocation21], %s3880
        %s3882 = sand.u32 %s45, 1
        %s3883 = scalar_lea.sflag [#allocation22], %s3882
        %s3884 = sand.u32 %s371, 1
        %s3885 = smul.addr %s3884, 128
        %s3886 = scalar_lea.vmem [#allocation23], %s3885
        // Predicated region
        $region109: #{tpu_custom_call.1} parent=63 // pred_check
          %p3887 = pneg %p329
        $region110: #{tpu_custom_call.1} parent=63 // pred_check_branch
          %3889 = sbr.rel (%p3887) target = $region112
        $region111: #{tpu_custom_call.1} parent=63 // pred_region
          %s3890 = smul.u32 16, %s45
          %s3892 = ssub.s32 4096, 4096
          %3893 = vsyncadd %s3873, %s3892
          %s3894 = smul.addr %s3890, 4
          %s3895 = smul.addr %s3894, 64
          %s3896 = scalar_lea.hbm %s11, %s3895
          %s3897 = sshll.u32 %s3876, 4
          %s3898 = int_to_ptr.vmem [resolvable:$true] %s3897
          %3903 = dma.vmem_to_hbm [thread:$0]  %s3898, 4096, %s3896, %s3873, 256, 256, 16
        $region112: #{tpu_custom_call.1} parent=63 // pred_fallthru
          _
        // Predicated region
        $region113: #{tpu_custom_call.1} parent=63 // pred_check
          %p3904 = pneg %p355
        $region114: #{tpu_custom_call.1} parent=63 // pred_check_branch
          %3906 = sbr.rel (%p3904) target = $region116
        $region115: #{tpu_custom_call.1} parent=63 // pred_region
          %s3908 = ssub.s32 2048, 2048
          %3909 = vsyncadd %s3878, %s3908
          %s3910 = smul.addr %s45, 64
          %s3911 = scalar_lea.hbm %s12, %s3910
          %s3912 = sshll.u32 %s3881, 4
          %s3913 = int_to_ptr.vmem [resolvable:$true] %s3912
          %3918 = dma.vmem_to_hbm [thread:$0]  %s3913, 2048, %s3911, %s3878, 64, 128, 4
        $region116: #{tpu_custom_call.1} parent=63 // pred_fallthru
          _
        // Predicated region
        $region117: #{tpu_custom_call.1} parent=63 // pred_check
          %p3919 = pneg %p381
        $region118: #{tpu_custom_call.1} parent=63 // pred_check_branch
          %3921 = sbr.rel (%p3919) target = $region120
        $region119: #{tpu_custom_call.1} parent=63 // pred_region
          %s3922 = smul.u32 16, %s45
          %s3924 = ssub.s32 2048, 2048
          %3925 = vsyncadd %s3883, %s3924
          %s3926 = smul.addr %s3922, 2
          %s3927 = smul.addr %s3926, 64
          %s3928 = scalar_lea.hbm %s13, %s3927
          %s3929 = sshll.u32 %s3886, 4
          %s3930 = int_to_ptr.vmem [resolvable:$true] %s3929
          %3935 = dma.vmem_to_hbm [thread:$0]  %s3930, 2048, %s3928, %s3883, 128, 128, 8
        $region120: #{tpu_custom_call.1} parent=63 // pred_fallthru
          _
      $region64: #{tpu_custom_call.1} parent=5 // pred_fallthru
        _
      %p3936 = scmp.le.s32.totalorder 2, %s40
      // Predicated region
      $region121: #{tpu_custom_call.1} parent=5 // pred_check
        %p3937 = pneg %p3936
      $region122: #{tpu_custom_call.1} parent=5 // pred_check_branch
        %3939 = sbr.rel (%p3937) target = $region124
      $region123: #{tpu_custom_call.1} parent=5 // pred_region
        %s3940 = ssub.s32 %s40, 2
        // Predicated region
        $region125: #{tpu_custom_call.1} parent=123 // pred_check
          %p3941 = pneg %p335
        $region126: #{tpu_custom_call.1} parent=123 // pred_check_branch
          %3943 = sbr.rel (%p3941) target = $region128
        $region127: #{tpu_custom_call.1} parent=123 // pred_region
          %s3944 = sand.u32 %s320, 1
          %s3945 = scalar_lea.sflag [#allocation4], %s3944
          %s3946 = sand.u32 %s320, 1
          %s3947 = smul.addr %s3946, 256
          %s3948 = scalar_lea.vmem [#allocation20], %s3947
          %3949 = dma.done %s3945, 4096
        $region128: #{tpu_custom_call.1} parent=123 // pred_fallthru
          _
        // Predicated region
        $region129: #{tpu_custom_call.1} parent=123 // pred_check
          %p3950 = pneg %p361
        $region130: #{tpu_custom_call.1} parent=123 // pred_check_branch
          %3952 = sbr.rel (%p3950) target = $region132
        $region131: #{tpu_custom_call.1} parent=123 // pred_region
          %s3953 = sand.u32 %s46, 1
          %s3954 = scalar_lea.sflag [#allocation22], %s3953
          %s3955 = sand.u32 %s346, 1
          %s3956 = smul.addr %s3955, 128
          %s3957 = scalar_lea.vmem [#allocation21], %s3956
          %3958 = dma.done %s3954, 2048
        $region132: #{tpu_custom_call.1} parent=123 // pred_fallthru
          _
        // Predicated region
        $region133: #{tpu_custom_call.1} parent=123 // pred_check
          %p3959 = pneg %p387
        $region134: #{tpu_custom_call.1} parent=123 // pred_check_branch
          %3961 = sbr.rel (%p3959) target = $region136
        $region135: #{tpu_custom_call.1} parent=123 // pred_region
          %s3962 = sand.u32 %s46, 1
          %s3963 = scalar_lea.sflag [#allocation22], %s3962
          %s3964 = sand.u32 %s372, 1
          %s3965 = smul.addr %s3964, 128
          %s3966 = scalar_lea.vmem [#allocation23], %s3965
          %3967 = dma.done %s3963, 2048
        $region136: #{tpu_custom_call.1} parent=123 // pred_fallthru
          _
      $region124: #{tpu_custom_call.1} parent=5 // pred_fallthru
        _
    $region6: #{tpu_custom_call.1} parent=1 // loop_footer
      %s44 = sadd.s32 1, %s40
    $region7: #{tpu_custom_call.1} parent=1 // loop_footer_branch
      %39 = sbr.rel target = $region3
    $region8: #{tpu_custom_call.1} parent=1 // loop_exit
      _
    %3968 = vsyncpa [#allocation3], 1
    %s3969 = scalar_lea.sflag [#allocation3], 1
    %3970 = vsyncpa %s3969, 1
    %3971 = vsyncpa [#allocation6], 1
    %s3972 = scalar_lea.sflag [#allocation6], 1
    %3973 = vsyncpa %s3972, 1
    %3974 = vsyncpa [#allocation9], 1
    %s3975 = scalar_lea.sflag [#allocation9], 1
    %3976 = vsyncpa %s3975, 1
    %3977 = vsyncpa [#allocation12], 1
    %s3978 = scalar_lea.sflag [#allocation12], 1
    %3979 = vsyncpa %s3978, 1
    %3980 = vsyncpa [#allocation15], 1
    %3981 = vsyncpa [#allocation18], 1
    %3982 = vsyncpa [#allocation4], 1
    %s3983 = scalar_lea.sflag [#allocation4], 1
    %3984 = vsyncpa %s3983, 1
    %3985 = vsyncpa [#allocation22], 1
    %s3986 = scalar_lea.sflag [#allocation22], 1
    %3987 = vsyncpa %s3986, 1

// kernel: tpu_custom_call.1
$region0: #{tpu_custom_call.1}
  #allocation0 [shape = 'u32[]', space=smem, size = 0x4, offset = 0x4, fixed_abs, tag = 'smem constant byte address 0x4 - core index']
  #allocation1 [shape = 'u32[144,128]{1,0:T(1,128)}', space=vmem, size = 0x12000, scoped, tag = 'internal scratch']
  %s0 = inlined_call_operand.hbm [shape: f32[256,256], index: 0, kind: input, shape index: {}]
  %s1 = inlined_call_operand.hbm [shape: f32[256,512], index: 1, kind: input, shape index: {}]
  %s2 = inlined_call_operand.hbm [shape: f32[256,512], index: 2, kind: input, shape index: {}]
  %s3 = inlined_call_operand.hbm [shape: f32[256,512], index: 3, kind: input, shape index: {}]
  %s4 = inlined_call_operand.hbm [shape: f32[256,256], index: 4, kind: input, shape index: {}]
  %s5 = inlined_call_operand.hbm [shape: f32[256,256], index: 5, kind: input, shape index: {}]
  %s6 = inlined_call_operand.hbm [shape: f32[256,256], index: 6, kind: input, shape index: {}]
  %s7 = inlined_call_operand.hbm [shape: f32[1,256], index: 7, kind: input, shape index: {}]
  %s8 = inlined_call_operand.hbm [shape: bf16[256,512], index: 8, kind: input, shape index: {}]
  %s9 = inlined_call_operand.hbm [shape: bf16[256,256], index: 9, kind: input, shape index: {}]
  %s10 = inlined_call_operand.hbm [shape: bf16[256,256], index: 10, kind: input, shape index: {}]
  %s11 = inlined_call_operand.hbm [shape: bf16[256,512], index: 11, kind: output, shape index: {0}]
  %s12 = inlined_call_operand.hbm [shape: bf16[256,256], index: 12, kind: output, shape index: {1}]
  %s13 = inlined_call_operand.hbm [shape: bf16[256,256], index: 13, kind: output, shape index: {2}]
  %14 = xla_tuple %s11, %s12, %s13
  %s15 = sld [smem:[#allocation0]]
  $region137: #{tpu_custom_call.1} parent=0
    _
  %s17 = ssub.s32 1, %s15
  %s18 = scalar_select 0, %s17, %s15
  $region1: #{tpu_custom_call.1} parent=0
    #allocation2 [shape = 'u8[262144]{0}', space=vmem, size = 0x40000, scoped, tag = 'input window, operand 0']
    #allocation3 [shape = 's32[2]{0}', space=sflag, size = 0x8, scoped, tag = 'scoped memory for tpu_custom_call.1']
    #allocation4 [shape = 's32[2]{0}', space=sflag, size = 0x8, scoped, tag = 'scoped memory for tpu_custom_call.1']
    #allocation5 [shape = 'u8[524288]{0}', space=vmem, size = 0x80000, scoped, tag = 'input window, operand 1']
    #allocation6 [shape = 's32[2]{0}', space=sflag, size = 0x8, scoped, tag = 'scoped memory for tpu_custom_call.1']
    #allocation7 [shape = 'u8[524288]{0}', space=vmem, size = 0x80000, scoped, tag = 'input window, operand 2']
    #allocation8 [shape = 'u8[524288]{0}', space=vmem, size = 0x80000, scoped, tag = 'input window, operand 3']
    #allocation9 [shape = 's32[2]{0}', space=sflag, size = 0x8, scoped, tag = 'scoped memory for tpu_custom_call.1']
    #allocation10 [shape = 'u8[262144]{0}', space=vmem, size = 0x40000, scoped, tag = 'input window, operand 4']
    #allocation11 [shape = 'u8[262144]{0}', space=vmem, size = 0x40000, scoped, tag = 'input window, operand 5']
    #allocation12 [shape = 's32[2]{0}', space=sflag, size = 0x8, scoped, tag = 'scoped memory for tpu_custom_call.1']
    #allocation13 [shape = 'u8[262144]{0}', space=vmem, size = 0x40000, scoped, tag = 'input window, operand 6']
    #allocation14 [shape = 'u8[1024]{0}', space=vmem, size = 0x400, scoped, tag = 'input window, operand 7, single buffered']
    #allocation15 [shape = 's32[1]{0}', space=sflag, size = 0x4, scoped, tag = 'scoped memory for tpu_custom_call.1']
    #allocation16 [shape = 'u8[262144]{0}', space=vmem, size = 0x40000, scoped, tag = 'input window, operand 8, single buffered']
    #allocation17 [shape = 'u8[131072]{0}', space=vmem, size = 0x20000, scoped, tag = 'input window, operand 9, single buffered']
    #allocation18 [shape = 's32[1]{0}', space=sflag, size = 0x4, scoped, tag = 'scoped memory for tpu_custom_call.1']
    #allocation19 [shape = 'u8[131072]{0}', space=vmem, size = 0x20000, scoped, tag = 'input window, operand 10, single buffered']
    #allocation20 [shape = 'u8[262144]{0}', space=vmem, size = 0x40000, scoped, tag = 'output window, operand 0']
    #allocation21 [shape = 'u8[131072]{0}', space=vmem, size = 0x20000, scoped, tag = 'output window, operand 1']
    #allocation22 [shape = 's32[2]{0}', space=sflag, size = 0x8, scoped, tag = 'scoped memory for tpu_custom_call.1']
    #allocation23 [shape = 'u8[131072]{0}', space=vmem, size = 0x20000, scoped, tag = 'output window, operand 2']
    %19 = vsyncpa [#allocation3], 0
    %s20 = scalar_lea.sflag [#allocation3], 1
    %21 = vsyncpa %s20, 0
    %22 = vsyncpa [#allocation6], 0
    %s23 = scalar_lea.sflag [#allocation6], 1
    %24 = vsyncpa %s23, 0
    %25 = vsyncpa [#allocation9], 0
    %s26 = scalar_lea.sflag [#allocation9], 1
    %27 = vsyncpa %s26, 0
    %28 = vsyncpa [#allocation12], 0
    %s29 = scalar_lea.sflag [#allocation12], 1
    %30 = vsyncpa %s29, 0
    %31 = vsyncpa [#allocation15], 0
    %32 = vsyncpa [#allocation18], 0
    %33 = vsyncpa [#allocation4], 0
    %s34 = scalar_lea.sflag [#allocation4], 1
    %35 = vsyncpa %s34, 0
    %36 = vsyncpa [#allocation22], 0
    %s37 = scalar_lea.sflag [#allocation22], 1
    %38 = vsyncpa %s37, 0
    loop: start=0, step=1, limit=4
    $region2: #{tpu_custom_call.1} parent=1 // loop_pre_header
      _
    $region3: #{tpu_custom_call.1} parent=1 // loop_header
      %s40 = sphi 0, %s44
      %p41 = scmp.ge.s32.totalorder %s40, 4
      %s50 = sphi 0, %s52
      %s53 = sphi 0, %s50
      %s54 = sphi 0, %s53
      %s70 = sphi 0, %s54
      %s76 = sphi 0, %s78
      %s79 = sphi 0, %s76
      %s80 = sphi 0, %s79
      %s96 = sphi 0, %s80
      %s102 = sphi 0, %s104
      %s105 = sphi 0, %s102
      %s106 = sphi 0, %s105
      %s122 = sphi 0, %s106
      %s128 = sphi 0, %s130
      %s131 = sphi 0, %s128
      %s132 = sphi 0, %s131
      %s148 = sphi 0, %s132
      %s154 = sphi 0, %s156
      %s157 = sphi 0, %s154
      %s158 = sphi 0, %s157
      %s174 = sphi 0, %s158
      %s180 = sphi 0, %s182
      %s183 = sphi 0, %s180
      %s184 = sphi 0, %s183
      %s200 = sphi 0, %s184
      %s206 = sphi 0, %s208
      %s209 = sphi 0, %s206
      %s210 = sphi 0, %s209
      %s226 = sphi 0, %s210
      %s230 = sphi 0, %s230
      %s232 = sphi 0, %s230
      %s233 = sphi 0, %s232
      %s247 = sphi 0, %s233
      %s251 = sphi 0, %s251
      %s253 = sphi 0, %s251
      %s254 = sphi 0, %s253
      %s268 = sphi 0, %s254
      %s272 = sphi 0, %s272
      %s274 = sphi 0, %s272
      %s275 = sphi 0, %s274
      %s289 = sphi 0, %s275
      %s293 = sphi 0, %s293
      %s295 = sphi 0, %s293
      %s296 = sphi 0, %s295
      %s310 = sphi 0, %s296
      %s316 = sphi 0, %s318
      %s319 = sphi 0, %s316
      %s320 = sphi 0, %s319
      %s336 = sphi 0, %s320
      %s342 = sphi 0, %s344
      %s345 = sphi 0, %s342
      %s346 = sphi 0, %s345
      %s362 = sphi 0, %s346
      %s368 = sphi 0, %s370
      %s371 = sphi 0, %s368
      %s372 = sphi 0, %s371
      %s388 = sphi 0, %s372
    $region4: #{tpu_custom_call.1} parent=1 // loop_header_branch
      %43 = sbr.rel (%p41) target = $region8
    $region5: #{tpu_custom_call.1} parent=1 // loop_body
      %s45 = ssub.s32 %s40, 1
      %s46 = ssub.s32 %s40, 2
      %s47 = sadd.s32 %s40, 1
      %s48 = ssub.s32 %s40, %s47
      %p49 = scmp.eq.s32.totalorder %s48, 0
      %s51 = sadd.s32 %s50, 1
      %s52 = scalar_select %p49, %s50, %s51
      %p55 = pneg %p49
      %p56 = scmp.eq.s32.totalorder %s40, 1
      %p57 = por %p55, %p56
      %p58 = scmp.ne.s32.totalorder %s50, %s53
      %p59 = scmp.eq.s32.totalorder %s40, 0
      %p60 = por %p58, %p59
      %p61 = scmp.ne.s32.totalorder %s50, %s53
      %p62 = scmp.eq.s32.totalorder %s45, 1
      %p63 = por %p61, %p62
      %p64 = scmp.ne.s32.totalorder %s53, %s54
      %p65 = scmp.eq.s32.totalorder %s45, 0
      %p66 = por %p64, %p65
      %p67 = scmp.ne.s32.totalorder %s53, %s54
      %p68 = scmp.eq.s32.totalorder %s46, 1
      %p69 = por %p67, %p68
      %p71 = scmp.ne.s32.totalorder %s54, %s70
      %p72 = scmp.eq.s32.totalorder %s46, 0
      %p73 = por %p71, %p72
      %s74 = ssub.s32 %s40, %s47
      %p75 = scmp.eq.s32.totalorder %s74, 0
      %s77 = sadd.s32 %s76, 1
      %s78 = scalar_select %p75, %s76, %s77
      %p81 = pneg %p75
      %p82 = scmp.eq.s32.totalorder %s40, 1
      %p83 = por %p81, %p82
      %p84 = scmp.ne.s32.totalorder %s76, %s79
      %p85 = scmp.eq.s32.totalorder %s40, 0
      %p86 = por %p84, %p85
      %p87 = scmp.ne.s32.totalorder %s76, %s79
      %p88 = scmp.eq.s32.totalorder %s45, 1
      %p89 = por %p87, %p88
      %p90 = scmp.ne.s32.totalorder %s79, %s80
      %p91 = scmp.eq.s32.totalorder %s45, 0
      %p92 = por %p90, %p91
      %p93 = scmp.ne.s32.totalorder %s79, %s80
      %p94 = scmp.eq.s32.totalorder %s46, 1
      %p95 = por %p93, %p94
      %p97 = scmp.ne.s32.totalorder %s80, %s96
      %p98 = scmp.eq.s32.totalorder %s46, 0
      %p99 = por %p97, %p98
      %s100 = ssub.s32 %s40, %s47
      %p101 = scmp.eq.s32.totalorder %s100, 0
      %s103 = sadd.s32 %s102, 1
      %s104 = scalar_select %p101, %s102, %s103
      %p107 = pneg %p101
      %p108 = scmp.eq.s32.totalorder %s40, 1
      %p109 = por %p107, %p108
      %p110 = scmp.ne.s32.totalorder %s102, %s105
      %p111 = scmp.eq.s32.totalorder %s40, 0
      %p112 = por %p110, %p111
      %p113 = scmp.ne.s32.totalorder %s102, %s105
      %p114 = scmp.eq.s32.totalorder %s45, 1
      %p115 = por %p113, %p114
      %p116 = scmp.ne.s32.totalorder %s105, %s106
      %p117 = scmp.eq.s32.totalorder %s45, 0
      %p118 = por %p116, %p117
      %p119 = scmp.ne.s32.totalorder %s105, %s106
      %p120 = scmp.eq.s32.totalorder %s46, 1
      %p121 = por %p119, %p120
      %p123 = scmp.ne.s32.totalorder %s106, %s122
      %p124 = scmp.eq.s32.totalorder %s46, 0
      %p125 = por %p123, %p124
      %s126 = ssub.s32 %s40, %s47
      %p127 = scmp.eq.s32.totalorder %s126, 0
      %s129 = sadd.s32 %s128, 1
      %s130 = scalar_select %p127, %s128, %s129
      %p133 = pneg %p127
      %p134 = scmp.eq.s32.totalorder %s40, 1
      %p135 = por %p133, %p134
      %p136 = scmp.ne.s32.totalorder %s128, %s131
      %p137 = scmp.eq.s32.totalorder %s40, 0
      %p138 = por %p136, %p137
      %p139 = scmp.ne.s32.totalorder %s128, %s131
      %p140 = scmp.eq.s32.totalorder %s45, 1
      %p141 = por %p139, %p140
      %p142 = scmp.ne.s32.totalorder %s131, %s132
      %p143 = scmp.eq.s32.totalorder %s45, 0
      %p144 = por %p142, %p143
      %p145 = scmp.ne.s32.totalorder %s131, %s132
      %p146 = scmp.eq.s32.totalorder %s46, 1
      %p147 = por %p145, %p146
      %p149 = scmp.ne.s32.totalorder %s132, %s148
      %p150 = scmp.eq.s32.totalorder %s46, 0
      %p151 = por %p149, %p150
      %s152 = ssub.s32 %s40, %s47
      %p153 = scmp.eq.s32.totalorder %s152, 0
      %s155 = sadd.s32 %s154, 1
      %s156 = scalar_select %p153, %s154, %s155
      %p159 = pneg %p153
      %p160 = scmp.eq.s32.totalorder %s40, 1
      %p161 = por %p159, %p160
      %p162 = scmp.ne.s32.totalorder %s154, %s157
      %p163 = scmp.eq.s32.totalorder %s40, 0
      %p164 = por %p162, %p163
      %p165 = scmp.ne.s32.totalorder %s154, %s157
      %p166 = scmp.eq.s32.totalorder %s45, 1
      %p167 = por %p165, %p166
      %p168 = scmp.ne.s32.totalorder %s157, %s158
      %p169 = scmp.eq.s32.totalorder %s45, 0
      %p170 = por %p168, %p169
      %p171 = scmp.ne.s32.totalorder %s157, %s158
      %p172 = scmp.eq.s32.totalorder %s46, 1
      %p173 = por %p171, %p172
      %p175 = scmp.ne.s32.totalorder %s158, %s174
      %p176 = scmp.eq.s32.totalorder %s46, 0
      %p177 = por %p175, %p176
      %s178 = ssub.s32 %s40, %s47
      %p179 = scmp.eq.s32.totalorder %s178, 0
      %s181 = sadd.s32 %s180, 1
      %s182 = scalar_select %p179, %s180, %s181
      %p185 = pneg %p179
      %p186 = scmp.eq.s32.totalorder %s40, 1
      %p187 = por %p185, %p186
      %p188 = scmp.ne.s32.totalorder %s180, %s183
      %p189 = scmp.eq.s32.totalorder %s40, 0
      %p190 = por %p188, %p189
      %p191 = scmp.ne.s32.totalorder %s180, %s183
      %p192 = scmp.eq.s32.totalorder %s45, 1
      %p193 = por %p191, %p192
      %p194 = scmp.ne.s32.totalorder %s183, %s184
      %p195 = scmp.eq.s32.totalorder %s45, 0
      %p196 = por %p194, %p195
      %p197 = scmp.ne.s32.totalorder %s183, %s184
      %p198 = scmp.eq.s32.totalorder %s46, 1
      %p199 = por %p197, %p198
      %p201 = scmp.ne.s32.totalorder %s184, %s200
      %p202 = scmp.eq.s32.totalorder %s46, 0
      %p203 = por %p201, %p202
      %s204 = ssub.s32 %s40, %s47
      %p205 = scmp.eq.s32.totalorder %s204, 0
      %s207 = sadd.s32 %s206, 1
      %s208 = scalar_select %p205, %s206, %s207
      %p211 = pneg %p205
      %p212 = scmp.eq.s32.totalorder %s40, 1
      %p213 = por %p211, %p212
      %p214 = scmp.ne.s32.totalorder %s206, %s209
      %p215 = scmp.eq.s32.totalorder %s40, 0
      %p216 = por %p214, %p215
      %p217 = scmp.ne.s32.totalorder %s206, %s209
      %p218 = scmp.eq.s32.totalorder %s45, 1
      %p219 = por %p217, %p218
      %p220 = scmp.ne.s32.totalorder %s209, %s210
      %p221 = scmp.eq.s32.totalorder %s45, 0
      %p222 = por %p220, %p221
      %p223 = scmp.ne.s32.totalorder %s209, %s210
      %p224 = scmp.eq.s32.totalorder %s46, 1
      %p225 = por %p223, %p224
      %p227 = scmp.ne.s32.totalorder %s210, %s226
      %p228 = scmp.eq.s32.totalorder %s46, 0
      %p229 = por %p227, %p228
      %s231 = sadd.s32 %s230, 1
      %p234 = scmp.eq.s32.totalorder %s40, 1
      %p235 = scmp.ne.s32.totalorder %s230, %s232
      %p236 = scmp.eq.s32.totalorder %s40, 0
      %p237 = por %p235, %p236
      %p238 = scmp.ne.s32.totalorder %s230, %s232
      %p239 = scmp.eq.s32.totalorder %s45, 1
      %p240 = por %p238, %p239
      %p241 = scmp.ne.s32.totalorder %s232, %s233
      %p242 = scmp.eq.s32.totalorder %s45, 0
      %p243 = por %p241, %p242
      %p244 = scmp.ne.s32.totalorder %s232, %s233
      %p245 = scmp.eq.s32.totalorder %s46, 1
      %p246 = por %p244, %p245
      %p248 = scmp.ne.s32.totalorder %s233, %s247
      %p249 = scmp.eq.s32.totalorder %s46, 0
      %p250 = por %p248, %p249
      %s252 = sadd.s32 %s251, 1
      %p255 = scmp.eq.s32.totalorder %s40, 1
      %p256 = scmp.ne.s32.totalorder %s251, %s253
      %p257 = scmp.eq.s32.totalorder %s40, 0
      %p258 = por %p256, %p257
      %p259 = scmp.ne.s32.totalorder %s251, %s253
      %p260 = scmp.eq.s32.totalorder %s45, 1
      %p261 = por %p259, %p260
      %p262 = scmp.ne.s32.totalorder %s253, %s254
      %p263 = scmp.eq.s32.totalorder %s45, 0
      %p264 = por %p262, %p263
      %p265 = scmp.ne.s32.totalorder %s253, %s254
      %p266 = scmp.eq.s32.totalorder %s46, 1
      %p267 = por %p265, %p266
      %p269 = scmp.ne.s32.totalorder %s254, %s268
      %p270 = scmp.eq.s32.totalorder %s46, 0
      %p271 = por %p269, %p270
      %s273 = sadd.s32 %s272, 1
      %p276 = scmp.eq.s32.totalorder %s40, 1
      %p277 = scmp.ne.s32.totalorder %s272, %s274
      %p278 = scmp.eq.s32.totalorder %s40, 0
      %p279 = por %p277, %p278
      %p280 = scmp.ne.s32.totalorder %s272, %s274
      %p281 = scmp.eq.s32.totalorder %s45, 1
      %p282 = por %p280, %p281
      %p283 = scmp.ne.s32.totalorder %s274, %s275
      %p284 = scmp.eq.s32.totalorder %s45, 0
      %p285 = por %p283, %p284
      %p286 = scmp.ne.s32.totalorder %s274, %s275
      %p287 = scmp.eq.s32.totalorder %s46, 1
      %p288 = por %p286, %p287
      %p290 = scmp.ne.s32.totalorder %s275, %s289
      %p291 = scmp.eq.s32.totalorder %s46, 0
      %p292 = por %p290, %p291
      %s294 = sadd.s32 %s293, 1
      %p297 = scmp.eq.s32.totalorder %s40, 1
      %p298 = scmp.ne.s32.totalorder %s293, %s295
      %p299 = scmp.eq.s32.totalorder %s40, 0
      %p300 = por %p298, %p299
      %p301 = scmp.ne.s32.totalorder %s293, %s295
      %p302 = scmp.eq.s32.totalorder %s45, 1
      %p303 = por %p301, %p302
      %p304 = scmp.ne.s32.totalorder %s295, %s296
      %p305 = scmp.eq.s32.totalorder %s45, 0
      %p306 = por %p304, %p305
      %p307 = scmp.ne.s32.totalorder %s295, %s296
      %p308 = scmp.eq.s32.totalorder %s46, 1
      %p309 = por %p307, %p308
      %p311 = scmp.ne.s32.totalorder %s296, %s310
      %p312 = scmp.eq.s32.totalorder %s46, 0
      %p313 = por %p311, %p312
      %s314 = ssub.s32 %s40, %s47
      %p315 = scmp.eq.s32.totalorder %s314, 0
      %s317 = sadd.s32 %s316, 1
      %s318 = scalar_select %p315, %s316, %s317
      %p321 = pneg %p315
      %p322 = scmp.eq.s32.totalorder %s40, 1
      %p323 = por %p321, %p322
      %p324 = scmp.ne.s32.totalorder %s316, %s319
      %p325 = scmp.eq.s32.totalorder %s40, 0
      %p326 = por %p324, %p325
      %p327 = scmp.ne.s32.totalorder %s316, %s319
      %p328 = scmp.eq.s32.totalorder %s45, 1
      %p329 = por %p327, %p328
      %p330 = scmp.ne.s32.totalorder %s319, %s320
      %p331 = scmp.eq.s32.totalorder %s45, 0
      %p332 = por %p330, %p331
      %p333 = scmp.ne.s32.totalorder %s319, %s320
      %p334 = scmp.eq.s32.totalorder %s46, 1
      %p335 = por %p333, %p334
      %p337 = scmp.ne.s32.totalorder %s320, %s336
      %p338 = scmp.eq.s32.totalorder %s46, 0
      %p339 = por %p337, %p338
      %s340 = ssub.s32 %s40, %s47
      %p341 = scmp.eq.s32.totalorder %s340, 0
      %s343 = sadd.s32 %s342, 1
      %s344 = scalar_select %p341, %s342, %s343
      %p347 = pneg %p341
      %p348 = scmp.eq.s32.totalorder %s40, 1
      %p349 = por %p347, %p348
      %p350 = scmp.ne.s32.totalorder %s342, %s345
      %p351 = scmp.eq.s32.totalorder %s40, 0
      %p352 = por %p350, %p351
      %p353 = scmp.ne.s32.totalorder %s342, %s345
      %p354 = scmp.eq.s32.totalorder %s45, 1
      %p355 = por %p353, %p354
      %p356 = scmp.ne.s32.totalorder %s345, %s346
      %p357 = scmp.eq.s32.totalorder %s45, 0
      %p358 = por %p356, %p357
      %p359 = scmp.ne.s32.totalorder %s345, %s346
      %p360 = scmp.eq.s32.totalorder %s46, 1
      %p361 = por %p359, %p360
      %p363 = scmp.ne.s32.totalorder %s346, %s362
      %p364 = scmp.eq.s32.totalorder %s46, 0
      %p365 = por %p363, %p364
      %s366 = ssub.s32 %s40, %s47
      %p367 = scmp.eq.s32.totalorder %s366, 0
      %s369 = sadd.s32 %s368, 1
      %s370 = scalar_select %p367, %s368, %s369
      %p373 = pneg %p367
      %p374 = scmp.eq.s32.totalorder %s40, 1
      %p375 = por %p373, %p374
      %p376 = scmp.ne.s32.totalorder %s368, %s371
      %p377 = scmp.eq.s32.totalorder %s40, 0
      %p378 = por %p376, %p377
      %p379 = scmp.ne.s32.totalorder %s368, %s371
      %p380 = scmp.eq.s32.totalorder %s45, 1
      %p381 = por %p379, %p380
      %p382 = scmp.ne.s32.totalorder %s371, %s372
      %p383 = scmp.eq.s32.totalorder %s45, 0
      %p384 = por %p382, %p383
      %p385 = scmp.ne.s32.totalorder %s371, %s372
      %p386 = scmp.eq.s32.totalorder %s46, 1
      %p387 = por %p385, %p386
      %p389 = scmp.ne.s32.totalorder %s372, %s388
      %p390 = scmp.eq.s32.totalorder %s46, 0
      %p391 = por %p389, %p390
      %p392 = scmp.le.s32.totalorder 1, %s40
      %p393 = scmp.lt.s32.totalorder %s40, 3
      %p394 = pnand %p392, %p393
      %p395 = pneg %p394
      // Predicated region
      $region9: #{tpu_custom_call.1} parent=5 // pred_check
        _
      $region10: #{tpu_custom_call.1} parent=5 // pred_check_branch
        %397 = sbr.rel (%p394) target = $region12
      $region11: #{tpu_custom_call.1} parent=5 // pred_region
        %s398 = ssub.s32 %s40, 1
        // Predicated region
        $region13: #{tpu_custom_call.1} parent=11 // pred_check
          %p399 = pneg %p243
        $region14: #{tpu_custom_call.1} parent=11 // pred_check_branch
          %401 = sbr.rel (%p399) target = $region16
        $region15: #{tpu_custom_call.1} parent=11 // pred_region
          %s403 = ssub.s32 32, 32
          %404 = vsyncadd [#allocation15], %s403
          %s406 = sshll.u32 [#allocation14], 4
          %s407 = int_to_ptr.vmem [resolvable:$true] %s406
          %409 = dma.hbm_to_vmem [thread:$0]  %s7, 32, %s407, [#allocation15]
        $region16: #{tpu_custom_call.1} parent=11 // pred_fallthru
          _
        // Predicated region
        $region17: #{tpu_custom_call.1} parent=11 // pred_check
          %p410 = pneg %p264
        $region18: #{tpu_custom_call.1} parent=11 // pred_check_branch
          %412 = sbr.rel (%p410) target = $region20
        $region19: #{tpu_custom_call.1} parent=11 // pred_region
          %s414 = ssub.s32 8192, 8192
          %415 = vsyncadd [#allocation15], %s414
          %s416 = sshll.u32 [#allocation16], 4
          %s417 = int_to_ptr.vmem [resolvable:$true] %s416
          %422 = dma.hbm_to_vmem [thread:$0]  %s8, 8192, %s417, [#allocation15], 256, 256, 16
        $region20: #{tpu_custom_call.1} parent=11 // pred_fallthru
          _
        // Predicated region
        $region21: #{tpu_custom_call.1} parent=11 // pred_check
          %p423 = pneg %p285
        $region22: #{tpu_custom_call.1} parent=11 // pred_check_branch
          %425 = sbr.rel (%p423) target = $region24
        $region23: #{tpu_custom_call.1} parent=11 // pred_region
          %s427 = ssub.s32 4096, 4096
          %428 = vsyncadd [#allocation18], %s427
          %s429 = sshll.u32 [#allocation17], 4
          %s430 = int_to_ptr.vmem [resolvable:$true] %s429
          %435 = dma.hbm_to_vmem [thread:$0]  %s9, 4096, %s430, [#allocation18], 128, 128, 8
        $region24: #{tpu_custom_call.1} parent=11 // pred_fallthru
          _
        // Predicated region
        $region25: #{tpu_custom_call.1} parent=11 // pred_check
          %p436 = pneg %p306
        $region26: #{tpu_custom_call.1} parent=11 // pred_check_branch
          %438 = sbr.rel (%p436) target = $region28
        $region27: #{tpu_custom_call.1} parent=11 // pred_region
          %s440 = ssub.s32 4096, 4096
          %441 = vsyncadd [#allocation18], %s440
          %s442 = sshll.u32 [#allocation19], 4
          %s443 = int_to_ptr.vmem [resolvable:$true] %s442
          %448 = dma.hbm_to_vmem [thread:$0]  %s10, 4096, %s443, [#allocation18], 128, 128, 8
        $region28: #{tpu_custom_call.1} parent=11 // pred_fallthru
          _
      $region12: #{tpu_custom_call.1} parent=5 // pred_fallthru
        _
      %p449 = scmp.lt.s32.totalorder %s40, 2
      // Predicated region
      $region29: #{tpu_custom_call.1} parent=5 // pred_check
        %p450 = pneg %p449
      $region30: #{tpu_custom_call.1} parent=5 // pred_check_branch
        %452 = sbr.rel (%p450) target = $region32
      $region31: #{tpu_custom_call.1} parent=5 // pred_region
        // Predicated region
        $region33: #{tpu_custom_call.1} parent=31 // pred_check
          %p453 = pneg %p60
        $region34: #{tpu_custom_call.1} parent=31 // pred_check_branch
          %455 = sbr.rel (%p453) target = $region36
        $region35: #{tpu_custom_call.1} parent=31 // pred_region
          %s456 = sand.u32 %s50, 1
          %s457 = scalar_lea.sflag [#allocation3], %s456
          %s458 = sand.u32 %s50, 1
          %s459 = smul.addr %s458, 256
          %s460 = scalar_lea.vmem [#allocation2], %s459
          %s461 = smul.u32 16, %s40
          %s463 = ssub.s32 4096, 4096
          %464 = vsyncadd %s457, %s463
          %s465 = smul.addr %s461, 2
          %s466 = smul.addr %s465, 128
          %s467 = scalar_lea.hbm %s0, %s466
          %s468 = sshll.u32 %s460, 4
          %s469 = int_to_ptr.vmem [resolvable:$true] %s468
          %474 = dma.hbm_to_vmem [thread:$0]  %s467, 4096, %s469, %s457, 256, 256, 16
        $region36: #{tpu_custom_call.1} parent=31 // pred_fallthru
          _
        // Predicated region
        $region37: #{tpu_custom_call.1} parent=31 // pred_check
          %p475 = pneg %p86
        $region38: #{tpu_custom_call.1} parent=31 // pred_check_branch
          %477 = sbr.rel (%p475) target = $region40
        $region39: #{tpu_custom_call.1} parent=31 // pred_region
          %s478 = sand.u32 %s40, 1
          %s479 = scalar_lea.sflag [#allocation6], %s478
          %s480 = sand.u32 %s76, 1
          %s481 = smul.addr %s480, 512
          %s482 = scalar_lea.vmem [#allocation5], %s481
          %s483 = smul.u32 16, %s40
          %s485 = ssub.s32 8192, 8192
          %486 = vsyncadd %s479, %s485
          %s487 = smul.addr %s483, 4
          %s488 = smul.addr %s487, 128
          %s489 = scalar_lea.hbm %s1, %s488
          %s490 = sshll.u32 %s482, 4
          %s491 = int_to_ptr.vmem [resolvable:$true] %s490
          %496 = dma.hbm_to_vmem [thread:$0]  %s489, 8192, %s491, %s479, 512, 512, 32
        $region40: #{tpu_custom_call.1} parent=31 // pred_fallthru
          _
        // Predicated region
        $region41: #{tpu_custom_call.1} parent=31 // pred_check
          %p497 = pneg %p112
        $region42: #{tpu_custom_call.1} parent=31 // pred_check_branch
          %499 = sbr.rel (%p497) target = $region44
        $region43: #{tpu_custom_call.1} parent=31 // pred_region
          %s500 = sand.u32 %s40, 1
          %s501 = scalar_lea.sflag [#allocation6], %s500
          %s502 = sand.u32 %s102, 1
          %s503 = smul.addr %s502, 512
          %s504 = scalar_lea.vmem [#allocation7], %s503
          %s505 = smul.u32 16, %s40
          %s507 = ssub.s32 8192, 8192
          %508 = vsyncadd %s501, %s507
          %s509 = smul.addr %s505, 4
          %s510 = smul.addr %s509, 128
          %s511 = scalar_lea.hbm %s2, %s510
          %s512 = sshll.u32 %s504, 4
          %s513 = int_to_ptr.vmem [resolvable:$true] %s512
          %518 = dma.hbm_to_vmem [thread:$0]  %s511, 8192, %s513, %s501, 512, 512, 32
        $region44: #{tpu_custom_call.1} parent=31 // pred_fallthru
          _
        // Predicated region
        $region45: #{tpu_custom_call.1} parent=31 // pred_check
          %p519 = pneg %p138
        $region46: #{tpu_custom_call.1} parent=31 // pred_check_branch
          %521 = sbr.rel (%p519) target = $region48
        $region47: #{tpu_custom_call.1} parent=31 // pred_region
          %s522 = sand.u32 %s40, 1
          %s523 = scalar_lea.sflag [#allocation9], %s522
          %s524 = sand.u32 %s128, 1
          %s525 = smul.addr %s524, 512
          %s526 = scalar_lea.vmem [#allocation8], %s525
          %s527 = smul.u32 16, %s40
          %s529 = ssub.s32 8192, 8192
          %530 = vsyncadd %s523, %s529
          %s531 = smul.addr %s527, 4
          %s532 = smul.addr %s531, 128
          %s533 = scalar_lea.hbm %s3, %s532
          %s534 = sshll.u32 %s526, 4
          %s535 = int_to_ptr.vmem [resolvable:$true] %s534
          %540 = dma.hbm_to_vmem [thread:$0]  %s533, 8192, %s535, %s523, 512, 512, 32
        $region48: #{tpu_custom_call.1} parent=31 // pred_fallthru
          _
        // Predicated region
        $region49: #{tpu_custom_call.1} parent=31 // pred_check
          %p541 = pneg %p164
        $region50: #{tpu_custom_call.1} parent=31 // pred_check_branch
          %543 = sbr.rel (%p541) target = $region52
        $region51: #{tpu_custom_call.1} parent=31 // pred_region
          %s544 = sand.u32 %s40, 1
          %s545 = scalar_lea.sflag [#allocation9], %s544
          %s546 = sand.u32 %s154, 1
          %s547 = smul.addr %s546, 256
          %s548 = scalar_lea.vmem [#allocation10], %s547
          %s549 = smul.u32 16, %s40
          %s551 = ssub.s32 4096, 4096
          %552 = vsyncadd %s545, %s551
          %s553 = smul.addr %s549, 2
          %s554 = smul.addr %s553, 128
          %s555 = scalar_lea.hbm %s4, %s554
          %s556 = sshll.u32 %s548, 4
          %s557 = int_to_ptr.vmem [resolvable:$true] %s556
          %562 = dma.hbm_to_vmem [thread:$0]  %s555, 4096, %s557, %s545, 256, 256, 16
        $region52: #{tpu_custom_call.1} parent=31 // pred_fallthru
          _
        // Predicated region
        $region53: #{tpu_custom_call.1} parent=31 // pred_check
          %p563 = pneg %p190
        $region54: #{tpu_custom_call.1} parent=31 // pred_check_branch
          %565 = sbr.rel (%p563) target = $region56
        $region55: #{tpu_custom_call.1} parent=31 // pred_region
          %s566 = sand.u32 %s40, 1
          %s567 = scalar_lea.sflag [#allocation12], %s566
          %s568 = sand.u32 %s180, 1
          %s569 = smul.addr %s568, 256
          %s570 = scalar_lea.vmem [#allocation11], %s569
          %s571 = smul.u32 16, %s40
          %s573 = ssub.s32 4096, 4096
          %574 = vsyncadd %s567, %s573
          %s575 = smul.addr %s571, 2
          %s576 = smul.addr %s575, 128
          %s577 = scalar_lea.hbm %s5, %s576
          %s578 = sshll.u32 %s570, 4
          %s579 = int_to_ptr.vmem [resolvable:$true] %s578
          %584 = dma.hbm_to_vmem [thread:$0]  %s577, 4096, %s579, %s567, 256, 256, 16
        $region56: #{tpu_custom_call.1} parent=31 // pred_fallthru
          _
        // Predicated region
        $region57: #{tpu_custom_call.1} parent=31 // pred_check
          %p585 = pneg %p216
        $region58: #{tpu_custom_call.1} parent=31 // pred_check_branch
          %587 = sbr.rel (%p585) target = $region60
        $region59: #{tpu_custom_call.1} parent=31 // pred_region
          %s588 = sand.u32 %s40, 1
          %s589 = scalar_lea.sflag [#allocation12], %s588
          %s590 = sand.u32 %s206, 1
          %s591 = smul.addr %s590, 256
          %s592 = scalar_lea.vmem [#allocation13], %s591
          %s593 = smul.u32 16, %s40
          %s595 = ssub.s32 4096, 4096
          %596 = vsyncadd %s589, %s595
          %s597 = smul.addr %s593, 2
          %s598 = smul.addr %s597, 128
          %s599 = scalar_lea.hbm %s6, %s598
          %s600 = sshll.u32 %s592, 4
          %s601 = int_to_ptr.vmem [resolvable:$true] %s600
          %606 = dma.hbm_to_vmem [thread:$0]  %s599, 4096, %s601, %s589, 256, 256, 16
        $region60: #{tpu_custom_call.1} parent=31 // pred_fallthru
          _
      $region32: #{tpu_custom_call.1} parent=5 // pred_fallthru
        _
      %p607 = scmp.le.s32.totalorder 1, %s40
      %p608 = scmp.lt.s32.totalorder %s40, 3
      %p609 = pnand %p607, %p608
      %p610 = pneg %p609
      // Predicated region
      $region61: #{tpu_custom_call.1} parent=5 // pred_check
        _
      $region62: #{tpu_custom_call.1} parent=5 // pred_check_branch
        %612 = sbr.rel (%p609) target = $region64
      $region63: #{tpu_custom_call.1} parent=5 // pred_region
        %s613 = ssub.s32 %s40, 1
        %s614 = sand.u32 %s53, 1
        %s615 = scalar_lea.sflag [#allocation3], %s614
        %s616 = sand.u32 %s53, 1
        %s617 = smul.addr %s616, 256
        %s618 = scalar_lea.vmem [#allocation2], %s617
        // Predicated region
        $region65: #{tpu_custom_call.1} parent=63 // pred_check
          %p619 = pneg %p66
        $region66: #{tpu_custom_call.1} parent=63 // pred_check_branch
          %621 = sbr.rel (%p619) target = $region68
        $region67: #{tpu_custom_call.1} parent=63 // pred_region
          %622 = dma.done %s615, 4096
        $region68: #{tpu_custom_call.1} parent=63 // pred_fallthru
          _
        %s623 = sand.u32 %s45, 1
        %s624 = scalar_lea.sflag [#allocation6], %s623
        %s625 = sand.u32 %s79, 1
        %s626 = smul.addr %s625, 512
        %s627 = scalar_lea.vmem [#allocation5], %s626
        // Predicated region
        $region69: #{tpu_custom_call.1} parent=63 // pred_check
          %p628 = pneg %p92
        $region70: #{tpu_custom_call.1} parent=63 // pred_check_branch
          %630 = sbr.rel (%p628) target = $region72
        $region71: #{tpu_custom_call.1} parent=63 // pred_region
          %631 = dma.done %s624, 8192
        $region72: #{tpu_custom_call.1} parent=63 // pred_fallthru
          _
        %s632 = sand.u32 %s45, 1
        %s633 = scalar_lea.sflag [#allocation6], %s632
        %s634 = sand.u32 %s105, 1
        %s635 = smul.addr %s634, 512
        %s636 = scalar_lea.vmem [#allocation7], %s635
        // Predicated region
        $region73: #{tpu_custom_call.1} parent=63 // pred_check
          %p637 = pneg %p118
        $region74: #{tpu_custom_call.1} parent=63 // pred_check_branch
          %639 = sbr.rel (%p637) target = $region76
        $region75: #{tpu_custom_call.1} parent=63 // pred_region
          %640 = dma.done %s633, 8192
        $region76: #{tpu_custom_call.1} parent=63 // pred_fallthru
          _
        %s641 = sand.u32 %s45, 1
        %s642 = scalar_lea.sflag [#allocation9], %s641
        %s643 = sand.u32 %s131, 1
        %s644 = smul.addr %s643, 512
        %s645 = scalar_lea.vmem [#allocation8], %s644
        // Predicated region
        $region77: #{tpu_custom_call.1} parent=63 // pred_check
          %p646 = pneg %p144
        $region78: #{tpu_custom_call.1} parent=63 // pred_check_branch
          %648 = sbr.rel (%p646) target = $region80
        $region79: #{tpu_custom_call.1} parent=63 // pred_region
          %649 = dma.done %s642, 8192
        $region80: #{tpu_custom_call.1} parent=63 // pred_fallthru
          _
        %s650 = sand.u32 %s45, 1
        %s651 = scalar_lea.sflag [#allocation9], %s650
        %s652 = sand.u32 %s157, 1
        %s653 = smul.addr %s652, 256
        %s654 = scalar_lea.vmem [#allocation10], %s653
        // Predicated region
        $region81: #{tpu_custom_call.1} parent=63 // pred_check
          %p655 = pneg %p170
        $region82: #{tpu_custom_call.1} parent=63 // pred_check_branch
          %657 = sbr.rel (%p655) target = $region84
        $region83: #{tpu_custom_call.1} parent=63 // pred_region
          %658 = dma.done %s651, 4096
        $region84: #{tpu_custom_call.1} parent=63 // pred_fallthru
          _
        %s659 = sand.u32 %s45, 1
        %s660 = scalar_lea.sflag [#allocation12], %s659
        %s661 = sand.u32 %s183, 1
        %s662 = smul.addr %s661, 256
        %s663 = scalar_lea.vmem [#allocation11], %s662
        // Predicated region
        $region85: #{tpu_custom_call.1} parent=63 // pred_check
          %p664 = pneg %p196
        $region86: #{tpu_custom_call.1} parent=63 // pred_check_branch
          %666 = sbr.rel (%p664) target = $region88
        $region87: #{tpu_custom_call.1} parent=63 // pred_region
          %667 = dma.done %s660, 4096
        $region88: #{tpu_custom_call.1} parent=63 // pred_fallthru
          _
        %s668 = sand.u32 %s45, 1
        %s669 = scalar_lea.sflag [#allocation12], %s668
        %s670 = sand.u32 %s209, 1
        %s671 = smul.addr %s670, 256
        %s672 = scalar_lea.vmem [#allocation13], %s671
        // Predicated region
        $region89: #{tpu_custom_call.1} parent=63 // pred_check
          %p673 = pneg %p222
        $region90: #{tpu_custom_call.1} parent=63 // pred_check_branch
          %675 = sbr.rel (%p673) target = $region92
        $region91: #{tpu_custom_call.1} parent=63 // pred_region
          %676 = dma.done %s669, 4096
        $region92: #{tpu_custom_call.1} parent=63 // pred_fallthru
          _
        // Predicated region
        $region93: #{tpu_custom_call.1} parent=63 // pred_check
          %p677 = pneg %p243
        $region94: #{tpu_custom_call.1} parent=63 // pred_check_branch
          %679 = sbr.rel (%p677) target = $region96
        $region95: #{tpu_custom_call.1} parent=63 // pred_region
          %680 = dma.done [#allocation15], 32
        $region96: #{tpu_custom_call.1} parent=63 // pred_fallthru
          _
        // Predicated region
        $region97: #{tpu_custom_call.1} parent=63 // pred_check
          %p681 = pneg %p264
        $region98: #{tpu_custom_call.1} parent=63 // pred_check_branch
          %683 = sbr.rel (%p681) target = $region100
        $region99: #{tpu_custom_call.1} parent=63 // pred_region
          %684 = dma.done [#allocation15], 8192
        $region100: #{tpu_custom_call.1} parent=63 // pred_fallthru
          _
        // Predicated region
        $region101: #{tpu_custom_call.1} parent=63 // pred_check
          %p685 = pneg %p285
        $region102: #{tpu_custom_call.1} parent=63 // pred_check_branch
          %687 = sbr.rel (%p685) target = $region104
        $region103: #{tpu_custom_call.1} parent=63 // pred_region
          %688 = dma.done [#allocation18], 4096
        $region104: #{tpu_custom_call.1} parent=63 // pred_fallthru
          _
        // Predicated region
        $region105: #{tpu_custom_call.1} parent=63 // pred_check
          %p689 = pneg %p306
        $region106: #{tpu_custom_call.1} parent=63 // pred_check_branch
          %691 = sbr.rel (%p689) target = $region108
        $region107: #{tpu_custom_call.1} parent=63 // pred_region
          %692 = dma.done [#allocation18], 4096
        $region108: #{tpu_custom_call.1} parent=63 // pred_fallthru
          _
        %s693 = sand.u32 %s53, 1
        %s694 = scalar_lea.sflag [#allocation3], %s693
        %s695 = sand.u32 %s53, 1
        %s696 = smul.addr %s695, 256
        %s697 = scalar_lea.vmem [#allocation2], %s696
        %p698 = pneg %p66
        %p699 = pneg %p63
        %s700 = sand.u32 %s45, 1
        %s701 = scalar_lea.sflag [#allocation6], %s700
        %s702 = sand.u32 %s79, 1
        %s703 = smul.addr %s702, 512
        %s704 = scalar_lea.vmem [#allocation5], %s703
        %p705 = pneg %p92
        %p706 = pneg %p89
        %s707 = sand.u32 %s45, 1
        %s708 = scalar_lea.sflag [#allocation6], %s707
        %s709 = sand.u32 %s105, 1
        %s710 = smul.addr %s709, 512
        %s711 = scalar_lea.vmem [#allocation7], %s710
        %p712 = pneg %p118
        %p713 = pneg %p115
        %s714 = sand.u32 %s45, 1
        %s715 = scalar_lea.sflag [#allocation9], %s714
        %s716 = sand.u32 %s131, 1
        %s717 = smul.addr %s716, 512
        %s718 = scalar_lea.vmem [#allocation8], %s717
        %p719 = pneg %p144
        %p720 = pneg %p141
        %s721 = sand.u32 %s45, 1
        %s722 = scalar_lea.sflag [#allocation9], %s721
        %s723 = sand.u32 %s157, 1
        %s724 = smul.addr %s723, 256
        %s725 = scalar_lea.vmem [#allocation10], %s724
        %p726 = pneg %p170
        %p727 = pneg %p167
        %s728 = sand.u32 %s45, 1
        %s729 = scalar_lea.sflag [#allocation12], %s728
        %s730 = sand.u32 %s183, 1
        %s731 = smul.addr %s730, 256
        %s732 = scalar_lea.vmem [#allocation11], %s731
        %p733 = pneg %p196
        %p734 = pneg %p193
        %s735 = sand.u32 %s45, 1
        %s736 = scalar_lea.sflag [#allocation12], %s735
        %s737 = sand.u32 %s209, 1
        %s738 = smul.addr %s737, 256
        %s739 = scalar_lea.vmem [#allocation13], %s738
        %p740 = pneg %p222
        %p741 = pneg %p219
        %p742 = pneg %p243
        %p743 = pneg %p240
        %p744 = pneg %p264
        %p745 = pneg %p261
        %p746 = pneg %p285
        %p747 = pneg %p282
        %p748 = pneg %p306
        %p749 = pneg %p303
        %p750 = pneg %p332
        %p751 = pneg %p329
        %s752 = sand.u32 %s319, 1
        %s753 = scalar_lea.sflag [#allocation4], %s752
        %s754 = sand.u32 %s319, 1
        %s755 = smul.addr %s754, 256
        %s756 = scalar_lea.vmem [#allocation20], %s755
        %p757 = pneg %p358
        %p758 = pneg %p355
        %s759 = sand.u32 %s45, 1
        %s760 = scalar_lea.sflag [#allocation22], %s759
        %s761 = sand.u32 %s345, 1
        %s762 = smul.addr %s761, 128
        %s763 = scalar_lea.vmem [#allocation21], %s762
        %p764 = pneg %p384
        %p765 = pneg %p381
        %s766 = sand.u32 %s45, 1
        %s767 = scalar_lea.sflag [#allocation22], %s766
        %s768 = sand.u32 %s371, 1
        %s769 = smul.addr %s768, 128
        %s770 = scalar_lea.vmem [#allocation23], %s769
        %s771 = smul.u32 16, %s45
        %s772 = smul.u32 16, %s45
        %s773 = smul.u32 16, %s45
        %s774 = smul.u32 16, %s45
        %s775 = smul.u32 16, %s45
        %s776 = smul.u32 16, %s45
        %s777 = smul.u32 16, %s45
        %s778 = smul.u32 16, %s45
        %s779 = smul.u32 16, %s45
        %v780 = vld [vmem:[%s618] sm:$0xff]
        %v781 = vld [vmem:[%s618 + $0x8] sm:$0xff]
        %v782 = vld [vmem:[%s618 + $0x10] sm:$0xff]
        %v783 = vld [vmem:[%s618 + $0x18] sm:$0xff]
        %v784 = vld [vmem:[%s618 + $0x20] sm:$0xff]
        %v785 = vld [vmem:[%s618 + $0x28] sm:$0xff]
        %v786 = vld [vmem:[%s618 + $0x30] sm:$0xff]
        %v787 = vld [vmem:[%s618 + $0x38] sm:$0xff]
        %v788 = vld [vmem:[%s618 + $0x40] sm:$0xff]
        %v789 = vld [vmem:[%s618 + $0x48] sm:$0xff]
        %v790 = vld [vmem:[%s618 + $0x50] sm:$0xff]
        %v791 = vld [vmem:[%s618 + $0x58] sm:$0xff]
        %v792 = vld [vmem:[%s618 + $0x60] sm:$0xff]
        %v793 = vld [vmem:[%s618 + $0x68] sm:$0xff]
        %v794 = vld [vmem:[%s618 + $0x70] sm:$0xff]
        %v795 = vld [vmem:[%s618 + $0x78] sm:$0xff]
        %v796 = vld [vmem:[%s618 + $0x80] sm:$0xff]
        %v797 = vld [vmem:[%s618 + $0x88] sm:$0xff]
        %v798 = vld [vmem:[%s618 + $0x90] sm:$0xff]
        %v799 = vld [vmem:[%s618 + $0x98] sm:$0xff]
        %v800 = vld [vmem:[%s618 + $0xa0] sm:$0xff]
        %v801 = vld [vmem:[%s618 + $0xa8] sm:$0xff]
        %v802 = vld [vmem:[%s618 + $0xb0] sm:$0xff]
        %v803 = vld [vmem:[%s618 + $0xb8] sm:$0xff]
        %v804 = vld [vmem:[%s618 + $0xc0] sm:$0xff]
        %v805 = vld [vmem:[%s618 + $0xc8] sm:$0xff]
        %v806 = vld [vmem:[%s618 + $0xd0] sm:$0xff]
        %v807 = vld [vmem:[%s618 + $0xd8] sm:$0xff]
        %v808 = vld [vmem:[%s618 + $0xe0] sm:$0xff]
        %v809 = vld [vmem:[%s618 + $0xe8] sm:$0xff]
        %v810 = vld [vmem:[%s618 + $0xf0] sm:$0xff]
        %v811 = vld [vmem:[%s618 + $0xf8] sm:$0xff]
        %v812 = vld [vmem:[#allocation14] sm:$0x3]
        %v813 = vmul.f32 %v780, %v780
        %v814 = vmul.f32 %v781, %v781
        %v815 = vmul.f32 %v782, %v782
        %v816 = vmul.f32 %v783, %v783
        %v817 = vmul.f32 %v784, %v784
        %v818 = vmul.f32 %v785, %v785
        %v819 = vmul.f32 %v786, %v786
        %v820 = vmul.f32 %v787, %v787
        %v821 = vmul.f32 %v788, %v788
        %v822 = vmul.f32 %v789, %v789
        %v823 = vmul.f32 %v790, %v790
        %v824 = vmul.f32 %v791, %v791
        %v825 = vmul.f32 %v792, %v792
        %v826 = vmul.f32 %v793, %v793
        %v827 = vmul.f32 %v794, %v794
        %v828 = vmul.f32 %v795, %v795
        %v829 = vmul.f32 %v796, %v796
        %v830 = vmul.f32 %v797, %v797
        %v831 = vmul.f32 %v798, %v798
        %v832 = vmul.f32 %v799, %v799
        %v833 = vmul.f32 %v800, %v800
        %v834 = vmul.f32 %v801, %v801
        %v835 = vmul.f32 %v802, %v802
        %v836 = vmul.f32 %v803, %v803
        %v837 = vmul.f32 %v804, %v804
        %v838 = vmul.f32 %v805, %v805
        %v839 = vmul.f32 %v806, %v806
        %v840 = vmul.f32 %v807, %v807
        %v841 = vmul.f32 %v808, %v808
        %v842 = vmul.f32 %v809, %v809
        %v843 = vmul.f32 %v810, %v810
        %v844 = vmul.f32 %v811, %v811
        %v845 = vadd.f32 %v813, %v814
        %846 = vadd.xlane.f32.xlu0 %v845
        %v847 = vpop.xlane.xlu0 %846
        %v848 = vadd.f32 %v815, %v816
        %849 = vadd.xlane.f32.xlu0 %v848
        %v850 = vpop.xlane.xlu0 %849
        %v851 = vadd.f32 %v817, %v818
        %852 = vadd.xlane.f32.xlu0 %v851
        %v853 = vpop.xlane.xlu0 %852
        %v854 = vadd.f32 %v819, %v820
        %855 = vadd.xlane.f32.xlu0 %v854
        %v856 = vpop.xlane.xlu0 %855
        %v857 = vadd.f32 %v821, %v822
        %858 = vadd.xlane.f32.xlu0 %v857
        %v859 = vpop.xlane.xlu0 %858
        %v860 = vadd.f32 %v823, %v824
        %861 = vadd.xlane.f32.xlu0 %v860
        %v862 = vpop.xlane.xlu0 %861
        %v863 = vadd.f32 %v825, %v826
        %864 = vadd.xlane.f32.xlu0 %v863
        %v865 = vpop.xlane.xlu0 %864
        %v866 = vadd.f32 %v827, %v828
        %867 = vadd.xlane.f32.xlu0 %v866
        %v868 = vpop.xlane.xlu0 %867
        %v869 = vadd.f32 %v829, %v830
        %870 = vadd.xlane.f32.xlu0 %v869
        %v871 = vpop.xlane.xlu0 %870
        %v872 = vadd.f32 %v831, %v832
        %873 = vadd.xlane.f32.xlu0 %v872
        %v874 = vpop.xlane.xlu0 %873
        %v875 = vadd.f32 %v833, %v834
        %876 = vadd.xlane.f32.xlu0 %v875
        %v877 = vpop.xlane.xlu0 %876
        %v878 = vadd.f32 %v835, %v836
        %879 = vadd.xlane.f32.xlu0 %v878
        %v880 = vpop.xlane.xlu0 %879
        %v881 = vadd.f32 %v837, %v838
        %882 = vadd.xlane.f32.xlu0 %v881
        %v883 = vpop.xlane.xlu0 %882
        %v884 = vadd.f32 %v839, %v840
        %885 = vadd.xlane.f32.xlu0 %v884
        %v886 = vpop.xlane.xlu0 %885
        %v887 = vadd.f32 %v841, %v842
        %888 = vadd.xlane.f32.xlu0 %v887
        %v889 = vpop.xlane.xlu0 %888
        %v890 = vadd.f32 %v843, %v844
        %891 = vadd.xlane.f32.xlu0 %v890
        %v892 = vpop.xlane.xlu0 %891
        %v893 = vrcp.pop 256.0
        %v894 = vmul.f32 %v847, %v893
        %v895 = vmul.f32 %v850, %v893
        %v896 = vmul.f32 %v853, %v893
        %v897 = vmul.f32 %v856, %v893
        %v898 = vmul.f32 %v859, %v893
        %v899 = vmul.f32 %v862, %v893
        %v900 = vmul.f32 %v865, %v893
        %v901 = vmul.f32 %v868, %v893
        %v902 = vmul.f32 %v871, %v893
        %v903 = vmul.f32 %v874, %v893
        %v904 = vmul.f32 %v877, %v893
        %v905 = vmul.f32 %v880, %v893
        %v906 = vmul.f32 %v883, %v893
        %v907 = vmul.f32 %v886, %v893
        %v908 = vmul.f32 %v889, %v893
        %v909 = vmul.f32 %v892, %v893
        %v910 = vadd.f32 %v894, 1e-06
        %v911 = vadd.f32 %v895, 1e-06
        %v912 = vadd.f32 %v896, 1e-06
        %v913 = vadd.f32 %v897, 1e-06
        %v914 = vadd.f32 %v898, 1e-06
        %v915 = vadd.f32 %v899, 1e-06
        %v916 = vadd.f32 %v900, 1e-06
        %v917 = vadd.f32 %v901, 1e-06
        %v918 = vadd.f32 %v902, 1e-06
        %v919 = vadd.f32 %v903, 1e-06
        %v920 = vadd.f32 %v904, 1e-06
        %v921 = vadd.f32 %v905, 1e-06
        %v922 = vadd.f32 %v906, 1e-06
        %v923 = vadd.f32 %v907, 1e-06
        %v924 = vadd.f32 %v908, 1e-06
        %v925 = vadd.f32 %v909, 1e-06
        %v926 = vrsqrt.pop %v910
        %v927 = vrsqrt.pop %v911
        %v928 = vrsqrt.pop %v912
        %v929 = vrsqrt.pop %v913
        %v930 = vrsqrt.pop %v914
        %v931 = vrsqrt.pop %v915
        %v932 = vrsqrt.pop %v916
        %v933 = vrsqrt.pop %v917
        %v934 = vrsqrt.pop %v918
        %v935 = vrsqrt.pop %v919
        %v936 = vrsqrt.pop %v920
        %v937 = vrsqrt.pop %v921
        %v938 = vrsqrt.pop %v922
        %v939 = vrsqrt.pop %v923
        %v940 = vrsqrt.pop %v924
        %v941 = vrsqrt.pop %v925
        %v942 = vmul.f32 %v780, %v926
        %v943 = vmul.f32 %v781, %v926
        %v944 = vmul.f32 %v782, %v927
        %v945 = vmul.f32 %v783, %v927
        %v946 = vmul.f32 %v784, %v928
        %v947 = vmul.f32 %v785, %v928
        %v948 = vmul.f32 %v786, %v929
        %v949 = vmul.f32 %v787, %v929
        %v950 = vmul.f32 %v788, %v930
        %v951 = vmul.f32 %v789, %v930
        %v952 = vmul.f32 %v790, %v931
        %v953 = vmul.f32 %v791, %v931
        %v954 = vmul.f32 %v792, %v932
        %v955 = vmul.f32 %v793, %v932
        %v956 = vmul.f32 %v794, %v933
        %v957 = vmul.f32 %v795, %v933
        %v958 = vmul.f32 %v796, %v934
        %v959 = vmul.f32 %v797, %v934
        %v960 = vmul.f32 %v798, %v935
        %v961 = vmul.f32 %v799, %v935
        %v962 = vmul.f32 %v800, %v936
        %v963 = vmul.f32 %v801, %v936
        %v964 = vmul.f32 %v802, %v937
        %v965 = vmul.f32 %v803, %v937
        %v966 = vmul.f32 %v804, %v938
        %v967 = vmul.f32 %v805, %v938
        %v968 = vmul.f32 %v806, %v939
        %v969 = vmul.f32 %v807, %v939
        %v970 = vmul.f32 %v808, %v940
        %v971 = vmul.f32 %v809, %v940
        %v972 = vmul.f32 %v810, %v941
        %v973 = vmul.f32 %v811, %v941
        %v975 = vlaneseq
        %v976 = vshrl.u32 %v975, 7
        %v977 = vsub.s32 0, %v976
        %v978 = vrot.slane %v812, %v977
        %v979 = vlaneseq
        %v980 = vshrl.u32 %v979, 7
        %v981 = vsub.s32 1, %v980
        %v982 = vrot.slane %v812, %v981
        %v985 = vmul.f32 %v942, %v978
        %v986 = vmul.f32 %v943, %v982
        %v987 = vmul.f32 %v944, %v978
        %v988 = vmul.f32 %v945, %v982
        %v989 = vmul.f32 %v946, %v978
        %v990 = vmul.f32 %v947, %v982
        %v991 = vmul.f32 %v948, %v978
        %v992 = vmul.f32 %v949, %v982
        %v993 = vmul.f32 %v950, %v978
        %v994 = vmul.f32 %v951, %v982
        %v995 = vmul.f32 %v952, %v978
        %v996 = vmul.f32 %v953, %v982
        %v997 = vmul.f32 %v954, %v978
        %v998 = vmul.f32 %v955, %v982
        %v999 = vmul.f32 %v956, %v978
        %v1000 = vmul.f32 %v957, %v982
        %v1001 = vmul.f32 %v958, %v978
        %v1002 = vmul.f32 %v959, %v982
        %v1003 = vmul.f32 %v960, %v978
        %v1004 = vmul.f32 %v961, %v982
        %v1005 = vmul.f32 %v962, %v978
        %v1006 = vmul.f32 %v963, %v982
        %v1007 = vmul.f32 %v964, %v978
        %v1008 = vmul.f32 %v965, %v982
        %v1009 = vmul.f32 %v966, %v978
        %v1010 = vmul.f32 %v967, %v982
        %v1011 = vmul.f32 %v968, %v978
        %v1012 = vmul.f32 %v969, %v982
        %v1013 = vmul.f32 %v970, %v978
        %v1014 = vmul.f32 %v971, %v982
        %v1015 = vmul.f32 %v972, %v978
        %v1016 = vmul.f32 %v973, %v982
        %v1017 = vpack.c.bf16 %v987, %v985
        %v1018 = vpack.c.bf16 %v988, %v986
        %v1019 = vpack.c.bf16 %v991, %v989
        %v1020 = vpack.c.bf16 %v992, %v990
        %v1021 = vpack.c.bf16 %v995, %v993
        %v1022 = vpack.c.bf16 %v996, %v994
        %v1023 = vpack.c.bf16 %v999, %v997
        %v1024 = vpack.c.bf16 %v1000, %v998
        %v1025 = vpack.c.bf16 %v1003, %v1001
        %v1026 = vpack.c.bf16 %v1004, %v1002
        %v1027 = vpack.c.bf16 %v1007, %v1005
        %v1028 = vpack.c.bf16 %v1008, %v1006
        %v1029 = vpack.c.bf16 %v1011, %v1009
        %v1030 = vpack.c.bf16 %v1012, %v1010
        %v1031 = vpack.c.bf16 %v1015, %v1013
        %v1032 = vpack.c.bf16 %v1016, %v1014
        %v1033 = vld [vmem:[#allocation16] sm:$0xff]
        %v1034 = vld [vmem:[#allocation16 + $0x8] sm:$0xff]
        %v1035 = vld [vmem:[#allocation16 + $0x10] sm:$0xff]
        %v1036 = vld [vmem:[#allocation16 + $0x18] sm:$0xff]
        %v1037 = vld [vmem:[#allocation16 + $0x20] sm:$0xff]
        %v1038 = vld [vmem:[#allocation16 + $0x28] sm:$0xff]
        %v1039 = vld [vmem:[#allocation16 + $0x30] sm:$0xff]
        %v1040 = vld [vmem:[#allocation16 + $0x38] sm:$0xff]
        %v1041 = vld [vmem:[#allocation16 + $0x40] sm:$0xff]
        %v1042 = vld [vmem:[#allocation16 + $0x48] sm:$0xff]
        %v1043 = vld [vmem:[#allocation16 + $0x50] sm:$0xff]
        %v1044 = vld [vmem:[#allocation16 + $0x58] sm:$0xff]
        %v1045 = vld [vmem:[#allocation16 + $0x60] sm:$0xff]
        %v1046 = vld [vmem:[#allocation16 + $0x68] sm:$0xff]
        %v1047 = vld [vmem:[#allocation16 + $0x70] sm:$0xff]
        %v1048 = vld [vmem:[#allocation16 + $0x78] sm:$0xff]
        %v1049 = vld [vmem:[#allocation16 + $0x80] sm:$0xff]
        %v1050 = vld [vmem:[#allocation16 + $0x88] sm:$0xff]
        %v1051 = vld [vmem:[#allocation16 + $0x90] sm:$0xff]
        %v1052 = vld [vmem:[#allocation16 + $0x98] sm:$0xff]
        %v1053 = vld [vmem:[#allocation16 + $0xa0] sm:$0xff]
        %v1054 = vld [vmem:[#allocation16 + $0xa8] sm:$0xff]
        %v1055 = vld [vmem:[#allocation16 + $0xb0] sm:$0xff]
        %v1056 = vld [vmem:[#allocation16 + $0xb8] sm:$0xff]
        %v1057 = vld [vmem:[#allocation16 + $0xc0] sm:$0xff]
        %v1058 = vld [vmem:[#allocation16 + $0xc8] sm:$0xff]
        %v1059 = vld [vmem:[#allocation16 + $0xd0] sm:$0xff]
        %v1060 = vld [vmem:[#allocation16 + $0xd8] sm:$0xff]
        %v1061 = vld [vmem:[#allocation16 + $0xe0] sm:$0xff]
        %v1062 = vld [vmem:[#allocation16 + $0xe8] sm:$0xff]
        %v1063 = vld [vmem:[#allocation16 + $0xf0] sm:$0xff]
        %v1064 = vld [vmem:[#allocation16 + $0xf8] sm:$0xff]
        %v1065 = vld [vmem:[#allocation16 + $0x100] sm:$0xff]
        %v1066 = vld [vmem:[#allocation16 + $0x108] sm:$0xff]
        %v1067 = vld [vmem:[#allocation16 + $0x110] sm:$0xff]
        %v1068 = vld [vmem:[#allocation16 + $0x118] sm:$0xff]
        %v1069 = vld [vmem:[#allocation16 + $0x120] sm:$0xff]
        %v1070 = vld [vmem:[#allocation16 + $0x128] sm:$0xff]
        %v1071 = vld [vmem:[#allocation16 + $0x130] sm:$0xff]
        %v1072 = vld [vmem:[#allocation16 + $0x138] sm:$0xff]
        %v1073 = vld [vmem:[#allocation16 + $0x140] sm:$0xff]
        %v1074 = vld [vmem:[#allocation16 + $0x148] sm:$0xff]
        %v1075 = vld [vmem:[#allocation16 + $0x150] sm:$0xff]
        %v1076 = vld [vmem:[#allocation16 + $0x158] sm:$0xff]
        %v1077 = vld [vmem:[#allocation16 + $0x160] sm:$0xff]
        %v1078 = vld [vmem:[#allocation16 + $0x168] sm:$0xff]
        %v1079 = vld [vmem:[#allocation16 + $0x170] sm:$0xff]
        %v1080 = vld [vmem:[#allocation16 + $0x178] sm:$0xff]
        %v1081 = vld [vmem:[#allocation16 + $0x180] sm:$0xff]
        %v1082 = vld [vmem:[#allocation16 + $0x188] sm:$0xff]
        %v1083 = vld [vmem:[#allocation16 + $0x190] sm:$0xff]
        %v1084 = vld [vmem:[#allocation16 + $0x198] sm:$0xff]
        %v1085 = vld [vmem:[#allocation16 + $0x1a0] sm:$0xff]
        %v1086 = vld [vmem:[#allocation16 + $0x1a8] sm:$0xff]
        %v1087 = vld [vmem:[#allocation16 + $0x1b0] sm:$0xff]
        %v1088 = vld [vmem:[#allocation16 + $0x1b8] sm:$0xff]
        %v1089 = vld [vmem:[#allocation16 + $0x1c0] sm:$0xff]
        %v1090 = vld [vmem:[#allocation16 + $0x1c8] sm:$0xff]
        %v1091 = vld [vmem:[#allocation16 + $0x1d0] sm:$0xff]
        %v1092 = vld [vmem:[#allocation16 + $0x1d8] sm:$0xff]
        %v1093 = vld [vmem:[#allocation16 + $0x1e0] sm:$0xff]
        %v1094 = vld [vmem:[#allocation16 + $0x1e8] sm:$0xff]
        %v1095 = vld [vmem:[#allocation16 + $0x1f0] sm:$0xff]
        %v1096 = vld [vmem:[#allocation16 + $0x1f8] sm:$0xff]
        %v1161 = vunpack.c.l.b16 %v1033
        %v1162 = vunpack.c.h.b16 %v1033
        %v1163 = vunpack.c.l.b16 %v1034
        %v1164 = vunpack.c.h.b16 %v1034
        %v1165 = vunpack.c.l.b16 %v1035
        %v1166 = vunpack.c.h.b16 %v1035
        %v1167 = vunpack.c.l.b16 %v1036
        %v1168 = vunpack.c.h.b16 %v1036
        %v1169 = vunpack.c.l.b16 %v1037
        %v1170 = vunpack.c.h.b16 %v1037
        %v1171 = vunpack.c.l.b16 %v1038
        %v1172 = vunpack.c.h.b16 %v1038
        %v1173 = vunpack.c.l.b16 %v1039
        %v1174 = vunpack.c.h.b16 %v1039
        %v1175 = vunpack.c.l.b16 %v1040
        %v1176 = vunpack.c.h.b16 %v1040
        %v1177 = vunpack.c.l.b16 %v1041
        %v1178 = vunpack.c.h.b16 %v1041
        %v1179 = vunpack.c.l.b16 %v1042
        %v1180 = vunpack.c.h.b16 %v1042
        %v1181 = vunpack.c.l.b16 %v1043
        %v1182 = vunpack.c.h.b16 %v1043
        %v1183 = vunpack.c.l.b16 %v1044
        %v1184 = vunpack.c.h.b16 %v1044
        %v1185 = vunpack.c.l.b16 %v1045
        %v1186 = vunpack.c.h.b16 %v1045
        %v1187 = vunpack.c.l.b16 %v1046
        %v1188 = vunpack.c.h.b16 %v1046
        %v1189 = vunpack.c.l.b16 %v1047
        %v1190 = vunpack.c.h.b16 %v1047
        %v1191 = vunpack.c.l.b16 %v1048
        %v1192 = vunpack.c.h.b16 %v1048
        %v1193 = vunpack.c.l.b16 %v1049
        %v1194 = vunpack.c.h.b16 %v1049
        %v1195 = vunpack.c.l.b16 %v1050
        %v1196 = vunpack.c.h.b16 %v1050
        %v1197 = vunpack.c.l.b16 %v1051
        %v1198 = vunpack.c.h.b16 %v1051
        %v1199 = vunpack.c.l.b16 %v1052
        %v1200 = vunpack.c.h.b16 %v1052
        %v1201 = vunpack.c.l.b16 %v1053
        %v1202 = vunpack.c.h.b16 %v1053
        %v1203 = vunpack.c.l.b16 %v1054
        %v1204 = vunpack.c.h.b16 %v1054
        %v1205 = vunpack.c.l.b16 %v1055
        %v1206 = vunpack.c.h.b16 %v1055
        %v1207 = vunpack.c.l.b16 %v1056
        %v1208 = vunpack.c.h.b16 %v1056
        %v1209 = vunpack.c.l.b16 %v1057
        %v1210 = vunpack.c.h.b16 %v1057
        %v1211 = vunpack.c.l.b16 %v1058
        %v1212 = vunpack.c.h.b16 %v1058
        %v1213 = vunpack.c.l.b16 %v1059
        %v1214 = vunpack.c.h.b16 %v1059
        %v1215 = vunpack.c.l.b16 %v1060
        %v1216 = vunpack.c.h.b16 %v1060
        %v1217 = vunpack.c.l.b16 %v1061
        %v1218 = vunpack.c.h.b16 %v1061
        %v1219 = vunpack.c.l.b16 %v1062
        %v1220 = vunpack.c.h.b16 %v1062
        %v1221 = vunpack.c.l.b16 %v1063
        %v1222 = vunpack.c.h.b16 %v1063
        %v1223 = vunpack.c.l.b16 %v1064
        %v1224 = vunpack.c.h.b16 %v1064
        %v1225 = vunpack.c.l.b16 %v1065
        %v1226 = vunpack.c.h.b16 %v1065
        %v1227 = vunpack.c.l.b16 %v1066
        %v1228 = vunpack.c.h.b16 %v1066
        %v1229 = vunpack.c.l.b16 %v1067
        %v1230 = vunpack.c.h.b16 %v1067
        %v1231 = vunpack.c.l.b16 %v1068
        %v1232 = vunpack.c.h.b16 %v1068
        %v1233 = vunpack.c.l.b16 %v1069
        %v1234 = vunpack.c.h.b16 %v1069
        %v1235 = vunpack.c.l.b16 %v1070
        %v1236 = vunpack.c.h.b16 %v1070
        %v1237 = vunpack.c.l.b16 %v1071
        %v1238 = vunpack.c.h.b16 %v1071
        %v1239 = vunpack.c.l.b16 %v1072
        %v1240 = vunpack.c.h.b16 %v1072
        %v1241 = vunpack.c.l.b16 %v1073
        %v1242 = vunpack.c.h.b16 %v1073
        %v1243 = vunpack.c.l.b16 %v1074
        %v1244 = vunpack.c.h.b16 %v1074
        %v1245 = vunpack.c.l.b16 %v1075
        %v1246 = vunpack.c.h.b16 %v1075
        %v1247 = vunpack.c.l.b16 %v1076
        %v1248 = vunpack.c.h.b16 %v1076
        %v1249 = vunpack.c.l.b16 %v1077
        %v1250 = vunpack.c.h.b16 %v1077
        %v1251 = vunpack.c.l.b16 %v1078
        %v1252 = vunpack.c.h.b16 %v1078
        %v1253 = vunpack.c.l.b16 %v1079
        %v1254 = vunpack.c.h.b16 %v1079
        %v1255 = vunpack.c.l.b16 %v1080
        %v1256 = vunpack.c.h.b16 %v1080
        %v1257 = vunpack.c.l.b16 %v1081
        %v1258 = vunpack.c.h.b16 %v1081
        %v1259 = vunpack.c.l.b16 %v1082
        %v1260 = vunpack.c.h.b16 %v1082
        %v1261 = vunpack.c.l.b16 %v1083
        %v1262 = vunpack.c.h.b16 %v1083
        %v1263 = vunpack.c.l.b16 %v1084
        %v1264 = vunpack.c.h.b16 %v1084
        %v1265 = vunpack.c.l.b16 %v1085
        %v1266 = vunpack.c.h.b16 %v1085
        %v1267 = vunpack.c.l.b16 %v1086
        %v1268 = vunpack.c.h.b16 %v1086
        %v1269 = vunpack.c.l.b16 %v1087
        %v1270 = vunpack.c.h.b16 %v1087
        %v1271 = vunpack.c.l.b16 %v1088
        %v1272 = vunpack.c.h.b16 %v1088
        %v1273 = vunpack.c.l.b16 %v1089
        %v1274 = vunpack.c.h.b16 %v1089
        %v1275 = vunpack.c.l.b16 %v1090
        %v1276 = vunpack.c.h.b16 %v1090
        %v1277 = vunpack.c.l.b16 %v1091
        %v1278 = vunpack.c.h.b16 %v1091
        %v1279 = vunpack.c.l.b16 %v1092
        %v1280 = vunpack.c.h.b16 %v1092
        %v1281 = vunpack.c.l.b16 %v1093
        %v1282 = vunpack.c.h.b16 %v1093
        %v1283 = vunpack.c.l.b16 %v1094
        %v1284 = vunpack.c.h.b16 %v1094
        %v1285 = vunpack.c.l.b16 %v1095
        %v1286 = vunpack.c.h.b16 %v1095
        %v1287 = vunpack.c.l.b16 %v1096
        %v1288 = vunpack.c.h.b16 %v1096
        %v1289 = vpack.c.b16 %v1165, %v1161
        %v1290 = vpack.c.b16 %v1166, %v1162
        %v1291 = vpack.c.b16 %v1167, %v1163
        %v1292 = vpack.c.b16 %v1168, %v1164
        %v1293 = vpack.c.b16 %v1173, %v1169
        %v1294 = vpack.c.b16 %v1174, %v1170
        %v1295 = vpack.c.b16 %v1175, %v1171
        %v1296 = vpack.c.b16 %v1176, %v1172
        %v1297 = vpack.c.b16 %v1181, %v1177
        %v1298 = vpack.c.b16 %v1182, %v1178
        %v1299 = vpack.c.b16 %v1183, %v1179
        %v1300 = vpack.c.b16 %v1184, %v1180
        %v1301 = vpack.c.b16 %v1189, %v1185
        %v1302 = vpack.c.b16 %v1190, %v1186
        %v1303 = vpack.c.b16 %v1191, %v1187
        %v1304 = vpack.c.b16 %v1192, %v1188
        %v1305 = vpack.c.b16 %v1197, %v1193
        %v1306 = vpack.c.b16 %v1198, %v1194
        %v1307 = vpack.c.b16 %v1199, %v1195
        %v1308 = vpack.c.b16 %v1200, %v1196
        %v1309 = vpack.c.b16 %v1205, %v1201
        %v1310 = vpack.c.b16 %v1206, %v1202
        %v1311 = vpack.c.b16 %v1207, %v1203
        %v1312 = vpack.c.b16 %v1208, %v1204
        %v1313 = vpack.c.b16 %v1213, %v1209
        %v1314 = vpack.c.b16 %v1214, %v1210
        %v1315 = vpack.c.b16 %v1215, %v1211
        %v1316 = vpack.c.b16 %v1216, %v1212
        %v1317 = vpack.c.b16 %v1221, %v1217
        %v1318 = vpack.c.b16 %v1222, %v1218
        %v1319 = vpack.c.b16 %v1223, %v1219
        %v1320 = vpack.c.b16 %v1224, %v1220
        %v1321 = vpack.c.b16 %v1229, %v1225
        %v1322 = vpack.c.b16 %v1230, %v1226
        %v1323 = vpack.c.b16 %v1231, %v1227
        %v1324 = vpack.c.b16 %v1232, %v1228
        %v1325 = vpack.c.b16 %v1237, %v1233
        %v1326 = vpack.c.b16 %v1238, %v1234
        %v1327 = vpack.c.b16 %v1239, %v1235
        %v1328 = vpack.c.b16 %v1240, %v1236
        %v1329 = vpack.c.b16 %v1245, %v1241
        %v1330 = vpack.c.b16 %v1246, %v1242
        %v1331 = vpack.c.b16 %v1247, %v1243
        %v1332 = vpack.c.b16 %v1248, %v1244
        %v1333 = vpack.c.b16 %v1253, %v1249
        %v1334 = vpack.c.b16 %v1254, %v1250
        %v1335 = vpack.c.b16 %v1255, %v1251
        %v1336 = vpack.c.b16 %v1256, %v1252
        %v1337 = vpack.c.b16 %v1261, %v1257
        %v1338 = vpack.c.b16 %v1262, %v1258
        %v1339 = vpack.c.b16 %v1263, %v1259
        %v1340 = vpack.c.b16 %v1264, %v1260
        %v1341 = vpack.c.b16 %v1269, %v1265
        %v1342 = vpack.c.b16 %v1270, %v1266
        %v1343 = vpack.c.b16 %v1271, %v1267
        %v1344 = vpack.c.b16 %v1272, %v1268
        %v1345 = vpack.c.b16 %v1277, %v1273
        %v1346 = vpack.c.b16 %v1278, %v1274
        %v1347 = vpack.c.b16 %v1279, %v1275
        %v1348 = vpack.c.b16 %v1280, %v1276
        %v1349 = vpack.c.b16 %v1285, %v1281
        %v1350 = vpack.c.b16 %v1286, %v1282
        %v1351 = vpack.c.b16 %v1287, %v1283
        %v1352 = vpack.c.b16 %v1288, %v1284
        %1417 = vmatprep.subr.bf16.mxu0 %v1290
        %1418 = vmatpush1.bf16.msra.mxu0 %v1289
        %1419 = vmatprep.subr.bf16.mxu0 %v1294
        %1420 = vmatpush1.bf16.msra.mxu0 %v1293
        %1421 = vmatprep.subr.bf16.mxu0 %v1298
        %1422 = vmatpush1.bf16.msra.mxu0 %v1297
        %1423 = vmatprep.subr.bf16.mxu0 %v1302
        %1424 = vmatpush1.bf16.msra.mxu0 %v1301
        %1425 = vmatprep.subr.bf16.mxu0 %v1306
        %1426 = vmatpush1.bf16.msra.mxu0 %v1305
        %1427 = vmatprep.subr.bf16.mxu0 %v1310
        %1428 = vmatpush1.bf16.msra.mxu0 %v1309
        %1429 = vmatprep.subr.bf16.mxu0 %v1314
        %1430 = vmatpush1.bf16.msra.mxu0 %v1313
        %1431 = vmatprep.subr.bf16.mxu0 %v1318
        %1432 = vmatpush1.bf16.msra.mxu0 %v1317
        %1433 = vmatprep.subr.bf16.mxu0 %v1322
        %1434 = vmatpush1.bf16.msra.mxu0 %v1321
        %1435 = vmatprep.subr.bf16.mxu0 %v1326
        %1436 = vmatpush1.bf16.msra.mxu0 %v1325
        %1437 = vmatprep.subr.bf16.mxu0 %v1330
        %1438 = vmatpush1.bf16.msra.mxu0 %v1329
        %1439 = vmatprep.subr.bf16.mxu0 %v1334
        %1440 = vmatpush1.bf16.msra.mxu0 %v1333
        %1441 = vmatprep.subr.bf16.mxu0 %v1338
        %1442 = vmatpush1.bf16.msra.mxu0 %v1337
        %1443 = vmatprep.subr.bf16.mxu0 %v1342
        %1444 = vmatpush1.bf16.msra.mxu0 %v1341
        %1445 = vmatprep.subr.bf16.mxu0 %v1346
        %1446 = vmatpush1.bf16.msra.mxu0 %v1345
        %1447 = vmatprep.subr.bf16.mxu0 %v1350
        %1448 = vmatpush1.bf16.msra.mxu0 %v1349
        %1449 = vmatprep.mubr.bf16.mxu0 %v1018
        %1450 = vmatmul.mubr.bf16.gmra.mrb[0].mxu0 %v1017
        %v1451 = vpop.f32.mrb[0].mxu0
        %v1452 = vadd.f32 0.0, %v1451
        %v1453 = vpop.f32.mrb[0].mxu0
        %v1454 = vadd.f32 0.0, %v1453
        %v1455 = vpop.f32.mrb[0].mxu0
        %v1456 = vadd.f32 0.0, %v1455
        %v1457 = vpop.f32.mrb[0].mxu0
        %v1458 = vadd.f32 0.0, %v1457
        %1459 = vmatprep.mubr.bf16.mxu0 %v1020
        %1460 = vmatmul.mubr.bf16.gmra.mrb[0].mxu0 %v1019
        %v1461 = vpop.f32.mrb[0].mxu0
        %v1462 = vadd.f32 0.0, %v1461
        %v1463 = vpop.f32.mrb[0].mxu0
        %v1464 = vadd.f32 0.0, %v1463
        %v1465 = vpop.f32.mrb[0].mxu0
        %v1466 = vadd.f32 0.0, %v1465
        %v1467 = vpop.f32.mrb[0].mxu0
        %v1468 = vadd.f32 0.0, %v1467
        %1469 = vmatprep.mubr.bf16.mxu0 %v1022
        %1470 = vmatmul.mubr.bf16.gmra.mrb[0].mxu0 %v1021
        %v1471 = vpop.f32.mrb[0].mxu0
        %v1472 = vadd.f32 0.0, %v1471
        %v1473 = vpop.f32.mrb[0].mxu0
        %v1474 = vadd.f32 0.0, %v1473
        %v1475 = vpop.f32.mrb[0].mxu0
        %v1476 = vadd.f32 0.0, %v1475
        %v1477 = vpop.f32.mrb[0].mxu0
        %v1478 = vadd.f32 0.0, %v1477
        %1479 = vmatprep.mubr.bf16.mxu0 %v1024
        %1480 = vmatmul.mubr.bf16.gmra.mrb[0].mxu0 %v1023
        %v1481 = vpop.f32.mrb[0].mxu0
        %v1482 = vadd.f32 0.0, %v1481
        %v1483 = vpop.f32.mrb[0].mxu0
        %v1484 = vadd.f32 0.0, %v1483
        %v1485 = vpop.f32.mrb[0].mxu0
        %v1486 = vadd.f32 0.0, %v1485
        %v1487 = vpop.f32.mrb[0].mxu0
        %v1488 = vadd.f32 0.0, %v1487
        %1489 = vmatprep.mubr.bf16.mxu0 %v1026
        %1490 = vmatmul.mubr.bf16.gmra.mrb[0].mxu0 %v1025
        %v1491 = vpop.f32.mrb[0].mxu0
        %v1492 = vadd.f32 0.0, %v1491
        %v1493 = vpop.f32.mrb[0].mxu0
        %v1494 = vadd.f32 0.0, %v1493
        %v1495 = vpop.f32.mrb[0].mxu0
        %v1496 = vadd.f32 0.0, %v1495
        %v1497 = vpop.f32.mrb[0].mxu0
        %v1498 = vadd.f32 0.0, %v1497
        %1499 = vmatprep.mubr.bf16.mxu0 %v1028
        %1500 = vmatmul.mubr.bf16.gmra.mrb[0].mxu0 %v1027
        %v1501 = vpop.f32.mrb[0].mxu0
        %v1502 = vadd.f32 0.0, %v1501
        %v1503 = vpop.f32.mrb[0].mxu0
        %v1504 = vadd.f32 0.0, %v1503
        %v1505 = vpop.f32.mrb[0].mxu0
        %v1506 = vadd.f32 0.0, %v1505
        %v1507 = vpop.f32.mrb[0].mxu0
        %v1508 = vadd.f32 0.0, %v1507
        %1509 = vmatprep.mubr.bf16.mxu0 %v1030
        %1510 = vmatmul.mubr.bf16.gmra.mrb[0].mxu0 %v1029
        %v1511 = vpop.f32.mrb[0].mxu0
        %v1512 = vadd.f32 0.0, %v1511
        %v1513 = vpop.f32.mrb[0].mxu0
        %v1514 = vadd.f32 0.0, %v1513
        %v1515 = vpop.f32.mrb[0].mxu0
        %v1516 = vadd.f32 0.0, %v1515
        %v1517 = vpop.f32.mrb[0].mxu0
        %v1518 = vadd.f32 0.0, %v1517
        %1519 = vmatprep.mubr.bf16.mxu0 %v1032
        %1520 = vmatmul.mubr.bf16.gmra.mrb[0].mxu0 %v1031
        %v1521 = vpop.f32.mrb[0].mxu0
        %v1522 = vadd.f32 0.0, %v1521
        %v1523 = vpop.f32.mrb[0].mxu0
        %v1524 = vadd.f32 0.0, %v1523
        %v1525 = vpop.f32.mrb[0].mxu0
        %v1526 = vadd.f32 0.0, %v1525
        %v1527 = vpop.f32.mrb[0].mxu0
        %v1528 = vadd.f32 0.0, %v1527
        %1529 = vdwg.mxu0
        %1530 = vmatprep.subr.bf16.mxu0 %v1292
        %1531 = vmatpush1.bf16.msra.mxu0 %v1291
        %1532 = vmatprep.subr.bf16.mxu0 %v1296
        %1533 = vmatpush1.bf16.msra.mxu0 %v1295
        %1534 = vmatprep.subr.bf16.mxu0 %v1300
        %1535 = vmatpush1.bf16.msra.mxu0 %v1299
        %1536 = vmatprep.subr.bf16.mxu0 %v1304
        %1537 = vmatpush1.bf16.msra.mxu0 %v1303
        %1538 = vmatprep.subr.bf16.mxu0 %v1308
        %1539 = vmatpush1.bf16.msra.mxu0 %v1307
        %1540 = vmatprep.subr.bf16.mxu0 %v1312
        %1541 = vmatpush1.bf16.msra.mxu0 %v1311
        %1542 = vmatprep.subr.bf16.mxu0 %v1316
        %1543 = vmatpush1.bf16.msra.mxu0 %v1315
        %1544 = vmatprep.subr.bf16.mxu0 %v1320
        %1545 = vmatpush1.bf16.msra.mxu0 %v1319
        %1546 = vmatprep.subr.bf16.mxu0 %v1324
        %1547 = vmatpush1.bf16.msra.mxu0 %v1323
        %1548 = vmatprep.subr.bf16.mxu0 %v1328
        %1549 = vmatpush1.bf16.msra.mxu0 %v1327
        %1550 = vmatprep.subr.bf16.mxu0 %v1332
        %1551 = vmatpush1.bf16.msra.mxu0 %v1331
        %1552 = vmatprep.subr.bf16.mxu0 %v1336
        %1553 = vmatpush1.bf16.msra.mxu0 %v1335
        %1554 = vmatprep.subr.bf16.mxu0 %v1340
        %1555 = vmatpush1.bf16.msra.mxu0 %v1339
        %1556 = vmatprep.subr.bf16.mxu0 %v1344
        %1557 = vmatpush1.bf16.msra.mxu0 %v1343
        %1558 = vmatprep.subr.bf16.mxu0 %v1348
        %1559 = vmatpush1.bf16.msra.mxu0 %v1347
        %1560 = vmatprep.subr.bf16.mxu0 %v1352
        %1561 = vmatpush1.bf16.msra.mxu0 %v1351
        %1562 = vmatprep.mubr.bf16.mxu0 %v1018
        %1563 = vmatmul.mubr.bf16.gmra.mrb[0].mxu0 %v1017
        %v1564 = vpop.f32.mrb[0].mxu0
        %v1565 = vadd.f32 0.0, %v1564
        %v1566 = vpop.f32.mrb[0].mxu0
        %v1567 = vadd.f32 0.0, %v1566
        %v1568 = vpop.f32.mrb[0].mxu0
        %v1569 = vadd.f32 0.0, %v1568
        %v1570 = vpop.f32.mrb[0].mxu0
        %v1571 = vadd.f32 0.0, %v1570
        %1572 = vmatprep.mubr.bf16.mxu0 %v1020
        %1573 = vmatmul.mubr.bf16.gmra.mrb[0].mxu0 %v1019
        %v1574 = vpop.f32.mrb[0].mxu0
        %v1575 = vadd.f32 0.0, %v1574
        %v1576 = vpop.f32.mrb[0].mxu0
        %v1577 = vadd.f32 0.0, %v1576
        %v1578 = vpop.f32.mrb[0].mxu0
        %v1579 = vadd.f32 0.0, %v1578
        %v1580 = vpop.f32.mrb[0].mxu0
        %v1581 = vadd.f32 0.0, %v1580
        %1582 = vmatprep.mubr.bf16.mxu0 %v1022
        %1583 = vmatmul.mubr.bf16.gmra.mrb[0].mxu0 %v1021
        %v1584 = vpop.f32.mrb[0].mxu0
        %v1585 = vadd.f32 0.0, %v1584
        %v1586 = vpop.f32.mrb[0].mxu0
        %v1587 = vadd.f32 0.0, %v1586
        %v1588 = vpop.f32.mrb[0].mxu0
        %v1589 = vadd.f32 0.0, %v1588
        %v1590 = vpop.f32.mrb[0].mxu0
        %v1591 = vadd.f32 0.0, %v1590
        %1592 = vmatprep.mubr.bf16.mxu0 %v1024
        %1593 = vmatmul.mubr.bf16.gmra.mrb[0].mxu0 %v1023
        %v1594 = vpop.f32.mrb[0].mxu0
        %v1595 = vadd.f32 0.0, %v1594
        %v1596 = vpop.f32.mrb[0].mxu0
        %v1597 = vadd.f32 0.0, %v1596
        %v1598 = vpop.f32.mrb[0].mxu0
        %v1599 = vadd.f32 0.0, %v1598
        %v1600 = vpop.f32.mrb[0].mxu0
        %v1601 = vadd.f32 0.0, %v1600
        %1602 = vmatprep.mubr.bf16.mxu0 %v1026
        %1603 = vmatmul.mubr.bf16.gmra.mrb[0].mxu0 %v1025
        %v1604 = vpop.f32.mrb[0].mxu0
        %v1605 = vadd.f32 0.0, %v1604
        %v1606 = vpop.f32.mrb[0].mxu0
        %v1607 = vadd.f32 0.0, %v1606
        %v1608 = vpop.f32.mrb[0].mxu0
        %v1609 = vadd.f32 0.0, %v1608
        %v1610 = vpop.f32.mrb[0].mxu0
        %v1611 = vadd.f32 0.0, %v1610
        %1612 = vmatprep.mubr.bf16.mxu0 %v1028
        %1613 = vmatmul.mubr.bf16.gmra.mrb[0].mxu0 %v1027
        %v1614 = vpop.f32.mrb[0].mxu0
        %v1615 = vadd.f32 0.0, %v1614
        %v1616 = vpop.f32.mrb[0].mxu0
        %v1617 = vadd.f32 0.0, %v1616
        %v1618 = vpop.f32.mrb[0].mxu0
        %v1619 = vadd.f32 0.0, %v1618
        %v1620 = vpop.f32.mrb[0].mxu0
        %v1621 = vadd.f32 0.0, %v1620
        %1622 = vmatprep.mubr.bf16.mxu0 %v1030
        %1623 = vmatmul.mubr.bf16.gmra.mrb[0].mxu0 %v1029
        %v1624 = vpop.f32.mrb[0].mxu0
        %v1625 = vadd.f32 0.0, %v1624
        %v1626 = vpop.f32.mrb[0].mxu0
        %v1627 = vadd.f32 0.0, %v1626
        %v1628 = vpop.f32.mrb[0].mxu0
        %v1629 = vadd.f32 0.0, %v1628
        %v1630 = vpop.f32.mrb[0].mxu0
        %v1631 = vadd.f32 0.0, %v1630
        %1632 = vmatprep.mubr.bf16.mxu0 %v1032
        %1633 = vmatmul.mubr.bf16.gmra.mrb[0].mxu0 %v1031
        %v1634 = vpop.f32.mrb[0].mxu0
        %v1635 = vadd.f32 0.0, %v1634
        %v1636 = vpop.f32.mrb[0].mxu0
        %v1637 = vadd.f32 0.0, %v1636
        %v1638 = vpop.f32.mrb[0].mxu0
        %v1639 = vadd.f32 0.0, %v1638
        %v1640 = vpop.f32.mrb[0].mxu0
        %v1641 = vadd.f32 0.0, %v1640
        %1642 = vdwg.mxu0
        %v1643 = vld [vmem:[#allocation17] sm:$0xff]
        %v1644 = vld [vmem:[#allocation17 + $0x8] sm:$0xff]
        %v1645 = vld [vmem:[#allocation17 + $0x10] sm:$0xff]
        %v1646 = vld [vmem:[#allocation17 + $0x18] sm:$0xff]
        %v1647 = vld [vmem:[#allocation17 + $0x20] sm:$0xff]
        %v1648 = vld [vmem:[#allocation17 + $0x28] sm:$0xff]
        %v1649 = vld [vmem:[#allocation17 + $0x30] sm:$0xff]
        %v1650 = vld [vmem:[#allocation17 + $0x38] sm:$0xff]
        %v1651 = vld [vmem:[#allocation17 + $0x40] sm:$0xff]
        %v1652 = vld [vmem:[#allocation17 + $0x48] sm:$0xff]
        %v1653 = vld [vmem:[#allocation17 + $0x50] sm:$0xff]
        %v1654 = vld [vmem:[#allocation17 + $0x58] sm:$0xff]
        %v1655 = vld [vmem:[#allocation17 + $0x60] sm:$0xff]
        %v1656 = vld [vmem:[#allocation17 + $0x68] sm:$0xff]
        %v1657 = vld [vmem:[#allocation17 + $0x70] sm:$0xff]
        %v1658 = vld [vmem:[#allocation17 + $0x78] sm:$0xff]
        %v1659 = vld [vmem:[#allocation17 + $0x80] sm:$0xff]
        %v1660 = vld [vmem:[#allocation17 + $0x88] sm:$0xff]
        %v1661 = vld [vmem:[#allocation17 + $0x90] sm:$0xff]
        %v1662 = vld [vmem:[#allocation17 + $0x98] sm:$0xff]
        %v1663 = vld [vmem:[#allocation17 + $0xa0] sm:$0xff]
        %v1664 = vld [vmem:[#allocation17 + $0xa8] sm:$0xff]
        %v1665 = vld [vmem:[#allocation17 + $0xb0] sm:$0xff]
        %v1666 = vld [vmem:[#allocation17 + $0xb8] sm:$0xff]
        %v1667 = vld [vmem:[#allocation17 + $0xc0] sm:$0xff]
        %v1668 = vld [vmem:[#allocation17 + $0xc8] sm:$0xff]
        %v1669 = vld [vmem:[#allocation17 + $0xd0] sm:$0xff]
        %v1670 = vld [vmem:[#allocation17 + $0xd8] sm:$0xff]
        %v1671 = vld [vmem:[#allocation17 + $0xe0] sm:$0xff]
        %v1672 = vld [vmem:[#allocation17 + $0xe8] sm:$0xff]
        %v1673 = vld [vmem:[#allocation17 + $0xf0] sm:$0xff]
        %v1674 = vld [vmem:[#allocation17 + $0xf8] sm:$0xff]
        %v1707 = vunpack.c.l.b16 %v1643
        %v1708 = vunpack.c.h.b16 %v1643
        %v1709 = vunpack.c.l.b16 %v1644
        %v1710 = vunpack.c.h.b16 %v1644
        %v1711 = vunpack.c.l.b16 %v1645
        %v1712 = vunpack.c.h.b16 %v1645
        %v1713 = vunpack.c.l.b16 %v1646
        %v1714 = vunpack.c.h.b16 %v1646
        %v1715 = vunpack.c.l.b16 %v1647
        %v1716 = vunpack.c.h.b16 %v1647
        %v1717 = vunpack.c.l.b16 %v1648
        %v1718 = vunpack.c.h.b16 %v1648
        %v1719 = vunpack.c.l.b16 %v1649
        %v1720 = vunpack.c.h.b16 %v1649
        %v1721 = vunpack.c.l.b16 %v1650
        %v1722 = vunpack.c.h.b16 %v1650
        %v1723 = vunpack.c.l.b16 %v1651
        %v1724 = vunpack.c.h.b16 %v1651
        %v1725 = vunpack.c.l.b16 %v1652
        %v1726 = vunpack.c.h.b16 %v1652
        %v1727 = vunpack.c.l.b16 %v1653
        %v1728 = vunpack.c.h.b16 %v1653
        %v1729 = vunpack.c.l.b16 %v1654
        %v1730 = vunpack.c.h.b16 %v1654
        %v1731 = vunpack.c.l.b16 %v1655
        %v1732 = vunpack.c.h.b16 %v1655
        %v1733 = vunpack.c.l.b16 %v1656
        %v1734 = vunpack.c.h.b16 %v1656
        %v1735 = vunpack.c.l.b16 %v1657
        %v1736 = vunpack.c.h.b16 %v1657
        %v1737 = vunpack.c.l.b16 %v1658
        %v1738 = vunpack.c.h.b16 %v1658
        %v1739 = vunpack.c.l.b16 %v1659
        %v1740 = vunpack.c.h.b16 %v1659
        %v1741 = vunpack.c.l.b16 %v1660
        %v1742 = vunpack.c.h.b16 %v1660
        %v1743 = vunpack.c.l.b16 %v1661
        %v1744 = vunpack.c.h.b16 %v1661
        %v1745 = vunpack.c.l.b16 %v1662
        %v1746 = vunpack.c.h.b16 %v1662
        %v1747 = vunpack.c.l.b16 %v1663
        %v1748 = vunpack.c.h.b16 %v1663
        %v1749 = vunpack.c.l.b16 %v1664
        %v1750 = vunpack.c.h.b16 %v1664
        %v1751 = vunpack.c.l.b16 %v1665
        %v1752 = vunpack.c.h.b16 %v1665
        %v1753 = vunpack.c.l.b16 %v1666
        %v1754 = vunpack.c.h.b16 %v1666
        %v1755 = vunpack.c.l.b16 %v1667
        %v1756 = vunpack.c.h.b16 %v1667
        %v1757 = vunpack.c.l.b16 %v1668
        %v1758 = vunpack.c.h.b16 %v1668
        %v1759 = vunpack.c.l.b16 %v1669
        %v1760 = vunpack.c.h.b16 %v1669
        %v1761 = vunpack.c.l.b16 %v1670
        %v1762 = vunpack.c.h.b16 %v1670
        %v1763 = vunpack.c.l.b16 %v1671
        %v1764 = vunpack.c.h.b16 %v1671
        %v1765 = vunpack.c.l.b16 %v1672
        %v1766 = vunpack.c.h.b16 %v1672
        %v1767 = vunpack.c.l.b16 %v1673
        %v1768 = vunpack.c.h.b16 %v1673
        %v1769 = vunpack.c.l.b16 %v1674
        %v1770 = vunpack.c.h.b16 %v1674
        %v1771 = vpack.c.b16 %v1709, %v1707
        %v1772 = vpack.c.b16 %v1710, %v1708
        %v1773 = vpack.c.b16 %v1713, %v1711
        %v1774 = vpack.c.b16 %v1714, %v1712
        %v1775 = vpack.c.b16 %v1717, %v1715
        %v1776 = vpack.c.b16 %v1718, %v1716
        %v1777 = vpack.c.b16 %v1721, %v1719
        %v1778 = vpack.c.b16 %v1722, %v1720
        %v1779 = vpack.c.b16 %v1725, %v1723
        %v1780 = vpack.c.b16 %v1726, %v1724
        %v1781 = vpack.c.b16 %v1729, %v1727
        %v1782 = vpack.c.b16 %v1730, %v1728
        %v1783 = vpack.c.b16 %v1733, %v1731
        %v1784 = vpack.c.b16 %v1734, %v1732
        %v1785 = vpack.c.b16 %v1737, %v1735
        %v1786 = vpack.c.b16 %v1738, %v1736
        %v1787 = vpack.c.b16 %v1741, %v1739
        %v1788 = vpack.c.b16 %v1742, %v1740
        %v1789 = vpack.c.b16 %v1745, %v1743
        %v1790 = vpack.c.b16 %v1746, %v1744
        %v1791 = vpack.c.b16 %v1749, %v1747
        %v1792 = vpack.c.b16 %v1750, %v1748
        %v1793 = vpack.c.b16 %v1753, %v1751
        %v1794 = vpack.c.b16 %v1754, %v1752
        %v1795 = vpack.c.b16 %v1757, %v1755
        %v1796 = vpack.c.b16 %v1758, %v1756
        %v1797 = vpack.c.b16 %v1761, %v1759
        %v1798 = vpack.c.b16 %v1762, %v1760
        %v1799 = vpack.c.b16 %v1765, %v1763
        %v1800 = vpack.c.b16 %v1766, %v1764
        %v1801 = vpack.c.b16 %v1769, %v1767
        %v1802 = vpack.c.b16 %v1770, %v1768
        %1835 = vmatprep.subr.bf16.mxu0 %v1772
        %1836 = vmatpush1.bf16.msra.mxu0 %v1771
        %1837 = vmatprep.subr.bf16.mxu0 %v1774
        %1838 = vmatpush1.bf16.msra.mxu0 %v1773
        %1839 = vmatprep.subr.bf16.mxu0 %v1776
        %1840 = vmatpush1.bf16.msra.mxu0 %v1775
        %1841 = vmatprep.subr.bf16.mxu0 %v1778
        %1842 = vmatpush1.bf16.msra.mxu0 %v1777
        %1843 = vmatprep.subr.bf16.mxu0 %v1780
        %1844 = vmatpush1.bf16.msra.mxu0 %v1779
        %1845 = vmatprep.subr.bf16.mxu0 %v1782
        %1846 = vmatpush1.bf16.msra.mxu0 %v1781
        %1847 = vmatprep.subr.bf16.mxu0 %v1784
        %1848 = vmatpush1.bf16.msra.mxu0 %v1783
        %1849 = vmatprep.subr.bf16.mxu0 %v1786
        %1850 = vmatpush1.bf16.msra.mxu0 %v1785
        %1851 = vmatprep.subr.bf16.mxu0 %v1788
        %1852 = vmatpush1.bf16.msra.mxu0 %v1787
        %1853 = vmatprep.subr.bf16.mxu0 %v1790
        %1854 = vmatpush1.bf16.msra.mxu0 %v1789
        %1855 = vmatprep.subr.bf16.mxu0 %v1792
        %1856 = vmatpush1.bf16.msra.mxu0 %v1791
        %1857 = vmatprep.subr.bf16.mxu0 %v1794
        %1858 = vmatpush1.bf16.msra.mxu0 %v1793
        %1859 = vmatprep.subr.bf16.mxu0 %v1796
        %1860 = vmatpush1.bf16.msra.mxu0 %v1795
        %1861 = vmatprep.subr.bf16.mxu0 %v1798
        %1862 = vmatpush1.bf16.msra.mxu0 %v1797
        %1863 = vmatprep.subr.bf16.mxu0 %v1800
        %1864 = vmatpush1.bf16.msra.mxu0 %v1799
        %1865 = vmatprep.subr.bf16.mxu0 %v1802
        %1866 = vmatpush1.bf16.msra.mxu0 %v1801
        %1867 = vmatprep.mubr.bf16.mxu0 %v1018
        %1868 = vmatmul.mubr.bf16.gmra.mrb[0].mxu0 %v1017
        %v1869 = vpop.f32.mrb[0].mxu0
        %v1870 = vadd.f32 0.0, %v1869
        %v1871 = vpop.f32.mrb[0].mxu0
        %v1872 = vadd.f32 0.0, %v1871
        %v1873 = vpop.f32.mrb[0].mxu0
        %v1874 = vadd.f32 0.0, %v1873
        %v1875 = vpop.f32.mrb[0].mxu0
        %v1876 = vadd.f32 0.0, %v1875
        %1877 = vmatprep.mubr.bf16.mxu0 %v1020
        %1878 = vmatmul.mubr.bf16.gmra.mrb[0].mxu0 %v1019
        %v1879 = vpop.f32.mrb[0].mxu0
        %v1880 = vadd.f32 0.0, %v1879
        %v1881 = vpop.f32.mrb[0].mxu0
        %v1882 = vadd.f32 0.0, %v1881
        %v1883 = vpop.f32.mrb[0].mxu0
        %v1884 = vadd.f32 0.0, %v1883
        %v1885 = vpop.f32.mrb[0].mxu0
        %v1886 = vadd.f32 0.0, %v1885
        %1887 = vmatprep.mubr.bf16.mxu0 %v1022
        %1888 = vmatmul.mubr.bf16.gmra.mrb[0].mxu0 %v1021
        %v1889 = vpop.f32.mrb[0].mxu0
        %v1890 = vadd.f32 0.0, %v1889
        %v1891 = vpop.f32.mrb[0].mxu0
        %v1892 = vadd.f32 0.0, %v1891
        %v1893 = vpop.f32.mrb[0].mxu0
        %v1894 = vadd.f32 0.0, %v1893
        %v1895 = vpop.f32.mrb[0].mxu0
        %v1896 = vadd.f32 0.0, %v1895
        %1897 = vmatprep.mubr.bf16.mxu0 %v1024
        %1898 = vmatmul.mubr.bf16.gmra.mrb[0].mxu0 %v1023
        %v1899 = vpop.f32.mrb[0].mxu0
        %v1900 = vadd.f32 0.0, %v1899
        %v1901 = vpop.f32.mrb[0].mxu0
        %v1902 = vadd.f32 0.0, %v1901
        %v1903 = vpop.f32.mrb[0].mxu0
        %v1904 = vadd.f32 0.0, %v1903
        %v1905 = vpop.f32.mrb[0].mxu0
        %v1906 = vadd.f32 0.0, %v1905
        %1907 = vmatprep.mubr.bf16.mxu0 %v1026
        %1908 = vmatmul.mubr.bf16.gmra.mrb[0].mxu0 %v1025
        %v1909 = vpop.f32.mrb[0].mxu0
        %v1910 = vadd.f32 0.0, %v1909
        %v1911 = vpop.f32.mrb[0].mxu0
        %v1912 = vadd.f32 0.0, %v1911
        %v1913 = vpop.f32.mrb[0].mxu0
        %v1914 = vadd.f32 0.0, %v1913
        %v1915 = vpop.f32.mrb[0].mxu0
        %v1916 = vadd.f32 0.0, %v1915
        %1917 = vmatprep.mubr.bf16.mxu0 %v1028
        %1918 = vmatmul.mubr.bf16.gmra.mrb[0].mxu0 %v1027
        %v1919 = vpop.f32.mrb[0].mxu0
        %v1920 = vadd.f32 0.0, %v1919
        %v1921 = vpop.f32.mrb[0].mxu0
        %v1922 = vadd.f32 0.0, %v1921
        %v1923 = vpop.f32.mrb[0].mxu0
        %v1924 = vadd.f32 0.0, %v1923
        %v1925 = vpop.f32.mrb[0].mxu0
        %v1926 = vadd.f32 0.0, %v1925
        %1927 = vmatprep.mubr.bf16.mxu0 %v1030
        %1928 = vmatmul.mubr.bf16.gmra.mrb[0].mxu0 %v1029
        %v1929 = vpop.f32.mrb[0].mxu0
        %v1930 = vadd.f32 0.0, %v1929
        %v1931 = vpop.f32.mrb[0].mxu0
        %v1932 = vadd.f32 0.0, %v1931
        %v1933 = vpop.f32.mrb[0].mxu0
        %v1934 = vadd.f32 0.0, %v1933
        %v1935 = vpop.f32.mrb[0].mxu0
        %v1936 = vadd.f32 0.0, %v1935
        %1937 = vmatprep.mubr.bf16.mxu0 %v1032
        %1938 = vmatmul.mubr.bf16.gmra.mrb[0].mxu0 %v1031
        %v1939 = vpop.f32.mrb[0].mxu0
        %v1940 = vadd.f32 0.0, %v1939
        %v1941 = vpop.f32.mrb[0].mxu0
        %v1942 = vadd.f32 0.0, %v1941
        %v1943 = vpop.f32.mrb[0].mxu0
        %v1944 = vadd.f32 0.0, %v1943
        %v1945 = vpop.f32.mrb[0].mxu0
        %v1946 = vadd.f32 0.0, %v1945
        %1947 = vdwg.mxu0
        %v1948 = vld [vmem:[#allocation19] sm:$0xff]
        %v1949 = vld [vmem:[#allocation19 + $0x8] sm:$0xff]
        %v1950 = vld [vmem:[#allocation19 + $0x10] sm:$0xff]
        %v1951 = vld [vmem:[#allocation19 + $0x18] sm:$0xff]
        %v1952 = vld [vmem:[#allocation19 + $0x20] sm:$0xff]
        %v1953 = vld [vmem:[#allocation19 + $0x28] sm:$0xff]
        %v1954 = vld [vmem:[#allocation19 + $0x30] sm:$0xff]
        %v1955 = vld [vmem:[#allocation19 + $0x38] sm:$0xff]
        %v1956 = vld [vmem:[#allocation19 + $0x40] sm:$0xff]
        %v1957 = vld [vmem:[#allocation19 + $0x48] sm:$0xff]
        %v1958 = vld [vmem:[#allocation19 + $0x50] sm:$0xff]
        %v1959 = vld [vmem:[#allocation19 + $0x58] sm:$0xff]
        %v1960 = vld [vmem:[#allocation19 + $0x60] sm:$0xff]
        %v1961 = vld [vmem:[#allocation19 + $0x68] sm:$0xff]
        %v1962 = vld [vmem:[#allocation19 + $0x70] sm:$0xff]
        %v1963 = vld [vmem:[#allocation19 + $0x78] sm:$0xff]
        %v1964 = vld [vmem:[#allocation19 + $0x80] sm:$0xff]
        %v1965 = vld [vmem:[#allocation19 + $0x88] sm:$0xff]
        %v1966 = vld [vmem:[#allocation19 + $0x90] sm:$0xff]
        %v1967 = vld [vmem:[#allocation19 + $0x98] sm:$0xff]
        %v1968 = vld [vmem:[#allocation19 + $0xa0] sm:$0xff]
        %v1969 = vld [vmem:[#allocation19 + $0xa8] sm:$0xff]
        %v1970 = vld [vmem:[#allocation19 + $0xb0] sm:$0xff]
        %v1971 = vld [vmem:[#allocation19 + $0xb8] sm:$0xff]
        %v1972 = vld [vmem:[#allocation19 + $0xc0] sm:$0xff]
        %v1973 = vld [vmem:[#allocation19 + $0xc8] sm:$0xff]
        %v1974 = vld [vmem:[#allocation19 + $0xd0] sm:$0xff]
        %v1975 = vld [vmem:[#allocation19 + $0xd8] sm:$0xff]
        %v1976 = vld [vmem:[#allocation19 + $0xe0] sm:$0xff]
        %v1977 = vld [vmem:[#allocation19 + $0xe8] sm:$0xff]
        %v1978 = vld [vmem:[#allocation19 + $0xf0] sm:$0xff]
        %v1979 = vld [vmem:[#allocation19 + $0xf8] sm:$0xff]
        %v2012 = vunpack.c.l.b16 %v1948
        %v2013 = vunpack.c.h.b16 %v1948
        %v2014 = vunpack.c.l.b16 %v1949
        %v2015 = vunpack.c.h.b16 %v1949
        %v2016 = vunpack.c.l.b16 %v1950
        %v2017 = vunpack.c.h.b16 %v1950
        %v2018 = vunpack.c.l.b16 %v1951
        %v2019 = vunpack.c.h.b16 %v1951
        %v2020 = vunpack.c.l.b16 %v1952
        %v2021 = vunpack.c.h.b16 %v1952
        %v2022 = vunpack.c.l.b16 %v1953
        %v2023 = vunpack.c.h.b16 %v1953
        %v2024 = vunpack.c.l.b16 %v1954
        %v2025 = vunpack.c.h.b16 %v1954
        %v2026 = vunpack.c.l.b16 %v1955
        %v2027 = vunpack.c.h.b16 %v1955
        %v2028 = vunpack.c.l.b16 %v1956
        %v2029 = vunpack.c.h.b16 %v1956
        %v2030 = vunpack.c.l.b16 %v1957
        %v2031 = vunpack.c.h.b16 %v1957
        %v2032 = vunpack.c.l.b16 %v1958
        %v2033 = vunpack.c.h.b16 %v1958
        %v2034 = vunpack.c.l.b16 %v1959
        %v2035 = vunpack.c.h.b16 %v1959
        %v2036 = vunpack.c.l.b16 %v1960
        %v2037 = vunpack.c.h.b16 %v1960
        %v2038 = vunpack.c.l.b16 %v1961
        %v2039 = vunpack.c.h.b16 %v1961
        %v2040 = vunpack.c.l.b16 %v1962
        %v2041 = vunpack.c.h.b16 %v1962
        %v2042 = vunpack.c.l.b16 %v1963
        %v2043 = vunpack.c.h.b16 %v1963
        %v2044 = vunpack.c.l.b16 %v1964
        %v2045 = vunpack.c.h.b16 %v1964
        %v2046 = vunpack.c.l.b16 %v1965
        %v2047 = vunpack.c.h.b16 %v1965
        %v2048 = vunpack.c.l.b16 %v1966
        %v2049 = vunpack.c.h.b16 %v1966
        %v2050 = vunpack.c.l.b16 %v1967
        %v2051 = vunpack.c.h.b16 %v1967
        %v2052 = vunpack.c.l.b16 %v1968
        %v2053 = vunpack.c.h.b16 %v1968
        %v2054 = vunpack.c.l.b16 %v1969
        %v2055 = vunpack.c.h.b16 %v1969
        %v2056 = vunpack.c.l.b16 %v1970
        %v2057 = vunpack.c.h.b16 %v1970
        %v2058 = vunpack.c.l.b16 %v1971
        %v2059 = vunpack.c.h.b16 %v1971
        %v2060 = vunpack.c.l.b16 %v1972
        %v2061 = vunpack.c.h.b16 %v1972
        %v2062 = vunpack.c.l.b16 %v1973
        %v2063 = vunpack.c.h.b16 %v1973
        %v2064 = vunpack.c.l.b16 %v1974
        %v2065 = vunpack.c.h.b16 %v1974
        %v2066 = vunpack.c.l.b16 %v1975
        %v2067 = vunpack.c.h.b16 %v1975
        %v2068 = vunpack.c.l.b16 %v1976
        %v2069 = vunpack.c.h.b16 %v1976
        %v2070 = vunpack.c.l.b16 %v1977
        %v2071 = vunpack.c.h.b16 %v1977
        %v2072 = vunpack.c.l.b16 %v1978
        %v2073 = vunpack.c.h.b16 %v1978
        %v2074 = vunpack.c.l.b16 %v1979
        %v2075 = vunpack.c.h.b16 %v1979
        %v2076 = vpack.c.b16 %v2014, %v2012
        %v2077 = vpack.c.b16 %v2015, %v2013
        %v2078 = vpack.c.b16 %v2018, %v2016
        %v2079 = vpack.c.b16 %v2019, %v2017
        %v2080 = vpack.c.b16 %v2022, %v2020
        %v2081 = vpack.c.b16 %v2023, %v2021
        %v2082 = vpack.c.b16 %v2026, %v2024
        %v2083 = vpack.c.b16 %v2027, %v2025
        %v2084 = vpack.c.b16 %v2030, %v2028
        %v2085 = vpack.c.b16 %v2031, %v2029
        %v2086 = vpack.c.b16 %v2034, %v2032
        %v2087 = vpack.c.b16 %v2035, %v2033
        %v2088 = vpack.c.b16 %v2038, %v2036
        %v2089 = vpack.c.b16 %v2039, %v2037
        %v2090 = vpack.c.b16 %v2042, %v2040
        %v2091 = vpack.c.b16 %v2043, %v2041
        %v2092 = vpack.c.b16 %v2046, %v2044
        %v2093 = vpack.c.b16 %v2047, %v2045
        %v2094 = vpack.c.b16 %v2050, %v2048
        %v2095 = vpack.c.b16 %v2051, %v2049
        %v2096 = vpack.c.b16 %v2054, %v2052
        %v2097 = vpack.c.b16 %v2055, %v2053
        %v2098 = vpack.c.b16 %v2058, %v2056
        %v2099 = vpack.c.b16 %v2059, %v2057
        %v2100 = vpack.c.b16 %v2062, %v2060
        %v2101 = vpack.c.b16 %v2063, %v2061
        %v2102 = vpack.c.b16 %v2066, %v2064
        %v2103 = vpack.c.b16 %v2067, %v2065
        %v2104 = vpack.c.b16 %v2070, %v2068
        %v2105 = vpack.c.b16 %v2071, %v2069
        %v2106 = vpack.c.b16 %v2074, %v2072
        %v2107 = vpack.c.b16 %v2075, %v2073
        %2140 = vmatprep.subr.bf16.mxu0 %v2077
        %2141 = vmatpush1.bf16.msra.mxu0 %v2076
        %2142 = vmatprep.subr.bf16.mxu0 %v2079
        %2143 = vmatpush1.bf16.msra.mxu0 %v2078
        %2144 = vmatprep.subr.bf16.mxu0 %v2081
        %2145 = vmatpush1.bf16.msra.mxu0 %v2080
        %2146 = vmatprep.subr.bf16.mxu0 %v2083
        %2147 = vmatpush1.bf16.msra.mxu0 %v2082
        %2148 = vmatprep.subr.bf16.mxu0 %v2085
        %2149 = vmatpush1.bf16.msra.mxu0 %v2084
        %2150 = vmatprep.subr.bf16.mxu0 %v2087
        %2151 = vmatpush1.bf16.msra.mxu0 %v2086
        %2152 = vmatprep.subr.bf16.mxu0 %v2089
        %2153 = vmatpush1.bf16.msra.mxu0 %v2088
        %2154 = vmatprep.subr.bf16.mxu0 %v2091
        %2155 = vmatpush1.bf16.msra.mxu0 %v2090
        %2156 = vmatprep.subr.bf16.mxu0 %v2093
        %2157 = vmatpush1.bf16.msra.mxu0 %v2092
        %2158 = vmatprep.subr.bf16.mxu0 %v2095
        %2159 = vmatpush1.bf16.msra.mxu0 %v2094
        %2160 = vmatprep.subr.bf16.mxu0 %v2097
        %2161 = vmatpush1.bf16.msra.mxu0 %v2096
        %2162 = vmatprep.subr.bf16.mxu0 %v2099
        %2163 = vmatpush1.bf16.msra.mxu0 %v2098
        %2164 = vmatprep.subr.bf16.mxu0 %v2101
        %2165 = vmatpush1.bf16.msra.mxu0 %v2100
        %2166 = vmatprep.subr.bf16.mxu0 %v2103
        %2167 = vmatpush1.bf16.msra.mxu0 %v2102
        %2168 = vmatprep.subr.bf16.mxu0 %v2105
        %2169 = vmatpush1.bf16.msra.mxu0 %v2104
        %2170 = vmatprep.subr.bf16.mxu0 %v2107
        %2171 = vmatpush1.bf16.msra.mxu0 %v2106
        %2172 = vmatprep.mubr.bf16.mxu0 %v1018
        %2173 = vmatmul.mubr.bf16.gmra.mrb[0].mxu0 %v1017
        %v2174 = vpop.f32.mrb[0].mxu0
        %v2175 = vadd.f32 0.0, %v2174
        %v2176 = vpop.f32.mrb[0].mxu0
        %v2177 = vadd.f32 0.0, %v2176
        %v2178 = vpop.f32.mrb[0].mxu0
        %v2179 = vadd.f32 0.0, %v2178
        %v2180 = vpop.f32.mrb[0].mxu0
        %v2181 = vadd.f32 0.0, %v2180
        %2182 = vmatprep.mubr.bf16.mxu0 %v1020
        %2183 = vmatmul.mubr.bf16.gmra.mrb[0].mxu0 %v1019
        %v2184 = vpop.f32.mrb[0].mxu0
        %v2185 = vadd.f32 0.0, %v2184
        %v2186 = vpop.f32.mrb[0].mxu0
        %v2187 = vadd.f32 0.0, %v2186
        %v2188 = vpop.f32.mrb[0].mxu0
        %v2189 = vadd.f32 0.0, %v2188
        %v2190 = vpop.f32.mrb[0].mxu0
        %v2191 = vadd.f32 0.0, %v2190
        %2192 = vmatprep.mubr.bf16.mxu0 %v1022
        %2193 = vmatmul.mubr.bf16.gmra.mrb[0].mxu0 %v1021
        %v2194 = vpop.f32.mrb[0].mxu0
        %v2195 = vadd.f32 0.0, %v2194
        %v2196 = vpop.f32.mrb[0].mxu0
        %v2197 = vadd.f32 0.0, %v2196
        %v2198 = vpop.f32.mrb[0].mxu0
        %v2199 = vadd.f32 0.0, %v2198
        %v2200 = vpop.f32.mrb[0].mxu0
        %v2201 = vadd.f32 0.0, %v2200
        %2202 = vmatprep.mubr.bf16.mxu0 %v1024
        %2203 = vmatmul.mubr.bf16.gmra.mrb[0].mxu0 %v1023
        %v2204 = vpop.f32.mrb[0].mxu0
        %v2205 = vadd.f32 0.0, %v2204
        %v2206 = vpop.f32.mrb[0].mxu0
        %v2207 = vadd.f32 0.0, %v2206
        %v2208 = vpop.f32.mrb[0].mxu0
        %v2209 = vadd.f32 0.0, %v2208
        %v2210 = vpop.f32.mrb[0].mxu0
        %v2211 = vadd.f32 0.0, %v2210
        %2212 = vmatprep.mubr.bf16.mxu0 %v1026
        %2213 = vmatmul.mubr.bf16.gmra.mrb[0].mxu0 %v1025
        %v2214 = vpop.f32.mrb[0].mxu0
        %v2215 = vadd.f32 0.0, %v2214
        %v2216 = vpop.f32.mrb[0].mxu0
        %v2217 = vadd.f32 0.0, %v2216
        %v2218 = vpop.f32.mrb[0].mxu0
        %v2219 = vadd.f32 0.0, %v2218
        %v2220 = vpop.f32.mrb[0].mxu0
        %v2221 = vadd.f32 0.0, %v2220
        %2222 = vmatprep.mubr.bf16.mxu0 %v1028
        %2223 = vmatmul.mubr.bf16.gmra.mrb[0].mxu0 %v1027
        %v2224 = vpop.f32.mrb[0].mxu0
        %v2225 = vadd.f32 0.0, %v2224
        %v2226 = vpop.f32.mrb[0].mxu0
        %v2227 = vadd.f32 0.0, %v2226
        %v2228 = vpop.f32.mrb[0].mxu0
        %v2229 = vadd.f32 0.0, %v2228
        %v2230 = vpop.f32.mrb[0].mxu0
        %v2231 = vadd.f32 0.0, %v2230
        %2232 = vmatprep.mubr.bf16.mxu0 %v1030
        %2233 = vmatmul.mubr.bf16.gmra.mrb[0].mxu0 %v1029
        %v2234 = vpop.f32.mrb[0].mxu0
        %v2235 = vadd.f32 0.0, %v2234
        %v2236 = vpop.f32.mrb[0].mxu0
        %v2237 = vadd.f32 0.0, %v2236
        %v2238 = vpop.f32.mrb[0].mxu0
        %v2239 = vadd.f32 0.0, %v2238
        %v2240 = vpop.f32.mrb[0].mxu0
        %v2241 = vadd.f32 0.0, %v2240
        %2242 = vmatprep.mubr.bf16.mxu0 %v1032
        %2243 = vmatmul.mubr.bf16.gmra.mrb[0].mxu0 %v1031
        %v2244 = vpop.f32.mrb[0].mxu0
        %v2245 = vadd.f32 0.0, %v2244
        %v2246 = vpop.f32.mrb[0].mxu0
        %v2247 = vadd.f32 0.0, %v2246
        %v2248 = vpop.f32.mrb[0].mxu0
        %v2249 = vadd.f32 0.0, %v2248
        %v2250 = vpop.f32.mrb[0].mxu0
        %v2251 = vadd.f32 0.0, %v2250
        %2252 = vdwg.mxu0
        %v2253 = vpack.c.bf16 %v2179, %v2175
        %v2254 = vpack.c.bf16 %v2181, %v2177
        %v2255 = vpack.c.bf16 %v2189, %v2185
        %v2256 = vpack.c.bf16 %v2191, %v2187
        %v2257 = vpack.c.bf16 %v2199, %v2195
        %v2258 = vpack.c.bf16 %v2201, %v2197
        %v2259 = vpack.c.bf16 %v2209, %v2205
        %v2260 = vpack.c.bf16 %v2211, %v2207
        %v2261 = vpack.c.bf16 %v2219, %v2215
        %v2262 = vpack.c.bf16 %v2221, %v2217
        %v2263 = vpack.c.bf16 %v2229, %v2225
        %v2264 = vpack.c.bf16 %v2231, %v2227
        %v2265 = vpack.c.bf16 %v2239, %v2235
        %v2266 = vpack.c.bf16 %v2241, %v2237
        %v2267 = vpack.c.bf16 %v2249, %v2245
        %v2268 = vpack.c.bf16 %v2251, %v2247
        %v2285 = vunpack.c.l.b16 %v2253
        %v2286 = vunpack.c.l.b16 %v2254
        %v2287 = vunpack.c.h.b16 %v2253
        %v2288 = vunpack.c.h.b16 %v2254
        %v2289 = vunpack.c.l.b16 %v2255
        %v2290 = vunpack.c.l.b16 %v2256
        %v2291 = vunpack.c.h.b16 %v2255
        %v2292 = vunpack.c.h.b16 %v2256
        %v2293 = vunpack.c.l.b16 %v2257
        %v2294 = vunpack.c.l.b16 %v2258
        %v2295 = vunpack.c.h.b16 %v2257
        %v2296 = vunpack.c.h.b16 %v2258
        %v2297 = vunpack.c.l.b16 %v2259
        %v2298 = vunpack.c.l.b16 %v2260
        %v2299 = vunpack.c.h.b16 %v2259
        %v2300 = vunpack.c.h.b16 %v2260
        %v2301 = vunpack.c.l.b16 %v2261
        %v2302 = vunpack.c.l.b16 %v2262
        %v2303 = vunpack.c.h.b16 %v2261
        %v2304 = vunpack.c.h.b16 %v2262
        %v2305 = vunpack.c.l.b16 %v2263
        %v2306 = vunpack.c.l.b16 %v2264
        %v2307 = vunpack.c.h.b16 %v2263
        %v2308 = vunpack.c.h.b16 %v2264
        %v2309 = vunpack.c.l.b16 %v2265
        %v2310 = vunpack.c.l.b16 %v2266
        %v2311 = vunpack.c.h.b16 %v2265
        %v2312 = vunpack.c.h.b16 %v2266
        %v2313 = vunpack.c.l.b16 %v2267
        %v2314 = vunpack.c.l.b16 %v2268
        %v2315 = vunpack.c.h.b16 %v2267
        %v2316 = vunpack.c.h.b16 %v2268
        %v2317 = vpack.c.b16 %v2286, %v2285
        %v2318 = vpack.c.b16 %v2288, %v2287
        %v2319 = vpack.c.b16 %v2290, %v2289
        %v2320 = vpack.c.b16 %v2292, %v2291
        %v2321 = vpack.c.b16 %v2294, %v2293
        %v2322 = vpack.c.b16 %v2296, %v2295
        %v2323 = vpack.c.b16 %v2298, %v2297
        %v2324 = vpack.c.b16 %v2300, %v2299
        %v2325 = vpack.c.b16 %v2302, %v2301
        %v2326 = vpack.c.b16 %v2304, %v2303
        %v2327 = vpack.c.b16 %v2306, %v2305
        %v2328 = vpack.c.b16 %v2308, %v2307
        %v2329 = vpack.c.b16 %v2310, %v2309
        %v2330 = vpack.c.b16 %v2312, %v2311
        %v2331 = vpack.c.b16 %v2314, %v2313
        %v2332 = vpack.c.b16 %v2316, %v2315
        %2349 = vst [vmem:[%s770] sm:$0xff] %v2317
        %2350 = vst [vmem:[%s770 + $0x8] sm:$0xff] %v2318
        %2351 = vst [vmem:[%s770 + $0x10] sm:$0xff] %v2319
        %2352 = vst [vmem:[%s770 + $0x18] sm:$0xff] %v2320
        %2353 = vst [vmem:[%s770 + $0x20] sm:$0xff] %v2321
        %2354 = vst [vmem:[%s770 + $0x28] sm:$0xff] %v2322
        %2355 = vst [vmem:[%s770 + $0x30] sm:$0xff] %v2323
        %2356 = vst [vmem:[%s770 + $0x38] sm:$0xff] %v2324
        %2357 = vst [vmem:[%s770 + $0x40] sm:$0xff] %v2325
        %2358 = vst [vmem:[%s770 + $0x48] sm:$0xff] %v2326
        %2359 = vst [vmem:[%s770 + $0x50] sm:$0xff] %v2327
        %2360 = vst [vmem:[%s770 + $0x58] sm:$0xff] %v2328
        %2361 = vst [vmem:[%s770 + $0x60] sm:$0xff] %v2329
        %2362 = vst [vmem:[%s770 + $0x68] sm:$0xff] %v2330
        %2363 = vst [vmem:[%s770 + $0x70] sm:$0xff] %v2331
        %2364 = vst [vmem:[%s770 + $0x78] sm:$0xff] %v2332
        %v2365 = vld [vmem:[%s627] sm:$0xff]
        %v2366 = vld [vmem:[%s627 + $0x8] sm:$0xff]
        %v2367 = vld [vmem:[%s627 + $0x10] sm:$0xff]
        %v2368 = vld [vmem:[%s627 + $0x18] sm:$0xff]
        %v2369 = vld [vmem:[%s627 + $0x20] sm:$0xff]
        %v2370 = vld [vmem:[%s627 + $0x28] sm:$0xff]
        %v2371 = vld [vmem:[%s627 + $0x30] sm:$0xff]
        %v2372 = vld [vmem:[%s627 + $0x38] sm:$0xff]
        %v2373 = vld [vmem:[%s627 + $0x40] sm:$0xff]
        %v2374 = vld [vmem:[%s627 + $0x48] sm:$0xff]
        %v2375 = vld [vmem:[%s627 + $0x50] sm:$0xff]
        %v2376 = vld [vmem:[%s627 + $0x58] sm:$0xff]
        %v2377 = vld [vmem:[%s627 + $0x60] sm:$0xff]
        %v2378 = vld [vmem:[%s627 + $0x68] sm:$0xff]
        %v2379 = vld [vmem:[%s627 + $0x70] sm:$0xff]
        %v2380 = vld [vmem:[%s627 + $0x78] sm:$0xff]
        %v2381 = vld [vmem:[%s627 + $0x80] sm:$0xff]
        %v2382 = vld [vmem:[%s627 + $0x88] sm:$0xff]
        %v2383 = vld [vmem:[%s627 + $0x90] sm:$0xff]
        %v2384 = vld [vmem:[%s627 + $0x98] sm:$0xff]
        %v2385 = vld [vmem:[%s627 + $0xa0] sm:$0xff]
        %v2386 = vld [vmem:[%s627 + $0xa8] sm:$0xff]
        %v2387 = vld [vmem:[%s627 + $0xb0] sm:$0xff]
        %v2388 = vld [vmem:[%s627 + $0xb8] sm:$0xff]
        %v2389 = vld [vmem:[%s627 + $0xc0] sm:$0xff]
        %v2390 = vld [vmem:[%s627 + $0xc8] sm:$0xff]
        %v2391 = vld [vmem:[%s627 + $0xd0] sm:$0xff]
        %v2392 = vld [vmem:[%s627 + $0xd8] sm:$0xff]
        %v2393 = vld [vmem:[%s627 + $0xe0] sm:$0xff]
        %v2394 = vld [vmem:[%s627 + $0xe8] sm:$0xff]
        %v2395 = vld [vmem:[%s627 + $0xf0] sm:$0xff]
        %v2396 = vld [vmem:[%s627 + $0xf8] sm:$0xff]
        %v2397 = vld [vmem:[%s627 + $0x100] sm:$0xff]
        %v2398 = vld [vmem:[%s627 + $0x108] sm:$0xff]
        %v2399 = vld [vmem:[%s627 + $0x110] sm:$0xff]
        %v2400 = vld [vmem:[%s627 + $0x118] sm:$0xff]
        %v2401 = vld [vmem:[%s627 + $0x120] sm:$0xff]
        %v2402 = vld [vmem:[%s627 + $0x128] sm:$0xff]
        %v2403 = vld [vmem:[%s627 + $0x130] sm:$0xff]
        %v2404 = vld [vmem:[%s627 + $0x138] sm:$0xff]
        %v2405 = vld [vmem:[%s627 + $0x140] sm:$0xff]
        %v2406 = vld [vmem:[%s627 + $0x148] sm:$0xff]
        %v2407 = vld [vmem:[%s627 + $0x150] sm:$0xff]
        %v2408 = vld [vmem:[%s627 + $0x158] sm:$0xff]
        %v2409 = vld [vmem:[%s627 + $0x160] sm:$0xff]
        %v2410 = vld [vmem:[%s627 + $0x168] sm:$0xff]
        %v2411 = vld [vmem:[%s627 + $0x170] sm:$0xff]
        %v2412 = vld [vmem:[%s627 + $0x178] sm:$0xff]
        %v2413 = vld [vmem:[%s627 + $0x180] sm:$0xff]
        %v2414 = vld [vmem:[%s627 + $0x188] sm:$0xff]
        %v2415 = vld [vmem:[%s627 + $0x190] sm:$0xff]
        %v2416 = vld [vmem:[%s627 + $0x198] sm:$0xff]
        %v2417 = vld [vmem:[%s627 + $0x1a0] sm:$0xff]
        %v2418 = vld [vmem:[%s627 + $0x1a8] sm:$0xff]
        %v2419 = vld [vmem:[%s627 + $0x1b0] sm:$0xff]
        %v2420 = vld [vmem:[%s627 + $0x1b8] sm:$0xff]
        %v2421 = vld [vmem:[%s627 + $0x1c0] sm:$0xff]
        %v2422 = vld [vmem:[%s627 + $0x1c8] sm:$0xff]
        %v2423 = vld [vmem:[%s627 + $0x1d0] sm:$0xff]
        %v2424 = vld [vmem:[%s627 + $0x1d8] sm:$0xff]
        %v2425 = vld [vmem:[%s627 + $0x1e0] sm:$0xff]
        %v2426 = vld [vmem:[%s627 + $0x1e8] sm:$0xff]
        %v2427 = vld [vmem:[%s627 + $0x1f0] sm:$0xff]
        %v2428 = vld [vmem:[%s627 + $0x1f8] sm:$0xff]
        %v2429 = vmul.f32 %v1452, %v2365
        %v2430 = vmul.f32 %v1454, %v2366
        %v2431 = vmul.f32 %v1565, %v2367
        %v2432 = vmul.f32 %v1567, %v2368
        %v2433 = vmul.f32 %v1456, %v2369
        %v2434 = vmul.f32 %v1458, %v2370
        %v2435 = vmul.f32 %v1569, %v2371
        %v2436 = vmul.f32 %v1571, %v2372
        %v2437 = vmul.f32 %v1462, %v2373
        %v2438 = vmul.f32 %v1464, %v2374
        %v2439 = vmul.f32 %v1575, %v2375
        %v2440 = vmul.f32 %v1577, %v2376
        %v2441 = vmul.f32 %v1466, %v2377
        %v2442 = vmul.f32 %v1468, %v2378
        %v2443 = vmul.f32 %v1579, %v2379
        %v2444 = vmul.f32 %v1581, %v2380
        %v2445 = vmul.f32 %v1472, %v2381
        %v2446 = vmul.f32 %v1474, %v2382
        %v2447 = vmul.f32 %v1585, %v2383
        %v2448 = vmul.f32 %v1587, %v2384
        %v2449 = vmul.f32 %v1476, %v2385
        %v2450 = vmul.f32 %v1478, %v2386
        %v2451 = vmul.f32 %v1589, %v2387
        %v2452 = vmul.f32 %v1591, %v2388
        %v2453 = vmul.f32 %v1482, %v2389
        %v2454 = vmul.f32 %v1484, %v2390
        %v2455 = vmul.f32 %v1595, %v2391
        %v2456 = vmul.f32 %v1597, %v2392
        %v2457 = vmul.f32 %v1486, %v2393
        %v2458 = vmul.f32 %v1488, %v2394
        %v2459 = vmul.f32 %v1599, %v2395
        %v2460 = vmul.f32 %v1601, %v2396
        %v2461 = vmul.f32 %v1492, %v2397
        %v2462 = vmul.f32 %v1494, %v2398
        %v2463 = vmul.f32 %v1605, %v2399
        %v2464 = vmul.f32 %v1607, %v2400
        %v2465 = vmul.f32 %v1496, %v2401
        %v2466 = vmul.f32 %v1498, %v2402
        %v2467 = vmul.f32 %v1609, %v2403
        %v2468 = vmul.f32 %v1611, %v2404
        %v2469 = vmul.f32 %v1502, %v2405
        %v2470 = vmul.f32 %v1504, %v2406
        %v2471 = vmul.f32 %v1615, %v2407
        %v2472 = vmul.f32 %v1617, %v2408
        %v2473 = vmul.f32 %v1506, %v2409
        %v2474 = vmul.f32 %v1508, %v2410
        %v2475 = vmul.f32 %v1619, %v2411
        %v2476 = vmul.f32 %v1621, %v2412
        %v2477 = vmul.f32 %v1512, %v2413
        %v2478 = vmul.f32 %v1514, %v2414
        %v2479 = vmul.f32 %v1625, %v2415
        %v2480 = vmul.f32 %v1627, %v2416
        %v2481 = vmul.f32 %v1516, %v2417
        %v2482 = vmul.f32 %v1518, %v2418
        %v2483 = vmul.f32 %v1629, %v2419
        %v2484 = vmul.f32 %v1631, %v2420
        %v2485 = vmul.f32 %v1522, %v2421
        %v2486 = vmul.f32 %v1524, %v2422
        %v2487 = vmul.f32 %v1635, %v2423
        %v2488 = vmul.f32 %v1637, %v2424
        %v2489 = vmul.f32 %v1526, %v2425
        %v2490 = vmul.f32 %v1528, %v2426
        %v2491 = vmul.f32 %v1639, %v2427
        %v2492 = vmul.f32 %v1641, %v2428
        %2493 = vrot.lane.b32.xlu0 %v1452, 64
        %v2494 = vpop.permute.xlu0 %2493
        %2495 = vrot.lane.b32.xlu0 %v1456, 64
        %v2496 = vpop.permute.xlu0 %2495
        %2497 = vrot.lane.b32.xlu0 %v1462, 64
        %v2498 = vpop.permute.xlu0 %2497
        %2499 = vrot.lane.b32.xlu0 %v1466, 64
        %v2500 = vpop.permute.xlu0 %2499
        %2501 = vrot.lane.b32.xlu0 %v1472, 64
        %v2502 = vpop.permute.xlu0 %2501
        %2503 = vrot.lane.b32.xlu0 %v1476, 64
        %v2504 = vpop.permute.xlu0 %2503
        %2505 = vrot.lane.b32.xlu0 %v1482, 64
        %v2506 = vpop.permute.xlu0 %2505
        %2507 = vrot.lane.b32.xlu0 %v1486, 64
        %v2508 = vpop.permute.xlu0 %2507
        %2509 = vrot.lane.b32.xlu0 %v1492, 64
        %v2510 = vpop.permute.xlu0 %2509
        %2511 = vrot.lane.b32.xlu0 %v1496, 64
        %v2512 = vpop.permute.xlu0 %2511
        %2513 = vrot.lane.b32.xlu0 %v1502, 64
        %v2514 = vpop.permute.xlu0 %2513
        %2515 = vrot.lane.b32.xlu0 %v1506, 64
        %v2516 = vpop.permute.xlu0 %2515
        %2517 = vrot.lane.b32.xlu0 %v1512, 64
        %v2518 = vpop.permute.xlu0 %2517
        %2519 = vrot.lane.b32.xlu0 %v1516, 64
        %v2520 = vpop.permute.xlu0 %2519
        %2521 = vrot.lane.b32.xlu0 %v1522, 64
        %v2522 = vpop.permute.xlu0 %2521
        %2523 = vrot.lane.b32.xlu0 %v1526, 64
        %v2524 = vpop.permute.xlu0 %2523
        %2525 = vrot.lane.b32.xlu0 %v1454, 64
        %v2526 = vpop.permute.xlu0 %2525
        %2527 = vrot.lane.b32.xlu0 %v1458, 64
        %v2528 = vpop.permute.xlu0 %2527
        %2529 = vrot.lane.b32.xlu0 %v1464, 64
        %v2530 = vpop.permute.xlu0 %2529
        %2531 = vrot.lane.b32.xlu0 %v1468, 64
        %v2532 = vpop.permute.xlu0 %2531
        %2533 = vrot.lane.b32.xlu0 %v1474, 64
        %v2534 = vpop.permute.xlu0 %2533
        %2535 = vrot.lane.b32.xlu0 %v1478, 64
        %v2536 = vpop.permute.xlu0 %2535
        %2537 = vrot.lane.b32.xlu0 %v1484, 64
        %v2538 = vpop.permute.xlu0 %2537
        %2539 = vrot.lane.b32.xlu0 %v1488, 64
        %v2540 = vpop.permute.xlu0 %2539
        %2541 = vrot.lane.b32.xlu0 %v1494, 64
        %v2542 = vpop.permute.xlu0 %2541
        %2543 = vrot.lane.b32.xlu0 %v1498, 64
        %v2544 = vpop.permute.xlu0 %2543
        %2545 = vrot.lane.b32.xlu0 %v1504, 64
        %v2546 = vpop.permute.xlu0 %2545
        %2547 = vrot.lane.b32.xlu0 %v1508, 64
        %v2548 = vpop.permute.xlu0 %2547
        %2549 = vrot.lane.b32.xlu0 %v1514, 64
        %v2550 = vpop.permute.xlu0 %2549
        %2551 = vrot.lane.b32.xlu0 %v1518, 64
        %v2552 = vpop.permute.xlu0 %2551
        %2553 = vrot.lane.b32.xlu0 %v1524, 64
        %v2554 = vpop.permute.xlu0 %2553
        %2555 = vrot.lane.b32.xlu0 %v1528, 64
        %v2556 = vpop.permute.xlu0 %2555
        %2557 = vrot.lane.b32.xlu0 %v1565, 64
        %v2558 = vpop.permute.xlu0 %2557
        %2559 = vrot.lane.b32.xlu0 %v1569, 64
        %v2560 = vpop.permute.xlu0 %2559
        %2561 = vrot.lane.b32.xlu0 %v1575, 64
        %v2562 = vpop.permute.xlu0 %2561
        %2563 = vrot.lane.b32.xlu0 %v1579, 64
        %v2564 = vpop.permute.xlu0 %2563
        %2565 = vrot.lane.b32.xlu0 %v1585, 64
        %v2566 = vpop.permute.xlu0 %2565
        %2567 = vrot.lane.b32.xlu0 %v1589, 64
        %v2568 = vpop.permute.xlu0 %2567
        %2569 = vrot.lane.b32.xlu0 %v1595, 64
        %v2570 = vpop.permute.xlu0 %2569
        %2571 = vrot.lane.b32.xlu0 %v1599, 64
        %v2572 = vpop.permute.xlu0 %2571
        %2573 = vrot.lane.b32.xlu0 %v1605, 64
        %v2574 = vpop.permute.xlu0 %2573
        %2575 = vrot.lane.b32.xlu0 %v1609, 64
        %v2576 = vpop.permute.xlu0 %2575
        %2577 = vrot.lane.b32.xlu0 %v1615, 64
        %v2578 = vpop.permute.xlu0 %2577
        %2579 = vrot.lane.b32.xlu0 %v1619, 64
        %v2580 = vpop.permute.xlu0 %2579
        %2581 = vrot.lane.b32.xlu0 %v1625, 64
        %v2582 = vpop.permute.xlu0 %2581
        %2583 = vrot.lane.b32.xlu0 %v1629, 64
        %v2584 = vpop.permute.xlu0 %2583
        %2585 = vrot.lane.b32.xlu0 %v1635, 64
        %v2586 = vpop.permute.xlu0 %2585
        %2587 = vrot.lane.b32.xlu0 %v1639, 64
        %v2588 = vpop.permute.xlu0 %2587
        %2589 = vrot.lane.b32.xlu0 %v1567, 64
        %v2590 = vpop.permute.xlu0 %2589
        %2591 = vrot.lane.b32.xlu0 %v1571, 64
        %v2592 = vpop.permute.xlu0 %2591
        %2593 = vrot.lane.b32.xlu0 %v1577, 64
        %v2594 = vpop.permute.xlu0 %2593
        %2595 = vrot.lane.b32.xlu0 %v1581, 64
        %v2596 = vpop.permute.xlu0 %2595
        %2597 = vrot.lane.b32.xlu0 %v1587, 64
        %v2598 = vpop.permute.xlu0 %2597
        %2599 = vrot.lane.b32.xlu0 %v1591, 64
        %v2600 = vpop.permute.xlu0 %2599
        %2601 = vrot.lane.b32.xlu0 %v1597, 64
        %v2602 = vpop.permute.xlu0 %2601
        %2603 = vrot.lane.b32.xlu0 %v1601, 64
        %v2604 = vpop.permute.xlu0 %2603
        %2605 = vrot.lane.b32.xlu0 %v1607, 64
        %v2606 = vpop.permute.xlu0 %2605
        %2607 = vrot.lane.b32.xlu0 %v1611, 64
        %v2608 = vpop.permute.xlu0 %2607
        %2609 = vrot.lane.b32.xlu0 %v1617, 64
        %v2610 = vpop.permute.xlu0 %2609
        %2611 = vrot.lane.b32.xlu0 %v1621, 64
        %v2612 = vpop.permute.xlu0 %2611
        %2613 = vrot.lane.b32.xlu0 %v1627, 64
        %v2614 = vpop.permute.xlu0 %2613
        %2615 = vrot.lane.b32.xlu0 %v1631, 64
        %v2616 = vpop.permute.xlu0 %2615
        %2617 = vrot.lane.b32.xlu0 %v1637, 64
        %v2618 = vpop.permute.xlu0 %2617
        %2619 = vrot.lane.b32.xlu0 %v1641, 64
        %v2620 = vpop.permute.xlu0 %2619
        %v2621 = vlaneseq
        %v2622 = vand.u32 %v2621, 127
        %vm2623 = vcmp.lt.s32.totalorder %v2622, 64
        %v2624 = vsel %vm2623, %v2558, %v2590
        %v2625 = vsel %vm2623, %v2560, %v2592
        %v2626 = vsel %vm2623, %v2562, %v2594
        %v2627 = vsel %vm2623, %v2564, %v2596
        %v2628 = vsel %vm2623, %v2566, %v2598
        %v2629 = vsel %vm2623, %v2568, %v2600
        %v2630 = vsel %vm2623, %v2570, %v2602
        %v2631 = vsel %vm2623, %v2572, %v2604
        %v2632 = vsel %vm2623, %v2574, %v2606
        %v2633 = vsel %vm2623, %v2576, %v2608
        %v2634 = vsel %vm2623, %v2578, %v2610
        %v2635 = vsel %vm2623, %v2580, %v2612
        %v2636 = vsel %vm2623, %v2582, %v2614
        %v2637 = vsel %vm2623, %v2584, %v2616
        %v2638 = vsel %vm2623, %v2586, %v2618
        %v2639 = vsel %vm2623, %v2588, %v2620
        %v2640 = vsel %vm2623, %v2526, %v2558
        %v2641 = vsel %vm2623, %v2528, %v2560
        %v2642 = vsel %vm2623, %v2530, %v2562
        %v2643 = vsel %vm2623, %v2532, %v2564
        %v2644 = vsel %vm2623, %v2534, %v2566
        %v2645 = vsel %vm2623, %v2536, %v2568
        %v2646 = vsel %vm2623, %v2538, %v2570
        %v2647 = vsel %vm2623, %v2540, %v2572
        %v2648 = vsel %vm2623, %v2542, %v2574
        %v2649 = vsel %vm2623, %v2544, %v2576
        %v2650 = vsel %vm2623, %v2546, %v2578
        %v2651 = vsel %vm2623, %v2548, %v2580
        %v2652 = vsel %vm2623, %v2550, %v2582
        %v2653 = vsel %vm2623, %v2552, %v2584
        %v2654 = vsel %vm2623, %v2554, %v2586
        %v2655 = vsel %vm2623, %v2556, %v2588
        %v2656 = vsel %vm2623, %v2494, %v2526
        %v2657 = vsel %vm2623, %v2496, %v2528
        %v2658 = vsel %vm2623, %v2498, %v2530
        %v2659 = vsel %vm2623, %v2500, %v2532
        %v2660 = vsel %vm2623, %v2502, %v2534
        %v2661 = vsel %vm2623, %v2504, %v2536
        %v2662 = vsel %vm2623, %v2506, %v2538
        %v2663 = vsel %vm2623, %v2508, %v2540
        %v2664 = vsel %vm2623, %v2510, %v2542
        %v2665 = vsel %vm2623, %v2512, %v2544
        %v2666 = vsel %vm2623, %v2514, %v2546
        %v2667 = vsel %vm2623, %v2516, %v2548
        %v2668 = vsel %vm2623, %v2518, %v2550
        %v2669 = vsel %vm2623, %v2520, %v2552
        %v2670 = vsel %vm2623, %v2522, %v2554
        %v2671 = vsel %vm2623, %v2524, %v2556
        %v2672 = vsel %vm2623, %v2590, %v2494
        %v2673 = vsel %vm2623, %v2592, %v2496
        %v2674 = vsel %vm2623, %v2594, %v2498
        %v2675 = vsel %vm2623, %v2596, %v2500
        %v2676 = vsel %vm2623, %v2598, %v2502
        %v2677 = vsel %vm2623, %v2600, %v2504
        %v2678 = vsel %vm2623, %v2602, %v2506
        %v2679 = vsel %vm2623, %v2604, %v2508
        %v2680 = vsel %vm2623, %v2606, %v2510
        %v2681 = vsel %vm2623, %v2608, %v2512
        %v2682 = vsel %vm2623, %v2610, %v2514
        %v2683 = vsel %vm2623, %v2612, %v2516
        %v2684 = vsel %vm2623, %v2614, %v2518
        %v2685 = vsel %vm2623, %v2616, %v2520
        %v2686 = vsel %vm2623, %v2618, %v2522
        %v2687 = vsel %vm2623, %v2620, %v2524
        %v2688 = vld [vmem:[%s636] sm:$0xff]
        %v2689 = vld [vmem:[%s636 + $0x8] sm:$0xff]
        %v2690 = vld [vmem:[%s636 + $0x10] sm:$0xff]
        %v2691 = vld [vmem:[%s636 + $0x18] sm:$0xff]
        %v2692 = vld [vmem:[%s636 + $0x20] sm:$0xff]
        %v2693 = vld [vmem:[%s636 + $0x28] sm:$0xff]
        %v2694 = vld [vmem:[%s636 + $0x30] sm:$0xff]
        %v2695 = vld [vmem:[%s636 + $0x38] sm:$0xff]
        %v2696 = vld [vmem:[%s636 + $0x40] sm:$0xff]
        %v2697 = vld [vmem:[%s636 + $0x48] sm:$0xff]
        %v2698 = vld [vmem:[%s636 + $0x50] sm:$0xff]
        %v2699 = vld [vmem:[%s636 + $0x58] sm:$0xff]
        %v2700 = vld [vmem:[%s636 + $0x60] sm:$0xff]
        %v2701 = vld [vmem:[%s636 + $0x68] sm:$0xff]
        %v2702 = vld [vmem:[%s636 + $0x70] sm:$0xff]
        %v2703 = vld [vmem:[%s636 + $0x78] sm:$0xff]
        %v2704 = vld [vmem:[%s636 + $0x80] sm:$0xff]
        %v2705 = vld [vmem:[%s636 + $0x88] sm:$0xff]
        %v2706 = vld [vmem:[%s636 + $0x90] sm:$0xff]
        %v2707 = vld [vmem:[%s636 + $0x98] sm:$0xff]
        %v2708 = vld [vmem:[%s636 + $0xa0] sm:$0xff]
        %v2709 = vld [vmem:[%s636 + $0xa8] sm:$0xff]
        %v2710 = vld [vmem:[%s636 + $0xb0] sm:$0xff]
        %v2711 = vld [vmem:[%s636 + $0xb8] sm:$0xff]
        %v2712 = vld [vmem:[%s636 + $0xc0] sm:$0xff]
        %v2713 = vld [vmem:[%s636 + $0xc8] sm:$0xff]
        %v2714 = vld [vmem:[%s636 + $0xd0] sm:$0xff]
        %v2715 = vld [vmem:[%s636 + $0xd8] sm:$0xff]
        %v2716 = vld [vmem:[%s636 + $0xe0] sm:$0xff]
        %v2717 = vld [vmem:[%s636 + $0xe8] sm:$0xff]
        %v2718 = vld [vmem:[%s636 + $0xf0] sm:$0xff]
        %v2719 = vld [vmem:[%s636 + $0xf8] sm:$0xff]
        %v2720 = vld [vmem:[%s636 + $0x100] sm:$0xff]
        %v2721 = vld [vmem:[%s636 + $0x108] sm:$0xff]
        %v2722 = vld [vmem:[%s636 + $0x110] sm:$0xff]
        %v2723 = vld [vmem:[%s636 + $0x118] sm:$0xff]
        %v2724 = vld [vmem:[%s636 + $0x120] sm:$0xff]
        %v2725 = vld [vmem:[%s636 + $0x128] sm:$0xff]
        %v2726 = vld [vmem:[%s636 + $0x130] sm:$0xff]
        %v2727 = vld [vmem:[%s636 + $0x138] sm:$0xff]
        %v2728 = vld [vmem:[%s636 + $0x140] sm:$0xff]
        %v2729 = vld [vmem:[%s636 + $0x148] sm:$0xff]
        %v2730 = vld [vmem:[%s636 + $0x150] sm:$0xff]
        %v2731 = vld [vmem:[%s636 + $0x158] sm:$0xff]
        %v2732 = vld [vmem:[%s636 + $0x160] sm:$0xff]
        %v2733 = vld [vmem:[%s636 + $0x168] sm:$0xff]
        %v2734 = vld [vmem:[%s636 + $0x170] sm:$0xff]
        %v2735 = vld [vmem:[%s636 + $0x178] sm:$0xff]
        %v2736 = vld [vmem:[%s636 + $0x180] sm:$0xff]
        %v2737 = vld [vmem:[%s636 + $0x188] sm:$0xff]
        %v2738 = vld [vmem:[%s636 + $0x190] sm:$0xff]
        %v2739 = vld [vmem:[%s636 + $0x198] sm:$0xff]
        %v2740 = vld [vmem:[%s636 + $0x1a0] sm:$0xff]
        %v2741 = vld [vmem:[%s636 + $0x1a8] sm:$0xff]
        %v2742 = vld [vmem:[%s636 + $0x1b0] sm:$0xff]
        %v2743 = vld [vmem:[%s636 + $0x1b8] sm:$0xff]
        %v2744 = vld [vmem:[%s636 + $0x1c0] sm:$0xff]
        %v2745 = vld [vmem:[%s636 + $0x1c8] sm:$0xff]
        %v2746 = vld [vmem:[%s636 + $0x1d0] sm:$0xff]
        %v2747 = vld [vmem:[%s636 + $0x1d8] sm:$0xff]
        %v2748 = vld [vmem:[%s636 + $0x1e0] sm:$0xff]
        %v2749 = vld [vmem:[%s636 + $0x1e8] sm:$0xff]
        %v2750 = vld [vmem:[%s636 + $0x1f0] sm:$0xff]
        %v2751 = vld [vmem:[%s636 + $0x1f8] sm:$0xff]
        %v2752 = vmul.f32 %v2656, %v2688
        %v2753 = vmul.f32 %v2640, %v2689
        %v2754 = vmul.f32 %v2624, %v2690
        %v2755 = vmul.f32 %v2672, %v2691
        %v2756 = vmul.f32 %v2657, %v2692
        %v2757 = vmul.f32 %v2641, %v2693
        %v2758 = vmul.f32 %v2625, %v2694
        %v2759 = vmul.f32 %v2673, %v2695
        %v2760 = vmul.f32 %v2658, %v2696
        %v2761 = vmul.f32 %v2642, %v2697
        %v2762 = vmul.f32 %v2626, %v2698
        %v2763 = vmul.f32 %v2674, %v2699
        %v2764 = vmul.f32 %v2659, %v2700
        %v2765 = vmul.f32 %v2643, %v2701
        %v2766 = vmul.f32 %v2627, %v2702
        %v2767 = vmul.f32 %v2675, %v2703
        %v2768 = vmul.f32 %v2660, %v2704
        %v2769 = vmul.f32 %v2644, %v2705
        %v2770 = vmul.f32 %v2628, %v2706
        %v2771 = vmul.f32 %v2676, %v2707
        %v2772 = vmul.f32 %v2661, %v2708
        %v2773 = vmul.f32 %v2645, %v2709
        %v2774 = vmul.f32 %v2629, %v2710
        %v2775 = vmul.f32 %v2677, %v2711
        %v2776 = vmul.f32 %v2662, %v2712
        %v2777 = vmul.f32 %v2646, %v2713
        %v2778 = vmul.f32 %v2630, %v2714
        %v2779 = vmul.f32 %v2678, %v2715
        %v2780 = vmul.f32 %v2663, %v2716
        %v2781 = vmul.f32 %v2647, %v2717
        %v2782 = vmul.f32 %v2631, %v2718
        %v2783 = vmul.f32 %v2679, %v2719
        %v2784 = vmul.f32 %v2664, %v2720
        %v2785 = vmul.f32 %v2648, %v2721
        %v2786 = vmul.f32 %v2632, %v2722
        %v2787 = vmul.f32 %v2680, %v2723
        %v2788 = vmul.f32 %v2665, %v2724
        %v2789 = vmul.f32 %v2649, %v2725
        %v2790 = vmul.f32 %v2633, %v2726
        %v2791 = vmul.f32 %v2681, %v2727
        %v2792 = vmul.f32 %v2666, %v2728
        %v2793 = vmul.f32 %v2650, %v2729
        %v2794 = vmul.f32 %v2634, %v2730
        %v2795 = vmul.f32 %v2682, %v2731
        %v2796 = vmul.f32 %v2667, %v2732
        %v2797 = vmul.f32 %v2651, %v2733
        %v2798 = vmul.f32 %v2635, %v2734
        %v2799 = vmul.f32 %v2683, %v2735
        %v2800 = vmul.f32 %v2668, %v2736
        %v2801 = vmul.f32 %v2652, %v2737
        %v2802 = vmul.f32 %v2636, %v2738
        %v2803 = vmul.f32 %v2684, %v2739
        %v2804 = vmul.f32 %v2669, %v2740
        %v2805 = vmul.f32 %v2653, %v2741
        %v2806 = vmul.f32 %v2637, %v2742
        %v2807 = vmul.f32 %v2685, %v2743
        %v2808 = vmul.f32 %v2670, %v2744
        %v2809 = vmul.f32 %v2654, %v2745
        %v2810 = vmul.f32 %v2638, %v2746
        %v2811 = vmul.f32 %v2686, %v2747
        %v2812 = vmul.f32 %v2671, %v2748
        %v2813 = vmul.f32 %v2655, %v2749
        %v2814 = vmul.f32 %v2639, %v2750
        %v2815 = vmul.f32 %v2687, %v2751
        %v2816 = vadd.f32 %v2429, %v2752
        %v2817 = vadd.f32 %v2430, %v2753
        %v2818 = vadd.f32 %v2431, %v2754
        %v2819 = vadd.f32 %v2432, %v2755
        %v2820 = vadd.f32 %v2433, %v2756
        %v2821 = vadd.f32 %v2434, %v2757
        %v2822 = vadd.f32 %v2435, %v2758
        %v2823 = vadd.f32 %v2436, %v2759
        %v2824 = vadd.f32 %v2437, %v2760
        %v2825 = vadd.f32 %v2438, %v2761
        %v2826 = vadd.f32 %v2439, %v2762
        %v2827 = vadd.f32 %v2440, %v2763
        %v2828 = vadd.f32 %v2441, %v2764
        %v2829 = vadd.f32 %v2442, %v2765
        %v2830 = vadd.f32 %v2443, %v2766
        %v2831 = vadd.f32 %v2444, %v2767
        %v2832 = vadd.f32 %v2445, %v2768
        %v2833 = vadd.f32 %v2446, %v2769
        %v2834 = vadd.f32 %v2447, %v2770
        %v2835 = vadd.f32 %v2448, %v2771
        %v2836 = vadd.f32 %v2449, %v2772
        %v2837 = vadd.f32 %v2450, %v2773
        %v2838 = vadd.f32 %v2451, %v2774
        %v2839 = vadd.f32 %v2452, %v2775
        %v2840 = vadd.f32 %v2453, %v2776
        %v2841 = vadd.f32 %v2454, %v2777
        %v2842 = vadd.f32 %v2455, %v2778
        %v2843 = vadd.f32 %v2456, %v2779
        %v2844 = vadd.f32 %v2457, %v2780
        %v2845 = vadd.f32 %v2458, %v2781
        %v2846 = vadd.f32 %v2459, %v2782
        %v2847 = vadd.f32 %v2460, %v2783
        %v2848 = vadd.f32 %v2461, %v2784
        %v2849 = vadd.f32 %v2462, %v2785
        %v2850 = vadd.f32 %v2463, %v2786
        %v2851 = vadd.f32 %v2464, %v2787
        %v2852 = vadd.f32 %v2465, %v2788
        %v2853 = vadd.f32 %v2466, %v2789
        %v2854 = vadd.f32 %v2467, %v2790
        %v2855 = vadd.f32 %v2468, %v2791
        %v2856 = vadd.f32 %v2469, %v2792
        %v2857 = vadd.f32 %v2470, %v2793
        %v2858 = vadd.f32 %v2471, %v2794
        %v2859 = vadd.f32 %v2472, %v2795
        %v2860 = vadd.f32 %v2473, %v2796
        %v2861 = vadd.f32 %v2474, %v2797
        %v2862 = vadd.f32 %v2475, %v2798
        %v2863 = vadd.f32 %v2476, %v2799
        %v2864 = vadd.f32 %v2477, %v2800
        %v2865 = vadd.f32 %v2478, %v2801
        %v2866 = vadd.f32 %v2479, %v2802
        %v2867 = vadd.f32 %v2480, %v2803
        %v2868 = vadd.f32 %v2481, %v2804
        %v2869 = vadd.f32 %v2482, %v2805
        %v2870 = vadd.f32 %v2483, %v2806
        %v2871 = vadd.f32 %v2484, %v2807
        %v2872 = vadd.f32 %v2485, %v2808
        %v2873 = vadd.f32 %v2486, %v2809
        %v2874 = vadd.f32 %v2487, %v2810
        %v2875 = vadd.f32 %v2488, %v2811
        %v2876 = vadd.f32 %v2489, %v2812
        %v2877 = vadd.f32 %v2490, %v2813
        %v2878 = vadd.f32 %v2491, %v2814
        %v2879 = vadd.f32 %v2492, %v2815
        %v2880 = vld [vmem:[%s645] sm:$0xff]
        %v2881 = vld [vmem:[%s645 + $0x8] sm:$0xff]
        %v2882 = vld [vmem:[%s645 + $0x10] sm:$0xff]
        %v2883 = vld [vmem:[%s645 + $0x18] sm:$0xff]
        %v2884 = vld [vmem:[%s645 + $0x20] sm:$0xff]
        %v2885 = vld [vmem:[%s645 + $0x28] sm:$0xff]
        %v2886 = vld [vmem:[%s645 + $0x30] sm:$0xff]
        %v2887 = vld [vmem:[%s645 + $0x38] sm:$0xff]
        %v2888 = vld [vmem:[%s645 + $0x40] sm:$0xff]
        %v2889 = vld [vmem:[%s645 + $0x48] sm:$0xff]
        %v2890 = vld [vmem:[%s645 + $0x50] sm:$0xff]
        %v2891 = vld [vmem:[%s645 + $0x58] sm:$0xff]
        %v2892 = vld [vmem:[%s645 + $0x60] sm:$0xff]
        %v2893 = vld [vmem:[%s645 + $0x68] sm:$0xff]
        %v2894 = vld [vmem:[%s645 + $0x70] sm:$0xff]
        %v2895 = vld [vmem:[%s645 + $0x78] sm:$0xff]
        %v2896 = vld [vmem:[%s645 + $0x80] sm:$0xff]
        %v2897 = vld [vmem:[%s645 + $0x88] sm:$0xff]
        %v2898 = vld [vmem:[%s645 + $0x90] sm:$0xff]
        %v2899 = vld [vmem:[%s645 + $0x98] sm:$0xff]
        %v2900 = vld [vmem:[%s645 + $0xa0] sm:$0xff]
        %v2901 = vld [vmem:[%s645 + $0xa8] sm:$0xff]
        %v2902 = vld [vmem:[%s645 + $0xb0] sm:$0xff]
        %v2903 = vld [vmem:[%s645 + $0xb8] sm:$0xff]
        %v2904 = vld [vmem:[%s645 + $0xc0] sm:$0xff]
        %v2905 = vld [vmem:[%s645 + $0xc8] sm:$0xff]
        %v2906 = vld [vmem:[%s645 + $0xd0] sm:$0xff]
        %v2907 = vld [vmem:[%s645 + $0xd8] sm:$0xff]
        %v2908 = vld [vmem:[%s645 + $0xe0] sm:$0xff]
        %v2909 = vld [vmem:[%s645 + $0xe8] sm:$0xff]
        %v2910 = vld [vmem:[%s645 + $0xf0] sm:$0xff]
        %v2911 = vld [vmem:[%s645 + $0xf8] sm:$0xff]
        %v2912 = vld [vmem:[%s645 + $0x100] sm:$0xff]
        %v2913 = vld [vmem:[%s645 + $0x108] sm:$0xff]
        %v2914 = vld [vmem:[%s645 + $0x110] sm:$0xff]
        %v2915 = vld [vmem:[%s645 + $0x118] sm:$0xff]
        %v2916 = vld [vmem:[%s645 + $0x120] sm:$0xff]
        %v2917 = vld [vmem:[%s645 + $0x128] sm:$0xff]
        %v2918 = vld [vmem:[%s645 + $0x130] sm:$0xff]
        %v2919 = vld [vmem:[%s645 + $0x138] sm:$0xff]
        %v2920 = vld [vmem:[%s645 + $0x140] sm:$0xff]
        %v2921 = vld [vmem:[%s645 + $0x148] sm:$0xff]
        %v2922 = vld [vmem:[%s645 + $0x150] sm:$0xff]
        %v2923 = vld [vmem:[%s645 + $0x158] sm:$0xff]
        %v2924 = vld [vmem:[%s645 + $0x160] sm:$0xff]
        %v2925 = vld [vmem:[%s645 + $0x168] sm:$0xff]
        %v2926 = vld [vmem:[%s645 + $0x170] sm:$0xff]
        %v2927 = vld [vmem:[%s645 + $0x178] sm:$0xff]
        %v2928 = vld [vmem:[%s645 + $0x180] sm:$0xff]
        %v2929 = vld [vmem:[%s645 + $0x188] sm:$0xff]
        %v2930 = vld [vmem:[%s645 + $0x190] sm:$0xff]
        %v2931 = vld [vmem:[%s645 + $0x198] sm:$0xff]
        %v2932 = vld [vmem:[%s645 + $0x1a0] sm:$0xff]
        %v2933 = vld [vmem:[%s645 + $0x1a8] sm:$0xff]
        %v2934 = vld [vmem:[%s645 + $0x1b0] sm:$0xff]
        %v2935 = vld [vmem:[%s645 + $0x1b8] sm:$0xff]
        %v2936 = vld [vmem:[%s645 + $0x1c0] sm:$0xff]
        %v2937 = vld [vmem:[%s645 + $0x1c8] sm:$0xff]
        %v2938 = vld [vmem:[%s645 + $0x1d0] sm:$0xff]
        %v2939 = vld [vmem:[%s645 + $0x1d8] sm:$0xff]
        %v2940 = vld [vmem:[%s645 + $0x1e0] sm:$0xff]
        %v2941 = vld [vmem:[%s645 + $0x1e8] sm:$0xff]
        %v2942 = vld [vmem:[%s645 + $0x1f0] sm:$0xff]
        %v2943 = vld [vmem:[%s645 + $0x1f8] sm:$0xff]
        %v2944 = vmul.f32 %v2672, %v2880
        %v2945 = vmul.f32 %v2656, %v2881
        %v2946 = vmul.f32 %v2640, %v2882
        %v2947 = vmul.f32 %v2624, %v2883
        %v2948 = vmul.f32 %v2673, %v2884
        %v2949 = vmul.f32 %v2657, %v2885
        %v2950 = vmul.f32 %v2641, %v2886
        %v2951 = vmul.f32 %v2625, %v2887
        %v2952 = vmul.f32 %v2674, %v2888
        %v2953 = vmul.f32 %v2658, %v2889
        %v2954 = vmul.f32 %v2642, %v2890
        %v2955 = vmul.f32 %v2626, %v2891
        %v2956 = vmul.f32 %v2675, %v2892
        %v2957 = vmul.f32 %v2659, %v2893
        %v2958 = vmul.f32 %v2643, %v2894
        %v2959 = vmul.f32 %v2627, %v2895
        %v2960 = vmul.f32 %v2676, %v2896
        %v2961 = vmul.f32 %v2660, %v2897
        %v2962 = vmul.f32 %v2644, %v2898
        %v2963 = vmul.f32 %v2628, %v2899
        %v2964 = vmul.f32 %v2677, %v2900
        %v2965 = vmul.f32 %v2661, %v2901
        %v2966 = vmul.f32 %v2645, %v2902
        %v2967 = vmul.f32 %v2629, %v2903
        %v2968 = vmul.f32 %v2678, %v2904
        %v2969 = vmul.f32 %v2662, %v2905
        %v2970 = vmul.f32 %v2646, %v2906
        %v2971 = vmul.f32 %v2630, %v2907
        %v2972 = vmul.f32 %v2679, %v2908
        %v2973 = vmul.f32 %v2663, %v2909
        %v2974 = vmul.f32 %v2647, %v2910
        %v2975 = vmul.f32 %v2631, %v2911
        %v2976 = vmul.f32 %v2680, %v2912
        %v2977 = vmul.f32 %v2664, %v2913
        %v2978 = vmul.f32 %v2648, %v2914
        %v2979 = vmul.f32 %v2632, %v2915
        %v2980 = vmul.f32 %v2681, %v2916
        %v2981 = vmul.f32 %v2665, %v2917
        %v2982 = vmul.f32 %v2649, %v2918
        %v2983 = vmul.f32 %v2633, %v2919
        %v2984 = vmul.f32 %v2682, %v2920
        %v2985 = vmul.f32 %v2666, %v2921
        %v2986 = vmul.f32 %v2650, %v2922
        %v2987 = vmul.f32 %v2634, %v2923
        %v2988 = vmul.f32 %v2683, %v2924
        %v2989 = vmul.f32 %v2667, %v2925
        %v2990 = vmul.f32 %v2651, %v2926
        %v2991 = vmul.f32 %v2635, %v2927
        %v2992 = vmul.f32 %v2684, %v2928
        %v2993 = vmul.f32 %v2668, %v2929
        %v2994 = vmul.f32 %v2652, %v2930
        %v2995 = vmul.f32 %v2636, %v2931
        %v2996 = vmul.f32 %v2685, %v2932
        %v2997 = vmul.f32 %v2669, %v2933
        %v2998 = vmul.f32 %v2653, %v2934
        %v2999 = vmul.f32 %v2637, %v2935
        %v3000 = vmul.f32 %v2686, %v2936
        %v3001 = vmul.f32 %v2670, %v2937
        %v3002 = vmul.f32 %v2654, %v2938
        %v3003 = vmul.f32 %v2638, %v2939
        %v3004 = vmul.f32 %v2687, %v2940
        %v3005 = vmul.f32 %v2671, %v2941
        %v3006 = vmul.f32 %v2655, %v2942
        %v3007 = vmul.f32 %v2639, %v2943
        %v3008 = vadd.f32 %v2816, %v2944
        %v3009 = vadd.f32 %v2817, %v2945
        %v3010 = vadd.f32 %v2818, %v2946
        %v3011 = vadd.f32 %v2819, %v2947
        %v3012 = vadd.f32 %v2820, %v2948
        %v3013 = vadd.f32 %v2821, %v2949
        %v3014 = vadd.f32 %v2822, %v2950
        %v3015 = vadd.f32 %v2823, %v2951
        %v3016 = vadd.f32 %v2824, %v2952
        %v3017 = vadd.f32 %v2825, %v2953
        %v3018 = vadd.f32 %v2826, %v2954
        %v3019 = vadd.f32 %v2827, %v2955
        %v3020 = vadd.f32 %v2828, %v2956
        %v3021 = vadd.f32 %v2829, %v2957
        %v3022 = vadd.f32 %v2830, %v2958
        %v3023 = vadd.f32 %v2831, %v2959
        %v3024 = vadd.f32 %v2832, %v2960
        %v3025 = vadd.f32 %v2833, %v2961
        %v3026 = vadd.f32 %v2834, %v2962
        %v3027 = vadd.f32 %v2835, %v2963
        %v3028 = vadd.f32 %v2836, %v2964
        %v3029 = vadd.f32 %v2837, %v2965
        %v3030 = vadd.f32 %v2838, %v2966
        %v3031 = vadd.f32 %v2839, %v2967
        %v3032 = vadd.f32 %v2840, %v2968
        %v3033 = vadd.f32 %v2841, %v2969
        %v3034 = vadd.f32 %v2842, %v2970
        %v3035 = vadd.f32 %v2843, %v2971
        %v3036 = vadd.f32 %v2844, %v2972
        %v3037 = vadd.f32 %v2845, %v2973
        %v3038 = vadd.f32 %v2846, %v2974
        %v3039 = vadd.f32 %v2847, %v2975
        %v3040 = vadd.f32 %v2848, %v2976
        %v3041 = vadd.f32 %v2849, %v2977
        %v3042 = vadd.f32 %v2850, %v2978
        %v3043 = vadd.f32 %v2851, %v2979
        %v3044 = vadd.f32 %v2852, %v2980
        %v3045 = vadd.f32 %v2853, %v2981
        %v3046 = vadd.f32 %v2854, %v2982
        %v3047 = vadd.f32 %v2855, %v2983
        %v3048 = vadd.f32 %v2856, %v2984
        %v3049 = vadd.f32 %v2857, %v2985
        %v3050 = vadd.f32 %v2858, %v2986
        %v3051 = vadd.f32 %v2859, %v2987
        %v3052 = vadd.f32 %v2860, %v2988
        %v3053 = vadd.f32 %v2861, %v2989
        %v3054 = vadd.f32 %v2862, %v2990
        %v3055 = vadd.f32 %v2863, %v2991
        %v3056 = vadd.f32 %v2864, %v2992
        %v3057 = vadd.f32 %v2865, %v2993
        %v3058 = vadd.f32 %v2866, %v2994
        %v3059 = vadd.f32 %v2867, %v2995
        %v3060 = vadd.f32 %v2868, %v2996
        %v3061 = vadd.f32 %v2869, %v2997
        %v3062 = vadd.f32 %v2870, %v2998
        %v3063 = vadd.f32 %v2871, %v2999
        %v3064 = vadd.f32 %v2872, %v3000
        %v3065 = vadd.f32 %v2873, %v3001
        %v3066 = vadd.f32 %v2874, %v3002
        %v3067 = vadd.f32 %v2875, %v3003
        %v3068 = vadd.f32 %v2876, %v3004
        %v3069 = vadd.f32 %v2877, %v3005
        %v3070 = vadd.f32 %v2878, %v3006
        %v3071 = vadd.f32 %v2879, %v3007
        %v3072 = vpack.c.bf16 %v3012, %v3008
        %v3073 = vpack.c.bf16 %v3013, %v3009
        %v3074 = vpack.c.bf16 %v3014, %v3010
        %v3075 = vpack.c.bf16 %v3015, %v3011
        %v3076 = vpack.c.bf16 %v3020, %v3016
        %v3077 = vpack.c.bf16 %v3021, %v3017
        %v3078 = vpack.c.bf16 %v3022, %v3018
        %v3079 = vpack.c.bf16 %v3023, %v3019
        %v3080 = vpack.c.bf16 %v3028, %v3024
        %v3081 = vpack.c.bf16 %v3029, %v3025
        %v3082 = vpack.c.bf16 %v3030, %v3026
        %v3083 = vpack.c.bf16 %v3031, %v3027
        %v3084 = vpack.c.bf16 %v3036, %v3032
        %v3085 = vpack.c.bf16 %v3037, %v3033
        %v3086 = vpack.c.bf16 %v3038, %v3034
        %v3087 = vpack.c.bf16 %v3039, %v3035
        %v3088 = vpack.c.bf16 %v3044, %v3040
        %v3089 = vpack.c.bf16 %v3045, %v3041
        %v3090 = vpack.c.bf16 %v3046, %v3042
        %v3091 = vpack.c.bf16 %v3047, %v3043
        %v3092 = vpack.c.bf16 %v3052, %v3048
        %v3093 = vpack.c.bf16 %v3053, %v3049
        %v3094 = vpack.c.bf16 %v3054, %v3050
        %v3095 = vpack.c.bf16 %v3055, %v3051
        %v3096 = vpack.c.bf16 %v3060, %v3056
        %v3097 = vpack.c.bf16 %v3061, %v3057
        %v3098 = vpack.c.bf16 %v3062, %v3058
        %v3099 = vpack.c.bf16 %v3063, %v3059
        %v3100 = vpack.c.bf16 %v3068, %v3064
        %v3101 = vpack.c.bf16 %v3069, %v3065
        %v3102 = vpack.c.bf16 %v3070, %v3066
        %v3103 = vpack.c.bf16 %v3071, %v3067
        %v3136 = vunpack.c.l.b16 %v3072
        %v3137 = vunpack.c.l.b16 %v3073
        %v3138 = vunpack.c.l.b16 %v3074
        %v3139 = vunpack.c.l.b16 %v3075
        %v3140 = vunpack.c.h.b16 %v3072
        %v3141 = vunpack.c.h.b16 %v3073
        %v3142 = vunpack.c.h.b16 %v3074
        %v3143 = vunpack.c.h.b16 %v3075
        %v3144 = vunpack.c.l.b16 %v3076
        %v3145 = vunpack.c.l.b16 %v3077
        %v3146 = vunpack.c.l.b16 %v3078
        %v3147 = vunpack.c.l.b16 %v3079
        %v3148 = vunpack.c.h.b16 %v3076
        %v3149 = vunpack.c.h.b16 %v3077
        %v3150 = vunpack.c.h.b16 %v3078
        %v3151 = vunpack.c.h.b16 %v3079
        %v3152 = vunpack.c.l.b16 %v3080
        %v3153 = vunpack.c.l.b16 %v3081
        %v3154 = vunpack.c.l.b16 %v3082
        %v3155 = vunpack.c.l.b16 %v3083
        %v3156 = vunpack.c.h.b16 %v3080
        %v3157 = vunpack.c.h.b16 %v3081
        %v3158 = vunpack.c.h.b16 %v3082
        %v3159 = vunpack.c.h.b16 %v3083
        %v3160 = vunpack.c.l.b16 %v3084
        %v3161 = vunpack.c.l.b16 %v3085
        %v3162 = vunpack.c.l.b16 %v3086
        %v3163 = vunpack.c.l.b16 %v3087
        %v3164 = vunpack.c.h.b16 %v3084
        %v3165 = vunpack.c.h.b16 %v3085
        %v3166 = vunpack.c.h.b16 %v3086
        %v3167 = vunpack.c.h.b16 %v3087
        %v3168 = vunpack.c.l.b16 %v3088
        %v3169 = vunpack.c.l.b16 %v3089
        %v3170 = vunpack.c.l.b16 %v3090
        %v3171 = vunpack.c.l.b16 %v3091
        %v3172 = vunpack.c.h.b16 %v3088
        %v3173 = vunpack.c.h.b16 %v3089
        %v3174 = vunpack.c.h.b16 %v3090
        %v3175 = vunpack.c.h.b16 %v3091
        %v3176 = vunpack.c.l.b16 %v3092
        %v3177 = vunpack.c.l.b16 %v3093
        %v3178 = vunpack.c.l.b16 %v3094
        %v3179 = vunpack.c.l.b16 %v3095
        %v3180 = vunpack.c.h.b16 %v3092
        %v3181 = vunpack.c.h.b16 %v3093
        %v3182 = vunpack.c.h.b16 %v3094
        %v3183 = vunpack.c.h.b16 %v3095
        %v3184 = vunpack.c.l.b16 %v3096
        %v3185 = vunpack.c.l.b16 %v3097
        %v3186 = vunpack.c.l.b16 %v3098
        %v3187 = vunpack.c.l.b16 %v3099
        %v3188 = vunpack.c.h.b16 %v3096
        %v3189 = vunpack.c.h.b16 %v3097
        %v3190 = vunpack.c.h.b16 %v3098
        %v3191 = vunpack.c.h.b16 %v3099
        %v3192 = vunpack.c.l.b16 %v3100
        %v3193 = vunpack.c.l.b16 %v3101
        %v3194 = vunpack.c.l.b16 %v3102
        %v3195 = vunpack.c.l.b16 %v3103
        %v3196 = vunpack.c.h.b16 %v3100
        %v3197 = vunpack.c.h.b16 %v3101
        %v3198 = vunpack.c.h.b16 %v3102
        %v3199 = vunpack.c.h.b16 %v3103
        %v3200 = vpack.c.b16 %v3137, %v3136
        %v3201 = vpack.c.b16 %v3139, %v3138
        %v3202 = vpack.c.b16 %v3141, %v3140
        %v3203 = vpack.c.b16 %v3143, %v3142
        %v3204 = vpack.c.b16 %v3145, %v3144
        %v3205 = vpack.c.b16 %v3147, %v3146
        %v3206 = vpack.c.b16 %v3149, %v3148
        %v3207 = vpack.c.b16 %v3151, %v3150
        %v3208 = vpack.c.b16 %v3153, %v3152
        %v3209 = vpack.c.b16 %v3155, %v3154
        %v3210 = vpack.c.b16 %v3157, %v3156
        %v3211 = vpack.c.b16 %v3159, %v3158
        %v3212 = vpack.c.b16 %v3161, %v3160
        %v3213 = vpack.c.b16 %v3163, %v3162
        %v3214 = vpack.c.b16 %v3165, %v3164
        %v3215 = vpack.c.b16 %v3167, %v3166
        %v3216 = vpack.c.b16 %v3169, %v3168
        %v3217 = vpack.c.b16 %v3171, %v3170
        %v3218 = vpack.c.b16 %v3173, %v3172
        %v3219 = vpack.c.b16 %v3175, %v3174
        %v3220 = vpack.c.b16 %v3177, %v3176
        %v3221 = vpack.c.b16 %v3179, %v3178
        %v3222 = vpack.c.b16 %v3181, %v3180
        %v3223 = vpack.c.b16 %v3183, %v3182
        %v3224 = vpack.c.b16 %v3185, %v3184
        %v3225 = vpack.c.b16 %v3187, %v3186
        %v3226 = vpack.c.b16 %v3189, %v3188
        %v3227 = vpack.c.b16 %v3191, %v3190
        %v3228 = vpack.c.b16 %v3193, %v3192
        %v3229 = vpack.c.b16 %v3195, %v3194
        %v3230 = vpack.c.b16 %v3197, %v3196
        %v3231 = vpack.c.b16 %v3199, %v3198
        %3264 = vst [vmem:[%s756] sm:$0xff] %v3200
        %3265 = vst [vmem:[%s756 + $0x8] sm:$0xff] %v3201
        %3266 = vst [vmem:[%s756 + $0x10] sm:$0xff] %v3202
        %3267 = vst [vmem:[%s756 + $0x18] sm:$0xff] %v3203
        %3268 = vst [vmem:[%s756 + $0x20] sm:$0xff] %v3204
        %3269 = vst [vmem:[%s756 + $0x28] sm:$0xff] %v3205
        %3270 = vst [vmem:[%s756 + $0x30] sm:$0xff] %v3206
        %3271 = vst [vmem:[%s756 + $0x38] sm:$0xff] %v3207
        %3272 = vst [vmem:[%s756 + $0x40] sm:$0xff] %v3208
        %3273 = vst [vmem:[%s756 + $0x48] sm:$0xff] %v3209
        %3274 = vst [vmem:[%s756 + $0x50] sm:$0xff] %v3210
        %3275 = vst [vmem:[%s756 + $0x58] sm:$0xff] %v3211
        %3276 = vst [vmem:[%s756 + $0x60] sm:$0xff] %v3212
        %3277 = vst [vmem:[%s756 + $0x68] sm:$0xff] %v3213
        %3278 = vst [vmem:[%s756 + $0x70] sm:$0xff] %v3214
        %3279 = vst [vmem:[%s756 + $0x78] sm:$0xff] %v3215
        %3280 = vst [vmem:[%s756 + $0x80] sm:$0xff] %v3216
        %3281 = vst [vmem:[%s756 + $0x88] sm:$0xff] %v3217
        %3282 = vst [vmem:[%s756 + $0x90] sm:$0xff] %v3218
        %3283 = vst [vmem:[%s756 + $0x98] sm:$0xff] %v3219
        %3284 = vst [vmem:[%s756 + $0xa0] sm:$0xff] %v3220
        %3285 = vst [vmem:[%s756 + $0xa8] sm:$0xff] %v3221
        %3286 = vst [vmem:[%s756 + $0xb0] sm:$0xff] %v3222
        %3287 = vst [vmem:[%s756 + $0xb8] sm:$0xff] %v3223
        %3288 = vst [vmem:[%s756 + $0xc0] sm:$0xff] %v3224
        %3289 = vst [vmem:[%s756 + $0xc8] sm:$0xff] %v3225
        %3290 = vst [vmem:[%s756 + $0xd0] sm:$0xff] %v3226
        %3291 = vst [vmem:[%s756 + $0xd8] sm:$0xff] %v3227
        %3292 = vst [vmem:[%s756 + $0xe0] sm:$0xff] %v3228
        %3293 = vst [vmem:[%s756 + $0xe8] sm:$0xff] %v3229
        %3294 = vst [vmem:[%s756 + $0xf0] sm:$0xff] %v3230
        %3295 = vst [vmem:[%s756 + $0xf8] sm:$0xff] %v3231
        %v3296 = vld [vmem:[%s654] sm:$0xff]
        %v3297 = vld [vmem:[%s654 + $0x8] sm:$0xff]
        %v3298 = vld [vmem:[%s654 + $0x10] sm:$0xff]
        %v3299 = vld [vmem:[%s654 + $0x18] sm:$0xff]
        %v3300 = vld [vmem:[%s654 + $0x20] sm:$0xff]
        %v3301 = vld [vmem:[%s654 + $0x28] sm:$0xff]
        %v3302 = vld [vmem:[%s654 + $0x30] sm:$0xff]
        %v3303 = vld [vmem:[%s654 + $0x38] sm:$0xff]
        %v3304 = vld [vmem:[%s654 + $0x40] sm:$0xff]
        %v3305 = vld [vmem:[%s654 + $0x48] sm:$0xff]
        %v3306 = vld [vmem:[%s654 + $0x50] sm:$0xff]
        %v3307 = vld [vmem:[%s654 + $0x58] sm:$0xff]
        %v3308 = vld [vmem:[%s654 + $0x60] sm:$0xff]
        %v3309 = vld [vmem:[%s654 + $0x68] sm:$0xff]
        %v3310 = vld [vmem:[%s654 + $0x70] sm:$0xff]
        %v3311 = vld [vmem:[%s654 + $0x78] sm:$0xff]
        %v3312 = vld [vmem:[%s654 + $0x80] sm:$0xff]
        %v3313 = vld [vmem:[%s654 + $0x88] sm:$0xff]
        %v3314 = vld [vmem:[%s654 + $0x90] sm:$0xff]
        %v3315 = vld [vmem:[%s654 + $0x98] sm:$0xff]
        %v3316 = vld [vmem:[%s654 + $0xa0] sm:$0xff]
        %v3317 = vld [vmem:[%s654 + $0xa8] sm:$0xff]
        %v3318 = vld [vmem:[%s654 + $0xb0] sm:$0xff]
        %v3319 = vld [vmem:[%s654 + $0xb8] sm:$0xff]
        %v3320 = vld [vmem:[%s654 + $0xc0] sm:$0xff]
        %v3321 = vld [vmem:[%s654 + $0xc8] sm:$0xff]
        %v3322 = vld [vmem:[%s654 + $0xd0] sm:$0xff]
        %v3323 = vld [vmem:[%s654 + $0xd8] sm:$0xff]
        %v3324 = vld [vmem:[%s654 + $0xe0] sm:$0xff]
        %v3325 = vld [vmem:[%s654 + $0xe8] sm:$0xff]
        %v3326 = vld [vmem:[%s654 + $0xf0] sm:$0xff]
        %v3327 = vld [vmem:[%s654 + $0xf8] sm:$0xff]
        %v3328 = vmul.f32 %v1870, %v3296
        %v3329 = vmul.f32 %v1872, %v3297
        %v3330 = vmul.f32 %v1874, %v3298
        %v3331 = vmul.f32 %v1876, %v3299
        %v3332 = vmul.f32 %v1880, %v3300
        %v3333 = vmul.f32 %v1882, %v3301
        %v3334 = vmul.f32 %v1884, %v3302
        %v3335 = vmul.f32 %v1886, %v3303
        %v3336 = vmul.f32 %v1890, %v3304
        %v3337 = vmul.f32 %v1892, %v3305
        %v3338 = vmul.f32 %v1894, %v3306
        %v3339 = vmul.f32 %v1896, %v3307
        %v3340 = vmul.f32 %v1900, %v3308
        %v3341 = vmul.f32 %v1902, %v3309
        %v3342 = vmul.f32 %v1904, %v3310
        %v3343 = vmul.f32 %v1906, %v3311
        %v3344 = vmul.f32 %v1910, %v3312
        %v3345 = vmul.f32 %v1912, %v3313
        %v3346 = vmul.f32 %v1914, %v3314
        %v3347 = vmul.f32 %v1916, %v3315
        %v3348 = vmul.f32 %v1920, %v3316
        %v3349 = vmul.f32 %v1922, %v3317
        %v3350 = vmul.f32 %v1924, %v3318
        %v3351 = vmul.f32 %v1926, %v3319
        %v3352 = vmul.f32 %v1930, %v3320
        %v3353 = vmul.f32 %v1932, %v3321
        %v3354 = vmul.f32 %v1934, %v3322
        %v3355 = vmul.f32 %v1936, %v3323
        %v3356 = vmul.f32 %v1940, %v3324
        %v3357 = vmul.f32 %v1942, %v3325
        %v3358 = vmul.f32 %v1944, %v3326
        %v3359 = vmul.f32 %v1946, %v3327
        %3360 = vrot.lane.b32.xlu0 %v1870, 64
        %v3361 = vpop.permute.xlu0 %3360
        %3362 = vrot.lane.b32.xlu0 %v1874, 64
        %v3363 = vpop.permute.xlu0 %3362
        %3364 = vrot.lane.b32.xlu0 %v1880, 64
        %v3365 = vpop.permute.xlu0 %3364
        %3366 = vrot.lane.b32.xlu0 %v1884, 64
        %v3367 = vpop.permute.xlu0 %3366
        %3368 = vrot.lane.b32.xlu0 %v1890, 64
        %v3369 = vpop.permute.xlu0 %3368
        %3370 = vrot.lane.b32.xlu0 %v1894, 64
        %v3371 = vpop.permute.xlu0 %3370
        %3372 = vrot.lane.b32.xlu0 %v1900, 64
        %v3373 = vpop.permute.xlu0 %3372
        %3374 = vrot.lane.b32.xlu0 %v1904, 64
        %v3375 = vpop.permute.xlu0 %3374
        %3376 = vrot.lane.b32.xlu0 %v1910, 64
        %v3377 = vpop.permute.xlu0 %3376
        %3378 = vrot.lane.b32.xlu0 %v1914, 64
        %v3379 = vpop.permute.xlu0 %3378
        %3380 = vrot.lane.b32.xlu0 %v1920, 64
        %v3381 = vpop.permute.xlu0 %3380
        %3382 = vrot.lane.b32.xlu0 %v1924, 64
        %v3383 = vpop.permute.xlu0 %3382
        %3384 = vrot.lane.b32.xlu0 %v1930, 64
        %v3385 = vpop.permute.xlu0 %3384
        %3386 = vrot.lane.b32.xlu0 %v1934, 64
        %v3387 = vpop.permute.xlu0 %3386
        %3388 = vrot.lane.b32.xlu0 %v1940, 64
        %v3389 = vpop.permute.xlu0 %3388
        %3390 = vrot.lane.b32.xlu0 %v1944, 64
        %v3391 = vpop.permute.xlu0 %3390
        %3392 = vrot.lane.b32.xlu0 %v1872, 64
        %v3393 = vpop.permute.xlu0 %3392
        %3394 = vrot.lane.b32.xlu0 %v1876, 64
        %v3395 = vpop.permute.xlu0 %3394
        %3396 = vrot.lane.b32.xlu0 %v1882, 64
        %v3397 = vpop.permute.xlu0 %3396
        %3398 = vrot.lane.b32.xlu0 %v1886, 64
        %v3399 = vpop.permute.xlu0 %3398
        %3400 = vrot.lane.b32.xlu0 %v1892, 64
        %v3401 = vpop.permute.xlu0 %3400
        %3402 = vrot.lane.b32.xlu0 %v1896, 64
        %v3403 = vpop.permute.xlu0 %3402
        %3404 = vrot.lane.b32.xlu0 %v1902, 64
        %v3405 = vpop.permute.xlu0 %3404
        %3406 = vrot.lane.b32.xlu0 %v1906, 64
        %v3407 = vpop.permute.xlu0 %3406
        %3408 = vrot.lane.b32.xlu0 %v1912, 64
        %v3409 = vpop.permute.xlu0 %3408
        %3410 = vrot.lane.b32.xlu0 %v1916, 64
        %v3411 = vpop.permute.xlu0 %3410
        %3412 = vrot.lane.b32.xlu0 %v1922, 64
        %v3413 = vpop.permute.xlu0 %3412
        %3414 = vrot.lane.b32.xlu0 %v1926, 64
        %v3415 = vpop.permute.xlu0 %3414
        %3416 = vrot.lane.b32.xlu0 %v1932, 64
        %v3417 = vpop.permute.xlu0 %3416
        %3418 = vrot.lane.b32.xlu0 %v1936, 64
        %v3419 = vpop.permute.xlu0 %3418
        %3420 = vrot.lane.b32.xlu0 %v1942, 64
        %v3421 = vpop.permute.xlu0 %3420
        %3422 = vrot.lane.b32.xlu0 %v1946, 64
        %v3423 = vpop.permute.xlu0 %3422
        %v3424 = vsel %vm2623, %v3361, %v3393
        %v3425 = vsel %vm2623, %v3363, %v3395
        %v3426 = vsel %vm2623, %v3365, %v3397
        %v3427 = vsel %vm2623, %v3367, %v3399
        %v3428 = vsel %vm2623, %v3369, %v3401
        %v3429 = vsel %vm2623, %v3371, %v3403
        %v3430 = vsel %vm2623, %v3373, %v3405
        %v3431 = vsel %vm2623, %v3375, %v3407
        %v3432 = vsel %vm2623, %v3377, %v3409
        %v3433 = vsel %vm2623, %v3379, %v3411
        %v3434 = vsel %vm2623, %v3381, %v3413
        %v3435 = vsel %vm2623, %v3383, %v3415
        %v3436 = vsel %vm2623, %v3385, %v3417
        %v3437 = vsel %vm2623, %v3387, %v3419
        %v3438 = vsel %vm2623, %v3389, %v3421
        %v3439 = vsel %vm2623, %v3391, %v3423
        %v3440 = vsel %vm2623, %v3393, %v3361
        %v3441 = vsel %vm2623, %v3395, %v3363
        %v3442 = vsel %vm2623, %v3397, %v3365
        %v3443 = vsel %vm2623, %v3399, %v3367
        %v3444 = vsel %vm2623, %v3401, %v3369
        %v3445 = vsel %vm2623, %v3403, %v3371
        %v3446 = vsel %vm2623, %v3405, %v3373
        %v3447 = vsel %vm2623, %v3407, %v3375
        %v3448 = vsel %vm2623, %v3409, %v3377
        %v3449 = vsel %vm2623, %v3411, %v3379
        %v3450 = vsel %vm2623, %v3413, %v3381
        %v3451 = vsel %vm2623, %v3415, %v3383
        %v3452 = vsel %vm2623, %v3417, %v3385
        %v3453 = vsel %vm2623, %v3419, %v3387
        %v3454 = vsel %vm2623, %v3421, %v3389
        %v3455 = vsel %vm2623, %v3423, %v3391
        %v3456 = vld [vmem:[%s663] sm:$0xff]
        %v3457 = vld [vmem:[%s663 + $0x8] sm:$0xff]
        %v3458 = vld [vmem:[%s663 + $0x10] sm:$0xff]
        %v3459 = vld [vmem:[%s663 + $0x18] sm:$0xff]
        %v3460 = vld [vmem:[%s663 + $0x20] sm:$0xff]
        %v3461 = vld [vmem:[%s663 + $0x28] sm:$0xff]
        %v3462 = vld [vmem:[%s663 + $0x30] sm:$0xff]
        %v3463 = vld [vmem:[%s663 + $0x38] sm:$0xff]
        %v3464 = vld [vmem:[%s663 + $0x40] sm:$0xff]
        %v3465 = vld [vmem:[%s663 + $0x48] sm:$0xff]
        %v3466 = vld [vmem:[%s663 + $0x50] sm:$0xff]
        %v3467 = vld [vmem:[%s663 + $0x58] sm:$0xff]
        %v3468 = vld [vmem:[%s663 + $0x60] sm:$0xff]
        %v3469 = vld [vmem:[%s663 + $0x68] sm:$0xff]
        %v3470 = vld [vmem:[%s663 + $0x70] sm:$0xff]
        %v3471 = vld [vmem:[%s663 + $0x78] sm:$0xff]
        %v3472 = vld [vmem:[%s663 + $0x80] sm:$0xff]
        %v3473 = vld [vmem:[%s663 + $0x88] sm:$0xff]
        %v3474 = vld [vmem:[%s663 + $0x90] sm:$0xff]
        %v3475 = vld [vmem:[%s663 + $0x98] sm:$0xff]
        %v3476 = vld [vmem:[%s663 + $0xa0] sm:$0xff]
        %v3477 = vld [vmem:[%s663 + $0xa8] sm:$0xff]
        %v3478 = vld [vmem:[%s663 + $0xb0] sm:$0xff]
        %v3479 = vld [vmem:[%s663 + $0xb8] sm:$0xff]
        %v3480 = vld [vmem:[%s663 + $0xc0] sm:$0xff]
        %v3481 = vld [vmem:[%s663 + $0xc8] sm:$0xff]
        %v3482 = vld [vmem:[%s663 + $0xd0] sm:$0xff]
        %v3483 = vld [vmem:[%s663 + $0xd8] sm:$0xff]
        %v3484 = vld [vmem:[%s663 + $0xe0] sm:$0xff]
        %v3485 = vld [vmem:[%s663 + $0xe8] sm:$0xff]
        %v3486 = vld [vmem:[%s663 + $0xf0] sm:$0xff]
        %v3487 = vld [vmem:[%s663 + $0xf8] sm:$0xff]
        %v3488 = vmul.f32 %v3424, %v3456
        %v3489 = vmul.f32 %v3440, %v3457
        %v3490 = vmul.f32 %v3425, %v3458
        %v3491 = vmul.f32 %v3441, %v3459
        %v3492 = vmul.f32 %v3426, %v3460
        %v3493 = vmul.f32 %v3442, %v3461
        %v3494 = vmul.f32 %v3427, %v3462
        %v3495 = vmul.f32 %v3443, %v3463
        %v3496 = vmul.f32 %v3428, %v3464
        %v3497 = vmul.f32 %v3444, %v3465
        %v3498 = vmul.f32 %v3429, %v3466
        %v3499 = vmul.f32 %v3445, %v3467
        %v3500 = vmul.f32 %v3430, %v3468
        %v3501 = vmul.f32 %v3446, %v3469
        %v3502 = vmul.f32 %v3431, %v3470
        %v3503 = vmul.f32 %v3447, %v3471
        %v3504 = vmul.f32 %v3432, %v3472
        %v3505 = vmul.f32 %v3448, %v3473
        %v3506 = vmul.f32 %v3433, %v3474
        %v3507 = vmul.f32 %v3449, %v3475
        %v3508 = vmul.f32 %v3434, %v3476
        %v3509 = vmul.f32 %v3450, %v3477
        %v3510 = vmul.f32 %v3435, %v3478
        %v3511 = vmul.f32 %v3451, %v3479
        %v3512 = vmul.f32 %v3436, %v3480
        %v3513 = vmul.f32 %v3452, %v3481
        %v3514 = vmul.f32 %v3437, %v3482
        %v3515 = vmul.f32 %v3453, %v3483
        %v3516 = vmul.f32 %v3438, %v3484
        %v3517 = vmul.f32 %v3454, %v3485
        %v3518 = vmul.f32 %v3439, %v3486
        %v3519 = vmul.f32 %v3455, %v3487
        %v3520 = vadd.f32 %v3328, %v3488
        %v3521 = vadd.f32 %v3329, %v3489
        %v3522 = vadd.f32 %v3330, %v3490
        %v3523 = vadd.f32 %v3331, %v3491
        %v3524 = vadd.f32 %v3332, %v3492
        %v3525 = vadd.f32 %v3333, %v3493
        %v3526 = vadd.f32 %v3334, %v3494
        %v3527 = vadd.f32 %v3335, %v3495
        %v3528 = vadd.f32 %v3336, %v3496
        %v3529 = vadd.f32 %v3337, %v3497
        %v3530 = vadd.f32 %v3338, %v3498
        %v3531 = vadd.f32 %v3339, %v3499
        %v3532 = vadd.f32 %v3340, %v3500
        %v3533 = vadd.f32 %v3341, %v3501
        %v3534 = vadd.f32 %v3342, %v3502
        %v3535 = vadd.f32 %v3343, %v3503
        %v3536 = vadd.f32 %v3344, %v3504
        %v3537 = vadd.f32 %v3345, %v3505
        %v3538 = vadd.f32 %v3346, %v3506
        %v3539 = vadd.f32 %v3347, %v3507
        %v3540 = vadd.f32 %v3348, %v3508
        %v3541 = vadd.f32 %v3349, %v3509
        %v3542 = vadd.f32 %v3350, %v3510
        %v3543 = vadd.f32 %v3351, %v3511
        %v3544 = vadd.f32 %v3352, %v3512
        %v3545 = vadd.f32 %v3353, %v3513
        %v3546 = vadd.f32 %v3354, %v3514
        %v3547 = vadd.f32 %v3355, %v3515
        %v3548 = vadd.f32 %v3356, %v3516
        %v3549 = vadd.f32 %v3357, %v3517
        %v3550 = vadd.f32 %v3358, %v3518
        %v3551 = vadd.f32 %v3359, %v3519
        %v3552 = vld [vmem:[%s672] sm:$0xff]
        %v3553 = vld [vmem:[%s672 + $0x8] sm:$0xff]
        %v3554 = vld [vmem:[%s672 + $0x10] sm:$0xff]
        %v3555 = vld [vmem:[%s672 + $0x18] sm:$0xff]
        %v3556 = vld [vmem:[%s672 + $0x20] sm:$0xff]
        %v3557 = vld [vmem:[%s672 + $0x28] sm:$0xff]
        %v3558 = vld [vmem:[%s672 + $0x30] sm:$0xff]
        %v3559 = vld [vmem:[%s672 + $0x38] sm:$0xff]
        %v3560 = vld [vmem:[%s672 + $0x40] sm:$0xff]
        %v3561 = vld [vmem:[%s672 + $0x48] sm:$0xff]
        %v3562 = vld [vmem:[%s672 + $0x50] sm:$0xff]
        %v3563 = vld [vmem:[%s672 + $0x58] sm:$0xff]
        %v3564 = vld [vmem:[%s672 + $0x60] sm:$0xff]
        %v3565 = vld [vmem:[%s672 + $0x68] sm:$0xff]
        %v3566 = vld [vmem:[%s672 + $0x70] sm:$0xff]
        %v3567 = vld [vmem:[%s672 + $0x78] sm:$0xff]
        %v3568 = vld [vmem:[%s672 + $0x80] sm:$0xff]
        %v3569 = vld [vmem:[%s672 + $0x88] sm:$0xff]
        %v3570 = vld [vmem:[%s672 + $0x90] sm:$0xff]
        %v3571 = vld [vmem:[%s672 + $0x98] sm:$0xff]
        %v3572 = vld [vmem:[%s672 + $0xa0] sm:$0xff]
        %v3573 = vld [vmem:[%s672 + $0xa8] sm:$0xff]
        %v3574 = vld [vmem:[%s672 + $0xb0] sm:$0xff]
        %v3575 = vld [vmem:[%s672 + $0xb8] sm:$0xff]
        %v3576 = vld [vmem:[%s672 + $0xc0] sm:$0xff]
        %v3577 = vld [vmem:[%s672 + $0xc8] sm:$0xff]
        %v3578 = vld [vmem:[%s672 + $0xd0] sm:$0xff]
        %v3579 = vld [vmem:[%s672 + $0xd8] sm:$0xff]
        %v3580 = vld [vmem:[%s672 + $0xe0] sm:$0xff]
        %v3581 = vld [vmem:[%s672 + $0xe8] sm:$0xff]
        %v3582 = vld [vmem:[%s672 + $0xf0] sm:$0xff]
        %v3583 = vld [vmem:[%s672 + $0xf8] sm:$0xff]
        %v3584 = vmul.f32 %v3440, %v3552
        %v3585 = vmul.f32 %v3424, %v3553
        %v3586 = vmul.f32 %v3441, %v3554
        %v3587 = vmul.f32 %v3425, %v3555
        %v3588 = vmul.f32 %v3442, %v3556
        %v3589 = vmul.f32 %v3426, %v3557
        %v3590 = vmul.f32 %v3443, %v3558
        %v3591 = vmul.f32 %v3427, %v3559
        %v3592 = vmul.f32 %v3444, %v3560
        %v3593 = vmul.f32 %v3428, %v3561
        %v3594 = vmul.f32 %v3445, %v3562
        %v3595 = vmul.f32 %v3429, %v3563
        %v3596 = vmul.f32 %v3446, %v3564
        %v3597 = vmul.f32 %v3430, %v3565
        %v3598 = vmul.f32 %v3447, %v3566
        %v3599 = vmul.f32 %v3431, %v3567
        %v3600 = vmul.f32 %v3448, %v3568
        %v3601 = vmul.f32 %v3432, %v3569
        %v3602 = vmul.f32 %v3449, %v3570
        %v3603 = vmul.f32 %v3433, %v3571
        %v3604 = vmul.f32 %v3450, %v3572
        %v3605 = vmul.f32 %v3434, %v3573
        %v3606 = vmul.f32 %v3451, %v3574
        %v3607 = vmul.f32 %v3435, %v3575
        %v3608 = vmul.f32 %v3452, %v3576
        %v3609 = vmul.f32 %v3436, %v3577
        %v3610 = vmul.f32 %v3453, %v3578
        %v3611 = vmul.f32 %v3437, %v3579
        %v3612 = vmul.f32 %v3454, %v3580
        %v3613 = vmul.f32 %v3438, %v3581
        %v3614 = vmul.f32 %v3455, %v3582
        %v3615 = vmul.f32 %v3439, %v3583
        %v3616 = vadd.f32 %v3520, %v3584
        %v3617 = vadd.f32 %v3521, %v3585
        %v3618 = vadd.f32 %v3522, %v3586
        %v3619 = vadd.f32 %v3523, %v3587
        %v3620 = vadd.f32 %v3524, %v3588
        %v3621 = vadd.f32 %v3525, %v3589
        %v3622 = vadd.f32 %v3526, %v3590
        %v3623 = vadd.f32 %v3527, %v3591
        %v3624 = vadd.f32 %v3528, %v3592
        %v3625 = vadd.f32 %v3529, %v3593
        %v3626 = vadd.f32 %v3530, %v3594
        %v3627 = vadd.f32 %v3531, %v3595
        %v3628 = vadd.f32 %v3532, %v3596
        %v3629 = vadd.f32 %v3533, %v3597
        %v3630 = vadd.f32 %v3534, %v3598
        %v3631 = vadd.f32 %v3535, %v3599
        %v3632 = vadd.f32 %v3536, %v3600
        %v3633 = vadd.f32 %v3537, %v3601
        %v3634 = vadd.f32 %v3538, %v3602
        %v3635 = vadd.f32 %v3539, %v3603
        %v3636 = vadd.f32 %v3540, %v3604
        %v3637 = vadd.f32 %v3541, %v3605
        %v3638 = vadd.f32 %v3542, %v3606
        %v3639 = vadd.f32 %v3543, %v3607
        %v3640 = vadd.f32 %v3544, %v3608
        %v3641 = vadd.f32 %v3545, %v3609
        %v3642 = vadd.f32 %v3546, %v3610
        %v3643 = vadd.f32 %v3547, %v3611
        %v3644 = vadd.f32 %v3548, %v3612
        %v3645 = vadd.f32 %v3549, %v3613
        %v3646 = vadd.f32 %v3550, %v3614
        %v3647 = vadd.f32 %v3551, %v3615
        %3648 = vxpose.xlu0.b32.start [1/16] %v3616, 128
        %3649 = vxpose.xlu0.b32.cont [2/16] %v3618, 128
        %3650 = vxpose.xlu0.b32.cont [3/16] %v3620, 128
        %3651 = vxpose.xlu0.b32.cont [4/16] %v3622, 128
        %3652 = vxpose.xlu0.b32.cont [5/16] %v3624, 128
        %3653 = vxpose.xlu0.b32.cont [6/16] %v3626, 128
        %3654 = vxpose.xlu0.b32.cont [7/16] %v3628, 128
        %3655 = vxpose.xlu0.b32.cont [8/16] %v3630, 128
        %3656 = vxpose.xlu0.b32.cont [9/16] %v3632, 128
        %3657 = vxpose.xlu0.b32.cont [10/16] %v3634, 128
        %3658 = vxpose.xlu0.b32.cont [11/16] %v3636, 128
        %3659 = vxpose.xlu0.b32.cont [12/16] %v3638, 128
        %3660 = vxpose.xlu0.b32.cont [13/16] %v3640, 128
        %3661 = vxpose.xlu0.b32.cont [14/16] %v3642, 128
        %3662 = vxpose.xlu0.b32.cont [15/16] %v3644, 128
        %3663 = vxpose.xlu0.b32.end [16/16] %v3646, 128
        %v3664 = vpop.trf.xlu0
        %v3665 = vpop.trf.xlu0
        %v3666 = vpop.trf.xlu0
        %v3667 = vpop.trf.xlu0
        %v3668 = vpop.trf.xlu0
        %v3669 = vpop.trf.xlu0
        %v3670 = vpop.trf.xlu0
        %v3671 = vpop.trf.xlu0
        %v3672 = vpop.trf.xlu0
        %v3673 = vpop.trf.xlu0
        %v3674 = vpop.trf.xlu0
        %v3675 = vpop.trf.xlu0
        %v3676 = vpop.trf.xlu0
        %v3677 = vpop.trf.xlu0
        %v3678 = vpop.trf.xlu0
        %v3679 = vpop.trf.xlu0
        %3680 = vxpose.xlu0.b32.start [1/16] %v3617, 128
        %3681 = vxpose.xlu0.b32.cont [2/16] %v3619, 128
        %3682 = vxpose.xlu0.b32.cont [3/16] %v3621, 128
        %3683 = vxpose.xlu0.b32.cont [4/16] %v3623, 128
        %3684 = vxpose.xlu0.b32.cont [5/16] %v3625, 128
        %3685 = vxpose.xlu0.b32.cont [6/16] %v3627, 128
        %3686 = vxpose.xlu0.b32.cont [7/16] %v3629, 128
        %3687 = vxpose.xlu0.b32.cont [8/16] %v3631, 128
        %3688 = vxpose.xlu0.b32.cont [9/16] %v3633, 128
        %3689 = vxpose.xlu0.b32.cont [10/16] %v3635, 128
        %3690 = vxpose.xlu0.b32.cont [11/16] %v3637, 128
        %3691 = vxpose.xlu0.b32.cont [12/16] %v3639, 128
        %3692 = vxpose.xlu0.b32.cont [13/16] %v3641, 128
        %3693 = vxpose.xlu0.b32.cont [14/16] %v3643, 128
        %3694 = vxpose.xlu0.b32.cont [15/16] %v3645, 128
        %3695 = vxpose.xlu0.b32.end [16/16] %v3647, 128
        %v3696 = vpop.trf.xlu0
        %v3697 = vpop.trf.xlu0
        %v3698 = vpop.trf.xlu0
        %v3699 = vpop.trf.xlu0
        %v3700 = vpop.trf.xlu0
        %v3701 = vpop.trf.xlu0
        %v3702 = vpop.trf.xlu0
        %v3703 = vpop.trf.xlu0
        %v3704 = vpop.trf.xlu0
        %v3705 = vpop.trf.xlu0
        %v3706 = vpop.trf.xlu0
        %v3707 = vpop.trf.xlu0
        %v3708 = vpop.trf.xlu0
        %v3709 = vpop.trf.xlu0
        %v3710 = vpop.trf.xlu0
        %v3711 = vpop.trf.xlu0
        %v3712 = vpack.c.bf16 %v3665, %v3664
        %v3713 = vpack.c.bf16 %v3667, %v3666
        %v3714 = vpack.c.bf16 %v3669, %v3668
        %v3715 = vpack.c.bf16 %v3671, %v3670
        %v3716 = vpack.c.bf16 %v3673, %v3672
        %v3717 = vpack.c.bf16 %v3675, %v3674
        %v3718 = vpack.c.bf16 %v3677, %v3676
        %v3719 = vpack.c.bf16 %v3679, %v3678
        %v3720 = vpack.c.bf16 %v3697, %v3696
        %v3721 = vpack.c.bf16 %v3699, %v3698
        %v3722 = vpack.c.bf16 %v3701, %v3700
        %v3723 = vpack.c.bf16 %v3703, %v3702
        %v3724 = vpack.c.bf16 %v3705, %v3704
        %v3725 = vpack.c.bf16 %v3707, %v3706
        %v3726 = vpack.c.bf16 %v3709, %v3708
        %v3727 = vpack.c.bf16 %v3711, %v3710
        %v3744 = vunpack.c.l.b16 %v3712
        %v3745 = vunpack.c.h.b16 %v3712
        %v3746 = vunpack.c.l.b16 %v3713
        %v3747 = vunpack.c.h.b16 %v3713
        %v3748 = vunpack.c.l.b16 %v3714
        %v3749 = vunpack.c.h.b16 %v3714
        %v3750 = vunpack.c.l.b16 %v3715
        %v3751 = vunpack.c.h.b16 %v3715
        %v3752 = vunpack.c.l.b16 %v3716
        %v3753 = vunpack.c.h.b16 %v3716
        %v3754 = vunpack.c.l.b16 %v3717
        %v3755 = vunpack.c.h.b16 %v3717
        %v3756 = vunpack.c.l.b16 %v3718
        %v3757 = vunpack.c.h.b16 %v3718
        %v3758 = vunpack.c.l.b16 %v3719
        %v3759 = vunpack.c.h.b16 %v3719
        %v3760 = vunpack.c.l.b16 %v3720
        %v3761 = vunpack.c.h.b16 %v3720
        %v3762 = vunpack.c.l.b16 %v3721
        %v3763 = vunpack.c.h.b16 %v3721
        %v3764 = vunpack.c.l.b16 %v3722
        %v3765 = vunpack.c.h.b16 %v3722
        %v3766 = vunpack.c.l.b16 %v3723
        %v3767 = vunpack.c.h.b16 %v3723
        %v3768 = vunpack.c.l.b16 %v3724
        %v3769 = vunpack.c.h.b16 %v3724
        %v3770 = vunpack.c.l.b16 %v3725
        %v3771 = vunpack.c.h.b16 %v3725
        %v3772 = vunpack.c.l.b16 %v3726
        %v3773 = vunpack.c.h.b16 %v3726
        %v3774 = vunpack.c.l.b16 %v3727
        %v3775 = vunpack.c.h.b16 %v3727
        %v3776 = vpack.c.b16 %v3744, %v3744
        %v3777 = vpack.c.b16 %v3745, %v3745
        %v3778 = vpack.c.b16 %v3746, %v3746
        %v3779 = vpack.c.b16 %v3747, %v3747
        %v3780 = vpack.c.b16 %v3748, %v3748
        %v3781 = vpack.c.b16 %v3749, %v3749
        %v3782 = vpack.c.b16 %v3750, %v3750
        %v3783 = vpack.c.b16 %v3751, %v3751
        %v3784 = vpack.c.b16 %v3752, %v3752
        %v3785 = vpack.c.b16 %v3753, %v3753
        %v3786 = vpack.c.b16 %v3754, %v3754
        %v3787 = vpack.c.b16 %v3755, %v3755
        %v3788 = vpack.c.b16 %v3756, %v3756
        %v3789 = vpack.c.b16 %v3757, %v3757
        %v3790 = vpack.c.b16 %v3758, %v3758
        %v3791 = vpack.c.b16 %v3759, %v3759
        %v3792 = vpack.c.b16 %v3760, %v3760
        %v3793 = vpack.c.b16 %v3761, %v3761
        %v3794 = vpack.c.b16 %v3762, %v3762
        %v3795 = vpack.c.b16 %v3763, %v3763
        %v3796 = vpack.c.b16 %v3764, %v3764
        %v3797 = vpack.c.b16 %v3765, %v3765
        %v3798 = vpack.c.b16 %v3766, %v3766
        %v3799 = vpack.c.b16 %v3767, %v3767
        %v3800 = vpack.c.b16 %v3768, %v3768
        %v3801 = vpack.c.b16 %v3769, %v3769
        %v3802 = vpack.c.b16 %v3770, %v3770
        %v3803 = vpack.c.b16 %v3771, %v3771
        %v3804 = vpack.c.b16 %v3772, %v3772
        %v3805 = vpack.c.b16 %v3773, %v3773
        %v3806 = vpack.c.b16 %v3774, %v3774
        %v3807 = vpack.c.b16 %v3775, %v3775
        %3840 = vst [vmem:[%s763] sm:$0xf] %v3776
        %3841 = vst [vmem:[%s763 + $0x4] sm:$0xf] %v3777
        %3842 = vst [vmem:[%s763 + $0x8] sm:$0xf] %v3778
        %3843 = vst [vmem:[%s763 + $0xc] sm:$0xf] %v3779
        %3844 = vst [vmem:[%s763 + $0x10] sm:$0xf] %v3780
        %3845 = vst [vmem:[%s763 + $0x14] sm:$0xf] %v3781
        %3846 = vst [vmem:[%s763 + $0x18] sm:$0xf] %v3782
        %3847 = vst [vmem:[%s763 + $0x1c] sm:$0xf] %v3783
        %3848 = vst [vmem:[%s763 + $0x20] sm:$0xf] %v3784
        %3849 = vst [vmem:[%s763 + $0x24] sm:$0xf] %v3785
        %3850 = vst [vmem:[%s763 + $0x28] sm:$0xf] %v3786
        %3851 = vst [vmem:[%s763 + $0x2c] sm:$0xf] %v3787
        %3852 = vst [vmem:[%s763 + $0x30] sm:$0xf] %v3788
        %3853 = vst [vmem:[%s763 + $0x34] sm:$0xf] %v3789
        %3854 = vst [vmem:[%s763 + $0x38] sm:$0xf] %v3790
        %3855 = vst [vmem:[%s763 + $0x3c] sm:$0xf] %v3791
        %3856 = vst [vmem:[%s763 + $0x40] sm:$0xf] %v3792
        %3857 = vst [vmem:[%s763 + $0x44] sm:$0xf] %v3793
        %3858 = vst [vmem:[%s763 + $0x48] sm:$0xf] %v3794
        %3859 = vst [vmem:[%s763 + $0x4c] sm:$0xf] %v3795
        %3860 = vst [vmem:[%s763 + $0x50] sm:$0xf] %v3796
        %3861 = vst [vmem:[%s763 + $0x54] sm:$0xf] %v3797
        %3862 = vst [vmem:[%s763 + $0x58] sm:$0xf] %v3798
        %3863 = vst [vmem:[%s763 + $0x5c] sm:$0xf] %v3799
        %3864 = vst [vmem:[%s763 + $0x60] sm:$0xf] %v3800
        %3865 = vst [vmem:[%s763 + $0x64] sm:$0xf] %v3801
        %3866 = vst [vmem:[%s763 + $0x68] sm:$0xf] %v3802
        %3867 = vst [vmem:[%s763 + $0x6c] sm:$0xf] %v3803
        %3868 = vst [vmem:[%s763 + $0x70] sm:$0xf] %v3804
        %3869 = vst [vmem:[%s763 + $0x74] sm:$0xf] %v3805
        %3870 = vst [vmem:[%s763 + $0x78] sm:$0xf] %v3806
        %3871 = vst [vmem:[%s763 + $0x7c] sm:$0xf] %v3807
        %s3872 = sand.u32 %s319, 1
        %s3873 = scalar_lea.sflag [#allocation4], %s3872
        %s3874 = sand.u32 %s319, 1
        %s3875 = smul.addr %s3874, 256
        %s3876 = scalar_lea.vmem [#allocation20], %s3875
        %s3877 = sand.u32 %s45, 1
        %s3878 = scalar_lea.sflag [#allocation22], %s3877
        %s3879 = sand.u32 %s345, 1
        %s3880 = smul.addr %s3879, 128
        %s3881 = scalar_lea.vmem [#allocation21], %s3880
        %s3882 = sand.u32 %s45, 1
        %s3883 = scalar_lea.sflag [#allocation22], %s3882
        %s3884 = sand.u32 %s371, 1
        %s3885 = smul.addr %s3884, 128
        %s3886 = scalar_lea.vmem [#allocation23], %s3885
        // Predicated region
        $region109: #{tpu_custom_call.1} parent=63 // pred_check
          %p3887 = pneg %p329
        $region110: #{tpu_custom_call.1} parent=63 // pred_check_branch
          %3889 = sbr.rel (%p3887) target = $region112
        $region111: #{tpu_custom_call.1} parent=63 // pred_region
          %s3890 = smul.u32 16, %s45
          %s3892 = ssub.s32 4096, 4096
          %3893 = vsyncadd %s3873, %s3892
          %s3894 = smul.addr %s3890, 4
          %s3895 = smul.addr %s3894, 64
          %s3896 = scalar_lea.hbm %s11, %s3895
          %s3897 = sshll.u32 %s3876, 4
          %s3898 = int_to_ptr.vmem [resolvable:$true] %s3897
          %3903 = dma.vmem_to_hbm [thread:$0]  %s3898, 4096, %s3896, %s3873, 256, 256, 16
        $region112: #{tpu_custom_call.1} parent=63 // pred_fallthru
          _
        // Predicated region
        $region113: #{tpu_custom_call.1} parent=63 // pred_check
          %p3904 = pneg %p355
        $region114: #{tpu_custom_call.1} parent=63 // pred_check_branch
          %3906 = sbr.rel (%p3904) target = $region116
        $region115: #{tpu_custom_call.1} parent=63 // pred_region
          %s3908 = ssub.s32 2048, 2048
          %3909 = vsyncadd %s3878, %s3908
          %s3910 = smul.addr %s45, 64
          %s3911 = scalar_lea.hbm %s12, %s3910
          %s3912 = sshll.u32 %s3881, 4
          %s3913 = int_to_ptr.vmem [resolvable:$true] %s3912
          %3918 = dma.vmem_to_hbm [thread:$0]  %s3913, 2048, %s3911, %s3878, 64, 128, 4
        $region116: #{tpu_custom_call.1} parent=63 // pred_fallthru
          _
        // Predicated region
        $region117: #{tpu_custom_call.1} parent=63 // pred_check
          %p3919 = pneg %p381
        $region118: #{tpu_custom_call.1} parent=63 // pred_check_branch
          %3921 = sbr.rel (%p3919) target = $region120
        $region119: #{tpu_custom_call.1} parent=63 // pred_region
          %s3922 = smul.u32 16, %s45
          %s3924 = ssub.s32 2048, 2048
          %3925 = vsyncadd %s3883, %s3924
          %s3926 = smul.addr %s3922, 2
          %s3927 = smul.addr %s3926, 64
          %s3928 = scalar_lea.hbm %s13, %s3927
          %s3929 = sshll.u32 %s3886, 4
          %s3930 = int_to_ptr.vmem [resolvable:$true] %s3929
          %3935 = dma.vmem_to_hbm [thread:$0]  %s3930, 2048, %s3928, %s3883, 128, 128, 8
        $region120: #{tpu_custom_call.1} parent=63 // pred_fallthru
          _
      $region64: #{tpu_custom_call.1} parent=5 // pred_fallthru
        _
      %p3936 = scmp.le.s32.totalorder 2, %s40
      // Predicated region
      $region121: #{tpu_custom_call.1} parent=5 // pred_check
        %p3937 = pneg %p3936
      $region122: #{tpu_custom_call.1} parent=5 // pred_check_branch
        %3939 = sbr.rel (%p3937) target = $region124
      $region123: #{tpu_custom_call.1} parent=5 // pred_region
        %s3940 = ssub.s32 %s40, 2
        // Predicated region
        $region125: #{tpu_custom_call.1} parent=123 // pred_check
          %p3941 = pneg %p335
        $region126: #{tpu_custom_call.1} parent=123 // pred_check_branch
          %3943 = sbr.rel (%p3941) target = $region128
        $region127: #{tpu_custom_call.1} parent=123 // pred_region
          %s3944 = sand.u32 %s320, 1
          %s3945 = scalar_lea.sflag [#allocation4], %s3944
          %s3946 = sand.u32 %s320, 1
          %s3947 = smul.addr %s3946, 256
          %s3948 = scalar_lea.vmem [#allocation20], %s3947
          %3949 = dma.done %s3945, 4096
        $region128: #{tpu_custom_call.1} parent=123 // pred_fallthru
          _
        // Predicated region
        $region129: #{tpu_custom_call.1} parent=123 // pred_check
          %p3950 = pneg %p361
        $region130: #{tpu_custom_call.1} parent=123 // pred_check_branch
          %3952 = sbr.rel (%p3950) target = $region132
        $region131: #{tpu_custom_call.1} parent=123 // pred_region
          %s3953 = sand.u32 %s46, 1
          %s3954 = scalar_lea.sflag [#allocation22], %s3953
          %s3955 = sand.u32 %s346, 1
          %s3956 = smul.addr %s3955, 128
          %s3957 = scalar_lea.vmem [#allocation21], %s3956
          %3958 = dma.done %s3954, 2048
        $region132: #{tpu_custom_call.1} parent=123 // pred_fallthru
          _
        // Predicated region
        $region133: #{tpu_custom_call.1} parent=123 // pred_check
          %p3959 = pneg %p387
        $region134: #{tpu_custom_call.1} parent=123 // pred_check_branch
          %3961 = sbr.rel (%p3959) target = $region136
        $region135: #{tpu_custom_call.1} parent=123 // pred_region
          %s3962 = sand.u32 %s46, 1
          %s3963 = scalar_lea.sflag [#allocation22], %s3962
          %s3964 = sand.u32 %s372, 1
          %s3965 = smul.addr %s3964, 128
          %s3966 = scalar_lea.vmem [#allocation23], %s3965
          %3967 = dma.done %s3963, 2048
        $region136: #{tpu_custom_call.1} parent=123 // pred_fallthru
          _
      $region124: #{tpu_custom_call.1} parent=5 // pred_fallthru
        _
    $region6: #{tpu_custom_call.1} parent=1 // loop_footer
      %s44 = sadd.s32 1, %s40
    $region7: #{tpu_custom_call.1} parent=1 // loop_footer_branch
      %39 = sbr.rel target = $region3
    $region8: #{tpu_custom_call.1} parent=1 // loop_exit
      _
    %3968 = vsyncpa [#allocation3], 1
    %s3969 = scalar_lea.sflag [#allocation3], 1
    %3970 = vsyncpa %s3969, 1
    %3971 = vsyncpa [#allocation6], 1
    %s3972 = scalar_lea.sflag [#allocation6], 1
    %3973 = vsyncpa %s3972, 1
    %3974 = vsyncpa [#allocation9], 1
    %s3975 = scalar_lea.sflag [#allocation9], 1
    %3976 = vsyncpa %s3975, 1
    %3977 = vsyncpa [#allocation12], 1
    %s3978 = scalar_lea.sflag [#allocation12], 1
    %3979 = vsyncpa %s3978, 1
    %3980 = vsyncpa [#allocation15], 1
    %3981 = vsyncpa [#allocation18], 1
    %3982 = vsyncpa [#allocation4], 1
    %s3983 = scalar_lea.sflag [#allocation4], 1
    %3984 = vsyncpa %s3983, 1
    %3985 = vsyncpa [#allocation22], 1
    %s3986 = scalar_lea.sflag [#allocation22], 1
    %3987 = vsyncpa %s3986, 1

</llo_original>
